<compile_context>
chip_gen: v7x
topology: tpu7x:2x2x1
jax: 0.10.0
libtpu: 0.0.40
codegen_flags: <defaults>
</compile_context>

<pallas_src>
import jax
import jax.numpy as jnp
from jax.experimental import pallas as pl
from jax.experimental.pallas import tpu as pltpu


# ----------------------------------------------------------------------------
# In-kernel building blocks (VMEM-resident values, NHWC per image)
# ----------------------------------------------------------------------------
def _conv3x3_relu(x, w_ref, b_ref):
    """x: (H, W, Cin) f32 value. w_ref: (9*Cin, Cout). b_ref: (1, Cout).

    padding=1 3x3 conv as a single im2col matmul, fused bias + ReLU epilogue.
    """
    H, W, Cin = x.shape
    Cout = w_ref.shape[-1]

    # Zero halo built in-register (no HBM pad round-trip).
    zr = jnp.zeros((1, W, Cin), jnp.float32)
    xp = jnp.concatenate([zr, x, zr], axis=0)                 # (H+2, W, Cin)
    zc = jnp.zeros((H + 2, 1, Cin), jnp.float32)
    xp = jnp.concatenate([zc, xp, zc], axis=1)                # (H+2, W+2, Cin)

    # im2col: 9 shifted taps concatenated along channels -> ONE MXU matmul
    # with K = 9*Cin (instead of 9 skinny matmuls with K = Cin).
    taps = [xp[dy:dy + H, dx:dx + W, :] for dy in range(3) for dx in range(3)]
    pat = jnp.concatenate(taps, axis=-1)                      # (H, W, 9*Cin)
    pat = pat.reshape(H * W, 9 * Cin)

    y = jnp.dot(pat, w_ref[...], preferred_element_type=jnp.float32)
    y = jnp.maximum(y + b_ref[...], 0.0)                      # bias + ReLU
    return y.reshape(H, W, Cout)


def _maxpool2x2(x):
    """(H, W, C) -> (H//2, W//2, C). Layout-safe: no strided indexing."""
    H, W, C = x.shape
    Ho, Wo = H // 2, W // 2
    # Pool along H via a leading-dim-only reshape (free relayout).
    xr = x.reshape(Ho, 2, W, C)
    xh = jnp.maximum(xr[:, 0], xr[:, 1])                      # (Ho, W, C)
    # Pool along W via static column-pair maxima + one concat (W <= 16).
    cols = [jnp.maximum(xh[:, 2 * j:2 * j + 1, :], xh[:, 2 * j + 1:2 * j + 2, :])
            for j in range(Wo)]
    return jnp.concatenate(cols, axis=1)                      # (Ho, Wo, C)


def _upsample2x2(x):
    """Nearest-neighbour x2 along H and W, fully in VMEM."""
    H, W, C = x.shape
    # Duplicate columns (sublane axis) via static slices + one concat (W <= 8).
    cols = []
    for j in range(W):
        c = x[:, j:j + 1, :]
        cols += [c, c]
    xw = jnp.concatenate(cols, axis=1)                        # (H, 2W, C)
    # Duplicate rows via a pure leading-dim reshape (free).
    xw = xw[:, None]                                          # (H, 1, 2W, C)
    xw = jnp.concatenate([xw, xw], axis=1)                    # (H, 2, 2W, C)
    return xw.reshape(2 * H, 2 * W, C)                        # (2H, 2W, C)


# ----------------------------------------------------------------------------
# Fused whole-network kernel (one grid step = one batch element)
# ----------------------------------------------------------------------------
def _autoencoder_kernel(x_ref,
                        w1, b1, w2, b2, w3, b3, w4, b4, w5, b5, w6, b6, w7, b7,
                        o_ref):
    x = x_ref[0]                                              # (H, W, 3)

    # ---- encoder ----
    x = _maxpool2x2(_conv3x3_relu(x, w1, b1))                 # (H/2, W/2, 32)
    x = _maxpool2x2(_conv3x3_relu(x, w2, b2))                 # (H/4, W/4, 32)
    x = _maxpool2x2(_conv3x3_relu(x, w3, b3))                 # (H/8, W/8, 16)

    # ---- decoder ----
    x = _conv3x3_relu(_upsample2x2(x), w4, b4)                # (H/4, W/4, 16)
    x = _conv3x3_relu(_upsample2x2(x), w5, b5)                # (H/2, W/2, 32)
    x = _conv3x3_relu(_upsample2x2(x), w6, b6)                # (H,   W,   32)
    x = _conv3x3_relu(x, w7, b7)                              # (H,   W,    3)

    o_ref[0] = x


def _autoencoder_pallas(x_nhwc, flat_params):
    N, H, W, Cin = x_nhwc.shape
    assert H % 8 == 0 and W % 8 == 0, "spatial dims must be divisible by 8"

    in_specs = [pl.BlockSpec((1, H, W, Cin), lambda n: (n, 0, 0, 0))]
    # Weights/biases: full-array blocks, constant index_map -> DMA'd once.
    in_specs += [pl.BlockSpec(p.shape, lambda n: (0, 0)) for p in flat_params]

    return pl.pallas_call(
        _autoencoder_kernel,
        out_shape=jax.ShapeDtypeStruct((N, H, W, 3), jnp.float32),
        grid=(N,),
        in_specs=in_specs,
        out_specs=pl.BlockSpec((1, H, W, 3), lambda n: (n, 0, 0, 0)),
        compiler_params=pltpu.CompilerParams(
            dimension_semantics=("parallel",)),               # batch across TCs
    )(x_nhwc, *flat_params)


# ----------------------------------------------------------------------------
# Public forward (NCHW in / NCHW out, like the PyTorch module)
# ----------------------------------------------------------------------------
@jax.jit
def autoencoder_forward(x_nchw, params):
    x = jnp.transpose(x_nchw, (0, 2, 3, 1))                   # NCHW -> NHWC
    flat = []
    for w, b in params:                                       # w: (3,3,Cin,Cout) HWIO
        cin, cout = w.shape[2], w.shape[3]
        flat.append(w.reshape(9 * cin, cout).astype(jnp.float32))
        flat.append(b.reshape(1, cout).astype(jnp.float32))
    y = _autoencoder_pallas(x, flat)
    return jnp.transpose(y, (0, 3, 1, 2))                     # NHWC -> NCHW


# ----------------------------------------------------------------------------
# Deterministic param init (PyTorch Conv2d default: U(-1/sqrt(fan_in), +))
# ----------------------------------------------------------------------------
def _init_conv(key, cin, cout):
    kw, kb = jax.random.split(key)
    bound = 1.0 / ((cin * 9) ** 0.5)
    w = jax.random.uniform(kw, (3, 3, cin, cout), jnp.float32, -bound, bound)
    b = jax.random.uniform(kb, (cout,), jnp.float32, -bound, bound)
    return w, b


def init_params(key):
    # encoder: 3->32, 32->32, 32->16 ; decoder: 16->16, 16->32, 32->32, 32->3
    dims = [(3, 32), (32, 32), (32, 16), (16, 16), (16, 32), (32, 32), (32, 3)]
    keys = jax.random.split(key, len(dims))
    return [_init_conv(k, ci, co) for k, (ci, co) in zip(keys, dims)]


# ----------------------------------------------------------------------------
# Pure-JAX reference (numerical validation of the fused kernel)
# ----------------------------------------------------------------------------
@jax.jit
def _reference_forward(x_nchw, params):
    x = jnp.transpose(x_nchw, (0, 2, 3, 1))

    def conv(x, w, b):
        y = jax.lax.conv_general_dilated(
            x, w, window_strides=(1, 1), padding="SAME",
            dimension_numbers=("NHWC", "HWIO", "NHWC"))
        return jnp.maximum(y + b, 0.0)

    def pool(x):
        return jax.lax.reduce_window(x, -jnp.inf, jax.lax.max,
                                     (1, 2, 2, 1), (1, 2, 2, 1), "VALID")

    def up(x):
        return jnp.repeat(jnp.repeat(x, 2, axis=1), 2, axis=2)

    (w1, b1), (w2, b2), (w3, b3), (w4, b4), (w5, b5), (w6, b6), (w7, b7) = params
    x = pool(conv(x, w1, b1))
    x = pool(conv(x, w2, b2))
    x = pool(conv(x, w3, b3))
    x = conv(up(x), w4, b4)
    x = conv(up(x), w5, b5)
    x = conv(up(x), w6, b6)
    x = conv(x, w7, b7)
    return jnp.transpose(x, (0, 3, 1, 2))


if __name__ == "__main__":
    key = jax.random.PRNGKey(0)
    k_x, k_p = jax.random.split(key)
    x = jax.random.normal(k_x, (2, 3, 16, 16), dtype=jnp.float32)   # NCHW like PyTorch
    params = init_params(k_p)

    y = autoencoder_forward(x, params)
    jax.block_until_ready(y)

    assert y.shape == (2, 3, 16, 16), y.shape
    assert bool(jnp.all(jnp.isfinite(y)))
    assert bool(jnp.all(y >= 0.0))                  # final ReLU

    y_ref = _reference_forward(x, params)
    assert bool(jnp.allclose(y, y_ref, atol=5e-2, rtol=5e-2)), \
        float(jnp.max(jnp.abs(y - y_ref)))

    print("KERNEL_OK")
</pallas_src>

<mosaic_0001>
module attributes {stable_mosaic.version = 11 : i64} {
  func.func @_autoencoder_kernel(%arg0: i32, %arg1: memref<1x16x16x3xf32, #tpu.memory_space<vmem>>, %arg2: memref<27x32xf32, #tpu.memory_space<vmem>>, %arg3: memref<1x32xf32, #tpu.memory_space<vmem>>, %arg4: memref<288x32xf32, #tpu.memory_space<vmem>>, %arg5: memref<1x32xf32, #tpu.memory_space<vmem>>, %arg6: memref<288x16xf32, #tpu.memory_space<vmem>>, %arg7: memref<1x16xf32, #tpu.memory_space<vmem>>, %arg8: memref<144x16xf32, #tpu.memory_space<vmem>>, %arg9: memref<1x16xf32, #tpu.memory_space<vmem>>, %arg10: memref<144x32xf32, #tpu.memory_space<vmem>>, %arg11: memref<1x32xf32, #tpu.memory_space<vmem>>, %arg12: memref<288x32xf32, #tpu.memory_space<vmem>>, %arg13: memref<1x32xf32, #tpu.memory_space<vmem>>, %arg14: memref<288x3xf32, #tpu.memory_space<vmem>>, %arg15: memref<1x3xf32, #tpu.memory_space<vmem>>, %arg16: memref<1x16x16x3xf32, #tpu.memory_space<vmem>>) attributes {dimension_semantics = [#tpu.dimension_semantics<parallel>], iteration_bounds = array<i64: 2>, scalar_prefetch = 0 : i64, scratch_operands = 0 : i64, tpu.core_type = #tpu.core_type<tc>, window_params = [{transform_indices = @transform_0, window_bounds = array<i64: 1, 16, 16, 3>}, {pipeline_mode = #tpu.pipeline_mode<synchronous>, transform_indices = @transform_1, window_bounds = array<i64: 27, 32>}, {pipeline_mode = #tpu.pipeline_mode<synchronous>, transform_indices = @transform_2, window_bounds = array<i64: 1, 32>}, {pipeline_mode = #tpu.pipeline_mode<synchronous>, transform_indices = @transform_3, window_bounds = array<i64: 288, 32>}, {pipeline_mode = #tpu.pipeline_mode<synchronous>, transform_indices = @transform_4, window_bounds = array<i64: 1, 32>}, {pipeline_mode = #tpu.pipeline_mode<synchronous>, transform_indices = @transform_5, window_bounds = array<i64: 288, 16>}, {pipeline_mode = #tpu.pipeline_mode<synchronous>, transform_indices = @transform_6, window_bounds = array<i64: 1, 16>}, {pipeline_mode = #tpu.pipeline_mode<synchronous>, transform_indices = @transform_7, window_bounds = array<i64: 144, 16>}, {pipeline_mode = #tpu.pipeline_mode<synchronous>, transform_indices = @transform_8, window_bounds = array<i64: 1, 16>}, {pipeline_mode = #tpu.pipeline_mode<synchronous>, transform_indices = @transform_9, window_bounds = array<i64: 144, 32>}, {pipeline_mode = #tpu.pipeline_mode<synchronous>, transform_indices = @transform_10, window_bounds = array<i64: 1, 32>}, {pipeline_mode = #tpu.pipeline_mode<synchronous>, transform_indices = @transform_11, window_bounds = array<i64: 288, 32>}, {pipeline_mode = #tpu.pipeline_mode<synchronous>, transform_indices = @transform_12, window_bounds = array<i64: 1, 32>}, {pipeline_mode = #tpu.pipeline_mode<synchronous>, transform_indices = @transform_13, window_bounds = array<i64: 288, 3>}, {pipeline_mode = #tpu.pipeline_mode<synchronous>, transform_indices = @transform_14, window_bounds = array<i64: 1, 3>}, {transform_indices = @transform_15, window_bounds = array<i64: 1, 16, 16, 3>}]} {
    %c0 = arith.constant 0 : index
    %c0_0 = arith.constant 0 : index
    %c0_1 = arith.constant 0 : index
    %c0_2 = arith.constant 0 : index
    %0 = vector.load %arg1[%c0, %c0_0, %c0_1, %c0_2] : memref<1x16x16x3xf32, #tpu.memory_space<vmem>>, vector<1x16x16x3xf32>
    %1 = vector.shape_cast %0 : vector<1x16x16x3xf32> to vector<16x16x3xf32>
    %cst = arith.constant 0.000000e+00 : f32
    %2 = vector.broadcast %cst : f32 to vector<1x16x3xf32>
    %3 = tpu.concatenate %2, %1, %2 in 0 : vector<1x16x3xf32>, vector<16x16x3xf32>, vector<1x16x3xf32> -> vector<18x16x3xf32>
    %cst_3 = arith.constant 0.000000e+00 : f32
    %4 = vector.broadcast %cst_3 : f32 to vector<18x1x3xf32>
    %5 = tpu.concatenate %4, %3, %4 in 1 : vector<18x1x3xf32>, vector<18x16x3xf32>, vector<18x1x3xf32> -> vector<18x18x3xf32>
    %6 = vector.extract_strided_slice %5 {offsets = [0, 0, 0], sizes = [16, 16, 3], strides = [1, 1, 1]} : vector<18x18x3xf32> to vector<16x16x3xf32>
    %7 = vector.extract_strided_slice %5 {offsets = [0, 1, 0], sizes = [16, 16, 3], strides = [1, 1, 1]} : vector<18x18x3xf32> to vector<16x16x3xf32>
    %8 = vector.extract_strided_slice %5 {offsets = [0, 2, 0], sizes = [16, 16, 3], strides = [1, 1, 1]} : vector<18x18x3xf32> to vector<16x16x3xf32>
    %9 = vector.extract_strided_slice %5 {offsets = [1, 0, 0], sizes = [16, 16, 3], strides = [1, 1, 1]} : vector<18x18x3xf32> to vector<16x16x3xf32>
    %10 = vector.extract_strided_slice %5 {offsets = [1, 1, 0], sizes = [16, 16, 3], strides = [1, 1, 1]} : vector<18x18x3xf32> to vector<16x16x3xf32>
    %11 = vector.extract_strided_slice %5 {offsets = [1, 2, 0], sizes = [16, 16, 3], strides = [1, 1, 1]} : vector<18x18x3xf32> to vector<16x16x3xf32>
    %12 = vector.extract_strided_slice %5 {offsets = [2, 0, 0], sizes = [16, 16, 3], strides = [1, 1, 1]} : vector<18x18x3xf32> to vector<16x16x3xf32>
    %13 = vector.extract_strided_slice %5 {offsets = [2, 1, 0], sizes = [16, 16, 3], strides = [1, 1, 1]} : vector<18x18x3xf32> to vector<16x16x3xf32>
    %14 = vector.extract_strided_slice %5 {offsets = [2, 2, 0], sizes = [16, 16, 3], strides = [1, 1, 1]} : vector<18x18x3xf32> to vector<16x16x3xf32>
    %15 = tpu.concatenate %6, %7, %8, %9, %10, %11, %12, %13, %14 in 2 : vector<16x16x3xf32>, vector<16x16x3xf32>, vector<16x16x3xf32>, vector<16x16x3xf32>, vector<16x16x3xf32>, vector<16x16x3xf32>, vector<16x16x3xf32>, vector<16x16x3xf32>, vector<16x16x3xf32> -> vector<16x16x27xf32>
    %16 = vector.shape_cast %15 : vector<16x16x27xf32> to vector<256x27xf32>
    %c0_4 = arith.constant 0 : index
    %c0_5 = arith.constant 0 : index
    %17 = vector.load %arg2[%c0_4, %c0_5] : memref<27x32xf32, #tpu.memory_space<vmem>>, vector<27x32xf32>
    %cst_6 = arith.constant dense<0.000000e+00> : vector<256x32xf32>
    %18 = tpu.matmul %16, %17, %cst_6 {dimension_numbers = #tpu.dot_dimension_numbers<[1], [0], [0], [1], [0, 0, 1, 1], [], []>} : vector<256x27xf32>, vector<27x32xf32>, vector<256x32xf32> -> vector<256x32xf32>
    %c0_7 = arith.constant 0 : index
    %c0_8 = arith.constant 0 : index
    %19 = vector.load %arg3[%c0_7, %c0_8] : memref<1x32xf32, #tpu.memory_space<vmem>>, vector<1x32xf32>
    %20 = vector.broadcast %19 : vector<1x32xf32> to vector<256x32xf32>
    %21 = arith.addf %18, %20 : vector<256x32xf32>
    %cst_9 = arith.constant 0.000000e+00 : f32
    %22 = vector.broadcast %cst_9 : f32 to vector<256x32xf32>
    %23 = arith.maximumf %21, %22 : vector<256x32xf32>
    %24 = vector.shape_cast %23 : vector<256x32xf32> to vector<16x16x32xf32>
    %25 = vector.shape_cast %24 : vector<16x16x32xf32> to vector<8x2x16x32xf32>
    %26 = vector.extract_strided_slice %25 {offsets = [0, 0, 0, 0], sizes = [8, 1, 16, 32], strides = [1, 1, 1, 1]} : vector<8x2x16x32xf32> to vector<8x1x16x32xf32>
    %27 = vector.shape_cast %26 : vector<8x1x16x32xf32> to vector<8x16x32xf32>
    %28 = vector.extract_strided_slice %25 {offsets = [0, 1, 0, 0], sizes = [8, 1, 16, 32], strides = [1, 1, 1, 1]} : vector<8x2x16x32xf32> to vector<8x1x16x32xf32>
    %29 = vector.shape_cast %28 : vector<8x1x16x32xf32> to vector<8x16x32xf32>
    %30 = arith.maximumf %27, %29 : vector<8x16x32xf32>
    %31 = vector.extract_strided_slice %30 {offsets = [0, 0, 0], sizes = [8, 1, 32], strides = [1, 1, 1]} : vector<8x16x32xf32> to vector<8x1x32xf32>
    %32 = vector.extract_strided_slice %30 {offsets = [0, 1, 0], sizes = [8, 1, 32], strides = [1, 1, 1]} : vector<8x16x32xf32> to vector<8x1x32xf32>
    %33 = arith.maximumf %31, %32 : vector<8x1x32xf32>
    %34 = vector.extract_strided_slice %30 {offsets = [0, 2, 0], sizes = [8, 1, 32], strides = [1, 1, 1]} : vector<8x16x32xf32> to vector<8x1x32xf32>
    %35 = vector.extract_strided_slice %30 {offsets = [0, 3, 0], sizes = [8, 1, 32], strides = [1, 1, 1]} : vector<8x16x32xf32> to vector<8x1x32xf32>
    %36 = arith.maximumf %34, %35 : vector<8x1x32xf32>
    %37 = vector.extract_strided_slice %30 {offsets = [0, 4, 0], sizes = [8, 1, 32], strides = [1, 1, 1]} : vector<8x16x32xf32> to vector<8x1x32xf32>
    %38 = vector.extract_strided_slice %30 {offsets = [0, 5, 0], sizes = [8, 1, 32], strides = [1, 1, 1]} : vector<8x16x32xf32> to vector<8x1x32xf32>
    %39 = arith.maximumf %37, %38 : vector<8x1x32xf32>
    %40 = vector.extract_strided_slice %30 {offsets = [0, 6, 0], sizes = [8, 1, 32], strides = [1, 1, 1]} : vector<8x16x32xf32> to vector<8x1x32xf32>
    %41 = vector.extract_strided_slice %30 {offsets = [0, 7, 0], sizes = [8, 1, 32], strides = [1, 1, 1]} : vector<8x16x32xf32> to vector<8x1x32xf32>
    %42 = arith.maximumf %40, %41 : vector<8x1x32xf32>
    %43 = vector.extract_strided_slice %30 {offsets = [0, 8, 0], sizes = [8, 1, 32], strides = [1, 1, 1]} : vector<8x16x32xf32> to vector<8x1x32xf32>
    %44 = vector.extract_strided_slice %30 {offsets = [0, 9, 0], sizes = [8, 1, 32], strides = [1, 1, 1]} : vector<8x16x32xf32> to vector<8x1x32xf32>
    %45 = arith.maximumf %43, %44 : vector<8x1x32xf32>
    %46 = vector.extract_strided_slice %30 {offsets = [0, 10, 0], sizes = [8, 1, 32], strides = [1, 1, 1]} : vector<8x16x32xf32> to vector<8x1x32xf32>
    %47 = vector.extract_strided_slice %30 {offsets = [0, 11, 0], sizes = [8, 1, 32], strides = [1, 1, 1]} : vector<8x16x32xf32> to vector<8x1x32xf32>
    %48 = arith.maximumf %46, %47 : vector<8x1x32xf32>
    %49 = vector.extract_strided_slice %30 {offsets = [0, 12, 0], sizes = [8, 1, 32], strides = [1, 1, 1]} : vector<8x16x32xf32> to vector<8x1x32xf32>
    %50 = vector.extract_strided_slice %30 {offsets = [0, 13, 0], sizes = [8, 1, 32], strides = [1, 1, 1]} : vector<8x16x32xf32> to vector<8x1x32xf32>
    %51 = arith.maximumf %49, %50 : vector<8x1x32xf32>
    %52 = vector.extract_strided_slice %30 {offsets = [0, 14, 0], sizes = [8, 1, 32], strides = [1, 1, 1]} : vector<8x16x32xf32> to vector<8x1x32xf32>
    %53 = vector.extract_strided_slice %30 {offsets = [0, 15, 0], sizes = [8, 1, 32], strides = [1, 1, 1]} : vector<8x16x32xf32> to vector<8x1x32xf32>
    %54 = arith.maximumf %52, %53 : vector<8x1x32xf32>
    %55 = tpu.concatenate %33, %36, %39, %42, %45, %48, %51, %54 in 1 : vector<8x1x32xf32>, vector<8x1x32xf32>, vector<8x1x32xf32>, vector<8x1x32xf32>, vector<8x1x32xf32>, vector<8x1x32xf32>, vector<8x1x32xf32>, vector<8x1x32xf32> -> vector<8x8x32xf32>
    %cst_10 = arith.constant 0.000000e+00 : f32
    %56 = vector.broadcast %cst_10 : f32 to vector<1x8x32xf32>
    %57 = tpu.concatenate %56, %55, %56 in 0 : vector<1x8x32xf32>, vector<8x8x32xf32>, vector<1x8x32xf32> -> vector<10x8x32xf32>
    %cst_11 = arith.constant 0.000000e+00 : f32
    %58 = vector.broadcast %cst_11 : f32 to vector<10x1x32xf32>
    %59 = tpu.concatenate %58, %57, %58 in 1 : vector<10x1x32xf32>, vector<10x8x32xf32>, vector<10x1x32xf32> -> vector<10x10x32xf32>
    %60 = vector.extract_strided_slice %59 {offsets = [0, 0, 0], sizes = [8, 8, 32], strides = [1, 1, 1]} : vector<10x10x32xf32> to vector<8x8x32xf32>
    %61 = vector.extract_strided_slice %59 {offsets = [0, 1, 0], sizes = [8, 8, 32], strides = [1, 1, 1]} : vector<10x10x32xf32> to vector<8x8x32xf32>
    %62 = vector.extract_strided_slice %59 {offsets = [0, 2, 0], sizes = [8, 8, 32], strides = [1, 1, 1]} : vector<10x10x32xf32> to vector<8x8x32xf32>
    %63 = vector.extract_strided_slice %59 {offsets = [1, 0, 0], sizes = [8, 8, 32], strides = [1, 1, 1]} : vector<10x10x32xf32> to vector<8x8x32xf32>
    %64 = vector.extract_strided_slice %59 {offsets = [1, 1, 0], sizes = [8, 8, 32], strides = [1, 1, 1]} : vector<10x10x32xf32> to vector<8x8x32xf32>
    %65 = vector.extract_strided_slice %59 {offsets = [1, 2, 0], sizes = [8, 8, 32], strides = [1, 1, 1]} : vector<10x10x32xf32> to vector<8x8x32xf32>
    %66 = vector.extract_strided_slice %59 {offsets = [2, 0, 0], sizes = [8, 8, 32], strides = [1, 1, 1]} : vector<10x10x32xf32> to vector<8x8x32xf32>
    %67 = vector.extract_strided_slice %59 {offsets = [2, 1, 0], sizes = [8, 8, 32], strides = [1, 1, 1]} : vector<10x10x32xf32> to vector<8x8x32xf32>
    %68 = vector.extract_strided_slice %59 {offsets = [2, 2, 0], sizes = [8, 8, 32], strides = [1, 1, 1]} : vector<10x10x32xf32> to vector<8x8x32xf32>
    %69 = tpu.concatenate %60, %61, %62, %63, %64, %65, %66, %67, %68 in 2 : vector<8x8x32xf32>, vector<8x8x32xf32>, vector<8x8x32xf32>, vector<8x8x32xf32>, vector<8x8x32xf32>, vector<8x8x32xf32>, vector<8x8x32xf32>, vector<8x8x32xf32>, vector<8x8x32xf32> -> vector<8x8x288xf32>
    %70 = vector.shape_cast %69 : vector<8x8x288xf32> to vector<64x288xf32>
    %c0_12 = arith.constant 0 : index
    %c0_13 = arith.constant 0 : index
    %71 = vector.load %arg4[%c0_12, %c0_13] : memref<288x32xf32, #tpu.memory_space<vmem>>, vector<288x32xf32>
    %cst_14 = arith.constant dense<0.000000e+00> : vector<64x32xf32>
    %72 = tpu.matmul %70, %71, %cst_14 {dimension_numbers = #tpu.dot_dimension_numbers<[1], [0], [0], [1], [0, 0, 1, 1], [], []>} : vector<64x288xf32>, vector<288x32xf32>, vector<64x32xf32> -> vector<64x32xf32>
    %c0_15 = arith.constant 0 : index
    %c0_16 = arith.constant 0 : index
    %73 = vector.load %arg5[%c0_15, %c0_16] : memref<1x32xf32, #tpu.memory_space<vmem>>, vector<1x32xf32>
    %74 = vector.broadcast %73 : vector<1x32xf32> to vector<64x32xf32>
    %75 = arith.addf %72, %74 : vector<64x32xf32>
    %cst_17 = arith.constant 0.000000e+00 : f32
    %76 = vector.broadcast %cst_17 : f32 to vector<64x32xf32>
    %77 = arith.maximumf %75, %76 : vector<64x32xf32>
    %78 = vector.shape_cast %77 : vector<64x32xf32> to vector<8x8x32xf32>
    %79 = vector.shape_cast %78 : vector<8x8x32xf32> to vector<4x2x8x32xf32>
    %80 = vector.extract_strided_slice %79 {offsets = [0, 0, 0, 0], sizes = [4, 1, 8, 32], strides = [1, 1, 1, 1]} : vector<4x2x8x32xf32> to vector<4x1x8x32xf32>
    %81 = vector.shape_cast %80 : vector<4x1x8x32xf32> to vector<4x8x32xf32>
    %82 = vector.extract_strided_slice %79 {offsets = [0, 1, 0, 0], sizes = [4, 1, 8, 32], strides = [1, 1, 1, 1]} : vector<4x2x8x32xf32> to vector<4x1x8x32xf32>
    %83 = vector.shape_cast %82 : vector<4x1x8x32xf32> to vector<4x8x32xf32>
    %84 = arith.maximumf %81, %83 : vector<4x8x32xf32>
    %85 = vector.extract_strided_slice %84 {offsets = [0, 0, 0], sizes = [4, 1, 32], strides = [1, 1, 1]} : vector<4x8x32xf32> to vector<4x1x32xf32>
    %86 = vector.extract_strided_slice %84 {offsets = [0, 1, 0], sizes = [4, 1, 32], strides = [1, 1, 1]} : vector<4x8x32xf32> to vector<4x1x32xf32>
    %87 = arith.maximumf %85, %86 : vector<4x1x32xf32>
    %88 = vector.extract_strided_slice %84 {offsets = [0, 2, 0], sizes = [4, 1, 32], strides = [1, 1, 1]} : vector<4x8x32xf32> to vector<4x1x32xf32>
    %89 = vector.extract_strided_slice %84 {offsets = [0, 3, 0], sizes = [4, 1, 32], strides = [1, 1, 1]} : vector<4x8x32xf32> to vector<4x1x32xf32>
    %90 = arith.maximumf %88, %89 : vector<4x1x32xf32>
    %91 = vector.extract_strided_slice %84 {offsets = [0, 4, 0], sizes = [4, 1, 32], strides = [1, 1, 1]} : vector<4x8x32xf32> to vector<4x1x32xf32>
    %92 = vector.extract_strided_slice %84 {offsets = [0, 5, 0], sizes = [4, 1, 32], strides = [1, 1, 1]} : vector<4x8x32xf32> to vector<4x1x32xf32>
    %93 = arith.maximumf %91, %92 : vector<4x1x32xf32>
    %94 = vector.extract_strided_slice %84 {offsets = [0, 6, 0], sizes = [4, 1, 32], strides = [1, 1, 1]} : vector<4x8x32xf32> to vector<4x1x32xf32>
    %95 = vector.extract_strided_slice %84 {offsets = [0, 7, 0], sizes = [4, 1, 32], strides = [1, 1, 1]} : vector<4x8x32xf32> to vector<4x1x32xf32>
    %96 = arith.maximumf %94, %95 : vector<4x1x32xf32>
    %97 = tpu.concatenate %87, %90, %93, %96 in 1 : vector<4x1x32xf32>, vector<4x1x32xf32>, vector<4x1x32xf32>, vector<4x1x32xf32> -> vector<4x4x32xf32>
    %cst_18 = arith.constant 0.000000e+00 : f32
    %98 = vector.broadcast %cst_18 : f32 to vector<1x4x32xf32>
    %99 = tpu.concatenate %98, %97, %98 in 0 : vector<1x4x32xf32>, vector<4x4x32xf32>, vector<1x4x32xf32> -> vector<6x4x32xf32>
    %cst_19 = arith.constant 0.000000e+00 : f32
    %100 = vector.broadcast %cst_19 : f32 to vector<6x1x32xf32>
    %101 = tpu.concatenate %100, %99, %100 in 1 : vector<6x1x32xf32>, vector<6x4x32xf32>, vector<6x1x32xf32> -> vector<6x6x32xf32>
    %102 = vector.extract_strided_slice %101 {offsets = [0, 0, 0], sizes = [4, 4, 32], strides = [1, 1, 1]} : vector<6x6x32xf32> to vector<4x4x32xf32>
    %103 = vector.extract_strided_slice %101 {offsets = [0, 1, 0], sizes = [4, 4, 32], strides = [1, 1, 1]} : vector<6x6x32xf32> to vector<4x4x32xf32>
    %104 = vector.extract_strided_slice %101 {offsets = [0, 2, 0], sizes = [4, 4, 32], strides = [1, 1, 1]} : vector<6x6x32xf32> to vector<4x4x32xf32>
    %105 = vector.extract_strided_slice %101 {offsets = [1, 0, 0], sizes = [4, 4, 32], strides = [1, 1, 1]} : vector<6x6x32xf32> to vector<4x4x32xf32>
    %106 = vector.extract_strided_slice %101 {offsets = [1, 1, 0], sizes = [4, 4, 32], strides = [1, 1, 1]} : vector<6x6x32xf32> to vector<4x4x32xf32>
    %107 = vector.extract_strided_slice %101 {offsets = [1, 2, 0], sizes = [4, 4, 32], strides = [1, 1, 1]} : vector<6x6x32xf32> to vector<4x4x32xf32>
    %108 = vector.extract_strided_slice %101 {offsets = [2, 0, 0], sizes = [4, 4, 32], strides = [1, 1, 1]} : vector<6x6x32xf32> to vector<4x4x32xf32>
    %109 = vector.extract_strided_slice %101 {offsets = [2, 1, 0], sizes = [4, 4, 32], strides = [1, 1, 1]} : vector<6x6x32xf32> to vector<4x4x32xf32>
    %110 = vector.extract_strided_slice %101 {offsets = [2, 2, 0], sizes = [4, 4, 32], strides = [1, 1, 1]} : vector<6x6x32xf32> to vector<4x4x32xf32>
    %111 = tpu.concatenate %102, %103, %104, %105, %106, %107, %108, %109, %110 in 2 : vector<4x4x32xf32>, vector<4x4x32xf32>, vector<4x4x32xf32>, vector<4x4x32xf32>, vector<4x4x32xf32>, vector<4x4x32xf32>, vector<4x4x32xf32>, vector<4x4x32xf32>, vector<4x4x32xf32> -> vector<4x4x288xf32>
    %112 = vector.shape_cast %111 : vector<4x4x288xf32> to vector<16x288xf32>
    %c0_20 = arith.constant 0 : index
    %c0_21 = arith.constant 0 : index
    %113 = vector.load %arg6[%c0_20, %c0_21] : memref<288x16xf32, #tpu.memory_space<vmem>>, vector<288x16xf32>
    %cst_22 = arith.constant dense<0.000000e+00> : vector<16x16xf32>
    %114 = tpu.matmul %112, %113, %cst_22 {dimension_numbers = #tpu.dot_dimension_numbers<[1], [0], [0], [1], [0, 0, 1, 1], [], []>} : vector<16x288xf32>, vector<288x16xf32>, vector<16x16xf32> -> vector<16x16xf32>
    %c0_23 = arith.constant 0 : index
    %c0_24 = arith.constant 0 : index
    %115 = vector.load %arg7[%c0_23, %c0_24] : memref<1x16xf32, #tpu.memory_space<vmem>>, vector<1x16xf32>
    %116 = vector.broadcast %115 : vector<1x16xf32> to vector<16x16xf32>
    %117 = arith.addf %114, %116 : vector<16x16xf32>
    %cst_25 = arith.constant 0.000000e+00 : f32
    %118 = vector.broadcast %cst_25 : f32 to vector<16x16xf32>
    %119 = arith.maximumf %117, %118 : vector<16x16xf32>
    %120 = vector.shape_cast %119 : vector<16x16xf32> to vector<4x4x16xf32>
    %121 = vector.shape_cast %120 : vector<4x4x16xf32> to vector<2x2x4x16xf32>
    %122 = vector.extract_strided_slice %121 {offsets = [0, 0, 0, 0], sizes = [2, 1, 4, 16], strides = [1, 1, 1, 1]} : vector<2x2x4x16xf32> to vector<2x1x4x16xf32>
    %123 = vector.shape_cast %122 : vector<2x1x4x16xf32> to vector<2x4x16xf32>
    %124 = vector.extract_strided_slice %121 {offsets = [0, 1, 0, 0], sizes = [2, 1, 4, 16], strides = [1, 1, 1, 1]} : vector<2x2x4x16xf32> to vector<2x1x4x16xf32>
    %125 = vector.shape_cast %124 : vector<2x1x4x16xf32> to vector<2x4x16xf32>
    %126 = arith.maximumf %123, %125 : vector<2x4x16xf32>
    %127 = vector.extract_strided_slice %126 {offsets = [0, 0, 0], sizes = [2, 1, 16], strides = [1, 1, 1]} : vector<2x4x16xf32> to vector<2x1x16xf32>
    %128 = vector.extract_strided_slice %126 {offsets = [0, 1, 0], sizes = [2, 1, 16], strides = [1, 1, 1]} : vector<2x4x16xf32> to vector<2x1x16xf32>
    %129 = arith.maximumf %127, %128 : vector<2x1x16xf32>
    %130 = vector.extract_strided_slice %126 {offsets = [0, 2, 0], sizes = [2, 1, 16], strides = [1, 1, 1]} : vector<2x4x16xf32> to vector<2x1x16xf32>
    %131 = vector.extract_strided_slice %126 {offsets = [0, 3, 0], sizes = [2, 1, 16], strides = [1, 1, 1]} : vector<2x4x16xf32> to vector<2x1x16xf32>
    %132 = arith.maximumf %130, %131 : vector<2x1x16xf32>
    %133 = tpu.concatenate %129, %132 in 1 : vector<2x1x16xf32>, vector<2x1x16xf32> -> vector<2x2x16xf32>
    %134 = vector.extract_strided_slice %133 {offsets = [0, 0, 0], sizes = [2, 1, 16], strides = [1, 1, 1]} : vector<2x2x16xf32> to vector<2x1x16xf32>
    %135 = vector.extract_strided_slice %133 {offsets = [0, 1, 0], sizes = [2, 1, 16], strides = [1, 1, 1]} : vector<2x2x16xf32> to vector<2x1x16xf32>
    %136 = tpu.concatenate %134, %134, %135, %135 in 1 : vector<2x1x16xf32>, vector<2x1x16xf32>, vector<2x1x16xf32>, vector<2x1x16xf32> -> vector<2x4x16xf32>
    %137 = vector.shape_cast %136 : vector<2x4x16xf32> to vector<2x1x4x16xf32>
    %138 = tpu.concatenate %137, %137 in 1 : vector<2x1x4x16xf32>, vector<2x1x4x16xf32> -> vector<2x2x4x16xf32>
    %139 = vector.shape_cast %138 : vector<2x2x4x16xf32> to vector<4x4x16xf32>
    %cst_26 = arith.constant 0.000000e+00 : f32
    %140 = vector.broadcast %cst_26 : f32 to vector<1x4x16xf32>
    %141 = tpu.concatenate %140, %139, %140 in 0 : vector<1x4x16xf32>, vector<4x4x16xf32>, vector<1x4x16xf32> -> vector<6x4x16xf32>
    %cst_27 = arith.constant 0.000000e+00 : f32
    %142 = vector.broadcast %cst_27 : f32 to vector<6x1x16xf32>
    %143 = tpu.concatenate %142, %141, %142 in 1 : vector<6x1x16xf32>, vector<6x4x16xf32>, vector<6x1x16xf32> -> vector<6x6x16xf32>
    %144 = vector.extract_strided_slice %143 {offsets = [0, 0, 0], sizes = [4, 4, 16], strides = [1, 1, 1]} : vector<6x6x16xf32> to vector<4x4x16xf32>
    %145 = vector.extract_strided_slice %143 {offsets = [0, 1, 0], sizes = [4, 4, 16], strides = [1, 1, 1]} : vector<6x6x16xf32> to vector<4x4x16xf32>
    %146 = vector.extract_strided_slice %143 {offsets = [0, 2, 0], sizes = [4, 4, 16], strides = [1, 1, 1]} : vector<6x6x16xf32> to vector<4x4x16xf32>
    %147 = vector.extract_strided_slice %143 {offsets = [1, 0, 0], sizes = [4, 4, 16], strides = [1, 1, 1]} : vector<6x6x16xf32> to vector<4x4x16xf32>
    %148 = vector.extract_strided_slice %143 {offsets = [1, 1, 0], sizes = [4, 4, 16], strides = [1, 1, 1]} : vector<6x6x16xf32> to vector<4x4x16xf32>
    %149 = vector.extract_strided_slice %143 {offsets = [1, 2, 0], sizes = [4, 4, 16], strides = [1, 1, 1]} : vector<6x6x16xf32> to vector<4x4x16xf32>
    %150 = vector.extract_strided_slice %143 {offsets = [2, 0, 0], sizes = [4, 4, 16], strides = [1, 1, 1]} : vector<6x6x16xf32> to vector<4x4x16xf32>
    %151 = vector.extract_strided_slice %143 {offsets = [2, 1, 0], sizes = [4, 4, 16], strides = [1, 1, 1]} : vector<6x6x16xf32> to vector<4x4x16xf32>
    %152 = vector.extract_strided_slice %143 {offsets = [2, 2, 0], sizes = [4, 4, 16], strides = [1, 1, 1]} : vector<6x6x16xf32> to vector<4x4x16xf32>
    %153 = tpu.concatenate %144, %145, %146, %147, %148, %149, %150, %151, %152 in 2 : vector<4x4x16xf32>, vector<4x4x16xf32>, vector<4x4x16xf32>, vector<4x4x16xf32>, vector<4x4x16xf32>, vector<4x4x16xf32>, vector<4x4x16xf32>, vector<4x4x16xf32>, vector<4x4x16xf32> -> vector<4x4x144xf32>
    %154 = vector.shape_cast %153 : vector<4x4x144xf32> to vector<16x144xf32>
    %c0_28 = arith.constant 0 : index
    %c0_29 = arith.constant 0 : index
    %155 = vector.load %arg8[%c0_28, %c0_29] : memref<144x16xf32, #tpu.memory_space<vmem>>, vector<144x16xf32>
    %cst_30 = arith.constant dense<0.000000e+00> : vector<16x16xf32>
    %156 = tpu.matmul %154, %155, %cst_30 {dimension_numbers = #tpu.dot_dimension_numbers<[1], [0], [0], [1], [0, 0, 1, 1], [], []>} : vector<16x144xf32>, vector<144x16xf32>, vector<16x16xf32> -> vector<16x16xf32>
    %c0_31 = arith.constant 0 : index
    %c0_32 = arith.constant 0 : index
    %157 = vector.load %arg9[%c0_31, %c0_32] : memref<1x16xf32, #tpu.memory_space<vmem>>, vector<1x16xf32>
    %158 = vector.broadcast %157 : vector<1x16xf32> to vector<16x16xf32>
    %159 = arith.addf %156, %158 : vector<16x16xf32>
    %cst_33 = arith.constant 0.000000e+00 : f32
    %160 = vector.broadcast %cst_33 : f32 to vector<16x16xf32>
    %161 = arith.maximumf %159, %160 : vector<16x16xf32>
    %162 = vector.shape_cast %161 : vector<16x16xf32> to vector<4x4x16xf32>
    %163 = vector.extract_strided_slice %162 {offsets = [0, 0, 0], sizes = [4, 1, 16], strides = [1, 1, 1]} : vector<4x4x16xf32> to vector<4x1x16xf32>
    %164 = vector.extract_strided_slice %162 {offsets = [0, 1, 0], sizes = [4, 1, 16], strides = [1, 1, 1]} : vector<4x4x16xf32> to vector<4x1x16xf32>
    %165 = vector.extract_strided_slice %162 {offsets = [0, 2, 0], sizes = [4, 1, 16], strides = [1, 1, 1]} : vector<4x4x16xf32> to vector<4x1x16xf32>
    %166 = vector.extract_strided_slice %162 {offsets = [0, 3, 0], sizes = [4, 1, 16], strides = [1, 1, 1]} : vector<4x4x16xf32> to vector<4x1x16xf32>
    %167 = tpu.concatenate %163, %163, %164, %164, %165, %165, %166, %166 in 1 : vector<4x1x16xf32>, vector<4x1x16xf32>, vector<4x1x16xf32>, vector<4x1x16xf32>, vector<4x1x16xf32>, vector<4x1x16xf32>, vector<4x1x16xf32>, vector<4x1x16xf32> -> vector<4x8x16xf32>
    %168 = vector.shape_cast %167 : vector<4x8x16xf32> to vector<4x1x8x16xf32>
    %169 = tpu.concatenate %168, %168 in 1 : vector<4x1x8x16xf32>, vector<4x1x8x16xf32> -> vector<4x2x8x16xf32>
    %170 = vector.shape_cast %169 : vector<4x2x8x16xf32> to vector<8x8x16xf32>
    %cst_34 = arith.constant 0.000000e+00 : f32
    %171 = vector.broadcast %cst_34 : f32 to vector<1x8x16xf32>
    %172 = tpu.concatenate %171, %170, %171 in 0 : vector<1x8x16xf32>, vector<8x8x16xf32>, vector<1x8x16xf32> -> vector<10x8x16xf32>
    %cst_35 = arith.constant 0.000000e+00 : f32
    %173 = vector.broadcast %cst_35 : f32 to vector<10x1x16xf32>
    %174 = tpu.concatenate %173, %172, %173 in 1 : vector<10x1x16xf32>, vector<10x8x16xf32>, vector<10x1x16xf32> -> vector<10x10x16xf32>
    %175 = vector.extract_strided_slice %174 {offsets = [0, 0, 0], sizes = [8, 8, 16], strides = [1, 1, 1]} : vector<10x10x16xf32> to vector<8x8x16xf32>
    %176 = vector.extract_strided_slice %174 {offsets = [0, 1, 0], sizes = [8, 8, 16], strides = [1, 1, 1]} : vector<10x10x16xf32> to vector<8x8x16xf32>
    %177 = vector.extract_strided_slice %174 {offsets = [0, 2, 0], sizes = [8, 8, 16], strides = [1, 1, 1]} : vector<10x10x16xf32> to vector<8x8x16xf32>
    %178 = vector.extract_strided_slice %174 {offsets = [1, 0, 0], sizes = [8, 8, 16], strides = [1, 1, 1]} : vector<10x10x16xf32> to vector<8x8x16xf32>
    %179 = vector.extract_strided_slice %174 {offsets = [1, 1, 0], sizes = [8, 8, 16], strides = [1, 1, 1]} : vector<10x10x16xf32> to vector<8x8x16xf32>
    %180 = vector.extract_strided_slice %174 {offsets = [1, 2, 0], sizes = [8, 8, 16], strides = [1, 1, 1]} : vector<10x10x16xf32> to vector<8x8x16xf32>
    %181 = vector.extract_strided_slice %174 {offsets = [2, 0, 0], sizes = [8, 8, 16], strides = [1, 1, 1]} : vector<10x10x16xf32> to vector<8x8x16xf32>
    %182 = vector.extract_strided_slice %174 {offsets = [2, 1, 0], sizes = [8, 8, 16], strides = [1, 1, 1]} : vector<10x10x16xf32> to vector<8x8x16xf32>
    %183 = vector.extract_strided_slice %174 {offsets = [2, 2, 0], sizes = [8, 8, 16], strides = [1, 1, 1]} : vector<10x10x16xf32> to vector<8x8x16xf32>
    %184 = tpu.concatenate %175, %176, %177, %178, %179, %180, %181, %182, %183 in 2 : vector<8x8x16xf32>, vector<8x8x16xf32>, vector<8x8x16xf32>, vector<8x8x16xf32>, vector<8x8x16xf32>, vector<8x8x16xf32>, vector<8x8x16xf32>, vector<8x8x16xf32>, vector<8x8x16xf32> -> vector<8x8x144xf32>
    %185 = vector.shape_cast %184 : vector<8x8x144xf32> to vector<64x144xf32>
    %c0_36 = arith.constant 0 : index
    %c0_37 = arith.constant 0 : index
    %186 = vector.load %arg10[%c0_36, %c0_37] : memref<144x32xf32, #tpu.memory_space<vmem>>, vector<144x32xf32>
    %cst_38 = arith.constant dense<0.000000e+00> : vector<64x32xf32>
    %187 = tpu.matmul %185, %186, %cst_38 {dimension_numbers = #tpu.dot_dimension_numbers<[1], [0], [0], [1], [0, 0, 1, 1], [], []>} : vector<64x144xf32>, vector<144x32xf32>, vector<64x32xf32> -> vector<64x32xf32>
    %c0_39 = arith.constant 0 : index
    %c0_40 = arith.constant 0 : index
    %188 = vector.load %arg11[%c0_39, %c0_40] : memref<1x32xf32, #tpu.memory_space<vmem>>, vector<1x32xf32>
    %189 = vector.broadcast %188 : vector<1x32xf32> to vector<64x32xf32>
    %190 = arith.addf %187, %189 : vector<64x32xf32>
    %cst_41 = arith.constant 0.000000e+00 : f32
    %191 = vector.broadcast %cst_41 : f32 to vector<64x32xf32>
    %192 = arith.maximumf %190, %191 : vector<64x32xf32>
    %193 = vector.shape_cast %192 : vector<64x32xf32> to vector<8x8x32xf32>
    %194 = vector.extract_strided_slice %193 {offsets = [0, 0, 0], sizes = [8, 1, 32], strides = [1, 1, 1]} : vector<8x8x32xf32> to vector<8x1x32xf32>
    %195 = vector.extract_strided_slice %193 {offsets = [0, 1, 0], sizes = [8, 1, 32], strides = [1, 1, 1]} : vector<8x8x32xf32> to vector<8x1x32xf32>
    %196 = vector.extract_strided_slice %193 {offsets = [0, 2, 0], sizes = [8, 1, 32], strides = [1, 1, 1]} : vector<8x8x32xf32> to vector<8x1x32xf32>
    %197 = vector.extract_strided_slice %193 {offsets = [0, 3, 0], sizes = [8, 1, 32], strides = [1, 1, 1]} : vector<8x8x32xf32> to vector<8x1x32xf32>
    %198 = vector.extract_strided_slice %193 {offsets = [0, 4, 0], sizes = [8, 1, 32], strides = [1, 1, 1]} : vector<8x8x32xf32> to vector<8x1x32xf32>
    %199 = vector.extract_strided_slice %193 {offsets = [0, 5, 0], sizes = [8, 1, 32], strides = [1, 1, 1]} : vector<8x8x32xf32> to vector<8x1x32xf32>
    %200 = vector.extract_strided_slice %193 {offsets = [0, 6, 0], sizes = [8, 1, 32], strides = [1, 1, 1]} : vector<8x8x32xf32> to vector<8x1x32xf32>
    %201 = vector.extract_strided_slice %193 {offsets = [0, 7, 0], sizes = [8, 1, 32], strides = [1, 1, 1]} : vector<8x8x32xf32> to vector<8x1x32xf32>
    %202 = tpu.concatenate %194, %194, %195, %195, %196, %196, %197, %197, %198, %198, %199, %199, %200, %200, %201, %201 in 1 : vector<8x1x32xf32>, vector<8x1x32xf32>, vector<8x1x32xf32>, vector<8x1x32xf32>, vector<8x1x32xf32>, vector<8x1x32xf32>, vector<8x1x32xf32>, vector<8x1x32xf32>, vector<8x1x32xf32>, vector<8x1x32xf32>, vector<8x1x32xf32>, vector<8x1x32xf32>, vector<8x1x32xf32>, vector<8x1x32xf32>, vector<8x1x32xf32>, vector<8x1x32xf32> -> vector<8x16x32xf32>
    %203 = vector.shape_cast %202 : vector<8x16x32xf32> to vector<8x1x16x32xf32>
    %204 = tpu.concatenate %203, %203 in 1 : vector<8x1x16x32xf32>, vector<8x1x16x32xf32> -> vector<8x2x16x32xf32>
    %205 = vector.shape_cast %204 : vector<8x2x16x32xf32> to vector<16x16x32xf32>
    %cst_42 = arith.constant 0.000000e+00 : f32
    %206 = vector.broadcast %cst_42 : f32 to vector<1x16x32xf32>
    %207 = tpu.concatenate %206, %205, %206 in 0 : vector<1x16x32xf32>, vector<16x16x32xf32>, vector<1x16x32xf32> -> vector<18x16x32xf32>
    %cst_43 = arith.constant 0.000000e+00 : f32
    %208 = vector.broadcast %cst_43 : f32 to vector<18x1x32xf32>
    %209 = tpu.concatenate %208, %207, %208 in 1 : vector<18x1x32xf32>, vector<18x16x32xf32>, vector<18x1x32xf32> -> vector<18x18x32xf32>
    %210 = vector.extract_strided_slice %209 {offsets = [0, 0, 0], sizes = [16, 16, 32], strides = [1, 1, 1]} : vector<18x18x32xf32> to vector<16x16x32xf32>
    %211 = vector.extract_strided_slice %209 {offsets = [0, 1, 0], sizes = [16, 16, 32], strides = [1, 1, 1]} : vector<18x18x32xf32> to vector<16x16x32xf32>
    %212 = vector.extract_strided_slice %209 {offsets = [0, 2, 0], sizes = [16, 16, 32], strides = [1, 1, 1]} : vector<18x18x32xf32> to vector<16x16x32xf32>
    %213 = vector.extract_strided_slice %209 {offsets = [1, 0, 0], sizes = [16, 16, 32], strides = [1, 1, 1]} : vector<18x18x32xf32> to vector<16x16x32xf32>
    %214 = vector.extract_strided_slice %209 {offsets = [1, 1, 0], sizes = [16, 16, 32], strides = [1, 1, 1]} : vector<18x18x32xf32> to vector<16x16x32xf32>
    %215 = vector.extract_strided_slice %209 {offsets = [1, 2, 0], sizes = [16, 16, 32], strides = [1, 1, 1]} : vector<18x18x32xf32> to vector<16x16x32xf32>
    %216 = vector.extract_strided_slice %209 {offsets = [2, 0, 0], sizes = [16, 16, 32], strides = [1, 1, 1]} : vector<18x18x32xf32> to vector<16x16x32xf32>
    %217 = vector.extract_strided_slice %209 {offsets = [2, 1, 0], sizes = [16, 16, 32], strides = [1, 1, 1]} : vector<18x18x32xf32> to vector<16x16x32xf32>
    %218 = vector.extract_strided_slice %209 {offsets = [2, 2, 0], sizes = [16, 16, 32], strides = [1, 1, 1]} : vector<18x18x32xf32> to vector<16x16x32xf32>
    %219 = tpu.concatenate %210, %211, %212, %213, %214, %215, %216, %217, %218 in 2 : vector<16x16x32xf32>, vector<16x16x32xf32>, vector<16x16x32xf32>, vector<16x16x32xf32>, vector<16x16x32xf32>, vector<16x16x32xf32>, vector<16x16x32xf32>, vector<16x16x32xf32>, vector<16x16x32xf32> -> vector<16x16x288xf32>
    %220 = vector.shape_cast %219 : vector<16x16x288xf32> to vector<256x288xf32>
    %c0_44 = arith.constant 0 : index
    %c0_45 = arith.constant 0 : index
    %221 = vector.load %arg12[%c0_44, %c0_45] : memref<288x32xf32, #tpu.memory_space<vmem>>, vector<288x32xf32>
    %cst_46 = arith.constant dense<0.000000e+00> : vector<256x32xf32>
    %222 = tpu.matmul %220, %221, %cst_46 {dimension_numbers = #tpu.dot_dimension_numbers<[1], [0], [0], [1], [0, 0, 1, 1], [], []>} : vector<256x288xf32>, vector<288x32xf32>, vector<256x32xf32> -> vector<256x32xf32>
    %c0_47 = arith.constant 0 : index
    %c0_48 = arith.constant 0 : index
    %223 = vector.load %arg13[%c0_47, %c0_48] : memref<1x32xf32, #tpu.memory_space<vmem>>, vector<1x32xf32>
    %224 = vector.broadcast %223 : vector<1x32xf32> to vector<256x32xf32>
    %225 = arith.addf %222, %224 : vector<256x32xf32>
    %cst_49 = arith.constant 0.000000e+00 : f32
    %226 = vector.broadcast %cst_49 : f32 to vector<256x32xf32>
    %227 = arith.maximumf %225, %226 : vector<256x32xf32>
    %228 = vector.shape_cast %227 : vector<256x32xf32> to vector<16x16x32xf32>
    %cst_50 = arith.constant 0.000000e+00 : f32
    %229 = vector.broadcast %cst_50 : f32 to vector<1x16x32xf32>
    %230 = tpu.concatenate %229, %228, %229 in 0 : vector<1x16x32xf32>, vector<16x16x32xf32>, vector<1x16x32xf32> -> vector<18x16x32xf32>
    %cst_51 = arith.constant 0.000000e+00 : f32
    %231 = vector.broadcast %cst_51 : f32 to vector<18x1x32xf32>
    %232 = tpu.concatenate %231, %230, %231 in 1 : vector<18x1x32xf32>, vector<18x16x32xf32>, vector<18x1x32xf32> -> vector<18x18x32xf32>
    %233 = vector.extract_strided_slice %232 {offsets = [0, 0, 0], sizes = [16, 16, 32], strides = [1, 1, 1]} : vector<18x18x32xf32> to vector<16x16x32xf32>
    %234 = vector.extract_strided_slice %232 {offsets = [0, 1, 0], sizes = [16, 16, 32], strides = [1, 1, 1]} : vector<18x18x32xf32> to vector<16x16x32xf32>
    %235 = vector.extract_strided_slice %232 {offsets = [0, 2, 0], sizes = [16, 16, 32], strides = [1, 1, 1]} : vector<18x18x32xf32> to vector<16x16x32xf32>
    %236 = vector.extract_strided_slice %232 {offsets = [1, 0, 0], sizes = [16, 16, 32], strides = [1, 1, 1]} : vector<18x18x32xf32> to vector<16x16x32xf32>
    %237 = vector.extract_strided_slice %232 {offsets = [1, 1, 0], sizes = [16, 16, 32], strides = [1, 1, 1]} : vector<18x18x32xf32> to vector<16x16x32xf32>
    %238 = vector.extract_strided_slice %232 {offsets = [1, 2, 0], sizes = [16, 16, 32], strides = [1, 1, 1]} : vector<18x18x32xf32> to vector<16x16x32xf32>
    %239 = vector.extract_strided_slice %232 {offsets = [2, 0, 0], sizes = [16, 16, 32], strides = [1, 1, 1]} : vector<18x18x32xf32> to vector<16x16x32xf32>
    %240 = vector.extract_strided_slice %232 {offsets = [2, 1, 0], sizes = [16, 16, 32], strides = [1, 1, 1]} : vector<18x18x32xf32> to vector<16x16x32xf32>
    %241 = vector.extract_strided_slice %232 {offsets = [2, 2, 0], sizes = [16, 16, 32], strides = [1, 1, 1]} : vector<18x18x32xf32> to vector<16x16x32xf32>
    %242 = tpu.concatenate %233, %234, %235, %236, %237, %238, %239, %240, %241 in 2 : vector<16x16x32xf32>, vector<16x16x32xf32>, vector<16x16x32xf32>, vector<16x16x32xf32>, vector<16x16x32xf32>, vector<16x16x32xf32>, vector<16x16x32xf32>, vector<16x16x32xf32>, vector<16x16x32xf32> -> vector<16x16x288xf32>
    %243 = vector.shape_cast %242 : vector<16x16x288xf32> to vector<256x288xf32>
    %c0_52 = arith.constant 0 : index
    %c0_53 = arith.constant 0 : index
    %244 = vector.load %arg14[%c0_52, %c0_53] : memref<288x3xf32, #tpu.memory_space<vmem>>, vector<288x3xf32>
    %cst_54 = arith.constant dense<0.000000e+00> : vector<256x3xf32>
    %245 = tpu.matmul %243, %244, %cst_54 {dimension_numbers = #tpu.dot_dimension_numbers<[1], [0], [0], [1], [0, 0, 1, 1], [], []>} : vector<256x288xf32>, vector<288x3xf32>, vector<256x3xf32> -> vector<256x3xf32>
    %c0_55 = arith.constant 0 : index
    %c0_56 = arith.constant 0 : index
    %246 = vector.load %arg15[%c0_55, %c0_56] : memref<1x3xf32, #tpu.memory_space<vmem>>, vector<1x3xf32>
    %247 = vector.broadcast %246 : vector<1x3xf32> to vector<256x3xf32>
    %248 = arith.addf %245, %247 : vector<256x3xf32>
    %cst_57 = arith.constant 0.000000e+00 : f32
    %249 = vector.broadcast %cst_57 : f32 to vector<256x3xf32>
    %250 = arith.maximumf %248, %249 : vector<256x3xf32>
    %251 = vector.shape_cast %250 : vector<256x3xf32> to vector<16x16x3xf32>
    %c0_58 = arith.constant 0 : index
    %c0_59 = arith.constant 0 : index
    %c0_60 = arith.constant 0 : index
    %c0_61 = arith.constant 0 : index
    %252 = vector.load %arg16[%c0_58, %c0_59, %c0_60, %c0_61] : memref<1x16x16x3xf32, #tpu.memory_space<vmem>>, vector<1x16x16x3xf32>
    %253 = vector.shape_cast %252 : vector<1x16x16x3xf32> to vector<16x16x3xf32>
    %254 = vector.shape_cast %251 : vector<16x16x3xf32> to vector<1x16x16x3xf32>
    tpu.vector_store %arg16[%c0_58, %c0_59, %c0_60, %c0_61], %254 {strides = array<i32>} : memref<1x16x16x3xf32, #tpu.memory_space<vmem>>, vector<1x16x16x3xf32>,
    return
  }
  func.func @transform_0(%arg0: i32) -> (i32, i32, i32, i32) {
    %c0_i32 = arith.constant 0 : i32
    %c0_i32_0 = arith.constant 0 : i32
    %c0_i32_1 = arith.constant 0 : i32
    %c0_i32_2 = arith.constant 0 : i32
    return %arg0, %c0_i32, %c0_i32_0, %c0_i32_1 : i32, i32, i32, i32
  }
  func.func @transform_1(%arg0: i32) -> (i32, i32) {
    %c0_i32 = arith.constant 0 : i32
    %c0_i32_0 = arith.constant 0 : i32
    %c0_i32_1 = arith.constant 0 : i32
    return %c0_i32, %c0_i32_0 : i32, i32
  }
  func.func @transform_2(%arg0: i32) -> (i32, i32) {
    %c0_i32 = arith.constant 0 : i32
    %c0_i32_0 = arith.constant 0 : i32
    %c0_i32_1 = arith.constant 0 : i32
    return %c0_i32, %c0_i32_0 : i32, i32
  }
  func.func @transform_3(%arg0: i32) -> (i32, i32) {
    %c0_i32 = arith.constant 0 : i32
    %c0_i32_0 = arith.constant 0 : i32
    %c0_i32_1 = arith.constant 0 : i32
    return %c0_i32, %c0_i32_0 : i32, i32
  }
  func.func @transform_4(%arg0: i32) -> (i32, i32) {
    %c0_i32 = arith.constant 0 : i32
    %c0_i32_0 = arith.constant 0 : i32
    %c0_i32_1 = arith.constant 0 : i32
    return %c0_i32, %c0_i32_0 : i32, i32
  }
  func.func @transform_5(%arg0: i32) -> (i32, i32) {
    %c0_i32 = arith.constant 0 : i32
    %c0_i32_0 = arith.constant 0 : i32
    %c0_i32_1 = arith.constant 0 : i32
    return %c0_i32, %c0_i32_0 : i32, i32
  }
  func.func @transform_6(%arg0: i32) -> (i32, i32) {
    %c0_i32 = arith.constant 0 : i32
    %c0_i32_0 = arith.constant 0 : i32
    %c0_i32_1 = arith.constant 0 : i32
    return %c0_i32, %c0_i32_0 : i32, i32
  }
  func.func @transform_7(%arg0: i32) -> (i32, i32) {
    %c0_i32 = arith.constant 0 : i32
    %c0_i32_0 = arith.constant 0 : i32
    %c0_i32_1 = arith.constant 0 : i32
    return %c0_i32, %c0_i32_0 : i32, i32
  }
  func.func @transform_8(%arg0: i32) -> (i32, i32) {
    %c0_i32 = arith.constant 0 : i32
    %c0_i32_0 = arith.constant 0 : i32
    %c0_i32_1 = arith.constant 0 : i32
    return %c0_i32, %c0_i32_0 : i32, i32
  }
  func.func @transform_9(%arg0: i32) -> (i32, i32) {
    %c0_i32 = arith.constant 0 : i32
    %c0_i32_0 = arith.constant 0 : i32
    %c0_i32_1 = arith.constant 0 : i32
    return %c0_i32, %c0_i32_0 : i32, i32
  }
  func.func @transform_10(%arg0: i32) -> (i32, i32) {
    %c0_i32 = arith.constant 0 : i32
    %c0_i32_0 = arith.constant 0 : i32
    %c0_i32_1 = arith.constant 0 : i32
    return %c0_i32, %c0_i32_0 : i32, i32
  }
  func.func @transform_11(%arg0: i32) -> (i32, i32) {
    %c0_i32 = arith.constant 0 : i32
    %c0_i32_0 = arith.constant 0 : i32
    %c0_i32_1 = arith.constant 0 : i32
    return %c0_i32, %c0_i32_0 : i32, i32
  }
  func.func @transform_12(%arg0: i32) -> (i32, i32) {
    %c0_i32 = arith.constant 0 : i32
    %c0_i32_0 = arith.constant 0 : i32
    %c0_i32_1 = arith.constant 0 : i32
    return %c0_i32, %c0_i32_0 : i32, i32
  }
  func.func @transform_13(%arg0: i32) -> (i32, i32) {
    %c0_i32 = arith.constant 0 : i32
    %c0_i32_0 = arith.constant 0 : i32
    %c0_i32_1 = arith.constant 0 : i32
    return %c0_i32, %c0_i32_0 : i32, i32
  }
  func.func @transform_14(%arg0: i32) -> (i32, i32) {
    %c0_i32 = arith.constant 0 : i32
    %c0_i32_0 = arith.constant 0 : i32
    %c0_i32_1 = arith.constant 0 : i32
    return %c0_i32, %c0_i32_0 : i32, i32
  }
  func.func @transform_15(%arg0: i32) -> (i32, i32, i32, i32) {
    %c0_i32 = arith.constant 0 : i32
    %c0_i32_0 = arith.constant 0 : i32
    %c0_i32_1 = arith.constant 0 : i32
    %c0_i32_2 = arith.constant 0 : i32
    return %arg0, %c0_i32, %c0_i32_0, %c0_i32_1 : i32, i32, i32, i32
  }
}

</mosaic_0001>

<llo_original>
// kernel: autoencoder_forward.1
$region0: #{autoencoder_forward.1}
  #allocation0 [shape = 'u32[]', space=smem, size = 0x4, offset = 0x4, fixed_abs, tag = 'smem constant byte address 0x4 - core index']
  #allocation1 [shape = 'u32[144,128]{1,0:T(1,128)}', space=vmem, size = 0x12000, scoped, tag = 'internal scratch']
  %s0 = inlined_call_operand.vmem [shape: f32[2,16,16,3], index: 0, kind: input, shape index: {}]
  %s1 = inlined_call_operand.vmem [shape: f32[27,32], index: 1, kind: input, shape index: {}]
  %s2 = inlined_call_operand.vmem [shape: f32[1,32], index: 2, kind: input, shape index: {}]
  %s3 = inlined_call_operand.vmem [shape: f32[288,32], index: 3, kind: input, shape index: {}]
  %s4 = inlined_call_operand.vmem [shape: f32[1,32], index: 4, kind: input, shape index: {}]
  %s5 = inlined_call_operand.vmem [shape: f32[288,16], index: 5, kind: input, shape index: {}]
  %s6 = inlined_call_operand.vmem [shape: f32[1,16], index: 6, kind: input, shape index: {}]
  %s7 = inlined_call_operand.vmem [shape: f32[144,16], index: 7, kind: input, shape index: {}]
  %s8 = inlined_call_operand.vmem [shape: f32[1,16], index: 8, kind: input, shape index: {}]
  %s9 = inlined_call_operand.vmem [shape: f32[144,32], index: 9, kind: input, shape index: {}]
  %s10 = inlined_call_operand.vmem [shape: f32[1,32], index: 10, kind: input, shape index: {}]
  %s11 = inlined_call_operand.vmem [shape: f32[288,32], index: 11, kind: input, shape index: {}]
  %s12 = inlined_call_operand.vmem [shape: f32[1,32], index: 12, kind: input, shape index: {}]
  %s13 = inlined_call_operand.vmem [shape: f32[288,3], index: 13, kind: input, shape index: {}]
  %s14 = inlined_call_operand.vmem [shape: f32[1,3], index: 14, kind: input, shape index: {}]
  %s15 = inlined_call_operand.vmem [shape: f32[2,16,16,3], index: 15, kind: output, shape index: {}]
  %s16 = sld [smem:[#allocation0]]
  $region93: #{autoencoder_forward.1} parent=0
    _
  %s18 = ssub.s32 1, %s16
  %s19 = scalar_select 0, %s18, %s16
  loop: start=0, step=1, limit=4
  $region2: #{autoencoder_forward.1} parent=0 // loop_pre_header
    _
  $region3: #{autoencoder_forward.1} parent=0 // loop_header
    %s21 = sphi 0, %s25
    %p22 = scmp.ge.s32.totalorder %s21, 4
    %s31 = sphi 0, %s33
    %s34 = sphi 0, %s31
    %s35 = sphi 0, %s34
    %s51 = sphi 0, %s35
    %s55 = sphi 0, %s55
    %s57 = sphi 0, %s55
    %s58 = sphi 0, %s57
    %s72 = sphi 0, %s58
    %s76 = sphi 0, %s76
    %s78 = sphi 0, %s76
    %s79 = sphi 0, %s78
    %s93 = sphi 0, %s79
    %s97 = sphi 0, %s97
    %s99 = sphi 0, %s97
    %s100 = sphi 0, %s99
    %s114 = sphi 0, %s100
    %s118 = sphi 0, %s118
    %s120 = sphi 0, %s118
    %s121 = sphi 0, %s120
    %s135 = sphi 0, %s121
    %s139 = sphi 0, %s139
    %s141 = sphi 0, %s139
    %s142 = sphi 0, %s141
    %s156 = sphi 0, %s142
    %s160 = sphi 0, %s160
    %s162 = sphi 0, %s160
    %s163 = sphi 0, %s162
    %s177 = sphi 0, %s163
    %s181 = sphi 0, %s181
    %s183 = sphi 0, %s181
    %s184 = sphi 0, %s183
    %s198 = sphi 0, %s184
    %s202 = sphi 0, %s202
    %s204 = sphi 0, %s202
    %s205 = sphi 0, %s204
    %s219 = sphi 0, %s205
    %s223 = sphi 0, %s223
    %s225 = sphi 0, %s223
    %s226 = sphi 0, %s225
    %s240 = sphi 0, %s226
    %s244 = sphi 0, %s244
    %s246 = sphi 0, %s244
    %s247 = sphi 0, %s246
    %s261 = sphi 0, %s247
    %s265 = sphi 0, %s265
    %s267 = sphi 0, %s265
    %s268 = sphi 0, %s267
    %s282 = sphi 0, %s268
    %s286 = sphi 0, %s286
    %s288 = sphi 0, %s286
    %s289 = sphi 0, %s288
    %s303 = sphi 0, %s289
    %s307 = sphi 0, %s307
    %s309 = sphi 0, %s307
    %s310 = sphi 0, %s309
    %s324 = sphi 0, %s310
    %s328 = sphi 0, %s328
    %s330 = sphi 0, %s328
    %s331 = sphi 0, %s330
    %s345 = sphi 0, %s331
    %s351 = sphi 0, %s353
    %s354 = sphi 0, %s351
    %s355 = sphi 0, %s354
    %s371 = sphi 0, %s355
  $region4: #{autoencoder_forward.1} parent=0 // loop_header_branch
    %24 = sbr.rel (%p22) target = $region8
  $region5: #{autoencoder_forward.1} parent=0 // loop_body
    %s26 = ssub.s32 %s21, 1
    %s27 = ssub.s32 %s21, 2
    %s28 = sadd.s32 %s21, 1
    %s29 = ssub.s32 %s21, %s28
    %p30 = scmp.eq.s32.totalorder %s29, 0
    %s32 = sadd.s32 %s31, 1
    %s33 = scalar_select %p30, %s31, %s32
    %p36 = pneg %p30
    %p37 = scmp.eq.s32.totalorder %s21, 1
    %p38 = por %p36, %p37
    %p39 = scmp.ne.s32.totalorder %s31, %s34
    %p40 = scmp.eq.s32.totalorder %s21, 0
    %p41 = por %p39, %p40
    %p42 = scmp.ne.s32.totalorder %s31, %s34
    %p43 = scmp.eq.s32.totalorder %s26, 1
    %p44 = por %p42, %p43
    %p45 = scmp.ne.s32.totalorder %s34, %s35
    %p46 = scmp.eq.s32.totalorder %s26, 0
    %p47 = por %p45, %p46
    %p48 = scmp.ne.s32.totalorder %s34, %s35
    %p49 = scmp.eq.s32.totalorder %s27, 1
    %p50 = por %p48, %p49
    %p52 = scmp.ne.s32.totalorder %s35, %s51
    %p53 = scmp.eq.s32.totalorder %s27, 0
    %p54 = por %p52, %p53
    %s56 = sadd.s32 %s55, 1
    %p59 = scmp.eq.s32.totalorder %s21, 1
    %p60 = scmp.ne.s32.totalorder %s55, %s57
    %p61 = scmp.eq.s32.totalorder %s21, 0
    %p62 = por %p60, %p61
    %p63 = scmp.ne.s32.totalorder %s55, %s57
    %p64 = scmp.eq.s32.totalorder %s26, 1
    %p65 = por %p63, %p64
    %p66 = scmp.ne.s32.totalorder %s57, %s58
    %p67 = scmp.eq.s32.totalorder %s26, 0
    %p68 = por %p66, %p67
    %p69 = scmp.ne.s32.totalorder %s57, %s58
    %p70 = scmp.eq.s32.totalorder %s27, 1
    %p71 = por %p69, %p70
    %p73 = scmp.ne.s32.totalorder %s58, %s72
    %p74 = scmp.eq.s32.totalorder %s27, 0
    %p75 = por %p73, %p74
    %s77 = sadd.s32 %s76, 1
    %p80 = scmp.eq.s32.totalorder %s21, 1
    %p81 = scmp.ne.s32.totalorder %s76, %s78
    %p82 = scmp.eq.s32.totalorder %s21, 0
    %p83 = por %p81, %p82
    %p84 = scmp.ne.s32.totalorder %s76, %s78
    %p85 = scmp.eq.s32.totalorder %s26, 1
    %p86 = por %p84, %p85
    %p87 = scmp.ne.s32.totalorder %s78, %s79
    %p88 = scmp.eq.s32.totalorder %s26, 0
    %p89 = por %p87, %p88
    %p90 = scmp.ne.s32.totalorder %s78, %s79
    %p91 = scmp.eq.s32.totalorder %s27, 1
    %p92 = por %p90, %p91
    %p94 = scmp.ne.s32.totalorder %s79, %s93
    %p95 = scmp.eq.s32.totalorder %s27, 0
    %p96 = por %p94, %p95
    %s98 = sadd.s32 %s97, 1
    %p101 = scmp.eq.s32.totalorder %s21, 1
    %p102 = scmp.ne.s32.totalorder %s97, %s99
    %p103 = scmp.eq.s32.totalorder %s21, 0
    %p104 = por %p102, %p103
    %p105 = scmp.ne.s32.totalorder %s97, %s99
    %p106 = scmp.eq.s32.totalorder %s26, 1
    %p107 = por %p105, %p106
    %p108 = scmp.ne.s32.totalorder %s99, %s100
    %p109 = scmp.eq.s32.totalorder %s26, 0
    %p110 = por %p108, %p109
    %p111 = scmp.ne.s32.totalorder %s99, %s100
    %p112 = scmp.eq.s32.totalorder %s27, 1
    %p113 = por %p111, %p112
    %p115 = scmp.ne.s32.totalorder %s100, %s114
    %p116 = scmp.eq.s32.totalorder %s27, 0
    %p117 = por %p115, %p116
    %s119 = sadd.s32 %s118, 1
    %p122 = scmp.eq.s32.totalorder %s21, 1
    %p123 = scmp.ne.s32.totalorder %s118, %s120
    %p124 = scmp.eq.s32.totalorder %s21, 0
    %p125 = por %p123, %p124
    %p126 = scmp.ne.s32.totalorder %s118, %s120
    %p127 = scmp.eq.s32.totalorder %s26, 1
    %p128 = por %p126, %p127
    %p129 = scmp.ne.s32.totalorder %s120, %s121
    %p130 = scmp.eq.s32.totalorder %s26, 0
    %p131 = por %p129, %p130
    %p132 = scmp.ne.s32.totalorder %s120, %s121
    %p133 = scmp.eq.s32.totalorder %s27, 1
    %p134 = por %p132, %p133
    %p136 = scmp.ne.s32.totalorder %s121, %s135
    %p137 = scmp.eq.s32.totalorder %s27, 0
    %p138 = por %p136, %p137
    %s140 = sadd.s32 %s139, 1
    %p143 = scmp.eq.s32.totalorder %s21, 1
    %p144 = scmp.ne.s32.totalorder %s139, %s141
    %p145 = scmp.eq.s32.totalorder %s21, 0
    %p146 = por %p144, %p145
    %p147 = scmp.ne.s32.totalorder %s139, %s141
    %p148 = scmp.eq.s32.totalorder %s26, 1
    %p149 = por %p147, %p148
    %p150 = scmp.ne.s32.totalorder %s141, %s142
    %p151 = scmp.eq.s32.totalorder %s26, 0
    %p152 = por %p150, %p151
    %p153 = scmp.ne.s32.totalorder %s141, %s142
    %p154 = scmp.eq.s32.totalorder %s27, 1
    %p155 = por %p153, %p154
    %p157 = scmp.ne.s32.totalorder %s142, %s156
    %p158 = scmp.eq.s32.totalorder %s27, 0
    %p159 = por %p157, %p158
    %s161 = sadd.s32 %s160, 1
    %p164 = scmp.eq.s32.totalorder %s21, 1
    %p165 = scmp.ne.s32.totalorder %s160, %s162
    %p166 = scmp.eq.s32.totalorder %s21, 0
    %p167 = por %p165, %p166
    %p168 = scmp.ne.s32.totalorder %s160, %s162
    %p169 = scmp.eq.s32.totalorder %s26, 1
    %p170 = por %p168, %p169
    %p171 = scmp.ne.s32.totalorder %s162, %s163
    %p172 = scmp.eq.s32.totalorder %s26, 0
    %p173 = por %p171, %p172
    %p174 = scmp.ne.s32.totalorder %s162, %s163
    %p175 = scmp.eq.s32.totalorder %s27, 1
    %p176 = por %p174, %p175
    %p178 = scmp.ne.s32.totalorder %s163, %s177
    %p179 = scmp.eq.s32.totalorder %s27, 0
    %p180 = por %p178, %p179
    %s182 = sadd.s32 %s181, 1
    %p185 = scmp.eq.s32.totalorder %s21, 1
    %p186 = scmp.ne.s32.totalorder %s181, %s183
    %p187 = scmp.eq.s32.totalorder %s21, 0
    %p188 = por %p186, %p187
    %p189 = scmp.ne.s32.totalorder %s181, %s183
    %p190 = scmp.eq.s32.totalorder %s26, 1
    %p191 = por %p189, %p190
    %p192 = scmp.ne.s32.totalorder %s183, %s184
    %p193 = scmp.eq.s32.totalorder %s26, 0
    %p194 = por %p192, %p193
    %p195 = scmp.ne.s32.totalorder %s183, %s184
    %p196 = scmp.eq.s32.totalorder %s27, 1
    %p197 = por %p195, %p196
    %p199 = scmp.ne.s32.totalorder %s184, %s198
    %p200 = scmp.eq.s32.totalorder %s27, 0
    %p201 = por %p199, %p200
    %s203 = sadd.s32 %s202, 1
    %p206 = scmp.eq.s32.totalorder %s21, 1
    %p207 = scmp.ne.s32.totalorder %s202, %s204
    %p208 = scmp.eq.s32.totalorder %s21, 0
    %p209 = por %p207, %p208
    %p210 = scmp.ne.s32.totalorder %s202, %s204
    %p211 = scmp.eq.s32.totalorder %s26, 1
    %p212 = por %p210, %p211
    %p213 = scmp.ne.s32.totalorder %s204, %s205
    %p214 = scmp.eq.s32.totalorder %s26, 0
    %p215 = por %p213, %p214
    %p216 = scmp.ne.s32.totalorder %s204, %s205
    %p217 = scmp.eq.s32.totalorder %s27, 1
    %p218 = por %p216, %p217
    %p220 = scmp.ne.s32.totalorder %s205, %s219
    %p221 = scmp.eq.s32.totalorder %s27, 0
    %p222 = por %p220, %p221
    %s224 = sadd.s32 %s223, 1
    %p227 = scmp.eq.s32.totalorder %s21, 1
    %p228 = scmp.ne.s32.totalorder %s223, %s225
    %p229 = scmp.eq.s32.totalorder %s21, 0
    %p230 = por %p228, %p229
    %p231 = scmp.ne.s32.totalorder %s223, %s225
    %p232 = scmp.eq.s32.totalorder %s26, 1
    %p233 = por %p231, %p232
    %p234 = scmp.ne.s32.totalorder %s225, %s226
    %p235 = scmp.eq.s32.totalorder %s26, 0
    %p236 = por %p234, %p235
    %p237 = scmp.ne.s32.totalorder %s225, %s226
    %p238 = scmp.eq.s32.totalorder %s27, 1
    %p239 = por %p237, %p238
    %p241 = scmp.ne.s32.totalorder %s226, %s240
    %p242 = scmp.eq.s32.totalorder %s27, 0
    %p243 = por %p241, %p242
    %s245 = sadd.s32 %s244, 1
    %p248 = scmp.eq.s32.totalorder %s21, 1
    %p249 = scmp.ne.s32.totalorder %s244, %s246
    %p250 = scmp.eq.s32.totalorder %s21, 0
    %p251 = por %p249, %p250
    %p252 = scmp.ne.s32.totalorder %s244, %s246
    %p253 = scmp.eq.s32.totalorder %s26, 1
    %p254 = por %p252, %p253
    %p255 = scmp.ne.s32.totalorder %s246, %s247
    %p256 = scmp.eq.s32.totalorder %s26, 0
    %p257 = por %p255, %p256
    %p258 = scmp.ne.s32.totalorder %s246, %s247
    %p259 = scmp.eq.s32.totalorder %s27, 1
    %p260 = por %p258, %p259
    %p262 = scmp.ne.s32.totalorder %s247, %s261
    %p263 = scmp.eq.s32.totalorder %s27, 0
    %p264 = por %p262, %p263
    %s266 = sadd.s32 %s265, 1
    %p269 = scmp.eq.s32.totalorder %s21, 1
    %p270 = scmp.ne.s32.totalorder %s265, %s267
    %p271 = scmp.eq.s32.totalorder %s21, 0
    %p272 = por %p270, %p271
    %p273 = scmp.ne.s32.totalorder %s265, %s267
    %p274 = scmp.eq.s32.totalorder %s26, 1
    %p275 = por %p273, %p274
    %p276 = scmp.ne.s32.totalorder %s267, %s268
    %p277 = scmp.eq.s32.totalorder %s26, 0
    %p278 = por %p276, %p277
    %p279 = scmp.ne.s32.totalorder %s267, %s268
    %p280 = scmp.eq.s32.totalorder %s27, 1
    %p281 = por %p279, %p280
    %p283 = scmp.ne.s32.totalorder %s268, %s282
    %p284 = scmp.eq.s32.totalorder %s27, 0
    %p285 = por %p283, %p284
    %s287 = sadd.s32 %s286, 1
    %p290 = scmp.eq.s32.totalorder %s21, 1
    %p291 = scmp.ne.s32.totalorder %s286, %s288
    %p292 = scmp.eq.s32.totalorder %s21, 0
    %p293 = por %p291, %p292
    %p294 = scmp.ne.s32.totalorder %s286, %s288
    %p295 = scmp.eq.s32.totalorder %s26, 1
    %p296 = por %p294, %p295
    %p297 = scmp.ne.s32.totalorder %s288, %s289
    %p298 = scmp.eq.s32.totalorder %s26, 0
    %p299 = por %p297, %p298
    %p300 = scmp.ne.s32.totalorder %s288, %s289
    %p301 = scmp.eq.s32.totalorder %s27, 1
    %p302 = por %p300, %p301
    %p304 = scmp.ne.s32.totalorder %s289, %s303
    %p305 = scmp.eq.s32.totalorder %s27, 0
    %p306 = por %p304, %p305
    %s308 = sadd.s32 %s307, 1
    %p311 = scmp.eq.s32.totalorder %s21, 1
    %p312 = scmp.ne.s32.totalorder %s307, %s309
    %p313 = scmp.eq.s32.totalorder %s21, 0
    %p314 = por %p312, %p313
    %p315 = scmp.ne.s32.totalorder %s307, %s309
    %p316 = scmp.eq.s32.totalorder %s26, 1
    %p317 = por %p315, %p316
    %p318 = scmp.ne.s32.totalorder %s309, %s310
    %p319 = scmp.eq.s32.totalorder %s26, 0
    %p320 = por %p318, %p319
    %p321 = scmp.ne.s32.totalorder %s309, %s310
    %p322 = scmp.eq.s32.totalorder %s27, 1
    %p323 = por %p321, %p322
    %p325 = scmp.ne.s32.totalorder %s310, %s324
    %p326 = scmp.eq.s32.totalorder %s27, 0
    %p327 = por %p325, %p326
    %s329 = sadd.s32 %s328, 1
    %p332 = scmp.eq.s32.totalorder %s21, 1
    %p333 = scmp.ne.s32.totalorder %s328, %s330
    %p334 = scmp.eq.s32.totalorder %s21, 0
    %p335 = por %p333, %p334
    %p336 = scmp.ne.s32.totalorder %s328, %s330
    %p337 = scmp.eq.s32.totalorder %s26, 1
    %p338 = por %p336, %p337
    %p339 = scmp.ne.s32.totalorder %s330, %s331
    %p340 = scmp.eq.s32.totalorder %s26, 0
    %p341 = por %p339, %p340
    %p342 = scmp.ne.s32.totalorder %s330, %s331
    %p343 = scmp.eq.s32.totalorder %s27, 1
    %p344 = por %p342, %p343
    %p346 = scmp.ne.s32.totalorder %s331, %s345
    %p347 = scmp.eq.s32.totalorder %s27, 0
    %p348 = por %p346, %p347
    %s349 = ssub.s32 %s21, %s28
    %p350 = scmp.eq.s32.totalorder %s349, 0
    %s352 = sadd.s32 %s351, 1
    %s353 = scalar_select %p350, %s351, %s352
    %p356 = pneg %p350
    %p357 = scmp.eq.s32.totalorder %s21, 1
    %p358 = por %p356, %p357
    %p359 = scmp.ne.s32.totalorder %s351, %s354
    %p360 = scmp.eq.s32.totalorder %s21, 0
    %p361 = por %p359, %p360
    %p362 = scmp.ne.s32.totalorder %s351, %s354
    %p363 = scmp.eq.s32.totalorder %s26, 1
    %p364 = por %p362, %p363
    %p365 = scmp.ne.s32.totalorder %s354, %s355
    %p366 = scmp.eq.s32.totalorder %s26, 0
    %p367 = por %p365, %p366
    %p368 = scmp.ne.s32.totalorder %s354, %s355
    %p369 = scmp.eq.s32.totalorder %s27, 1
    %p370 = por %p368, %p369
    %p372 = scmp.ne.s32.totalorder %s355, %s371
    %p373 = scmp.eq.s32.totalorder %s27, 0
    %p374 = por %p372, %p373
    %p375 = scmp.le.s32.totalorder 1, %s21
    %p376 = scmp.lt.s32.totalorder %s21, 3
    %p377 = pnand %p375, %p376
    %p378 = pneg %p377
    // Predicated region
    $region9: #{autoencoder_forward.1} parent=5 // pred_check
      _
    $region10: #{autoencoder_forward.1} parent=5 // pred_check_branch
      %380 = sbr.rel (%p377) target = $region12
    $region11: #{autoencoder_forward.1} parent=5 // pred_region
      %s381 = ssub.s32 %s21, 1
      // Predicated region
      $region13: #{autoencoder_forward.1} parent=11 // pred_check
        %p382 = pneg %p68
      $region14: #{autoencoder_forward.1} parent=11 // pred_check_branch
        %384 = sbr.rel (%p382) target = $region16
      $region15: #{autoencoder_forward.1} parent=11 // pred_region
        _
      $region16: #{autoencoder_forward.1} parent=11 // pred_fallthru
        _
      // Predicated region
      $region17: #{autoencoder_forward.1} parent=11 // pred_check
        %p385 = pneg %p89
      $region18: #{autoencoder_forward.1} parent=11 // pred_check_branch
        %387 = sbr.rel (%p385) target = $region20
      $region19: #{autoencoder_forward.1} parent=11 // pred_region
        _
      $region20: #{autoencoder_forward.1} parent=11 // pred_fallthru
        _
      // Predicated region
      $region21: #{autoencoder_forward.1} parent=11 // pred_check
        %p388 = pneg %p110
      $region22: #{autoencoder_forward.1} parent=11 // pred_check_branch
        %390 = sbr.rel (%p388) target = $region24
      $region23: #{autoencoder_forward.1} parent=11 // pred_region
        _
      $region24: #{autoencoder_forward.1} parent=11 // pred_fallthru
        _
      // Predicated region
      $region25: #{autoencoder_forward.1} parent=11 // pred_check
        %p391 = pneg %p131
      $region26: #{autoencoder_forward.1} parent=11 // pred_check_branch
        %393 = sbr.rel (%p391) target = $region28
      $region27: #{autoencoder_forward.1} parent=11 // pred_region
        _
      $region28: #{autoencoder_forward.1} parent=11 // pred_fallthru
        _
      // Predicated region
      $region29: #{autoencoder_forward.1} parent=11 // pred_check
        %p394 = pneg %p152
      $region30: #{autoencoder_forward.1} parent=11 // pred_check_branch
        %396 = sbr.rel (%p394) target = $region32
      $region31: #{autoencoder_forward.1} parent=11 // pred_region
        _
      $region32: #{autoencoder_forward.1} parent=11 // pred_fallthru
        _
      // Predicated region
      $region33: #{autoencoder_forward.1} parent=11 // pred_check
        %p397 = pneg %p173
      $region34: #{autoencoder_forward.1} parent=11 // pred_check_branch
        %399 = sbr.rel (%p397) target = $region36
      $region35: #{autoencoder_forward.1} parent=11 // pred_region
        _
      $region36: #{autoencoder_forward.1} parent=11 // pred_fallthru
        _
      // Predicated region
      $region37: #{autoencoder_forward.1} parent=11 // pred_check
        %p400 = pneg %p194
      $region38: #{autoencoder_forward.1} parent=11 // pred_check_branch
        %402 = sbr.rel (%p400) target = $region40
      $region39: #{autoencoder_forward.1} parent=11 // pred_region
        _
      $region40: #{autoencoder_forward.1} parent=11 // pred_fallthru
        _
      // Predicated region
      $region41: #{autoencoder_forward.1} parent=11 // pred_check
        %p403 = pneg %p215
      $region42: #{autoencoder_forward.1} parent=11 // pred_check_branch
        %405 = sbr.rel (%p403) target = $region44
      $region43: #{autoencoder_forward.1} parent=11 // pred_region
        _
      $region44: #{autoencoder_forward.1} parent=11 // pred_fallthru
        _
      // Predicated region
      $region45: #{autoencoder_forward.1} parent=11 // pred_check
        %p406 = pneg %p236
      $region46: #{autoencoder_forward.1} parent=11 // pred_check_branch
        %408 = sbr.rel (%p406) target = $region48
      $region47: #{autoencoder_forward.1} parent=11 // pred_region
        _
      $region48: #{autoencoder_forward.1} parent=11 // pred_fallthru
        _
      // Predicated region
      $region49: #{autoencoder_forward.1} parent=11 // pred_check
        %p409 = pneg %p257
      $region50: #{autoencoder_forward.1} parent=11 // pred_check_branch
        %411 = sbr.rel (%p409) target = $region52
      $region51: #{autoencoder_forward.1} parent=11 // pred_region
        _
      $region52: #{autoencoder_forward.1} parent=11 // pred_fallthru
        _
      // Predicated region
      $region53: #{autoencoder_forward.1} parent=11 // pred_check
        %p412 = pneg %p278
      $region54: #{autoencoder_forward.1} parent=11 // pred_check_branch
        %414 = sbr.rel (%p412) target = $region56
      $region55: #{autoencoder_forward.1} parent=11 // pred_region
        _
      $region56: #{autoencoder_forward.1} parent=11 // pred_fallthru
        _
      // Predicated region
      $region57: #{autoencoder_forward.1} parent=11 // pred_check
        %p415 = pneg %p299
      $region58: #{autoencoder_forward.1} parent=11 // pred_check_branch
        %417 = sbr.rel (%p415) target = $region60
      $region59: #{autoencoder_forward.1} parent=11 // pred_region
        _
      $region60: #{autoencoder_forward.1} parent=11 // pred_fallthru
        _
      // Predicated region
      $region61: #{autoencoder_forward.1} parent=11 // pred_check
        %p418 = pneg %p320
      $region62: #{autoencoder_forward.1} parent=11 // pred_check_branch
        %420 = sbr.rel (%p418) target = $region64
      $region63: #{autoencoder_forward.1} parent=11 // pred_region
        _
      $region64: #{autoencoder_forward.1} parent=11 // pred_fallthru
        _
      // Predicated region
      $region65: #{autoencoder_forward.1} parent=11 // pred_check
        %p421 = pneg %p341
      $region66: #{autoencoder_forward.1} parent=11 // pred_check_branch
        %423 = sbr.rel (%p421) target = $region68
      $region67: #{autoencoder_forward.1} parent=11 // pred_region
        _
      $region68: #{autoencoder_forward.1} parent=11 // pred_fallthru
        _
    $region12: #{autoencoder_forward.1} parent=5 // pred_fallthru
      _
    %p424 = scmp.lt.s32.totalorder %s21, 2
    // Predicated region
    $region69: #{autoencoder_forward.1} parent=5 // pred_check
      %p425 = pneg %p424
    $region70: #{autoencoder_forward.1} parent=5 // pred_check_branch
      %427 = sbr.rel (%p425) target = $region72
    $region71: #{autoencoder_forward.1} parent=5 // pred_region
      // Predicated region
      $region73: #{autoencoder_forward.1} parent=71 // pred_check
        %p428 = pneg %p41
      $region74: #{autoencoder_forward.1} parent=71 // pred_check_branch
        %430 = sbr.rel (%p428) target = $region76
      $region75: #{autoencoder_forward.1} parent=71 // pred_region
        %p431 = scmp.lt.s32.totalorder %s21, 1
        %s432 = scalar_select %p431, %s21, 1
        %s433 = smul.addr %s432, 32
        %s434 = smul.addr %s433, 8
        %s435 = scalar_lea.vmem %s0, %s434
      $region76: #{autoencoder_forward.1} parent=71 // pred_fallthru
        _
    $region72: #{autoencoder_forward.1} parent=5 // pred_fallthru
      _
    %p436 = scmp.le.s32.totalorder 1, %s21
    %p437 = scmp.lt.s32.totalorder %s21, 3
    %p438 = pnand %p436, %p437
    %p439 = pneg %p438
    // Predicated region
    $region77: #{autoencoder_forward.1} parent=5 // pred_check
      _
    $region78: #{autoencoder_forward.1} parent=5 // pred_check_branch
      %441 = sbr.rel (%p438) target = $region80
    $region79: #{autoencoder_forward.1} parent=5 // pred_region
      %s442 = ssub.s32 %s21, 1
      %p443 = scmp.lt.s32.totalorder %s26, 1
      %s444 = scalar_select %p443, %s26, 1
      %s445 = smul.addr %s444, 32
      %s446 = smul.addr %s445, 8
      %s447 = scalar_lea.vmem %s0, %s446
      %p448 = pneg %p47
      %p449 = pneg %p44
      %p450 = pneg %p68
      %p451 = pneg %p65
      %p452 = pneg %p89
      %p453 = pneg %p86
      %p454 = pneg %p110
      %p455 = pneg %p107
      %p456 = pneg %p131
      %p457 = pneg %p128
      %p458 = pneg %p152
      %p459 = pneg %p149
      %p460 = pneg %p173
      %p461 = pneg %p170
      %p462 = pneg %p194
      %p463 = pneg %p191
      %p464 = pneg %p215
      %p465 = pneg %p212
      %p466 = pneg %p236
      %p467 = pneg %p233
      %p468 = pneg %p257
      %p469 = pneg %p254
      %p470 = pneg %p278
      %p471 = pneg %p275
      %p472 = pneg %p299
      %p473 = pneg %p296
      %p474 = pneg %p320
      %p475 = pneg %p317
      %p476 = pneg %p341
      %p477 = pneg %p338
      %p478 = pneg %p367
      %p479 = pneg %p364
      %p480 = scmp.lt.s32.totalorder %s26, 1
      %s481 = scalar_select %p480, %s26, 1
      %s482 = smul.addr %s481, 32
      %s483 = smul.addr %s482, 8
      %s484 = scalar_lea.vmem %s15, %s483
      %p485 = scmp.lt.s32.totalorder %s26, 1
      %s486 = scalar_select %p485, %s26, 1
      %s487 = smul.addr %s486, 32
      %s488 = smul.addr %s487, 8
      %s489 = scalar_lea.vmem %s0, %s488
      %p490 = scmp.lt.s32.totalorder %s26, 1
      %s491 = scalar_select %p490, %s26, 1
      %s492 = smul.addr %s491, 32
      %s493 = smul.addr %s492, 8
      %s494 = scalar_lea.vmem %s15, %s493
      %v495 = vld [vmem:[%s489] sm:$0xff]
      %v496 = vld [vmem:[%s489 + $0x8] sm:$0xff]
      %v497 = vld [vmem:[%s489 + $0x10] sm:$0xff]
      %v498 = vld [vmem:[%s489 + $0x18] sm:$0xff]
      %v499 = vld [vmem:[%s489 + $0x20] sm:$0xff]
      %v500 = vld [vmem:[%s489 + $0x28] sm:$0xff]
      %v501 = vld [vmem:[%s489 + $0x30] sm:$0xff]
      %v502 = vld [vmem:[%s489 + $0x38] sm:$0xff]
      %v503 = vld [vmem:[%s489 + $0x40] sm:$0xff]
      %v504 = vld [vmem:[%s489 + $0x48] sm:$0xff]
      %v505 = vld [vmem:[%s489 + $0x50] sm:$0xff]
      %v506 = vld [vmem:[%s489 + $0x58] sm:$0xff]
      %v507 = vld [vmem:[%s489 + $0x60] sm:$0xff]
      %v508 = vld [vmem:[%s489 + $0x68] sm:$0xff]
      %v509 = vld [vmem:[%s489 + $0x70] sm:$0xff]
      %v510 = vld [vmem:[%s489 + $0x78] sm:$0xff]
      %v511 = vld [vmem:[%s489 + $0x80] sm:$0xff]
      %v512 = vld [vmem:[%s489 + $0x88] sm:$0xff]
      %v513 = vld [vmem:[%s489 + $0x90] sm:$0xff]
      %v514 = vld [vmem:[%s489 + $0x98] sm:$0xff]
      %v515 = vld [vmem:[%s489 + $0xa0] sm:$0xff]
      %v516 = vld [vmem:[%s489 + $0xa8] sm:$0xff]
      %v517 = vld [vmem:[%s489 + $0xb0] sm:$0xff]
      %v518 = vld [vmem:[%s489 + $0xb8] sm:$0xff]
      %v519 = vld [vmem:[%s489 + $0xc0] sm:$0xff]
      %v520 = vld [vmem:[%s489 + $0xc8] sm:$0xff]
      %v521 = vld [vmem:[%s489 + $0xd0] sm:$0xff]
      %v522 = vld [vmem:[%s489 + $0xd8] sm:$0xff]
      %v523 = vld [vmem:[%s489 + $0xe0] sm:$0xff]
      %v524 = vld [vmem:[%s489 + $0xe8] sm:$0xff]
      %v525 = vld [vmem:[%s489 + $0xf0] sm:$0xff]
      %v526 = vld [vmem:[%s489 + $0xf8] sm:$0xff]
      %vm560 = vcmask 1040384
      %v561 = vrot.slane 0.0, 7
      %v562 = vsel %vm560, %v561, %v561
      %v563 = vrot.slane %v495, 7
      %v564 = vrot.slane %v496, 7
      %v565 = vsel %vm560, %v563, %v564
      %v566 = vrot.slane %v497, 7
      %v567 = vrot.slane %v498, 7
      %v568 = vsel %vm560, %v566, %v567
      %v569 = vrot.slane %v499, 7
      %v570 = vrot.slane %v500, 7
      %v571 = vsel %vm560, %v569, %v570
      %v572 = vrot.slane %v501, 7
      %v573 = vrot.slane %v502, 7
      %v574 = vsel %vm560, %v572, %v573
      %v575 = vrot.slane %v503, 7
      %v576 = vrot.slane %v504, 7
      %v577 = vsel %vm560, %v575, %v576
      %v578 = vrot.slane %v505, 7
      %v579 = vrot.slane %v506, 7
      %v580 = vsel %vm560, %v578, %v579
      %v581 = vrot.slane %v507, 7
      %v582 = vrot.slane %v508, 7
      %v583 = vsel %vm560, %v581, %v582
      %v584 = vrot.slane %v509, 7
      %v585 = vrot.slane %v510, 7
      %v586 = vsel %vm560, %v584, %v585
      %v587 = vrot.slane %v511, 7
      %v588 = vrot.slane %v512, 7
      %v589 = vsel %vm560, %v587, %v588
      %v590 = vrot.slane %v513, 7
      %v591 = vrot.slane %v514, 7
      %v592 = vsel %vm560, %v590, %v591
      %v593 = vrot.slane %v515, 7
      %v594 = vrot.slane %v516, 7
      %v595 = vsel %vm560, %v593, %v594
      %v596 = vrot.slane %v517, 7
      %v597 = vrot.slane %v518, 7
      %v598 = vsel %vm560, %v596, %v597
      %v599 = vrot.slane %v519, 7
      %v600 = vrot.slane %v520, 7
      %v601 = vsel %vm560, %v599, %v600
      %v602 = vrot.slane %v521, 7
      %v603 = vrot.slane %v522, 7
      %v604 = vsel %vm560, %v602, %v603
      %v605 = vrot.slane %v523, 7
      %v606 = vrot.slane %v524, 7
      %v607 = vsel %vm560, %v605, %v606
      %v608 = vrot.slane %v525, 7
      %v609 = vrot.slane %v526, 7
      %v610 = vsel %vm560, %v608, %v609
      %v660 = vsel %vm560, 0.0, %v561
      %v661 = vsel %vm560, 0.0, %v563
      %v662 = vsel %vm560, 0.0, %v566
      %v663 = vsel %vm560, 0.0, %v569
      %v664 = vsel %vm560, 0.0, %v572
      %v665 = vsel %vm560, 0.0, %v575
      %v666 = vsel %vm560, 0.0, %v578
      %v667 = vsel %vm560, 0.0, %v581
      %v668 = vsel %vm560, 0.0, %v584
      %v669 = vsel %vm560, 0.0, %v587
      %v670 = vsel %vm560, 0.0, %v590
      %v671 = vsel %vm560, 0.0, %v593
      %v672 = vsel %vm560, 0.0, %v596
      %v673 = vsel %vm560, 0.0, %v599
      %v674 = vsel %vm560, 0.0, %v602
      %v675 = vsel %vm560, 0.0, %v605
      %v676 = vsel %vm560, 0.0, %v608
      %v677 = vsel %vm560, %v561, 0.0
      %v678 = vsel %vm560, %v564, 0.0
      %v679 = vsel %vm560, %v567, 0.0
      %v680 = vsel %vm560, %v570, 0.0
      %v681 = vsel %vm560, %v573, 0.0
      %v682 = vsel %vm560, %v576, 0.0
      %v683 = vsel %vm560, %v579, 0.0
      %v684 = vsel %vm560, %v582, 0.0
      %v685 = vsel %vm560, %v585, 0.0
      %v686 = vsel %vm560, %v588, 0.0
      %v687 = vsel %vm560, %v591, 0.0
      %v688 = vsel %vm560, %v594, 0.0
      %v689 = vsel %vm560, %v597, 0.0
      %v690 = vsel %vm560, %v600, 0.0
      %v691 = vsel %vm560, %v603, 0.0
      %v692 = vsel %vm560, %v606, 0.0
      %v693 = vsel %vm560, %v609, 0.0
      %vm726 = vcmask 1046528
      %v727 = vrot.slane %v660, 1
      %v728 = vrot.slane %v562, 1
      %v729 = vsel %vm726, %v727, %v728
      %v730 = vrot.slane %v677, 1
      %v731 = vsel %vm726, %v728, %v730
      %v732 = vrot.slane %v661, 1
      %v733 = vrot.slane %v565, 1
      %v734 = vsel %vm726, %v732, %v733
      %v735 = vrot.slane %v678, 1
      %v736 = vsel %vm726, %v733, %v735
      %v737 = vrot.slane %v662, 1
      %v738 = vrot.slane %v568, 1
      %v739 = vsel %vm726, %v737, %v738
      %v740 = vrot.slane %v679, 1
      %v741 = vsel %vm726, %v738, %v740
      %v742 = vrot.slane %v663, 1
      %v743 = vrot.slane %v571, 1
      %v744 = vsel %vm726, %v742, %v743
      %v745 = vrot.slane %v680, 1
      %v746 = vsel %vm726, %v743, %v745
      %v747 = vrot.slane %v664, 1
      %v748 = vrot.slane %v574, 1
      %v749 = vsel %vm726, %v747, %v748
      %v750 = vrot.slane %v681, 1
      %v751 = vsel %vm726, %v748, %v750
      %v752 = vrot.slane %v665, 1
      %v753 = vrot.slane %v577, 1
      %v754 = vsel %vm726, %v752, %v753
      %v755 = vrot.slane %v682, 1
      %v756 = vsel %vm726, %v753, %v755
      %v757 = vrot.slane %v666, 1
      %v758 = vrot.slane %v580, 1
      %v759 = vsel %vm726, %v757, %v758
      %v760 = vrot.slane %v683, 1
      %v761 = vsel %vm726, %v758, %v760
      %v762 = vrot.slane %v667, 1
      %v763 = vrot.slane %v583, 1
      %v764 = vsel %vm726, %v762, %v763
      %v765 = vrot.slane %v684, 1
      %v766 = vsel %vm726, %v763, %v765
      %v767 = vrot.slane %v668, 1
      %v768 = vrot.slane %v586, 1
      %v769 = vsel %vm726, %v767, %v768
      %v770 = vrot.slane %v685, 1
      %v771 = vsel %vm726, %v768, %v770
      %v772 = vrot.slane %v669, 1
      %v773 = vrot.slane %v589, 1
      %v774 = vsel %vm726, %v772, %v773
      %v775 = vrot.slane %v686, 1
      %v776 = vsel %vm726, %v773, %v775
      %v777 = vrot.slane %v670, 1
      %v778 = vrot.slane %v592, 1
      %v779 = vsel %vm726, %v777, %v778
      %v780 = vrot.slane %v687, 1
      %v781 = vsel %vm726, %v778, %v780
      %v782 = vrot.slane %v671, 1
      %v783 = vrot.slane %v595, 1
      %v784 = vsel %vm726, %v782, %v783
      %v785 = vrot.slane %v688, 1
      %v786 = vsel %vm726, %v783, %v785
      %v787 = vrot.slane %v672, 1
      %v788 = vrot.slane %v598, 1
      %v789 = vsel %vm726, %v787, %v788
      %v790 = vrot.slane %v689, 1
      %v791 = vsel %vm726, %v788, %v790
      %v792 = vrot.slane %v673, 1
      %v793 = vrot.slane %v601, 1
      %v794 = vsel %vm726, %v792, %v793
      %v795 = vrot.slane %v690, 1
      %v796 = vsel %vm726, %v793, %v795
      %v797 = vrot.slane %v674, 1
      %v798 = vrot.slane %v604, 1
      %v799 = vsel %vm726, %v797, %v798
      %v800 = vrot.slane %v691, 1
      %v801 = vsel %vm726, %v798, %v800
      %v802 = vrot.slane %v675, 1
      %v803 = vrot.slane %v607, 1
      %v804 = vsel %vm726, %v802, %v803
      %v805 = vrot.slane %v692, 1
      %v806 = vsel %vm726, %v803, %v805
      %807 = vrot.lane.b32.xlu0 %v729, 3
      %v808 = vpop.permute.xlu0 %807
      %809 = vrot.lane.b32.xlu0 %v731, 3
      %v810 = vpop.permute.xlu0 %809
      %811 = vrot.lane.b32.xlu0 %v734, 3
      %v812 = vpop.permute.xlu0 %811
      %813 = vrot.lane.b32.xlu0 %v736, 3
      %v814 = vpop.permute.xlu0 %813
      %815 = vrot.lane.b32.xlu0 %v739, 3
      %v816 = vpop.permute.xlu0 %815
      %817 = vrot.lane.b32.xlu0 %v741, 3
      %v818 = vpop.permute.xlu0 %817
      %819 = vrot.lane.b32.xlu0 %v744, 3
      %v820 = vpop.permute.xlu0 %819
      %821 = vrot.lane.b32.xlu0 %v746, 3
      %v822 = vpop.permute.xlu0 %821
      %823 = vrot.lane.b32.xlu0 %v749, 3
      %v824 = vpop.permute.xlu0 %823
      %825 = vrot.lane.b32.xlu0 %v751, 3
      %v826 = vpop.permute.xlu0 %825
      %827 = vrot.lane.b32.xlu0 %v754, 3
      %v828 = vpop.permute.xlu0 %827
      %829 = vrot.lane.b32.xlu0 %v756, 3
      %v830 = vpop.permute.xlu0 %829
      %831 = vrot.lane.b32.xlu0 %v759, 3
      %v832 = vpop.permute.xlu0 %831
      %833 = vrot.lane.b32.xlu0 %v761, 3
      %v834 = vpop.permute.xlu0 %833
      %835 = vrot.lane.b32.xlu0 %v764, 3
      %v836 = vpop.permute.xlu0 %835
      %837 = vrot.lane.b32.xlu0 %v766, 3
      %v838 = vpop.permute.xlu0 %837
      %839 = vrot.lane.b32.xlu0 %v769, 3
      %v840 = vpop.permute.xlu0 %839
      %841 = vrot.lane.b32.xlu0 %v771, 3
      %v842 = vpop.permute.xlu0 %841
      %843 = vrot.lane.b32.xlu0 %v774, 3
      %v844 = vpop.permute.xlu0 %843
      %845 = vrot.lane.b32.xlu0 %v776, 3
      %v846 = vpop.permute.xlu0 %845
      %847 = vrot.lane.b32.xlu0 %v779, 3
      %v848 = vpop.permute.xlu0 %847
      %849 = vrot.lane.b32.xlu0 %v781, 3
      %v850 = vpop.permute.xlu0 %849
      %851 = vrot.lane.b32.xlu0 %v784, 3
      %v852 = vpop.permute.xlu0 %851
      %853 = vrot.lane.b32.xlu0 %v786, 3
      %v854 = vpop.permute.xlu0 %853
      %855 = vrot.lane.b32.xlu0 %v789, 3
      %v856 = vpop.permute.xlu0 %855
      %857 = vrot.lane.b32.xlu0 %v791, 3
      %v858 = vpop.permute.xlu0 %857
      %859 = vrot.lane.b32.xlu0 %v794, 3
      %v860 = vpop.permute.xlu0 %859
      %861 = vrot.lane.b32.xlu0 %v796, 3
      %v862 = vpop.permute.xlu0 %861
      %863 = vrot.lane.b32.xlu0 %v799, 3
      %v864 = vpop.permute.xlu0 %863
      %865 = vrot.lane.b32.xlu0 %v801, 3
      %v866 = vpop.permute.xlu0 %865
      %867 = vrot.lane.b32.xlu0 %v804, 3
      %v868 = vpop.permute.xlu0 %867
      %869 = vrot.lane.b32.xlu0 %v806, 3
      %v870 = vpop.permute.xlu0 %869
      %vm903 = vcmask 1045504
      %v904 = vrot.slane %v660, 2
      %v905 = vrot.slane %v562, 2
      %v906 = vsel %vm903, %v904, %v905
      %v907 = vrot.slane %v677, 2
      %v908 = vsel %vm903, %v905, %v907
      %v909 = vrot.slane %v661, 2
      %v910 = vrot.slane %v565, 2
      %v911 = vsel %vm903, %v909, %v910
      %v912 = vrot.slane %v678, 2
      %v913 = vsel %vm903, %v910, %v912
      %v914 = vrot.slane %v662, 2
      %v915 = vrot.slane %v568, 2
      %v916 = vsel %vm903, %v914, %v915
      %v917 = vrot.slane %v679, 2
      %v918 = vsel %vm903, %v915, %v917
      %v919 = vrot.slane %v663, 2
      %v920 = vrot.slane %v571, 2
      %v921 = vsel %vm903, %v919, %v920
      %v922 = vrot.slane %v680, 2
      %v923 = vsel %vm903, %v920, %v922
      %v924 = vrot.slane %v664, 2
      %v925 = vrot.slane %v574, 2
      %v926 = vsel %vm903, %v924, %v925
      %v927 = vrot.slane %v681, 2
      %v928 = vsel %vm903, %v925, %v927
      %v929 = vrot.slane %v665, 2
      %v930 = vrot.slane %v577, 2
      %v931 = vsel %vm903, %v929, %v930
      %v932 = vrot.slane %v682, 2
      %v933 = vsel %vm903, %v930, %v932
      %v934 = vrot.slane %v666, 2
      %v935 = vrot.slane %v580, 2
      %v936 = vsel %vm903, %v934, %v935
      %v937 = vrot.slane %v683, 2
      %v938 = vsel %vm903, %v935, %v937
      %v939 = vrot.slane %v667, 2
      %v940 = vrot.slane %v583, 2
      %v941 = vsel %vm903, %v939, %v940
      %v942 = vrot.slane %v684, 2
      %v943 = vsel %vm903, %v940, %v942
      %v944 = vrot.slane %v668, 2
      %v945 = vrot.slane %v586, 2
      %v946 = vsel %vm903, %v944, %v945
      %v947 = vrot.slane %v685, 2
      %v948 = vsel %vm903, %v945, %v947
      %v949 = vrot.slane %v669, 2
      %v950 = vrot.slane %v589, 2
      %v951 = vsel %vm903, %v949, %v950
      %v952 = vrot.slane %v686, 2
      %v953 = vsel %vm903, %v950, %v952
      %v954 = vrot.slane %v670, 2
      %v955 = vrot.slane %v592, 2
      %v956 = vsel %vm903, %v954, %v955
      %v957 = vrot.slane %v687, 2
      %v958 = vsel %vm903, %v955, %v957
      %v959 = vrot.slane %v671, 2
      %v960 = vrot.slane %v595, 2
      %v961 = vsel %vm903, %v959, %v960
      %v962 = vrot.slane %v688, 2
      %v963 = vsel %vm903, %v960, %v962
      %v964 = vrot.slane %v672, 2
      %v965 = vrot.slane %v598, 2
      %v966 = vsel %vm903, %v964, %v965
      %v967 = vrot.slane %v689, 2
      %v968 = vsel %vm903, %v965, %v967
      %v969 = vrot.slane %v673, 2
      %v970 = vrot.slane %v601, 2
      %v971 = vsel %vm903, %v969, %v970
      %v972 = vrot.slane %v690, 2
      %v973 = vsel %vm903, %v970, %v972
      %v974 = vrot.slane %v674, 2
      %v975 = vrot.slane %v604, 2
      %v976 = vsel %vm903, %v974, %v975
      %v977 = vrot.slane %v691, 2
      %v978 = vsel %vm903, %v975, %v977
      %v979 = vrot.slane %v675, 2
      %v980 = vrot.slane %v607, 2
      %v981 = vsel %vm903, %v979, %v980
      %v982 = vrot.slane %v692, 2
      %v983 = vsel %vm903, %v980, %v982
      %984 = vrot.lane.b32.xlu0 %v906, 6
      %v985 = vpop.permute.xlu0 %984
      %986 = vrot.lane.b32.xlu0 %v908, 6
      %v987 = vpop.permute.xlu0 %986
      %988 = vrot.lane.b32.xlu0 %v911, 6
      %v989 = vpop.permute.xlu0 %988
      %990 = vrot.lane.b32.xlu0 %v913, 6
      %v991 = vpop.permute.xlu0 %990
      %992 = vrot.lane.b32.xlu0 %v916, 6
      %v993 = vpop.permute.xlu0 %992
      %994 = vrot.lane.b32.xlu0 %v918, 6
      %v995 = vpop.permute.xlu0 %994
      %996 = vrot.lane.b32.xlu0 %v921, 6
      %v997 = vpop.permute.xlu0 %996
      %998 = vrot.lane.b32.xlu0 %v923, 6
      %v999 = vpop.permute.xlu0 %998
      %1000 = vrot.lane.b32.xlu0 %v926, 6
      %v1001 = vpop.permute.xlu0 %1000
      %1002 = vrot.lane.b32.xlu0 %v928, 6
      %v1003 = vpop.permute.xlu0 %1002
      %1004 = vrot.lane.b32.xlu0 %v931, 6
      %v1005 = vpop.permute.xlu0 %1004
      %1006 = vrot.lane.b32.xlu0 %v933, 6
      %v1007 = vpop.permute.xlu0 %1006
      %1008 = vrot.lane.b32.xlu0 %v936, 6
      %v1009 = vpop.permute.xlu0 %1008
      %1010 = vrot.lane.b32.xlu0 %v938, 6
      %v1011 = vpop.permute.xlu0 %1010
      %1012 = vrot.lane.b32.xlu0 %v941, 6
      %v1013 = vpop.permute.xlu0 %1012
      %1014 = vrot.lane.b32.xlu0 %v943, 6
      %v1015 = vpop.permute.xlu0 %1014
      %1016 = vrot.lane.b32.xlu0 %v946, 6
      %v1017 = vpop.permute.xlu0 %1016
      %1018 = vrot.lane.b32.xlu0 %v948, 6
      %v1019 = vpop.permute.xlu0 %1018
      %1020 = vrot.lane.b32.xlu0 %v951, 6
      %v1021 = vpop.permute.xlu0 %1020
      %1022 = vrot.lane.b32.xlu0 %v953, 6
      %v1023 = vpop.permute.xlu0 %1022
      %1024 = vrot.lane.b32.xlu0 %v956, 6
      %v1025 = vpop.permute.xlu0 %1024
      %1026 = vrot.lane.b32.xlu0 %v958, 6
      %v1027 = vpop.permute.xlu0 %1026
      %1028 = vrot.lane.b32.xlu0 %v961, 6
      %v1029 = vpop.permute.xlu0 %1028
      %1030 = vrot.lane.b32.xlu0 %v963, 6
      %v1031 = vpop.permute.xlu0 %1030
      %1032 = vrot.lane.b32.xlu0 %v966, 6
      %v1033 = vpop.permute.xlu0 %1032
      %1034 = vrot.lane.b32.xlu0 %v968, 6
      %v1035 = vpop.permute.xlu0 %1034
      %1036 = vrot.lane.b32.xlu0 %v971, 6
      %v1037 = vpop.permute.xlu0 %1036
      %1038 = vrot.lane.b32.xlu0 %v973, 6
      %v1039 = vpop.permute.xlu0 %1038
      %1040 = vrot.lane.b32.xlu0 %v976, 6
      %v1041 = vpop.permute.xlu0 %1040
      %1042 = vrot.lane.b32.xlu0 %v978, 6
      %v1043 = vpop.permute.xlu0 %1042
      %1044 = vrot.lane.b32.xlu0 %v981, 6
      %v1045 = vpop.permute.xlu0 %1044
      %1046 = vrot.lane.b32.xlu0 %v983, 6
      %v1047 = vpop.permute.xlu0 %1046
      %1081 = vrot.lane.b32.xlu0 %v661, 9
      %v1082 = vpop.permute.xlu0 %1081
      %1083 = vrot.lane.b32.xlu0 %v565, 9
      %v1084 = vpop.permute.xlu0 %1083
      %1085 = vrot.lane.b32.xlu0 %v662, 9
      %v1086 = vpop.permute.xlu0 %1085
      %1087 = vrot.lane.b32.xlu0 %v568, 9
      %v1088 = vpop.permute.xlu0 %1087
      %1089 = vrot.lane.b32.xlu0 %v663, 9
      %v1090 = vpop.permute.xlu0 %1089
      %1091 = vrot.lane.b32.xlu0 %v571, 9
      %v1092 = vpop.permute.xlu0 %1091
      %1093 = vrot.lane.b32.xlu0 %v664, 9
      %v1094 = vpop.permute.xlu0 %1093
      %1095 = vrot.lane.b32.xlu0 %v574, 9
      %v1096 = vpop.permute.xlu0 %1095
      %1097 = vrot.lane.b32.xlu0 %v665, 9
      %v1098 = vpop.permute.xlu0 %1097
      %1099 = vrot.lane.b32.xlu0 %v577, 9
      %v1100 = vpop.permute.xlu0 %1099
      %1101 = vrot.lane.b32.xlu0 %v666, 9
      %v1102 = vpop.permute.xlu0 %1101
      %1103 = vrot.lane.b32.xlu0 %v580, 9
      %v1104 = vpop.permute.xlu0 %1103
      %1105 = vrot.lane.b32.xlu0 %v667, 9
      %v1106 = vpop.permute.xlu0 %1105
      %1107 = vrot.lane.b32.xlu0 %v583, 9
      %v1108 = vpop.permute.xlu0 %1107
      %1109 = vrot.lane.b32.xlu0 %v668, 9
      %v1110 = vpop.permute.xlu0 %1109
      %1111 = vrot.lane.b32.xlu0 %v586, 9
      %v1112 = vpop.permute.xlu0 %1111
      %1113 = vrot.lane.b32.xlu0 %v669, 9
      %v1114 = vpop.permute.xlu0 %1113
      %1115 = vrot.lane.b32.xlu0 %v589, 9
      %v1116 = vpop.permute.xlu0 %1115
      %1117 = vrot.lane.b32.xlu0 %v670, 9
      %v1118 = vpop.permute.xlu0 %1117
      %1119 = vrot.lane.b32.xlu0 %v592, 9
      %v1120 = vpop.permute.xlu0 %1119
      %1121 = vrot.lane.b32.xlu0 %v671, 9
      %v1122 = vpop.permute.xlu0 %1121
      %1123 = vrot.lane.b32.xlu0 %v595, 9
      %v1124 = vpop.permute.xlu0 %1123
      %1125 = vrot.lane.b32.xlu0 %v672, 9
      %v1126 = vpop.permute.xlu0 %1125
      %1127 = vrot.lane.b32.xlu0 %v598, 9
      %v1128 = vpop.permute.xlu0 %1127
      %1129 = vrot.lane.b32.xlu0 %v673, 9
      %v1130 = vpop.permute.xlu0 %1129
      %1131 = vrot.lane.b32.xlu0 %v601, 9
      %v1132 = vpop.permute.xlu0 %1131
      %1133 = vrot.lane.b32.xlu0 %v674, 9
      %v1134 = vpop.permute.xlu0 %1133
      %1135 = vrot.lane.b32.xlu0 %v604, 9
      %v1136 = vpop.permute.xlu0 %1135
      %1137 = vrot.lane.b32.xlu0 %v675, 9
      %v1138 = vpop.permute.xlu0 %1137
      %1139 = vrot.lane.b32.xlu0 %v607, 9
      %v1140 = vpop.permute.xlu0 %1139
      %1141 = vrot.lane.b32.xlu0 %v676, 9
      %v1142 = vpop.permute.xlu0 %1141
      %1143 = vrot.lane.b32.xlu0 %v610, 9
      %v1144 = vpop.permute.xlu0 %1143
      %v1178 = vrot.slane %v676, 1
      %v1179 = vrot.slane %v610, 1
      %v1180 = vsel %vm726, %v1178, %v1179
      %v1181 = vrot.slane %v693, 1
      %v1182 = vsel %vm726, %v1179, %v1181
      %1183 = vrot.lane.b32.xlu0 %v734, 12
      %v1184 = vpop.permute.xlu0 %1183
      %1185 = vrot.lane.b32.xlu0 %v736, 12
      %v1186 = vpop.permute.xlu0 %1185
      %1187 = vrot.lane.b32.xlu0 %v739, 12
      %v1188 = vpop.permute.xlu0 %1187
      %1189 = vrot.lane.b32.xlu0 %v741, 12
      %v1190 = vpop.permute.xlu0 %1189
      %1191 = vrot.lane.b32.xlu0 %v744, 12
      %v1192 = vpop.permute.xlu0 %1191
      %1193 = vrot.lane.b32.xlu0 %v746, 12
      %v1194 = vpop.permute.xlu0 %1193
      %1195 = vrot.lane.b32.xlu0 %v749, 12
      %v1196 = vpop.permute.xlu0 %1195
      %1197 = vrot.lane.b32.xlu0 %v751, 12
      %v1198 = vpop.permute.xlu0 %1197
      %1199 = vrot.lane.b32.xlu0 %v754, 12
      %v1200 = vpop.permute.xlu0 %1199
      %1201 = vrot.lane.b32.xlu0 %v756, 12
      %v1202 = vpop.permute.xlu0 %1201
      %1203 = vrot.lane.b32.xlu0 %v759, 12
      %v1204 = vpop.permute.xlu0 %1203
      %1205 = vrot.lane.b32.xlu0 %v761, 12
      %v1206 = vpop.permute.xlu0 %1205
      %1207 = vrot.lane.b32.xlu0 %v764, 12
      %v1208 = vpop.permute.xlu0 %1207
      %1209 = vrot.lane.b32.xlu0 %v766, 12
      %v1210 = vpop.permute.xlu0 %1209
      %1211 = vrot.lane.b32.xlu0 %v769, 12
      %v1212 = vpop.permute.xlu0 %1211
      %1213 = vrot.lane.b32.xlu0 %v771, 12
      %v1214 = vpop.permute.xlu0 %1213
      %1215 = vrot.lane.b32.xlu0 %v774, 12
      %v1216 = vpop.permute.xlu0 %1215
      %1217 = vrot.lane.b32.xlu0 %v776, 12
      %v1218 = vpop.permute.xlu0 %1217
      %1219 = vrot.lane.b32.xlu0 %v779, 12
      %v1220 = vpop.permute.xlu0 %1219
      %1221 = vrot.lane.b32.xlu0 %v781, 12
      %v1222 = vpop.permute.xlu0 %1221
      %1223 = vrot.lane.b32.xlu0 %v784, 12
      %v1224 = vpop.permute.xlu0 %1223
      %1225 = vrot.lane.b32.xlu0 %v786, 12
      %v1226 = vpop.permute.xlu0 %1225
      %1227 = vrot.lane.b32.xlu0 %v789, 12
      %v1228 = vpop.permute.xlu0 %1227
      %1229 = vrot.lane.b32.xlu0 %v791, 12
      %v1230 = vpop.permute.xlu0 %1229
      %1231 = vrot.lane.b32.xlu0 %v794, 12
      %v1232 = vpop.permute.xlu0 %1231
      %1233 = vrot.lane.b32.xlu0 %v796, 12
      %v1234 = vpop.permute.xlu0 %1233
      %1235 = vrot.lane.b32.xlu0 %v799, 12
      %v1236 = vpop.permute.xlu0 %1235
      %1237 = vrot.lane.b32.xlu0 %v801, 12
      %v1238 = vpop.permute.xlu0 %1237
      %1239 = vrot.lane.b32.xlu0 %v804, 12
      %v1240 = vpop.permute.xlu0 %1239
      %1241 = vrot.lane.b32.xlu0 %v806, 12
      %v1242 = vpop.permute.xlu0 %1241
      %1243 = vrot.lane.b32.xlu0 %v1180, 12
      %v1244 = vpop.permute.xlu0 %1243
      %1245 = vrot.lane.b32.xlu0 %v1182, 12
      %v1246 = vpop.permute.xlu0 %1245
      %v1279 = vrot.slane %v676, 2
      %v1280 = vrot.slane %v610, 2
      %v1281 = vsel %vm903, %v1279, %v1280
      %v1282 = vrot.slane %v693, 2
      %v1283 = vsel %vm903, %v1280, %v1282
      %1284 = vrot.lane.b32.xlu0 %v911, 15
      %v1285 = vpop.permute.xlu0 %1284
      %1286 = vrot.lane.b32.xlu0 %v913, 15
      %v1287 = vpop.permute.xlu0 %1286
      %1288 = vrot.lane.b32.xlu0 %v916, 15
      %v1289 = vpop.permute.xlu0 %1288
      %1290 = vrot.lane.b32.xlu0 %v918, 15
      %v1291 = vpop.permute.xlu0 %1290
      %1292 = vrot.lane.b32.xlu0 %v921, 15
      %v1293 = vpop.permute.xlu0 %1292
      %1294 = vrot.lane.b32.xlu0 %v923, 15
      %v1295 = vpop.permute.xlu0 %1294
      %1296 = vrot.lane.b32.xlu0 %v926, 15
      %v1297 = vpop.permute.xlu0 %1296
      %1298 = vrot.lane.b32.xlu0 %v928, 15
      %v1299 = vpop.permute.xlu0 %1298
      %1300 = vrot.lane.b32.xlu0 %v931, 15
      %v1301 = vpop.permute.xlu0 %1300
      %1302 = vrot.lane.b32.xlu0 %v933, 15
      %v1303 = vpop.permute.xlu0 %1302
      %1304 = vrot.lane.b32.xlu0 %v936, 15
      %v1305 = vpop.permute.xlu0 %1304
      %1306 = vrot.lane.b32.xlu0 %v938, 15
      %v1307 = vpop.permute.xlu0 %1306
      %1308 = vrot.lane.b32.xlu0 %v941, 15
      %v1309 = vpop.permute.xlu0 %1308
      %1310 = vrot.lane.b32.xlu0 %v943, 15
      %v1311 = vpop.permute.xlu0 %1310
      %1312 = vrot.lane.b32.xlu0 %v946, 15
      %v1313 = vpop.permute.xlu0 %1312
      %1314 = vrot.lane.b32.xlu0 %v948, 15
      %v1315 = vpop.permute.xlu0 %1314
      %1316 = vrot.lane.b32.xlu0 %v951, 15
      %v1317 = vpop.permute.xlu0 %1316
      %1318 = vrot.lane.b32.xlu0 %v953, 15
      %v1319 = vpop.permute.xlu0 %1318
      %1320 = vrot.lane.b32.xlu0 %v956, 15
      %v1321 = vpop.permute.xlu0 %1320
      %1322 = vrot.lane.b32.xlu0 %v958, 15
      %v1323 = vpop.permute.xlu0 %1322
      %1324 = vrot.lane.b32.xlu0 %v961, 15
      %v1325 = vpop.permute.xlu0 %1324
      %1326 = vrot.lane.b32.xlu0 %v963, 15
      %v1327 = vpop.permute.xlu0 %1326
      %1328 = vrot.lane.b32.xlu0 %v966, 15
      %v1329 = vpop.permute.xlu0 %1328
      %1330 = vrot.lane.b32.xlu0 %v968, 15
      %v1331 = vpop.permute.xlu0 %1330
      %1332 = vrot.lane.b32.xlu0 %v971, 15
      %v1333 = vpop.permute.xlu0 %1332
      %1334 = vrot.lane.b32.xlu0 %v973, 15
      %v1335 = vpop.permute.xlu0 %1334
      %1336 = vrot.lane.b32.xlu0 %v976, 15
      %v1337 = vpop.permute.xlu0 %1336
      %1338 = vrot.lane.b32.xlu0 %v978, 15
      %v1339 = vpop.permute.xlu0 %1338
      %1340 = vrot.lane.b32.xlu0 %v981, 15
      %v1341 = vpop.permute.xlu0 %1340
      %1342 = vrot.lane.b32.xlu0 %v983, 15
      %v1343 = vpop.permute.xlu0 %1342
      %1344 = vrot.lane.b32.xlu0 %v1281, 15
      %v1345 = vpop.permute.xlu0 %1344
      %1346 = vrot.lane.b32.xlu0 %v1283, 15
      %v1347 = vpop.permute.xlu0 %1346
      %1380 = vrot.lane.b32.xlu0 %v662, 18
      %v1381 = vpop.permute.xlu0 %1380
      %1382 = vrot.lane.b32.xlu0 %v568, 18
      %v1383 = vpop.permute.xlu0 %1382
      %1384 = vrot.lane.b32.xlu0 %v663, 18
      %v1385 = vpop.permute.xlu0 %1384
      %1386 = vrot.lane.b32.xlu0 %v571, 18
      %v1387 = vpop.permute.xlu0 %1386
      %1388 = vrot.lane.b32.xlu0 %v664, 18
      %v1389 = vpop.permute.xlu0 %1388
      %1390 = vrot.lane.b32.xlu0 %v574, 18
      %v1391 = vpop.permute.xlu0 %1390
      %1392 = vrot.lane.b32.xlu0 %v665, 18
      %v1393 = vpop.permute.xlu0 %1392
      %1394 = vrot.lane.b32.xlu0 %v577, 18
      %v1395 = vpop.permute.xlu0 %1394
      %1396 = vrot.lane.b32.xlu0 %v666, 18
      %v1397 = vpop.permute.xlu0 %1396
      %1398 = vrot.lane.b32.xlu0 %v580, 18
      %v1399 = vpop.permute.xlu0 %1398
      %1400 = vrot.lane.b32.xlu0 %v667, 18
      %v1401 = vpop.permute.xlu0 %1400
      %1402 = vrot.lane.b32.xlu0 %v583, 18
      %v1403 = vpop.permute.xlu0 %1402
      %1404 = vrot.lane.b32.xlu0 %v668, 18
      %v1405 = vpop.permute.xlu0 %1404
      %1406 = vrot.lane.b32.xlu0 %v586, 18
      %v1407 = vpop.permute.xlu0 %1406
      %1408 = vrot.lane.b32.xlu0 %v669, 18
      %v1409 = vpop.permute.xlu0 %1408
      %1410 = vrot.lane.b32.xlu0 %v589, 18
      %v1411 = vpop.permute.xlu0 %1410
      %1412 = vrot.lane.b32.xlu0 %v670, 18
      %v1413 = vpop.permute.xlu0 %1412
      %1414 = vrot.lane.b32.xlu0 %v592, 18
      %v1415 = vpop.permute.xlu0 %1414
      %1416 = vrot.lane.b32.xlu0 %v671, 18
      %v1417 = vpop.permute.xlu0 %1416
      %1418 = vrot.lane.b32.xlu0 %v595, 18
      %v1419 = vpop.permute.xlu0 %1418
      %1420 = vrot.lane.b32.xlu0 %v672, 18
      %v1421 = vpop.permute.xlu0 %1420
      %1422 = vrot.lane.b32.xlu0 %v598, 18
      %v1423 = vpop.permute.xlu0 %1422
      %1424 = vrot.lane.b32.xlu0 %v673, 18
      %v1425 = vpop.permute.xlu0 %1424
      %1426 = vrot.lane.b32.xlu0 %v601, 18
      %v1427 = vpop.permute.xlu0 %1426
      %1428 = vrot.lane.b32.xlu0 %v674, 18
      %v1429 = vpop.permute.xlu0 %1428
      %1430 = vrot.lane.b32.xlu0 %v604, 18
      %v1431 = vpop.permute.xlu0 %1430
      %1432 = vrot.lane.b32.xlu0 %v675, 18
      %v1433 = vpop.permute.xlu0 %1432
      %1434 = vrot.lane.b32.xlu0 %v607, 18
      %v1435 = vpop.permute.xlu0 %1434
      %1436 = vrot.lane.b32.xlu0 %v676, 18
      %v1437 = vpop.permute.xlu0 %1436
      %1438 = vrot.lane.b32.xlu0 %v610, 18
      %v1439 = vpop.permute.xlu0 %1438
      %1440 = vrot.lane.b32.xlu0 %v660, 18
      %v1441 = vpop.permute.xlu0 %1440
      %1442 = vrot.lane.b32.xlu0 %v562, 18
      %v1443 = vpop.permute.xlu0 %1442
      %1476 = vrot.lane.b32.xlu0 %v739, 21
      %v1477 = vpop.permute.xlu0 %1476
      %1478 = vrot.lane.b32.xlu0 %v741, 21
      %v1479 = vpop.permute.xlu0 %1478
      %1480 = vrot.lane.b32.xlu0 %v744, 21
      %v1481 = vpop.permute.xlu0 %1480
      %1482 = vrot.lane.b32.xlu0 %v746, 21
      %v1483 = vpop.permute.xlu0 %1482
      %1484 = vrot.lane.b32.xlu0 %v749, 21
      %v1485 = vpop.permute.xlu0 %1484
      %1486 = vrot.lane.b32.xlu0 %v751, 21
      %v1487 = vpop.permute.xlu0 %1486
      %1488 = vrot.lane.b32.xlu0 %v754, 21
      %v1489 = vpop.permute.xlu0 %1488
      %1490 = vrot.lane.b32.xlu0 %v756, 21
      %v1491 = vpop.permute.xlu0 %1490
      %1492 = vrot.lane.b32.xlu0 %v759, 21
      %v1493 = vpop.permute.xlu0 %1492
      %1494 = vrot.lane.b32.xlu0 %v761, 21
      %v1495 = vpop.permute.xlu0 %1494
      %1496 = vrot.lane.b32.xlu0 %v764, 21
      %v1497 = vpop.permute.xlu0 %1496
      %1498 = vrot.lane.b32.xlu0 %v766, 21
      %v1499 = vpop.permute.xlu0 %1498
      %1500 = vrot.lane.b32.xlu0 %v769, 21
      %v1501 = vpop.permute.xlu0 %1500
      %1502 = vrot.lane.b32.xlu0 %v771, 21
      %v1503 = vpop.permute.xlu0 %1502
      %1504 = vrot.lane.b32.xlu0 %v774, 21
      %v1505 = vpop.permute.xlu0 %1504
      %1506 = vrot.lane.b32.xlu0 %v776, 21
      %v1507 = vpop.permute.xlu0 %1506
      %1508 = vrot.lane.b32.xlu0 %v779, 21
      %v1509 = vpop.permute.xlu0 %1508
      %1510 = vrot.lane.b32.xlu0 %v781, 21
      %v1511 = vpop.permute.xlu0 %1510
      %1512 = vrot.lane.b32.xlu0 %v784, 21
      %v1513 = vpop.permute.xlu0 %1512
      %1514 = vrot.lane.b32.xlu0 %v786, 21
      %v1515 = vpop.permute.xlu0 %1514
      %1516 = vrot.lane.b32.xlu0 %v789, 21
      %v1517 = vpop.permute.xlu0 %1516
      %1518 = vrot.lane.b32.xlu0 %v791, 21
      %v1519 = vpop.permute.xlu0 %1518
      %1520 = vrot.lane.b32.xlu0 %v794, 21
      %v1521 = vpop.permute.xlu0 %1520
      %1522 = vrot.lane.b32.xlu0 %v796, 21
      %v1523 = vpop.permute.xlu0 %1522
      %1524 = vrot.lane.b32.xlu0 %v799, 21
      %v1525 = vpop.permute.xlu0 %1524
      %1526 = vrot.lane.b32.xlu0 %v801, 21
      %v1527 = vpop.permute.xlu0 %1526
      %1528 = vrot.lane.b32.xlu0 %v804, 21
      %v1529 = vpop.permute.xlu0 %1528
      %1530 = vrot.lane.b32.xlu0 %v806, 21
      %v1531 = vpop.permute.xlu0 %1530
      %1532 = vrot.lane.b32.xlu0 %v1180, 21
      %v1533 = vpop.permute.xlu0 %1532
      %1534 = vrot.lane.b32.xlu0 %v1182, 21
      %v1535 = vpop.permute.xlu0 %1534
      %1536 = vrot.lane.b32.xlu0 %v729, 21
      %v1537 = vpop.permute.xlu0 %1536
      %1538 = vrot.lane.b32.xlu0 %v731, 21
      %v1539 = vpop.permute.xlu0 %1538
      %1572 = vrot.lane.b32.xlu0 %v916, 24
      %v1573 = vpop.permute.xlu0 %1572
      %1574 = vrot.lane.b32.xlu0 %v918, 24
      %v1575 = vpop.permute.xlu0 %1574
      %1576 = vrot.lane.b32.xlu0 %v921, 24
      %v1577 = vpop.permute.xlu0 %1576
      %1578 = vrot.lane.b32.xlu0 %v923, 24
      %v1579 = vpop.permute.xlu0 %1578
      %1580 = vrot.lane.b32.xlu0 %v926, 24
      %v1581 = vpop.permute.xlu0 %1580
      %1582 = vrot.lane.b32.xlu0 %v928, 24
      %v1583 = vpop.permute.xlu0 %1582
      %1584 = vrot.lane.b32.xlu0 %v931, 24
      %v1585 = vpop.permute.xlu0 %1584
      %1586 = vrot.lane.b32.xlu0 %v933, 24
      %v1587 = vpop.permute.xlu0 %1586
      %1588 = vrot.lane.b32.xlu0 %v936, 24
      %v1589 = vpop.permute.xlu0 %1588
      %1590 = vrot.lane.b32.xlu0 %v938, 24
      %v1591 = vpop.permute.xlu0 %1590
      %1592 = vrot.lane.b32.xlu0 %v941, 24
      %v1593 = vpop.permute.xlu0 %1592
      %1594 = vrot.lane.b32.xlu0 %v943, 24
      %v1595 = vpop.permute.xlu0 %1594
      %1596 = vrot.lane.b32.xlu0 %v946, 24
      %v1597 = vpop.permute.xlu0 %1596
      %1598 = vrot.lane.b32.xlu0 %v948, 24
      %v1599 = vpop.permute.xlu0 %1598
      %1600 = vrot.lane.b32.xlu0 %v951, 24
      %v1601 = vpop.permute.xlu0 %1600
      %1602 = vrot.lane.b32.xlu0 %v953, 24
      %v1603 = vpop.permute.xlu0 %1602
      %1604 = vrot.lane.b32.xlu0 %v956, 24
      %v1605 = vpop.permute.xlu0 %1604
      %1606 = vrot.lane.b32.xlu0 %v958, 24
      %v1607 = vpop.permute.xlu0 %1606
      %1608 = vrot.lane.b32.xlu0 %v961, 24
      %v1609 = vpop.permute.xlu0 %1608
      %1610 = vrot.lane.b32.xlu0 %v963, 24
      %v1611 = vpop.permute.xlu0 %1610
      %1612 = vrot.lane.b32.xlu0 %v966, 24
      %v1613 = vpop.permute.xlu0 %1612
      %1614 = vrot.lane.b32.xlu0 %v968, 24
      %v1615 = vpop.permute.xlu0 %1614
      %1616 = vrot.lane.b32.xlu0 %v971, 24
      %v1617 = vpop.permute.xlu0 %1616
      %1618 = vrot.lane.b32.xlu0 %v973, 24
      %v1619 = vpop.permute.xlu0 %1618
      %1620 = vrot.lane.b32.xlu0 %v976, 24
      %v1621 = vpop.permute.xlu0 %1620
      %1622 = vrot.lane.b32.xlu0 %v978, 24
      %v1623 = vpop.permute.xlu0 %1622
      %1624 = vrot.lane.b32.xlu0 %v981, 24
      %v1625 = vpop.permute.xlu0 %1624
      %1626 = vrot.lane.b32.xlu0 %v983, 24
      %v1627 = vpop.permute.xlu0 %1626
      %1628 = vrot.lane.b32.xlu0 %v1281, 24
      %v1629 = vpop.permute.xlu0 %1628
      %1630 = vrot.lane.b32.xlu0 %v1283, 24
      %v1631 = vpop.permute.xlu0 %1630
      %1632 = vrot.lane.b32.xlu0 %v906, 24
      %v1633 = vpop.permute.xlu0 %1632
      %1634 = vrot.lane.b32.xlu0 %v908, 24
      %v1635 = vpop.permute.xlu0 %1634
      %vm1668 = vcmask 23552
      %v1669 = vsel %vm1668, %v660, %v808
      %v1670 = vsel %vm1668, %v562, %v810
      %v1671 = vsel %vm1668, %v661, %v812
      %v1672 = vsel %vm1668, %v565, %v814
      %v1673 = vsel %vm1668, %v662, %v816
      %v1674 = vsel %vm1668, %v568, %v818
      %v1675 = vsel %vm1668, %v663, %v820
      %v1676 = vsel %vm1668, %v571, %v822
      %v1677 = vsel %vm1668, %v664, %v824
      %v1678 = vsel %vm1668, %v574, %v826
      %v1679 = vsel %vm1668, %v665, %v828
      %v1680 = vsel %vm1668, %v577, %v830
      %v1681 = vsel %vm1668, %v666, %v832
      %v1682 = vsel %vm1668, %v580, %v834
      %v1683 = vsel %vm1668, %v667, %v836
      %v1684 = vsel %vm1668, %v583, %v838
      %v1685 = vsel %vm1668, %v668, %v840
      %v1686 = vsel %vm1668, %v586, %v842
      %v1687 = vsel %vm1668, %v669, %v844
      %v1688 = vsel %vm1668, %v589, %v846
      %v1689 = vsel %vm1668, %v670, %v848
      %v1690 = vsel %vm1668, %v592, %v850
      %v1691 = vsel %vm1668, %v671, %v852
      %v1692 = vsel %vm1668, %v595, %v854
      %v1693 = vsel %vm1668, %v672, %v856
      %v1694 = vsel %vm1668, %v598, %v858
      %v1695 = vsel %vm1668, %v673, %v860
      %v1696 = vsel %vm1668, %v601, %v862
      %v1697 = vsel %vm1668, %v674, %v864
      %v1698 = vsel %vm1668, %v604, %v866
      %v1699 = vsel %vm1668, %v675, %v868
      %v1700 = vsel %vm1668, %v607, %v870
      %vm1701 = vcmask 48128
      %v1702 = vsel %vm1701, %v1669, %v985
      %v1703 = vsel %vm1701, %v1670, %v987
      %v1704 = vsel %vm1701, %v1671, %v989
      %v1705 = vsel %vm1701, %v1672, %v991
      %v1706 = vsel %vm1701, %v1673, %v993
      %v1707 = vsel %vm1701, %v1674, %v995
      %v1708 = vsel %vm1701, %v1675, %v997
      %v1709 = vsel %vm1701, %v1676, %v999
      %v1710 = vsel %vm1701, %v1677, %v1001
      %v1711 = vsel %vm1701, %v1678, %v1003
      %v1712 = vsel %vm1701, %v1679, %v1005
      %v1713 = vsel %vm1701, %v1680, %v1007
      %v1714 = vsel %vm1701, %v1681, %v1009
      %v1715 = vsel %vm1701, %v1682, %v1011
      %v1716 = vsel %vm1701, %v1683, %v1013
      %v1717 = vsel %vm1701, %v1684, %v1015
      %v1718 = vsel %vm1701, %v1685, %v1017
      %v1719 = vsel %vm1701, %v1686, %v1019
      %v1720 = vsel %vm1701, %v1687, %v1021
      %v1721 = vsel %vm1701, %v1688, %v1023
      %v1722 = vsel %vm1701, %v1689, %v1025
      %v1723 = vsel %vm1701, %v1690, %v1027
      %v1724 = vsel %vm1701, %v1691, %v1029
      %v1725 = vsel %vm1701, %v1692, %v1031
      %v1726 = vsel %vm1701, %v1693, %v1033
      %v1727 = vsel %vm1701, %v1694, %v1035
      %v1728 = vsel %vm1701, %v1695, %v1037
      %v1729 = vsel %vm1701, %v1696, %v1039
      %v1730 = vsel %vm1701, %v1697, %v1041
      %v1731 = vsel %vm1701, %v1698, %v1043
      %v1732 = vsel %vm1701, %v1699, %v1045
      %v1733 = vsel %vm1701, %v1700, %v1047
      %vm1734 = vcmask 72704
      %v1735 = vsel %vm1734, %v1702, %v1082
      %v1736 = vsel %vm1734, %v1703, %v1084
      %v1737 = vsel %vm1734, %v1704, %v1086
      %v1738 = vsel %vm1734, %v1705, %v1088
      %v1739 = vsel %vm1734, %v1706, %v1090
      %v1740 = vsel %vm1734, %v1707, %v1092
      %v1741 = vsel %vm1734, %v1708, %v1094
      %v1742 = vsel %vm1734, %v1709, %v1096
      %v1743 = vsel %vm1734, %v1710, %v1098
      %v1744 = vsel %vm1734, %v1711, %v1100
      %v1745 = vsel %vm1734, %v1712, %v1102
      %v1746 = vsel %vm1734, %v1713, %v1104
      %v1747 = vsel %vm1734, %v1714, %v1106
      %v1748 = vsel %vm1734, %v1715, %v1108
      %v1749 = vsel %vm1734, %v1716, %v1110
      %v1750 = vsel %vm1734, %v1717, %v1112
      %v1751 = vsel %vm1734, %v1718, %v1114
      %v1752 = vsel %vm1734, %v1719, %v1116
      %v1753 = vsel %vm1734, %v1720, %v1118
      %v1754 = vsel %vm1734, %v1721, %v1120
      %v1755 = vsel %vm1734, %v1722, %v1122
      %v1756 = vsel %vm1734, %v1723, %v1124
      %v1757 = vsel %vm1734, %v1724, %v1126
      %v1758 = vsel %vm1734, %v1725, %v1128
      %v1759 = vsel %vm1734, %v1726, %v1130
      %v1760 = vsel %vm1734, %v1727, %v1132
      %v1761 = vsel %vm1734, %v1728, %v1134
      %v1762 = vsel %vm1734, %v1729, %v1136
      %v1763 = vsel %vm1734, %v1730, %v1138
      %v1764 = vsel %vm1734, %v1731, %v1140
      %v1765 = vsel %vm1734, %v1732, %v1142
      %v1766 = vsel %vm1734, %v1733, %v1144
      %vm1767 = vcmask 97280
      %v1768 = vsel %vm1767, %v1735, %v1184
      %v1769 = vsel %vm1767, %v1736, %v1186
      %v1770 = vsel %vm1767, %v1737, %v1188
      %v1771 = vsel %vm1767, %v1738, %v1190
      %v1772 = vsel %vm1767, %v1739, %v1192
      %v1773 = vsel %vm1767, %v1740, %v1194
      %v1774 = vsel %vm1767, %v1741, %v1196
      %v1775 = vsel %vm1767, %v1742, %v1198
      %v1776 = vsel %vm1767, %v1743, %v1200
      %v1777 = vsel %vm1767, %v1744, %v1202
      %v1778 = vsel %vm1767, %v1745, %v1204
      %v1779 = vsel %vm1767, %v1746, %v1206
      %v1780 = vsel %vm1767, %v1747, %v1208
      %v1781 = vsel %vm1767, %v1748, %v1210
      %v1782 = vsel %vm1767, %v1749, %v1212
      %v1783 = vsel %vm1767, %v1750, %v1214
      %v1784 = vsel %vm1767, %v1751, %v1216
      %v1785 = vsel %vm1767, %v1752, %v1218
      %v1786 = vsel %vm1767, %v1753, %v1220
      %v1787 = vsel %vm1767, %v1754, %v1222
      %v1788 = vsel %vm1767, %v1755, %v1224
      %v1789 = vsel %vm1767, %v1756, %v1226
      %v1790 = vsel %vm1767, %v1757, %v1228
      %v1791 = vsel %vm1767, %v1758, %v1230
      %v1792 = vsel %vm1767, %v1759, %v1232
      %v1793 = vsel %vm1767, %v1760, %v1234
      %v1794 = vsel %vm1767, %v1761, %v1236
      %v1795 = vsel %vm1767, %v1762, %v1238
      %v1796 = vsel %vm1767, %v1763, %v1240
      %v1797 = vsel %vm1767, %v1764, %v1242
      %v1798 = vsel %vm1767, %v1765, %v1244
      %v1799 = vsel %vm1767, %v1766, %v1246
      %vm1800 = vcmask 121856
      %v1801 = vsel %vm1800, %v1768, %v1285
      %v1802 = vsel %vm1800, %v1769, %v1287
      %v1803 = vsel %vm1800, %v1770, %v1289
      %v1804 = vsel %vm1800, %v1771, %v1291
      %v1805 = vsel %vm1800, %v1772, %v1293
      %v1806 = vsel %vm1800, %v1773, %v1295
      %v1807 = vsel %vm1800, %v1774, %v1297
      %v1808 = vsel %vm1800, %v1775, %v1299
      %v1809 = vsel %vm1800, %v1776, %v1301
      %v1810 = vsel %vm1800, %v1777, %v1303
      %v1811 = vsel %vm1800, %v1778, %v1305
      %v1812 = vsel %vm1800, %v1779, %v1307
      %v1813 = vsel %vm1800, %v1780, %v1309
      %v1814 = vsel %vm1800, %v1781, %v1311
      %v1815 = vsel %vm1800, %v1782, %v1313
      %v1816 = vsel %vm1800, %v1783, %v1315
      %v1817 = vsel %vm1800, %v1784, %v1317
      %v1818 = vsel %vm1800, %v1785, %v1319
      %v1819 = vsel %vm1800, %v1786, %v1321
      %v1820 = vsel %vm1800, %v1787, %v1323
      %v1821 = vsel %vm1800, %v1788, %v1325
      %v1822 = vsel %vm1800, %v1789, %v1327
      %v1823 = vsel %vm1800, %v1790, %v1329
      %v1824 = vsel %vm1800, %v1791, %v1331
      %v1825 = vsel %vm1800, %v1792, %v1333
      %v1826 = vsel %vm1800, %v1793, %v1335
      %v1827 = vsel %vm1800, %v1794, %v1337
      %v1828 = vsel %vm1800, %v1795, %v1339
      %v1829 = vsel %vm1800, %v1796, %v1341
      %v1830 = vsel %vm1800, %v1797, %v1343
      %v1831 = vsel %vm1800, %v1798, %v1345
      %v1832 = vsel %vm1800, %v1799, %v1347
      %vm1833 = vcmask 146432
      %v1834 = vsel %vm1833, %v1801, %v1381
      %v1835 = vsel %vm1833, %v1802, %v1383
      %v1836 = vsel %vm1833, %v1803, %v1385
      %v1837 = vsel %vm1833, %v1804, %v1387
      %v1838 = vsel %vm1833, %v1805, %v1389
      %v1839 = vsel %vm1833, %v1806, %v1391
      %v1840 = vsel %vm1833, %v1807, %v1393
      %v1841 = vsel %vm1833, %v1808, %v1395
      %v1842 = vsel %vm1833, %v1809, %v1397
      %v1843 = vsel %vm1833, %v1810, %v1399
      %v1844 = vsel %vm1833, %v1811, %v1401
      %v1845 = vsel %vm1833, %v1812, %v1403
      %v1846 = vsel %vm1833, %v1813, %v1405
      %v1847 = vsel %vm1833, %v1814, %v1407
      %v1848 = vsel %vm1833, %v1815, %v1409
      %v1849 = vsel %vm1833, %v1816, %v1411
      %v1850 = vsel %vm1833, %v1817, %v1413
      %v1851 = vsel %vm1833, %v1818, %v1415
      %v1852 = vsel %vm1833, %v1819, %v1417
      %v1853 = vsel %vm1833, %v1820, %v1419
      %v1854 = vsel %vm1833, %v1821, %v1421
      %v1855 = vsel %vm1833, %v1822, %v1423
      %v1856 = vsel %vm1833, %v1823, %v1425
      %v1857 = vsel %vm1833, %v1824, %v1427
      %v1858 = vsel %vm1833, %v1825, %v1429
      %v1859 = vsel %vm1833, %v1826, %v1431
      %v1860 = vsel %vm1833, %v1827, %v1433
      %v1861 = vsel %vm1833, %v1828, %v1435
      %v1862 = vsel %vm1833, %v1829, %v1437
      %v1863 = vsel %vm1833, %v1830, %v1439
      %v1864 = vsel %vm1833, %v1831, %v1441
      %v1865 = vsel %vm1833, %v1832, %v1443
      %vm1866 = vcmask 171008
      %v1867 = vsel %vm1866, %v1834, %v1477
      %v1868 = vsel %vm1866, %v1835, %v1479
      %v1869 = vsel %vm1866, %v1836, %v1481
      %v1870 = vsel %vm1866, %v1837, %v1483
      %v1871 = vsel %vm1866, %v1838, %v1485
      %v1872 = vsel %vm1866, %v1839, %v1487
      %v1873 = vsel %vm1866, %v1840, %v1489
      %v1874 = vsel %vm1866, %v1841, %v1491
      %v1875 = vsel %vm1866, %v1842, %v1493
      %v1876 = vsel %vm1866, %v1843, %v1495
      %v1877 = vsel %vm1866, %v1844, %v1497
      %v1878 = vsel %vm1866, %v1845, %v1499
      %v1879 = vsel %vm1866, %v1846, %v1501
      %v1880 = vsel %vm1866, %v1847, %v1503
      %v1881 = vsel %vm1866, %v1848, %v1505
      %v1882 = vsel %vm1866, %v1849, %v1507
      %v1883 = vsel %vm1866, %v1850, %v1509
      %v1884 = vsel %vm1866, %v1851, %v1511
      %v1885 = vsel %vm1866, %v1852, %v1513
      %v1886 = vsel %vm1866, %v1853, %v1515
      %v1887 = vsel %vm1866, %v1854, %v1517
      %v1888 = vsel %vm1866, %v1855, %v1519
      %v1889 = vsel %vm1866, %v1856, %v1521
      %v1890 = vsel %vm1866, %v1857, %v1523
      %v1891 = vsel %vm1866, %v1858, %v1525
      %v1892 = vsel %vm1866, %v1859, %v1527
      %v1893 = vsel %vm1866, %v1860, %v1529
      %v1894 = vsel %vm1866, %v1861, %v1531
      %v1895 = vsel %vm1866, %v1862, %v1533
      %v1896 = vsel %vm1866, %v1863, %v1535
      %v1897 = vsel %vm1866, %v1864, %v1537
      %v1898 = vsel %vm1866, %v1865, %v1539
      %vm1899 = vcmask 195584
      %v1900 = vsel %vm1899, %v1867, %v1573
      %v1901 = vsel %vm1899, %v1868, %v1575
      %v1902 = vsel %vm1899, %v1869, %v1577
      %v1903 = vsel %vm1899, %v1870, %v1579
      %v1904 = vsel %vm1899, %v1871, %v1581
      %v1905 = vsel %vm1899, %v1872, %v1583
      %v1906 = vsel %vm1899, %v1873, %v1585
      %v1907 = vsel %vm1899, %v1874, %v1587
      %v1908 = vsel %vm1899, %v1875, %v1589
      %v1909 = vsel %vm1899, %v1876, %v1591
      %v1910 = vsel %vm1899, %v1877, %v1593
      %v1911 = vsel %vm1899, %v1878, %v1595
      %v1912 = vsel %vm1899, %v1879, %v1597
      %v1913 = vsel %vm1899, %v1880, %v1599
      %v1914 = vsel %vm1899, %v1881, %v1601
      %v1915 = vsel %vm1899, %v1882, %v1603
      %v1916 = vsel %vm1899, %v1883, %v1605
      %v1917 = vsel %vm1899, %v1884, %v1607
      %v1918 = vsel %vm1899, %v1885, %v1609
      %v1919 = vsel %vm1899, %v1886, %v1611
      %v1920 = vsel %vm1899, %v1887, %v1613
      %v1921 = vsel %vm1899, %v1888, %v1615
      %v1922 = vsel %vm1899, %v1889, %v1617
      %v1923 = vsel %vm1899, %v1890, %v1619
      %v1924 = vsel %vm1899, %v1891, %v1621
      %v1925 = vsel %vm1899, %v1892, %v1623
      %v1926 = vsel %vm1899, %v1893, %v1625
      %v1927 = vsel %vm1899, %v1894, %v1627
      %v1928 = vsel %vm1899, %v1895, %v1629
      %v1929 = vsel %vm1899, %v1896, %v1631
      %v1930 = vsel %vm1899, %v1897, %v1633
      %v1931 = vsel %vm1899, %v1898, %v1635
      %v1932 = vld [vmem:[%s1] sm:$0xff]
      %v1933 = vld [vmem:[%s1 + $0x8] sm:$0xff]
      %v1934 = vld [vmem:[%s1 + $0x10] sm:$0xff]
      %v1935 = vld [vmem:[%s1 + $0x18] sm:$0x7]
      %v1936 = vld [vmem:[%s2] sm:$0x1]
      %v1938 = vlaneseq
      %v1939 = vshrl.u32 %v1938, 7
      %v1940 = vsub.s32 0, %v1939
      %v1941 = vrot.slane %v1936, %v1940
      %vm1943 = vcmask 220160
      %v1945 = vsel %vm1943, %v1900, 0
      %v1948 = vsel %vm1943, %v1901, 0
      %v1951 = vsel %vm1943, %v1902, 0
      %v1954 = vsel %vm1943, %v1903, 0
      %v1957 = vsel %vm1943, %v1904, 0
      %v1960 = vsel %vm1943, %v1905, 0
      %v1963 = vsel %vm1943, %v1906, 0
      %v1966 = vsel %vm1943, %v1907, 0
      %v1969 = vsel %vm1943, %v1908, 0
      %v1972 = vsel %vm1943, %v1909, 0
      %v1975 = vsel %vm1943, %v1910, 0
      %v1978 = vsel %vm1943, %v1911, 0
      %v1981 = vsel %vm1943, %v1912, 0
      %v1984 = vsel %vm1943, %v1913, 0
      %v1987 = vsel %vm1943, %v1914, 0
      %v1990 = vsel %vm1943, %v1915, 0
      %v1993 = vsel %vm1943, %v1916, 0
      %v1996 = vsel %vm1943, %v1917, 0
      %v1999 = vsel %vm1943, %v1918, 0
      %v2002 = vsel %vm1943, %v1919, 0
      %v2005 = vsel %vm1943, %v1920, 0
      %v2008 = vsel %vm1943, %v1921, 0
      %v2011 = vsel %vm1943, %v1922, 0
      %v2014 = vsel %vm1943, %v1923, 0
      %v2017 = vsel %vm1943, %v1924, 0
      %v2020 = vsel %vm1943, %v1925, 0
      %v2023 = vsel %vm1943, %v1926, 0
      %v2026 = vsel %vm1943, %v1927, 0
      %v2029 = vsel %vm1943, %v1928, 0
      %v2032 = vsel %vm1943, %v1929, 0
      %v2035 = vsel %vm1943, %v1930, 0
      %v2038 = vsel %vm1943, %v1931, 0
      %vm2040 = vcmask 1042432
      %v2042 = vsel %vm2040, %v1935, 0
      %2044 = vmatprep.subr.mxu0 0.0
      %2045 = vmatpush1.msra.mxu0 %v1932
      %2046 = vmatprep.subr.mxu0 0.0
      %2047 = vmatpush1.msra.mxu0 %v1933
      %2048 = vmatprep.subr.mxu0 0.0
      %2049 = vmatpush1.msra.mxu0 %v1934
      %2050 = vmatprep.subr.mxu0 0.0
      %2051 = vmatpush1.msra.mxu0 %v2042
      %2052 = vmatprep.subr.mxu0 0.0
      %2053 = vmatpush1.msra.mxu0 0.0
      %2054 = vmatprep.subr.mxu0 0.0
      %2055 = vmatpush1.msra.mxu0 0.0
      %2056 = vmatprep.subr.mxu0 0.0
      %2057 = vmatpush1.msra.mxu0 0.0
      %2058 = vmatprep.subr.mxu0 0.0
      %2059 = vmatpush1.msra.mxu0 0.0
      %2060 = vmatprep.subr.mxu0 0.0
      %2061 = vmatpush1.msra.mxu0 0.0
      %2062 = vmatprep.subr.mxu0 0.0
      %2063 = vmatpush1.msra.mxu0 0.0
      %2064 = vmatprep.subr.mxu0 0.0
      %2065 = vmatpush1.msra.mxu0 0.0
      %2066 = vmatprep.subr.mxu0 0.0
      %2067 = vmatpush1.msra.mxu0 0.0
      %2068 = vmatprep.subr.mxu0 0.0
      %2069 = vmatpush1.msra.mxu0 0.0
      %2070 = vmatprep.subr.mxu0 0.0
      %2071 = vmatpush1.msra.mxu0 0.0
      %2072 = vmatprep.subr.mxu0 0.0
      %2073 = vmatpush1.msra.mxu0 0.0
      %2074 = vmatprep.subr.mxu0 0.0
      %2075 = vmatpush1.msra.mxu0 0.0
      %2076 = vmatprep.subr.mxu0 0.0
      %2077 = vmatpush1.msra.mxu0 0.0
      %2078 = vmatprep.subr.mxu0 0.0
      %2079 = vmatpush1.msra.mxu0 0.0
      %2080 = vmatprep.subr.mxu0 0.0
      %2081 = vmatpush1.msra.mxu0 0.0
      %2082 = vmatprep.subr.mxu0 0.0
      %2083 = vmatpush1.msra.mxu0 0.0
      %2084 = vmatprep.subr.mxu0 0.0
      %2085 = vmatpush1.msra.mxu0 0.0
      %2086 = vmatprep.subr.mxu0 0.0
      %2087 = vmatpush1.msra.mxu0 0.0
      %2088 = vmatprep.subr.mxu0 0.0
      %2089 = vmatpush1.msra.mxu0 0.0
      %2090 = vmatprep.subr.mxu0 0.0
      %2091 = vmatpush1.msra.mxu0 0.0
      %2092 = vmatprep.subr.mxu0 0.0
      %2093 = vmatpush1.msra.mxu0 0.0
      %2094 = vmatprep.subr.mxu0 0.0
      %2095 = vmatpush1.msra.mxu0 0.0
      %2096 = vmatprep.subr.mxu0 0.0
      %2097 = vmatpush1.msra.mxu0 0.0
      %2098 = vmatprep.subr.mxu0 0.0
      %2099 = vmatpush1.msra.mxu0 0.0
      %2100 = vmatprep.subr.mxu0 0.0
      %2101 = vmatpush1.msra.mxu0 0.0
      %2102 = vmatprep.subr.mxu0 0.0
      %2103 = vmatpush1.msra.mxu0 0.0
      %2104 = vmatprep.subr.mxu0 0.0
      %2105 = vmatpush1.msra.mxu0 0.0
      %2106 = vmatprep.subr.mxu0 0.0
      %2107 = vmatpush1.msra.mxu0 0.0
      %2108 = vmatprep.mubr.f32.mxu0 0.0
      %2109 = vmatmul.mubr.f32.gmra.mrb[0].mxu0 %v1945
      %v2110 = vpop.f32.mrb[0].mxu0
      %v2111 = vadd.f32 %v1941, %v2110
      %v2112 = vpop.f32.mrb[0].mxu0
      %2113 = vmatprep.mubr.f32.mxu0 0.0
      %2114 = vmatmul.mubr.f32.gmra.mrb[0].mxu0 %v1948
      %v2115 = vpop.f32.mrb[0].mxu0
      %v2116 = vadd.f32 %v1941, %v2115
      %v2117 = vpop.f32.mrb[0].mxu0
      %2118 = vmatprep.mubr.f32.mxu0 0.0
      %2119 = vmatmul.mubr.f32.gmra.mrb[0].mxu0 %v1951
      %v2120 = vpop.f32.mrb[0].mxu0
      %v2121 = vadd.f32 %v1941, %v2120
      %v2122 = vpop.f32.mrb[0].mxu0
      %2123 = vmatprep.mubr.f32.mxu0 0.0
      %2124 = vmatmul.mubr.f32.gmra.mrb[0].mxu0 %v1954
      %v2125 = vpop.f32.mrb[0].mxu0
      %v2126 = vadd.f32 %v1941, %v2125
      %v2127 = vpop.f32.mrb[0].mxu0
      %2128 = vmatprep.mubr.f32.mxu0 0.0
      %2129 = vmatmul.mubr.f32.gmra.mrb[0].mxu0 %v1957
      %v2130 = vpop.f32.mrb[0].mxu0
      %v2131 = vadd.f32 %v1941, %v2130
      %v2132 = vpop.f32.mrb[0].mxu0
      %2133 = vmatprep.mubr.f32.mxu0 0.0
      %2134 = vmatmul.mubr.f32.gmra.mrb[0].mxu0 %v1960
      %v2135 = vpop.f32.mrb[0].mxu0
      %v2136 = vadd.f32 %v1941, %v2135
      %v2137 = vpop.f32.mrb[0].mxu0
      %2138 = vmatprep.mubr.f32.mxu0 0.0
      %2139 = vmatmul.mubr.f32.gmra.mrb[0].mxu0 %v1963
      %v2140 = vpop.f32.mrb[0].mxu0
      %v2141 = vadd.f32 %v1941, %v2140
      %v2142 = vpop.f32.mrb[0].mxu0
      %2143 = vmatprep.mubr.f32.mxu0 0.0
      %2144 = vmatmul.mubr.f32.gmra.mrb[0].mxu0 %v1966
      %v2145 = vpop.f32.mrb[0].mxu0
      %v2146 = vadd.f32 %v1941, %v2145
      %v2147 = vpop.f32.mrb[0].mxu0
      %2148 = vmatprep.mubr.f32.mxu0 0.0
      %2149 = vmatmul.mubr.f32.gmra.mrb[0].mxu0 %v1969
      %v2150 = vpop.f32.mrb[0].mxu0
      %v2151 = vadd.f32 %v1941, %v2150
      %v2152 = vpop.f32.mrb[0].mxu0
      %2153 = vmatprep.mubr.f32.mxu0 0.0
      %2154 = vmatmul.mubr.f32.gmra.mrb[0].mxu0 %v1972
      %v2155 = vpop.f32.mrb[0].mxu0
      %v2156 = vadd.f32 %v1941, %v2155
      %v2157 = vpop.f32.mrb[0].mxu0
      %2158 = vmatprep.mubr.f32.mxu0 0.0
      %2159 = vmatmul.mubr.f32.gmra.mrb[0].mxu0 %v1975
      %v2160 = vpop.f32.mrb[0].mxu0
      %v2161 = vadd.f32 %v1941, %v2160
      %v2162 = vpop.f32.mrb[0].mxu0
      %2163 = vmatprep.mubr.f32.mxu0 0.0
      %2164 = vmatmul.mubr.f32.gmra.mrb[0].mxu0 %v1978
      %v2165 = vpop.f32.mrb[0].mxu0
      %v2166 = vadd.f32 %v1941, %v2165
      %v2167 = vpop.f32.mrb[0].mxu0
      %2168 = vmatprep.mubr.f32.mxu0 0.0
      %2169 = vmatmul.mubr.f32.gmra.mrb[0].mxu0 %v1981
      %v2170 = vpop.f32.mrb[0].mxu0
      %v2171 = vadd.f32 %v1941, %v2170
      %v2172 = vpop.f32.mrb[0].mxu0
      %2173 = vmatprep.mubr.f32.mxu0 0.0
      %2174 = vmatmul.mubr.f32.gmra.mrb[0].mxu0 %v1984
      %v2175 = vpop.f32.mrb[0].mxu0
      %v2176 = vadd.f32 %v1941, %v2175
      %v2177 = vpop.f32.mrb[0].mxu0
      %2178 = vmatprep.mubr.f32.mxu0 0.0
      %2179 = vmatmul.mubr.f32.gmra.mrb[0].mxu0 %v1987
      %v2180 = vpop.f32.mrb[0].mxu0
      %v2181 = vadd.f32 %v1941, %v2180
      %v2182 = vpop.f32.mrb[0].mxu0
      %2183 = vmatprep.mubr.f32.mxu0 0.0
      %2184 = vmatmul.mubr.f32.gmra.mrb[0].mxu0 %v1990
      %v2185 = vpop.f32.mrb[0].mxu0
      %v2186 = vadd.f32 %v1941, %v2185
      %v2187 = vpop.f32.mrb[0].mxu0
      %2188 = vmatprep.mubr.f32.mxu0 0.0
      %2189 = vmatmul.mubr.f32.gmra.mrb[0].mxu0 %v1993
      %v2190 = vpop.f32.mrb[0].mxu0
      %v2191 = vadd.f32 %v1941, %v2190
      %v2192 = vpop.f32.mrb[0].mxu0
      %2193 = vmatprep.mubr.f32.mxu0 0.0
      %2194 = vmatmul.mubr.f32.gmra.mrb[0].mxu0 %v1996
      %v2195 = vpop.f32.mrb[0].mxu0
      %v2196 = vadd.f32 %v1941, %v2195
      %v2197 = vpop.f32.mrb[0].mxu0
      %2198 = vmatprep.mubr.f32.mxu0 0.0
      %2199 = vmatmul.mubr.f32.gmra.mrb[0].mxu0 %v1999
      %v2200 = vpop.f32.mrb[0].mxu0
      %v2201 = vadd.f32 %v1941, %v2200
      %v2202 = vpop.f32.mrb[0].mxu0
      %2203 = vmatprep.mubr.f32.mxu0 0.0
      %2204 = vmatmul.mubr.f32.gmra.mrb[0].mxu0 %v2002
      %v2205 = vpop.f32.mrb[0].mxu0
      %v2206 = vadd.f32 %v1941, %v2205
      %v2207 = vpop.f32.mrb[0].mxu0
      %2208 = vmatprep.mubr.f32.mxu0 0.0
      %2209 = vmatmul.mubr.f32.gmra.mrb[0].mxu0 %v2005
      %v2210 = vpop.f32.mrb[0].mxu0
      %v2211 = vadd.f32 %v1941, %v2210
      %v2212 = vpop.f32.mrb[0].mxu0
      %2213 = vmatprep.mubr.f32.mxu0 0.0
      %2214 = vmatmul.mubr.f32.gmra.mrb[0].mxu0 %v2008
      %v2215 = vpop.f32.mrb[0].mxu0
      %v2216 = vadd.f32 %v1941, %v2215
      %v2217 = vpop.f32.mrb[0].mxu0
      %2218 = vmatprep.mubr.f32.mxu0 0.0
      %2219 = vmatmul.mubr.f32.gmra.mrb[0].mxu0 %v2011
      %v2220 = vpop.f32.mrb[0].mxu0
      %v2221 = vadd.f32 %v1941, %v2220
      %v2222 = vpop.f32.mrb[0].mxu0
      %2223 = vmatprep.mubr.f32.mxu0 0.0
      %2224 = vmatmul.mubr.f32.gmra.mrb[0].mxu0 %v2014
      %v2225 = vpop.f32.mrb[0].mxu0
      %v2226 = vadd.f32 %v1941, %v2225
      %v2227 = vpop.f32.mrb[0].mxu0
      %2228 = vmatprep.mubr.f32.mxu0 0.0
      %2229 = vmatmul.mubr.f32.gmra.mrb[0].mxu0 %v2017
      %v2230 = vpop.f32.mrb[0].mxu0
      %v2231 = vadd.f32 %v1941, %v2230
      %v2232 = vpop.f32.mrb[0].mxu0
      %2233 = vmatprep.mubr.f32.mxu0 0.0
      %2234 = vmatmul.mubr.f32.gmra.mrb[0].mxu0 %v2020
      %v2235 = vpop.f32.mrb[0].mxu0
      %v2236 = vadd.f32 %v1941, %v2235
      %v2237 = vpop.f32.mrb[0].mxu0
      %2238 = vmatprep.mubr.f32.mxu0 0.0
      %2239 = vmatmul.mubr.f32.gmra.mrb[0].mxu0 %v2023
      %v2240 = vpop.f32.mrb[0].mxu0
      %v2241 = vadd.f32 %v1941, %v2240
      %v2242 = vpop.f32.mrb[0].mxu0
      %2243 = vmatprep.mubr.f32.mxu0 0.0
      %2244 = vmatmul.mubr.f32.gmra.mrb[0].mxu0 %v2026
      %v2245 = vpop.f32.mrb[0].mxu0
      %v2246 = vadd.f32 %v1941, %v2245
      %v2247 = vpop.f32.mrb[0].mxu0
      %2248 = vmatprep.mubr.f32.mxu0 0.0
      %2249 = vmatmul.mubr.f32.gmra.mrb[0].mxu0 %v2029
      %v2250 = vpop.f32.mrb[0].mxu0
      %v2251 = vadd.f32 %v1941, %v2250
      %v2252 = vpop.f32.mrb[0].mxu0
      %2253 = vmatprep.mubr.f32.mxu0 0.0
      %2254 = vmatmul.mubr.f32.gmra.mrb[0].mxu0 %v2032
      %v2255 = vpop.f32.mrb[0].mxu0
      %v2256 = vadd.f32 %v1941, %v2255
      %v2257 = vpop.f32.mrb[0].mxu0
      %2258 = vmatprep.mubr.f32.mxu0 0.0
      %2259 = vmatmul.mubr.f32.gmra.mrb[0].mxu0 %v2035
      %v2260 = vpop.f32.mrb[0].mxu0
      %v2261 = vadd.f32 %v1941, %v2260
      %v2262 = vpop.f32.mrb[0].mxu0
      %2263 = vmatprep.mubr.f32.mxu0 0.0
      %2264 = vmatmul.mubr.f32.gmra.mrb[0].mxu0 %v2038
      %v2265 = vpop.f32.mrb[0].mxu0
      %v2266 = vadd.f32 %v1941, %v2265
      %v2267 = vpop.f32.mrb[0].mxu0
      %2268 = vdwg.mxu0
      %v2269 = vmax.f32 %v2111, 0.0
      %v2270 = vmax.f32 %v2116, 0.0
      %v2271 = vmax.f32 %v2121, 0.0
      %v2272 = vmax.f32 %v2126, 0.0
      %v2273 = vmax.f32 %v2131, 0.0
      %v2274 = vmax.f32 %v2136, 0.0
      %v2275 = vmax.f32 %v2141, 0.0
      %v2276 = vmax.f32 %v2146, 0.0
      %v2277 = vmax.f32 %v2151, 0.0
      %v2278 = vmax.f32 %v2156, 0.0
      %v2279 = vmax.f32 %v2161, 0.0
      %v2280 = vmax.f32 %v2166, 0.0
      %v2281 = vmax.f32 %v2171, 0.0
      %v2282 = vmax.f32 %v2176, 0.0
      %v2283 = vmax.f32 %v2181, 0.0
      %v2284 = vmax.f32 %v2186, 0.0
      %v2285 = vmax.f32 %v2191, 0.0
      %v2286 = vmax.f32 %v2196, 0.0
      %v2287 = vmax.f32 %v2201, 0.0
      %v2288 = vmax.f32 %v2206, 0.0
      %v2289 = vmax.f32 %v2211, 0.0
      %v2290 = vmax.f32 %v2216, 0.0
      %v2291 = vmax.f32 %v2221, 0.0
      %v2292 = vmax.f32 %v2226, 0.0
      %v2293 = vmax.f32 %v2231, 0.0
      %v2294 = vmax.f32 %v2236, 0.0
      %v2295 = vmax.f32 %v2241, 0.0
      %v2296 = vmax.f32 %v2246, 0.0
      %v2297 = vmax.f32 %v2251, 0.0
      %v2298 = vmax.f32 %v2256, 0.0
      %v2299 = vmax.f32 %v2261, 0.0
      %v2300 = vmax.f32 %v2266, 0.0
      %v2301 = vmax.f32 %v2269, %v2271
      %v2302 = vmax.f32 %v2270, %v2272
      %v2303 = vmax.f32 %v2273, %v2275
      %v2304 = vmax.f32 %v2274, %v2276
      %v2305 = vmax.f32 %v2277, %v2279
      %v2306 = vmax.f32 %v2278, %v2280
      %v2307 = vmax.f32 %v2281, %v2283
      %v2308 = vmax.f32 %v2282, %v2284
      %v2309 = vmax.f32 %v2285, %v2287
      %v2310 = vmax.f32 %v2286, %v2288
      %v2311 = vmax.f32 %v2289, %v2291
      %v2312 = vmax.f32 %v2290, %v2292
      %v2313 = vmax.f32 %v2293, %v2295
      %v2314 = vmax.f32 %v2294, %v2296
      %v2315 = vmax.f32 %v2297, %v2299
      %v2316 = vmax.f32 %v2298, %v2300
      %v2325 = vrot.slane %v2301, 1
      %v2326 = vrot.slane %v2303, 1
      %v2327 = vrot.slane %v2305, 1
      %v2328 = vrot.slane %v2307, 1
      %v2329 = vrot.slane %v2309, 1
      %v2330 = vrot.slane %v2311, 1
      %v2331 = vrot.slane %v2313, 1
      %v2332 = vrot.slane %v2315, 1
      %v2341 = vmax.f32 %v2301, %v2325
      %v2342 = vmax.f32 %v2303, %v2326
      %v2343 = vmax.f32 %v2305, %v2327
      %v2344 = vmax.f32 %v2307, %v2328
      %v2345 = vmax.f32 %v2309, %v2329
      %v2346 = vmax.f32 %v2311, %v2330
      %v2347 = vmax.f32 %v2313, %v2331
      %v2348 = vmax.f32 %v2315, %v2332
      %v2357 = vrot.slane %v2302, 1
      %v2358 = vrot.slane %v2304, 1
      %v2359 = vrot.slane %v2306, 1
      %v2360 = vrot.slane %v2308, 1
      %v2361 = vrot.slane %v2310, 1
      %v2362 = vrot.slane %v2312, 1
      %v2363 = vrot.slane %v2314, 1
      %v2364 = vrot.slane %v2316, 1
      %v2373 = vmax.f32 %v2302, %v2357
      %v2374 = vmax.f32 %v2304, %v2358
      %v2375 = vmax.f32 %v2306, %v2359
      %v2376 = vmax.f32 %v2308, %v2360
      %v2377 = vmax.f32 %v2310, %v2361
      %v2378 = vmax.f32 %v2312, %v2362
      %v2379 = vmax.f32 %v2314, %v2363
      %v2380 = vmax.f32 %v2316, %v2364
      %v2389 = vrot.slane %v2341, 1
      %v2390 = vrot.slane %v2342, 1
      %v2391 = vrot.slane %v2343, 1
      %v2392 = vrot.slane %v2344, 1
      %v2393 = vrot.slane %v2345, 1
      %v2394 = vrot.slane %v2346, 1
      %v2395 = vrot.slane %v2347, 1
      %v2396 = vrot.slane %v2348, 1
      %v2405 = vrot.slane %v2341, 2
      %v2406 = vrot.slane %v2342, 2
      %v2407 = vrot.slane %v2343, 2
      %v2408 = vrot.slane %v2344, 2
      %v2409 = vrot.slane %v2345, 2
      %v2410 = vrot.slane %v2346, 2
      %v2411 = vrot.slane %v2347, 2
      %v2412 = vrot.slane %v2348, 2
      %v2421 = vrot.slane %v2341, 3
      %v2422 = vrot.slane %v2342, 3
      %v2423 = vrot.slane %v2343, 3
      %v2424 = vrot.slane %v2344, 3
      %v2425 = vrot.slane %v2345, 3
      %v2426 = vrot.slane %v2346, 3
      %v2427 = vrot.slane %v2347, 3
      %v2428 = vrot.slane %v2348, 3
      %v2445 = vrot.slane %v2373, 4
      %v2446 = vrot.slane %v2374, 4
      %v2447 = vrot.slane %v2375, 4
      %v2448 = vrot.slane %v2376, 4
      %v2449 = vrot.slane %v2377, 4
      %v2450 = vrot.slane %v2378, 4
      %v2451 = vrot.slane %v2379, 4
      %v2452 = vrot.slane %v2380, 4
      %v2461 = vrot.slane %v2373, 5
      %v2462 = vrot.slane %v2374, 5
      %v2463 = vrot.slane %v2375, 5
      %v2464 = vrot.slane %v2376, 5
      %v2465 = vrot.slane %v2377, 5
      %v2466 = vrot.slane %v2378, 5
      %v2467 = vrot.slane %v2379, 5
      %v2468 = vrot.slane %v2380, 5
      %v2477 = vrot.slane %v2373, 6
      %v2478 = vrot.slane %v2374, 6
      %v2479 = vrot.slane %v2375, 6
      %v2480 = vrot.slane %v2376, 6
      %v2481 = vrot.slane %v2377, 6
      %v2482 = vrot.slane %v2378, 6
      %v2483 = vrot.slane %v2379, 6
      %v2484 = vrot.slane %v2380, 6
      %v2493 = vrot.slane %v2373, 7
      %v2494 = vrot.slane %v2374, 7
      %v2495 = vrot.slane %v2375, 7
      %v2496 = vrot.slane %v2376, 7
      %v2497 = vrot.slane %v2377, 7
      %v2498 = vrot.slane %v2378, 7
      %v2499 = vrot.slane %v2379, 7
      %v2500 = vrot.slane %v2380, 7
      %v2509 = vsel %vm560, %v2341, %v2389
      %v2510 = vsel %vm560, %v2342, %v2390
      %v2511 = vsel %vm560, %v2343, %v2391
      %v2512 = vsel %vm560, %v2344, %v2392
      %v2513 = vsel %vm560, %v2345, %v2393
      %v2514 = vsel %vm560, %v2346, %v2394
      %v2515 = vsel %vm560, %v2347, %v2395
      %v2516 = vsel %vm560, %v2348, %v2396
      %vm2517 = vcmask 1041408
      %v2518 = vsel %vm2517, %v2509, %v2405
      %v2519 = vsel %vm2517, %v2510, %v2406
      %v2520 = vsel %vm2517, %v2511, %v2407
      %v2521 = vsel %vm2517, %v2512, %v2408
      %v2522 = vsel %vm2517, %v2513, %v2409
      %v2523 = vsel %vm2517, %v2514, %v2410
      %v2524 = vsel %vm2517, %v2515, %v2411
      %v2525 = vsel %vm2517, %v2516, %v2412
      %v2526 = vsel %vm2040, %v2518, %v2421
      %v2527 = vsel %vm2040, %v2519, %v2422
      %v2528 = vsel %vm2040, %v2520, %v2423
      %v2529 = vsel %vm2040, %v2521, %v2424
      %v2530 = vsel %vm2040, %v2522, %v2425
      %v2531 = vsel %vm2040, %v2523, %v2426
      %v2532 = vsel %vm2040, %v2524, %v2427
      %v2533 = vsel %vm2040, %v2525, %v2428
      %vm2534 = vcmask 1043456
      %v2535 = vsel %vm2534, %v2526, %v2445
      %v2536 = vsel %vm2534, %v2527, %v2446
      %v2537 = vsel %vm2534, %v2528, %v2447
      %v2538 = vsel %vm2534, %v2529, %v2448
      %v2539 = vsel %vm2534, %v2530, %v2449
      %v2540 = vsel %vm2534, %v2531, %v2450
      %v2541 = vsel %vm2534, %v2532, %v2451
      %v2542 = vsel %vm2534, %v2533, %v2452
      %vm2543 = vcmask 1044480
      %v2544 = vsel %vm2543, %v2535, %v2461
      %v2545 = vsel %vm2543, %v2536, %v2462
      %v2546 = vsel %vm2543, %v2537, %v2463
      %v2547 = vsel %vm2543, %v2538, %v2464
      %v2548 = vsel %vm2543, %v2539, %v2465
      %v2549 = vsel %vm2543, %v2540, %v2466
      %v2550 = vsel %vm2543, %v2541, %v2467
      %v2551 = vsel %vm2543, %v2542, %v2468
      %v2552 = vsel %vm903, %v2544, %v2477
      %v2553 = vsel %vm903, %v2545, %v2478
      %v2554 = vsel %vm903, %v2546, %v2479
      %v2555 = vsel %vm903, %v2547, %v2480
      %v2556 = vsel %vm903, %v2548, %v2481
      %v2557 = vsel %vm903, %v2549, %v2482
      %v2558 = vsel %vm903, %v2550, %v2483
      %v2559 = vsel %vm903, %v2551, %v2484
      %v2560 = vsel %vm726, %v2552, %v2493
      %v2561 = vsel %vm726, %v2553, %v2494
      %v2562 = vsel %vm726, %v2554, %v2495
      %v2563 = vsel %vm726, %v2555, %v2496
      %v2564 = vsel %vm726, %v2556, %v2497
      %v2565 = vsel %vm726, %v2557, %v2498
      %v2566 = vsel %vm726, %v2558, %v2499
      %v2567 = vsel %vm726, %v2559, %v2500
      %v2576 = vrot.slane %v2560, 7
      %v2577 = vrot.slane %v2561, 7
      %v2578 = vrot.slane %v2562, 7
      %v2579 = vrot.slane %v2563, 7
      %v2580 = vrot.slane %v2564, 7
      %v2581 = vrot.slane %v2565, 7
      %v2582 = vrot.slane %v2566, 7
      %v2583 = vrot.slane %v2567, 7
      %v2592 = vsel %vm560, 0.0, %v2576
      %v2593 = vsel %vm560, 0.0, %v2577
      %v2594 = vsel %vm560, 0.0, %v2578
      %v2595 = vsel %vm560, 0.0, %v2579
      %v2596 = vsel %vm560, 0.0, %v2580
      %v2597 = vsel %vm560, 0.0, %v2581
      %v2598 = vsel %vm560, 0.0, %v2582
      %v2599 = vsel %vm560, 0.0, %v2583
      %v2600 = vsel %vm560, %v2576, 0.0
      %v2601 = vsel %vm560, %v2577, 0.0
      %v2602 = vsel %vm560, %v2578, 0.0
      %v2603 = vsel %vm560, %v2579, 0.0
      %v2604 = vsel %vm560, %v2580, 0.0
      %v2605 = vsel %vm560, %v2581, 0.0
      %v2606 = vsel %vm560, %v2582, 0.0
      %v2607 = vsel %vm560, %v2583, 0.0
      %v2622 = vsel %vm726, %v727, %v730
      %v2623 = vrot.slane %v2592, 1
      %v2624 = vrot.slane %v2600, 1
      %v2625 = vsel %vm726, %v2623, %v2624
      %v2626 = vrot.slane %v2593, 1
      %v2627 = vrot.slane %v2601, 1
      %v2628 = vsel %vm726, %v2626, %v2627
      %v2629 = vrot.slane %v2594, 1
      %v2630 = vrot.slane %v2602, 1
      %v2631 = vsel %vm726, %v2629, %v2630
      %v2632 = vrot.slane %v2595, 1
      %v2633 = vrot.slane %v2603, 1
      %v2634 = vsel %vm726, %v2632, %v2633
      %v2635 = vrot.slane %v2596, 1
      %v2636 = vrot.slane %v2604, 1
      %v2637 = vsel %vm726, %v2635, %v2636
      %v2638 = vrot.slane %v2597, 1
      %v2639 = vrot.slane %v2605, 1
      %v2640 = vsel %vm726, %v2638, %v2639
      %v2641 = vrot.slane %v2598, 1
      %v2642 = vrot.slane %v2606, 1
      %v2643 = vsel %vm726, %v2641, %v2642
      %2644 = vrot.lane.b32.xlu0 %v2622, 32
      %v2645 = vpop.permute.xlu0 %2644
      %2646 = vrot.lane.b32.xlu0 %v2625, 32
      %v2647 = vpop.permute.xlu0 %2646
      %2648 = vrot.lane.b32.xlu0 %v2628, 32
      %v2649 = vpop.permute.xlu0 %2648
      %2650 = vrot.lane.b32.xlu0 %v2631, 32
      %v2651 = vpop.permute.xlu0 %2650
      %2652 = vrot.lane.b32.xlu0 %v2634, 32
      %v2653 = vpop.permute.xlu0 %2652
      %2654 = vrot.lane.b32.xlu0 %v2637, 32
      %v2655 = vpop.permute.xlu0 %2654
      %2656 = vrot.lane.b32.xlu0 %v2640, 32
      %v2657 = vpop.permute.xlu0 %2656
      %2658 = vrot.lane.b32.xlu0 %v2643, 32
      %v2659 = vpop.permute.xlu0 %2658
      %v2668 = vsel %vm903, %v904, %v907
      %v2669 = vrot.slane %v2592, 2
      %v2670 = vrot.slane %v2600, 2
      %v2671 = vsel %vm903, %v2669, %v2670
      %v2672 = vrot.slane %v2593, 2
      %v2673 = vrot.slane %v2601, 2
      %v2674 = vsel %vm903, %v2672, %v2673
      %v2675 = vrot.slane %v2594, 2
      %v2676 = vrot.slane %v2602, 2
      %v2677 = vsel %vm903, %v2675, %v2676
      %v2678 = vrot.slane %v2595, 2
      %v2679 = vrot.slane %v2603, 2
      %v2680 = vsel %vm903, %v2678, %v2679
      %v2681 = vrot.slane %v2596, 2
      %v2682 = vrot.slane %v2604, 2
      %v2683 = vsel %vm903, %v2681, %v2682
      %v2684 = vrot.slane %v2597, 2
      %v2685 = vrot.slane %v2605, 2
      %v2686 = vsel %vm903, %v2684, %v2685
      %v2687 = vrot.slane %v2598, 2
      %v2688 = vrot.slane %v2606, 2
      %v2689 = vsel %vm903, %v2687, %v2688
      %2690 = vrot.lane.b32.xlu0 %v2668, 64
      %v2691 = vpop.permute.xlu0 %2690
      %2692 = vrot.lane.b32.xlu0 %v2671, 64
      %v2693 = vpop.permute.xlu0 %2692
      %2694 = vrot.lane.b32.xlu0 %v2674, 64
      %v2695 = vpop.permute.xlu0 %2694
      %2696 = vrot.lane.b32.xlu0 %v2677, 64
      %v2697 = vpop.permute.xlu0 %2696
      %2698 = vrot.lane.b32.xlu0 %v2680, 64
      %v2699 = vpop.permute.xlu0 %2698
      %2700 = vrot.lane.b32.xlu0 %v2683, 64
      %v2701 = vpop.permute.xlu0 %2700
      %2702 = vrot.lane.b32.xlu0 %v2686, 64
      %v2703 = vpop.permute.xlu0 %2702
      %2704 = vrot.lane.b32.xlu0 %v2689, 64
      %v2705 = vpop.permute.xlu0 %2704
      %2715 = vrot.lane.b32.xlu0 %v2592, 96
      %v2716 = vpop.permute.xlu0 %2715
      %2717 = vrot.lane.b32.xlu0 %v2593, 96
      %v2718 = vpop.permute.xlu0 %2717
      %2719 = vrot.lane.b32.xlu0 %v2594, 96
      %v2720 = vpop.permute.xlu0 %2719
      %2721 = vrot.lane.b32.xlu0 %v2595, 96
      %v2722 = vpop.permute.xlu0 %2721
      %2723 = vrot.lane.b32.xlu0 %v2596, 96
      %v2724 = vpop.permute.xlu0 %2723
      %2725 = vrot.lane.b32.xlu0 %v2597, 96
      %v2726 = vpop.permute.xlu0 %2725
      %2727 = vrot.lane.b32.xlu0 %v2598, 96
      %v2728 = vpop.permute.xlu0 %2727
      %2729 = vrot.lane.b32.xlu0 %v2599, 96
      %v2730 = vpop.permute.xlu0 %2729
      %v2740 = vrot.slane %v2599, 1
      %v2741 = vrot.slane %v2607, 1
      %v2742 = vsel %vm726, %v2740, %v2741
      %v2751 = vrot.slane %v2599, 2
      %v2752 = vrot.slane %v2607, 2
      %v2753 = vsel %vm903, %v2751, %v2752
      %2754 = vrot.lane.b32.xlu0 %v2671, 32
      %v2755 = vpop.permute.xlu0 %2754
      %2756 = vrot.lane.b32.xlu0 %v2674, 32
      %v2757 = vpop.permute.xlu0 %2756
      %2758 = vrot.lane.b32.xlu0 %v2677, 32
      %v2759 = vpop.permute.xlu0 %2758
      %2760 = vrot.lane.b32.xlu0 %v2680, 32
      %v2761 = vpop.permute.xlu0 %2760
      %2762 = vrot.lane.b32.xlu0 %v2683, 32
      %v2763 = vpop.permute.xlu0 %2762
      %2764 = vrot.lane.b32.xlu0 %v2686, 32
      %v2765 = vpop.permute.xlu0 %2764
      %2766 = vrot.lane.b32.xlu0 %v2689, 32
      %v2767 = vpop.permute.xlu0 %2766
      %2768 = vrot.lane.b32.xlu0 %v2753, 32
      %v2769 = vpop.permute.xlu0 %2768
      %2778 = vrot.lane.b32.xlu0 %v2593, 64
      %v2779 = vpop.permute.xlu0 %2778
      %2780 = vrot.lane.b32.xlu0 %v2594, 64
      %v2781 = vpop.permute.xlu0 %2780
      %2782 = vrot.lane.b32.xlu0 %v2595, 64
      %v2783 = vpop.permute.xlu0 %2782
      %2784 = vrot.lane.b32.xlu0 %v2596, 64
      %v2785 = vpop.permute.xlu0 %2784
      %2786 = vrot.lane.b32.xlu0 %v2597, 64
      %v2787 = vpop.permute.xlu0 %2786
      %2788 = vrot.lane.b32.xlu0 %v2598, 64
      %v2789 = vpop.permute.xlu0 %2788
      %2790 = vrot.lane.b32.xlu0 %v2599, 64
      %v2791 = vpop.permute.xlu0 %2790
      %2792 = vrot.lane.b32.xlu0 %v660, 64
      %v2793 = vpop.permute.xlu0 %2792
      %2802 = vrot.lane.b32.xlu0 %v2628, 96
      %v2803 = vpop.permute.xlu0 %2802
      %2804 = vrot.lane.b32.xlu0 %v2631, 96
      %v2805 = vpop.permute.xlu0 %2804
      %2806 = vrot.lane.b32.xlu0 %v2634, 96
      %v2807 = vpop.permute.xlu0 %2806
      %2808 = vrot.lane.b32.xlu0 %v2637, 96
      %v2809 = vpop.permute.xlu0 %2808
      %2810 = vrot.lane.b32.xlu0 %v2640, 96
      %v2811 = vpop.permute.xlu0 %2810
      %2812 = vrot.lane.b32.xlu0 %v2643, 96
      %v2813 = vpop.permute.xlu0 %2812
      %2814 = vrot.lane.b32.xlu0 %v2742, 96
      %v2815 = vpop.permute.xlu0 %2814
      %2816 = vrot.lane.b32.xlu0 %v2622, 96
      %v2817 = vpop.permute.xlu0 %2816
      %vm2826 = vcmask 261120
      %v2827 = vsel %vm2826, %v660, %v2645
      %v2828 = vsel %vm2826, %v2592, %v2647
      %v2829 = vsel %vm2826, %v2593, %v2649
      %v2830 = vsel %vm2826, %v2594, %v2651
      %v2831 = vsel %vm2826, %v2595, %v2653
      %v2832 = vsel %vm2826, %v2596, %v2655
      %v2833 = vsel %vm2826, %v2597, %v2657
      %v2834 = vsel %vm2826, %v2598, %v2659
      %vm2835 = vcmask 523264
      %v2836 = vsel %vm2835, %v2827, %v2691
      %v2837 = vsel %vm2835, %v2828, %v2693
      %v2838 = vsel %vm2835, %v2829, %v2695
      %v2839 = vsel %vm2835, %v2830, %v2697
      %v2840 = vsel %vm2835, %v2831, %v2699
      %v2841 = vsel %vm2835, %v2832, %v2701
      %v2842 = vsel %vm2835, %v2833, %v2703
      %v2843 = vsel %vm2835, %v2834, %v2705
      %vm2844 = vcmask 785408
      %v2845 = vsel %vm2844, %v2836, %v2716
      %v2846 = vsel %vm2844, %v2837, %v2718
      %v2847 = vsel %vm2844, %v2838, %v2720
      %v2848 = vsel %vm2844, %v2839, %v2722
      %v2849 = vsel %vm2844, %v2840, %v2724
      %v2850 = vsel %vm2844, %v2841, %v2726
      %v2851 = vsel %vm2844, %v2842, %v2728
      %v2852 = vsel %vm2844, %v2843, %v2730
      %v2853 = vsel %vm2826, %v2625, %v2755
      %v2854 = vsel %vm2826, %v2628, %v2757
      %v2855 = vsel %vm2826, %v2631, %v2759
      %v2856 = vsel %vm2826, %v2634, %v2761
      %v2857 = vsel %vm2826, %v2637, %v2763
      %v2858 = vsel %vm2826, %v2640, %v2765
      %v2859 = vsel %vm2826, %v2643, %v2767
      %v2860 = vsel %vm2826, %v2742, %v2769
      %v2861 = vsel %vm2835, %v2853, %v2779
      %v2862 = vsel %vm2835, %v2854, %v2781
      %v2863 = vsel %vm2835, %v2855, %v2783
      %v2864 = vsel %vm2835, %v2856, %v2785
      %v2865 = vsel %vm2835, %v2857, %v2787
      %v2866 = vsel %vm2835, %v2858, %v2789
      %v2867 = vsel %vm2835, %v2859, %v2791
      %v2868 = vsel %vm2835, %v2860, %v2793
      %v2869 = vsel %vm2844, %v2861, %v2803
      %v2870 = vsel %vm2844, %v2862, %v2805
      %v2871 = vsel %vm2844, %v2863, %v2807
      %v2872 = vsel %vm2844, %v2864, %v2809
      %v2873 = vsel %vm2844, %v2865, %v2811
      %v2874 = vsel %vm2844, %v2866, %v2813
      %v2875 = vsel %vm2844, %v2867, %v2815
      %v2876 = vsel %vm2844, %v2868, %v2817
      %v2877 = vld [vmem:[%s3] sm:$0xff]
      %v2878 = vld [vmem:[%s3 + $0x8] sm:$0xff]
      %v2879 = vld [vmem:[%s3 + $0x10] sm:$0xff]
      %v2880 = vld [vmem:[%s3 + $0x18] sm:$0xff]
      %v2881 = vld [vmem:[%s3 + $0x20] sm:$0xff]
      %v2882 = vld [vmem:[%s3 + $0x28] sm:$0xff]
      %v2883 = vld [vmem:[%s3 + $0x30] sm:$0xff]
      %v2884 = vld [vmem:[%s3 + $0x38] sm:$0xff]
      %v2885 = vld [vmem:[%s3 + $0x40] sm:$0xff]
      %v2886 = vld [vmem:[%s3 + $0x48] sm:$0xff]
      %v2887 = vld [vmem:[%s3 + $0x50] sm:$0xff]
      %v2888 = vld [vmem:[%s3 + $0x58] sm:$0xff]
      %v2889 = vld [vmem:[%s3 + $0x60] sm:$0xff]
      %v2890 = vld [vmem:[%s3 + $0x68] sm:$0xff]
      %v2891 = vld [vmem:[%s3 + $0x70] sm:$0xff]
      %v2892 = vld [vmem:[%s3 + $0x78] sm:$0xff]
      %v2893 = vld [vmem:[%s3 + $0x80] sm:$0xff]
      %v2894 = vld [vmem:[%s3 + $0x88] sm:$0xff]
      %v2895 = vld [vmem:[%s3 + $0x90] sm:$0xff]
      %v2896 = vld [vmem:[%s3 + $0x98] sm:$0xff]
      %v2897 = vld [vmem:[%s3 + $0xa0] sm:$0xff]
      %v2898 = vld [vmem:[%s3 + $0xa8] sm:$0xff]
      %v2899 = vld [vmem:[%s3 + $0xb0] sm:$0xff]
      %v2900 = vld [vmem:[%s3 + $0xb8] sm:$0xff]
      %v2901 = vld [vmem:[%s3 + $0xc0] sm:$0xff]
      %v2902 = vld [vmem:[%s3 + $0xc8] sm:$0xff]
      %v2903 = vld [vmem:[%s3 + $0xd0] sm:$0xff]
      %v2904 = vld [vmem:[%s3 + $0xd8] sm:$0xff]
      %v2905 = vld [vmem:[%s3 + $0xe0] sm:$0xff]
      %v2906 = vld [vmem:[%s3 + $0xe8] sm:$0xff]
      %v2907 = vld [vmem:[%s3 + $0xf0] sm:$0xff]
      %v2908 = vld [vmem:[%s3 + $0xf8] sm:$0xff]
      %v2909 = vld [vmem:[%s3 + $0x100] sm:$0xff]
      %v2910 = vld [vmem:[%s3 + $0x108] sm:$0xff]
      %v2911 = vld [vmem:[%s3 + $0x110] sm:$0xff]
      %v2912 = vld [vmem:[%s3 + $0x118] sm:$0xff]
      %v2913 = vld [vmem:[%s4] sm:$0x1]
      %v2915 = vlaneseq
      %v2916 = vshrl.u32 %v2915, 7
      %v2917 = vsub.s32 0, %v2916
      %v2918 = vrot.slane %v2913, %v2917
      %v2920 = vsel %vm2826, %v2674, 0
      %v2922 = vsel %vm2826, %v2677, 0
      %v2924 = vsel %vm2826, %v2680, 0
      %v2926 = vsel %vm2826, %v2683, 0
      %v2928 = vsel %vm2826, %v2686, 0
      %v2930 = vsel %vm2826, %v2689, 0
      %v2932 = vsel %vm2826, %v2753, 0
      %v2934 = vsel %vm2826, %v2668, 0
      %2936 = vmatprep.subr.mxu0 0.0
      %2937 = vmatpush1.msra.mxu0 %v2877
      %2938 = vmatprep.subr.mxu0 0.0
      %2939 = vmatpush1.msra.mxu0 %v2878
      %2940 = vmatprep.subr.mxu0 0.0
      %2941 = vmatpush1.msra.mxu0 %v2879
      %2942 = vmatprep.subr.mxu0 0.0
      %2943 = vmatpush1.msra.mxu0 %v2880
      %2944 = vmatprep.subr.mxu0 0.0
      %2945 = vmatpush1.msra.mxu0 %v2881
      %2946 = vmatprep.subr.mxu0 0.0
      %2947 = vmatpush1.msra.mxu0 %v2882
      %2948 = vmatprep.subr.mxu0 0.0
      %2949 = vmatpush1.msra.mxu0 %v2883
      %2950 = vmatprep.subr.mxu0 0.0
      %2951 = vmatpush1.msra.mxu0 %v2884
      %2952 = vmatprep.subr.mxu0 0.0
      %2953 = vmatpush1.msra.mxu0 %v2885
      %2954 = vmatprep.subr.mxu0 0.0
      %2955 = vmatpush1.msra.mxu0 %v2886
      %2956 = vmatprep.subr.mxu0 0.0
      %2957 = vmatpush1.msra.mxu0 %v2887
      %2958 = vmatprep.subr.mxu0 0.0
      %2959 = vmatpush1.msra.mxu0 %v2888
      %2960 = vmatprep.subr.mxu0 0.0
      %2961 = vmatpush1.msra.mxu0 %v2889
      %2962 = vmatprep.subr.mxu0 0.0
      %2963 = vmatpush1.msra.mxu0 %v2890
      %2964 = vmatprep.subr.mxu0 0.0
      %2965 = vmatpush1.msra.mxu0 %v2891
      %2966 = vmatprep.subr.mxu0 0.0
      %2967 = vmatpush1.msra.mxu0 %v2892
      %2968 = vmatprep.subr.mxu0 0.0
      %2969 = vmatpush1.msra.mxu0 %v2893
      %2970 = vmatprep.subr.mxu0 0.0
      %2971 = vmatpush1.msra.mxu0 %v2894
      %2972 = vmatprep.subr.mxu0 0.0
      %2973 = vmatpush1.msra.mxu0 %v2895
      %2974 = vmatprep.subr.mxu0 0.0
      %2975 = vmatpush1.msra.mxu0 %v2896
      %2976 = vmatprep.subr.mxu0 0.0
      %2977 = vmatpush1.msra.mxu0 %v2897
      %2978 = vmatprep.subr.mxu0 0.0
      %2979 = vmatpush1.msra.mxu0 %v2898
      %2980 = vmatprep.subr.mxu0 0.0
      %2981 = vmatpush1.msra.mxu0 %v2899
      %2982 = vmatprep.subr.mxu0 0.0
      %2983 = vmatpush1.msra.mxu0 %v2900
      %2984 = vmatprep.subr.mxu0 0.0
      %2985 = vmatpush1.msra.mxu0 %v2901
      %2986 = vmatprep.subr.mxu0 0.0
      %2987 = vmatpush1.msra.mxu0 %v2902
      %2988 = vmatprep.subr.mxu0 0.0
      %2989 = vmatpush1.msra.mxu0 %v2903
      %2990 = vmatprep.subr.mxu0 0.0
      %2991 = vmatpush1.msra.mxu0 %v2904
      %2992 = vmatprep.subr.mxu0 0.0
      %2993 = vmatpush1.msra.mxu0 %v2905
      %2994 = vmatprep.subr.mxu0 0.0
      %2995 = vmatpush1.msra.mxu0 %v2906
      %2996 = vmatprep.subr.mxu0 0.0
      %2997 = vmatpush1.msra.mxu0 %v2907
      %2998 = vmatprep.subr.mxu0 0.0
      %2999 = vmatpush1.msra.mxu0 %v2908
      %3000 = vmatprep.mubr.f32.mxu0 %v2869
      %3001 = vmatmul.mubr.f32.gmra.mrb[0].mxu0 %v2845
      %v3002 = vpop.f32.mrb[0].mxu0
      %v3003 = vadd.f32 %v2918, %v3002
      %v3004 = vpop.f32.mrb[0].mxu0
      %3005 = vmatprep.mubr.f32.mxu0 %v2870
      %3006 = vmatmul.mubr.f32.gmra.mrb[0].mxu0 %v2846
      %v3007 = vpop.f32.mrb[0].mxu0
      %v3008 = vadd.f32 %v2918, %v3007
      %v3009 = vpop.f32.mrb[0].mxu0
      %3010 = vmatprep.mubr.f32.mxu0 %v2871
      %3011 = vmatmul.mubr.f32.gmra.mrb[0].mxu0 %v2847
      %v3012 = vpop.f32.mrb[0].mxu0
      %v3013 = vadd.f32 %v2918, %v3012
      %v3014 = vpop.f32.mrb[0].mxu0
      %3015 = vmatprep.mubr.f32.mxu0 %v2872
      %3016 = vmatmul.mubr.f32.gmra.mrb[0].mxu0 %v2848
      %v3017 = vpop.f32.mrb[0].mxu0
      %v3018 = vadd.f32 %v2918, %v3017
      %v3019 = vpop.f32.mrb[0].mxu0
      %3020 = vmatprep.mubr.f32.mxu0 %v2873
      %3021 = vmatmul.mubr.f32.gmra.mrb[0].mxu0 %v2849
      %v3022 = vpop.f32.mrb[0].mxu0
      %v3023 = vadd.f32 %v2918, %v3022
      %v3024 = vpop.f32.mrb[0].mxu0
      %3025 = vmatprep.mubr.f32.mxu0 %v2874
      %3026 = vmatmul.mubr.f32.gmra.mrb[0].mxu0 %v2850
      %v3027 = vpop.f32.mrb[0].mxu0
      %v3028 = vadd.f32 %v2918, %v3027
      %v3029 = vpop.f32.mrb[0].mxu0
      %3030 = vmatprep.mubr.f32.mxu0 %v2875
      %3031 = vmatmul.mubr.f32.gmra.mrb[0].mxu0 %v2851
      %v3032 = vpop.f32.mrb[0].mxu0
      %v3033 = vadd.f32 %v2918, %v3032
      %v3034 = vpop.f32.mrb[0].mxu0
      %3035 = vmatprep.mubr.f32.mxu0 %v2876
      %3036 = vmatmul.mubr.f32.gmra.mrb[0].mxu0 %v2852
      %v3037 = vpop.f32.mrb[0].mxu0
      %v3038 = vadd.f32 %v2918, %v3037
      %v3039 = vpop.f32.mrb[0].mxu0
      %3040 = vdwg.mxu0
      %3041 = vmatprep.subr.mxu0 0.0
      %3042 = vmatpush1.msra.mxu0 %v2909
      %3043 = vmatprep.subr.mxu0 0.0
      %3044 = vmatpush1.msra.mxu0 %v2910
      %3045 = vmatprep.subr.mxu0 0.0
      %3046 = vmatpush1.msra.mxu0 %v2911
      %3047 = vmatprep.subr.mxu0 0.0
      %3048 = vmatpush1.msra.mxu0 %v2912
      %3049 = vmatprep.subr.mxu0 0.0
      %3050 = vmatpush1.msra.mxu0 0.0
      %3051 = vmatprep.subr.mxu0 0.0
      %3052 = vmatpush1.msra.mxu0 0.0
      %3053 = vmatprep.subr.mxu0 0.0
      %3054 = vmatpush1.msra.mxu0 0.0
      %3055 = vmatprep.subr.mxu0 0.0
      %3056 = vmatpush1.msra.mxu0 0.0
      %3057 = vmatprep.subr.mxu0 0.0
      %3058 = vmatpush1.msra.mxu0 0.0
      %3059 = vmatprep.subr.mxu0 0.0
      %3060 = vmatpush1.msra.mxu0 0.0
      %3061 = vmatprep.subr.mxu0 0.0
      %3062 = vmatpush1.msra.mxu0 0.0
      %3063 = vmatprep.subr.mxu0 0.0
      %3064 = vmatpush1.msra.mxu0 0.0
      %3065 = vmatprep.subr.mxu0 0.0
      %3066 = vmatpush1.msra.mxu0 0.0
      %3067 = vmatprep.subr.mxu0 0.0
      %3068 = vmatpush1.msra.mxu0 0.0
      %3069 = vmatprep.subr.mxu0 0.0
      %3070 = vmatpush1.msra.mxu0 0.0
      %3071 = vmatprep.subr.mxu0 0.0
      %3072 = vmatpush1.msra.mxu0 0.0
      %3073 = vmatprep.subr.mxu0 0.0
      %3074 = vmatpush1.msra.mxu0 0.0
      %3075 = vmatprep.subr.mxu0 0.0
      %3076 = vmatpush1.msra.mxu0 0.0
      %3077 = vmatprep.subr.mxu0 0.0
      %3078 = vmatpush1.msra.mxu0 0.0
      %3079 = vmatprep.subr.mxu0 0.0
      %3080 = vmatpush1.msra.mxu0 0.0
      %3081 = vmatprep.subr.mxu0 0.0
      %3082 = vmatpush1.msra.mxu0 0.0
      %3083 = vmatprep.subr.mxu0 0.0
      %3084 = vmatpush1.msra.mxu0 0.0
      %3085 = vmatprep.subr.mxu0 0.0
      %3086 = vmatpush1.msra.mxu0 0.0
      %3087 = vmatprep.subr.mxu0 0.0
      %3088 = vmatpush1.msra.mxu0 0.0
      %3089 = vmatprep.subr.mxu0 0.0
      %3090 = vmatpush1.msra.mxu0 0.0
      %3091 = vmatprep.subr.mxu0 0.0
      %3092 = vmatpush1.msra.mxu0 0.0
      %3093 = vmatprep.subr.mxu0 0.0
      %3094 = vmatpush1.msra.mxu0 0.0
      %3095 = vmatprep.subr.mxu0 0.0
      %3096 = vmatpush1.msra.mxu0 0.0
      %3097 = vmatprep.subr.mxu0 0.0
      %3098 = vmatpush1.msra.mxu0 0.0
      %3099 = vmatprep.subr.mxu0 0.0
      %3100 = vmatpush1.msra.mxu0 0.0
      %3101 = vmatprep.subr.mxu0 0.0
      %3102 = vmatpush1.msra.mxu0 0.0
      %3103 = vmatprep.subr.mxu0 0.0
      %3104 = vmatpush1.msra.mxu0 0.0
      %3105 = vmatprep.mubr.f32.mxu0 0.0
      %3106 = vmatmul.mubr.f32.gmra.mrb[0].mxu0 %v2920
      %v3107 = vpop.f32.mrb[0].mxu0
      %v3108 = vadd.f32 %v3003, %v3107
      %v3109 = vpop.f32.mrb[0].mxu0
      %3110 = vmatprep.mubr.f32.mxu0 0.0
      %3111 = vmatmul.mubr.f32.gmra.mrb[0].mxu0 %v2922
      %v3112 = vpop.f32.mrb[0].mxu0
      %v3113 = vadd.f32 %v3008, %v3112
      %v3114 = vpop.f32.mrb[0].mxu0
      %3115 = vmatprep.mubr.f32.mxu0 0.0
      %3116 = vmatmul.mubr.f32.gmra.mrb[0].mxu0 %v2924
      %v3117 = vpop.f32.mrb[0].mxu0
      %v3118 = vadd.f32 %v3013, %v3117
      %v3119 = vpop.f32.mrb[0].mxu0
      %3120 = vmatprep.mubr.f32.mxu0 0.0
      %3121 = vmatmul.mubr.f32.gmra.mrb[0].mxu0 %v2926
      %v3122 = vpop.f32.mrb[0].mxu0
      %v3123 = vadd.f32 %v3018, %v3122
      %v3124 = vpop.f32.mrb[0].mxu0
      %3125 = vmatprep.mubr.f32.mxu0 0.0
      %3126 = vmatmul.mubr.f32.gmra.mrb[0].mxu0 %v2928
      %v3127 = vpop.f32.mrb[0].mxu0
      %v3128 = vadd.f32 %v3023, %v3127
      %v3129 = vpop.f32.mrb[0].mxu0
      %3130 = vmatprep.mubr.f32.mxu0 0.0
      %3131 = vmatmul.mubr.f32.gmra.mrb[0].mxu0 %v2930
      %v3132 = vpop.f32.mrb[0].mxu0
      %v3133 = vadd.f32 %v3028, %v3132
      %v3134 = vpop.f32.mrb[0].mxu0
      %3135 = vmatprep.mubr.f32.mxu0 0.0
      %3136 = vmatmul.mubr.f32.gmra.mrb[0].mxu0 %v2932
      %v3137 = vpop.f32.mrb[0].mxu0
      %v3138 = vadd.f32 %v3033, %v3137
      %v3139 = vpop.f32.mrb[0].mxu0
      %3140 = vmatprep.mubr.f32.mxu0 0.0
      %3141 = vmatmul.mubr.f32.gmra.mrb[0].mxu0 %v2934
      %v3142 = vpop.f32.mrb[0].mxu0
      %v3143 = vadd.f32 %v3038, %v3142
      %v3144 = vpop.f32.mrb[0].mxu0
      %3145 = vdwg.mxu0
      %v3146 = vmax.f32 %v3108, 0.0
      %v3147 = vmax.f32 %v3113, 0.0
      %v3148 = vmax.f32 %v3118, 0.0
      %v3149 = vmax.f32 %v3123, 0.0
      %v3150 = vmax.f32 %v3128, 0.0
      %v3151 = vmax.f32 %v3133, 0.0
      %v3152 = vmax.f32 %v3138, 0.0
      %v3153 = vmax.f32 %v3143, 0.0
      %v3154 = vmax.f32 %v3146, %v3147
      %v3155 = vmax.f32 %v3148, %v3149
      %v3156 = vmax.f32 %v3150, %v3151
      %v3157 = vmax.f32 %v3152, %v3153
      %v3162 = vrot.slane %v3154, 1
      %v3163 = vrot.slane %v3155, 1
      %v3164 = vrot.slane %v3156, 1
      %v3165 = vrot.slane %v3157, 1
      %v3170 = vmax.f32 %v3154, %v3162
      %v3171 = vmax.f32 %v3155, %v3163
      %v3172 = vmax.f32 %v3156, %v3164
      %v3173 = vmax.f32 %v3157, %v3165
      %v3178 = vrot.slane %v3170, 1
      %v3179 = vrot.slane %v3171, 1
      %v3180 = vrot.slane %v3172, 1
      %v3181 = vrot.slane %v3173, 1
      %v3186 = vrot.slane %v3170, 2
      %v3187 = vrot.slane %v3171, 2
      %v3188 = vrot.slane %v3172, 2
      %v3189 = vrot.slane %v3173, 2
      %v3194 = vrot.slane %v3170, 3
      %v3195 = vrot.slane %v3171, 3
      %v3196 = vrot.slane %v3172, 3
      %v3197 = vrot.slane %v3173, 3
      %v3202 = vsel %vm560, %v3170, %v3178
      %v3203 = vsel %vm560, %v3171, %v3179
      %v3204 = vsel %vm560, %v3172, %v3180
      %v3205 = vsel %vm560, %v3173, %v3181
      %v3206 = vsel %vm2517, %v3202, %v3186
      %v3207 = vsel %vm2517, %v3203, %v3187
      %v3208 = vsel %vm2517, %v3204, %v3188
      %v3209 = vsel %vm2517, %v3205, %v3189
      %v3210 = vsel %vm2040, %v3206, %v3194
      %v3211 = vsel %vm2040, %v3207, %v3195
      %v3212 = vsel %vm2040, %v3208, %v3196
      %v3213 = vsel %vm2040, %v3209, %v3197
      %v3218 = vrot.slane %v3210, 7
      %v3219 = vrot.slane %v3211, 7
      %v3220 = vrot.slane %v3212, 7
      %v3221 = vrot.slane %v3213, 7
      %v3226 = vsel %vm560, 0.0, %v3218
      %v3227 = vsel %vm560, 0.0, %v3219
      %v3228 = vsel %vm560, 0.0, %v3220
      %v3229 = vsel %vm560, 0.0, %v3221
      %v3230 = vsel %vm2543, %v660, 0.0
      %v3231 = vsel %vm2543, %v3226, 0.0
      %v3232 = vsel %vm2543, %v3227, 0.0
      %v3233 = vsel %vm2543, %v3228, 0.0
      %v3234 = vsel %vm2543, %v3229, 0.0
      %v3239 = vrot.slane %v3230, 1
      %v3240 = vrot.slane %v3231, 1
      %v3241 = vrot.slane %v3232, 1
      %v3242 = vrot.slane %v3233, 1
      %3243 = vrot.lane.b32.xlu0 %v3239, 32
      %v3244 = vpop.permute.xlu0 %3243
      %3245 = vrot.lane.b32.xlu0 %v3240, 32
      %v3246 = vpop.permute.xlu0 %3245
      %3247 = vrot.lane.b32.xlu0 %v3241, 32
      %v3248 = vpop.permute.xlu0 %3247
      %3249 = vrot.lane.b32.xlu0 %v3242, 32
      %v3250 = vpop.permute.xlu0 %3249
      %v3255 = vrot.slane %v3230, 2
      %v3256 = vrot.slane %v3231, 2
      %v3257 = vrot.slane %v3232, 2
      %v3258 = vrot.slane %v3233, 2
      %3259 = vrot.lane.b32.xlu0 %v3255, 64
      %v3260 = vpop.permute.xlu0 %3259
      %3261 = vrot.lane.b32.xlu0 %v3256, 64
      %v3262 = vpop.permute.xlu0 %3261
      %3263 = vrot.lane.b32.xlu0 %v3257, 64
      %v3264 = vpop.permute.xlu0 %3263
      %3265 = vrot.lane.b32.xlu0 %v3258, 64
      %v3266 = vpop.permute.xlu0 %3265
      %3272 = vrot.lane.b32.xlu0 %v3231, 96
      %v3273 = vpop.permute.xlu0 %3272
      %3274 = vrot.lane.b32.xlu0 %v3232, 96
      %v3275 = vpop.permute.xlu0 %3274
      %3276 = vrot.lane.b32.xlu0 %v3233, 96
      %v3277 = vpop.permute.xlu0 %3276
      %3278 = vrot.lane.b32.xlu0 %v3234, 96
      %v3279 = vpop.permute.xlu0 %3278
      %v3284 = vrot.slane %v3234, 1
      %v3289 = vrot.slane %v3234, 2
      %3290 = vrot.lane.b32.xlu0 %v3256, 32
      %v3291 = vpop.permute.xlu0 %3290
      %3292 = vrot.lane.b32.xlu0 %v3257, 32
      %v3293 = vpop.permute.xlu0 %3292
      %3294 = vrot.lane.b32.xlu0 %v3258, 32
      %v3295 = vpop.permute.xlu0 %3294
      %3296 = vrot.lane.b32.xlu0 %v3289, 32
      %v3297 = vpop.permute.xlu0 %3296
      %3302 = vrot.lane.b32.xlu0 %v3232, 64
      %v3303 = vpop.permute.xlu0 %3302
      %3304 = vrot.lane.b32.xlu0 %v3233, 64
      %v3305 = vpop.permute.xlu0 %3304
      %3306 = vrot.lane.b32.xlu0 %v3234, 64
      %v3307 = vpop.permute.xlu0 %3306
      %3308 = vrot.lane.b32.xlu0 %v3230, 64
      %v3309 = vpop.permute.xlu0 %3308
      %3314 = vrot.lane.b32.xlu0 %v3241, 96
      %v3315 = vpop.permute.xlu0 %3314
      %3316 = vrot.lane.b32.xlu0 %v3242, 96
      %v3317 = vpop.permute.xlu0 %3316
      %3318 = vrot.lane.b32.xlu0 %v3284, 96
      %v3319 = vpop.permute.xlu0 %3318
      %3320 = vrot.lane.b32.xlu0 %v3239, 96
      %v3321 = vpop.permute.xlu0 %3320
      %v3326 = vsel %vm2826, %v3230, %v3244
      %v3327 = vsel %vm2826, %v3231, %v3246
      %v3328 = vsel %vm2826, %v3232, %v3248
      %v3329 = vsel %vm2826, %v3233, %v3250
      %v3330 = vsel %vm2835, %v3326, %v3260
      %v3331 = vsel %vm2835, %v3327, %v3262
      %v3332 = vsel %vm2835, %v3328, %v3264
      %v3333 = vsel %vm2835, %v3329, %v3266
      %v3334 = vsel %vm2844, %v3330, %v3273
      %v3335 = vsel %vm2844, %v3331, %v3275
      %v3336 = vsel %vm2844, %v3332, %v3277
      %v3337 = vsel %vm2844, %v3333, %v3279
      %v3338 = vsel %vm2826, %v3240, %v3291
      %v3339 = vsel %vm2826, %v3241, %v3293
      %v3340 = vsel %vm2826, %v3242, %v3295
      %v3341 = vsel %vm2826, %v3284, %v3297
      %v3342 = vsel %vm2835, %v3338, %v3303
      %v3343 = vsel %vm2835, %v3339, %v3305
      %v3344 = vsel %vm2835, %v3340, %v3307
      %v3345 = vsel %vm2835, %v3341, %v3309
      %v3346 = vsel %vm2844, %v3342, %v3315
      %v3347 = vsel %vm2844, %v3343, %v3317
      %v3348 = vsel %vm2844, %v3344, %v3319
      %v3349 = vsel %vm2844, %v3345, %v3321
      %v3358 = vcombine.low %v3334, %v3346
      %v3359 = vcombine.low %v3335, %v3347
      %v3360 = vcombine.low %v3336, %v3348
      %v3361 = vcombine.low %v3337, %v3349
      %v3362 = vld [vmem:[%s5] sm:$0xff]
      %v3363 = vld [vmem:[%s5 + $0x8] sm:$0xff]
      %v3364 = vld [vmem:[%s5 + $0x10] sm:$0xff]
      %v3365 = vld [vmem:[%s5 + $0x18] sm:$0xff]
      %v3366 = vld [vmem:[%s5 + $0x20] sm:$0xff]
      %v3367 = vld [vmem:[%s5 + $0x28] sm:$0xff]
      %v3368 = vld [vmem:[%s5 + $0x30] sm:$0xff]
      %v3369 = vld [vmem:[%s5 + $0x38] sm:$0xff]
      %v3370 = vld [vmem:[%s5 + $0x40] sm:$0xff]
      %v3371 = vld [vmem:[%s5 + $0x48] sm:$0xff]
      %v3372 = vld [vmem:[%s5 + $0x50] sm:$0xff]
      %v3373 = vld [vmem:[%s5 + $0x58] sm:$0xff]
      %v3374 = vld [vmem:[%s5 + $0x60] sm:$0xff]
      %v3375 = vld [vmem:[%s5 + $0x68] sm:$0xff]
      %v3376 = vld [vmem:[%s5 + $0x70] sm:$0xff]
      %v3377 = vld [vmem:[%s5 + $0x78] sm:$0xff]
      %v3378 = vld [vmem:[%s5 + $0x80] sm:$0xff]
      %v3379 = vld [vmem:[%s5 + $0x88] sm:$0xff]
      %v3380 = vld [vmem:[%s5 + $0x90] sm:$0xff]
      %v3381 = vld [vmem:[%s5 + $0x98] sm:$0xff]
      %v3382 = vld [vmem:[%s5 + $0xa0] sm:$0xff]
      %v3383 = vld [vmem:[%s5 + $0xa8] sm:$0xff]
      %v3384 = vld [vmem:[%s5 + $0xb0] sm:$0xff]
      %v3385 = vld [vmem:[%s5 + $0xb8] sm:$0xff]
      %v3386 = vld [vmem:[%s5 + $0xc0] sm:$0xff]
      %v3387 = vld [vmem:[%s5 + $0xc8] sm:$0xff]
      %v3388 = vld [vmem:[%s5 + $0xd0] sm:$0xff]
      %v3389 = vld [vmem:[%s5 + $0xd8] sm:$0xff]
      %v3390 = vld [vmem:[%s5 + $0xe0] sm:$0xff]
      %v3391 = vld [vmem:[%s5 + $0xe8] sm:$0xff]
      %v3392 = vld [vmem:[%s5 + $0xf0] sm:$0xff]
      %v3393 = vld [vmem:[%s5 + $0xf8] sm:$0xff]
      %v3394 = vld [vmem:[%s5 + $0x100] sm:$0xff]
      %v3395 = vld [vmem:[%s5 + $0x108] sm:$0xff]
      %v3396 = vld [vmem:[%s5 + $0x110] sm:$0xff]
      %v3397 = vld [vmem:[%s5 + $0x118] sm:$0xff]
      %v3398 = vld [vmem:[%s6] sm:$0x1]
      %v3400 = vlaneseq
      %v3401 = vshrl.u32 %v3400, 7
      %v3402 = vsub.s32 0, %v3401
      %v3403 = vrot.slane %v3398, %v3402
      %v3405 = vcombine.low %v3358, %v3359
      %v3406 = vcombine.high %v3358, %v3359
      %v3407 = vcombine.low %v3257, %v3258
      %v3408 = vcombine.low %v3360, %v3361
      %v3409 = vcombine.high %v3360, %v3361
      %v3410 = vcombine.low %v3289, %v3255
      %v3415 = vsel %vm2826, %v3407, 0
      %v3417 = vsel %vm2826, %v3410, 0
      %3419 = vmatprep.subr.mxu0 0.0
      %3420 = vmatpush1.msra.mxu0 %v3362
      %3421 = vmatprep.subr.mxu0 0.0
      %3422 = vmatpush1.msra.mxu0 %v3363
      %3423 = vmatprep.subr.mxu0 0.0
      %3424 = vmatpush1.msra.mxu0 %v3364
      %3425 = vmatprep.subr.mxu0 0.0
      %3426 = vmatpush1.msra.mxu0 %v3365
      %3427 = vmatprep.subr.mxu0 0.0
      %3428 = vmatpush1.msra.mxu0 %v3366
      %3429 = vmatprep.subr.mxu0 0.0
      %3430 = vmatpush1.msra.mxu0 %v3367
      %3431 = vmatprep.subr.mxu0 0.0
      %3432 = vmatpush1.msra.mxu0 %v3368
      %3433 = vmatprep.subr.mxu0 0.0
      %3434 = vmatpush1.msra.mxu0 %v3369
      %3435 = vmatprep.subr.mxu0 0.0
      %3436 = vmatpush1.msra.mxu0 %v3370
      %3437 = vmatprep.subr.mxu0 0.0
      %3438 = vmatpush1.msra.mxu0 %v3371
      %3439 = vmatprep.subr.mxu0 0.0
      %3440 = vmatpush1.msra.mxu0 %v3372
      %3441 = vmatprep.subr.mxu0 0.0
      %3442 = vmatpush1.msra.mxu0 %v3373
      %3443 = vmatprep.subr.mxu0 0.0
      %3444 = vmatpush1.msra.mxu0 %v3374
      %3445 = vmatprep.subr.mxu0 0.0
      %3446 = vmatpush1.msra.mxu0 %v3375
      %3447 = vmatprep.subr.mxu0 0.0
      %3448 = vmatpush1.msra.mxu0 %v3376
      %3449 = vmatprep.subr.mxu0 0.0
      %3450 = vmatpush1.msra.mxu0 %v3377
      %3451 = vmatprep.subr.mxu0 0.0
      %3452 = vmatpush1.msra.mxu0 %v3378
      %3453 = vmatprep.subr.mxu0 0.0
      %3454 = vmatpush1.msra.mxu0 %v3379
      %3455 = vmatprep.subr.mxu0 0.0
      %3456 = vmatpush1.msra.mxu0 %v3380
      %3457 = vmatprep.subr.mxu0 0.0
      %3458 = vmatpush1.msra.mxu0 %v3381
      %3459 = vmatprep.subr.mxu0 0.0
      %3460 = vmatpush1.msra.mxu0 %v3382
      %3461 = vmatprep.subr.mxu0 0.0
      %3462 = vmatpush1.msra.mxu0 %v3383
      %3463 = vmatprep.subr.mxu0 0.0
      %3464 = vmatpush1.msra.mxu0 %v3384
      %3465 = vmatprep.subr.mxu0 0.0
      %3466 = vmatpush1.msra.mxu0 %v3385
      %3467 = vmatprep.subr.mxu0 0.0
      %3468 = vmatpush1.msra.mxu0 %v3386
      %3469 = vmatprep.subr.mxu0 0.0
      %3470 = vmatpush1.msra.mxu0 %v3387
      %3471 = vmatprep.subr.mxu0 0.0
      %3472 = vmatpush1.msra.mxu0 %v3388
      %3473 = vmatprep.subr.mxu0 0.0
      %3474 = vmatpush1.msra.mxu0 %v3389
      %3475 = vmatprep.subr.mxu0 0.0
      %3476 = vmatpush1.msra.mxu0 %v3390
      %3477 = vmatprep.subr.mxu0 0.0
      %3478 = vmatpush1.msra.mxu0 %v3391
      %3479 = vmatprep.subr.mxu0 0.0
      %3480 = vmatpush1.msra.mxu0 %v3392
      %3481 = vmatprep.subr.mxu0 0.0
      %3482 = vmatpush1.msra.mxu0 %v3393
      %3483 = vmatprep.mubr.f32.mxu0 %v3406
      %3484 = vmatmul.mubr.f32.gmra.mrb[0].mxu0 %v3405
      %v3485 = vpop.f32.mrb[0].mxu0
      %v3486 = vadd.f32 %v3403, %v3485
      %v3487 = vpop.f32.mrb[0].mxu0
      %3488 = vmatprep.mubr.f32.mxu0 %v3409
      %3489 = vmatmul.mubr.f32.gmra.mrb[0].mxu0 %v3408
      %v3490 = vpop.f32.mrb[0].mxu0
      %v3491 = vadd.f32 %v3403, %v3490
      %v3492 = vpop.f32.mrb[0].mxu0
      %3493 = vdwg.mxu0
      %3494 = vmatprep.subr.mxu0 0.0
      %3495 = vmatpush1.msra.mxu0 %v3394
      %3496 = vmatprep.subr.mxu0 0.0
      %3497 = vmatpush1.msra.mxu0 %v3395
      %3498 = vmatprep.subr.mxu0 0.0
      %3499 = vmatpush1.msra.mxu0 %v3396
      %3500 = vmatprep.subr.mxu0 0.0
      %3501 = vmatpush1.msra.mxu0 %v3397
      %3502 = vmatprep.subr.mxu0 0.0
      %3503 = vmatpush1.msra.mxu0 0.0
      %3504 = vmatprep.subr.mxu0 0.0
      %3505 = vmatpush1.msra.mxu0 0.0
      %3506 = vmatprep.subr.mxu0 0.0
      %3507 = vmatpush1.msra.mxu0 0.0
      %3508 = vmatprep.subr.mxu0 0.0
      %3509 = vmatpush1.msra.mxu0 0.0
      %3510 = vmatprep.subr.mxu0 0.0
      %3511 = vmatpush1.msra.mxu0 0.0
      %3512 = vmatprep.subr.mxu0 0.0
      %3513 = vmatpush1.msra.mxu0 0.0
      %3514 = vmatprep.subr.mxu0 0.0
      %3515 = vmatpush1.msra.mxu0 0.0
      %3516 = vmatprep.subr.mxu0 0.0
      %3517 = vmatpush1.msra.mxu0 0.0
      %3518 = vmatprep.subr.mxu0 0.0
      %3519 = vmatpush1.msra.mxu0 0.0
      %3520 = vmatprep.subr.mxu0 0.0
      %3521 = vmatpush1.msra.mxu0 0.0
      %3522 = vmatprep.subr.mxu0 0.0
      %3523 = vmatpush1.msra.mxu0 0.0
      %3524 = vmatprep.subr.mxu0 0.0
      %3525 = vmatpush1.msra.mxu0 0.0
      %3526 = vmatprep.subr.mxu0 0.0
      %3527 = vmatpush1.msra.mxu0 0.0
      %3528 = vmatprep.subr.mxu0 0.0
      %3529 = vmatpush1.msra.mxu0 0.0
      %3530 = vmatprep.subr.mxu0 0.0
      %3531 = vmatpush1.msra.mxu0 0.0
      %3532 = vmatprep.subr.mxu0 0.0
      %3533 = vmatpush1.msra.mxu0 0.0
      %3534 = vmatprep.subr.mxu0 0.0
      %3535 = vmatpush1.msra.mxu0 0.0
      %3536 = vmatprep.subr.mxu0 0.0
      %3537 = vmatpush1.msra.mxu0 0.0
      %3538 = vmatprep.subr.mxu0 0.0
      %3539 = vmatpush1.msra.mxu0 0.0
      %3540 = vmatprep.subr.mxu0 0.0
      %3541 = vmatpush1.msra.mxu0 0.0
      %3542 = vmatprep.subr.mxu0 0.0
      %3543 = vmatpush1.msra.mxu0 0.0
      %3544 = vmatprep.subr.mxu0 0.0
      %3545 = vmatpush1.msra.mxu0 0.0
      %3546 = vmatprep.subr.mxu0 0.0
      %3547 = vmatpush1.msra.mxu0 0.0
      %3548 = vmatprep.subr.mxu0 0.0
      %3549 = vmatpush1.msra.mxu0 0.0
      %3550 = vmatprep.subr.mxu0 0.0
      %3551 = vmatpush1.msra.mxu0 0.0
      %3552 = vmatprep.subr.mxu0 0.0
      %3553 = vmatpush1.msra.mxu0 0.0
      %3554 = vmatprep.subr.mxu0 0.0
      %3555 = vmatpush1.msra.mxu0 0.0
      %3556 = vmatprep.subr.mxu0 0.0
      %3557 = vmatpush1.msra.mxu0 0.0
      %3558 = vmatprep.mubr.f32.mxu0 0.0
      %3559 = vmatmul.mubr.f32.gmra.mrb[0].mxu0 %v3415
      %v3560 = vpop.f32.mrb[0].mxu0
      %v3561 = vadd.f32 %v3486, %v3560
      %v3562 = vpop.f32.mrb[0].mxu0
      %3563 = vmatprep.mubr.f32.mxu0 0.0
      %3564 = vmatmul.mubr.f32.gmra.mrb[0].mxu0 %v3417
      %v3565 = vpop.f32.mrb[0].mxu0
      %v3566 = vadd.f32 %v3491, %v3565
      %v3567 = vpop.f32.mrb[0].mxu0
      %3568 = vdwg.mxu0
      %v3569 = vmax.f32 %v3561, 0.0
      %v3570 = vmax.f32 %v3566, 0.0
      %v3573 = vcombine.high %v3569, %v3569
      %v3574 = vcombine.high %v3570, %v3570
      %v3577 = vmax.f32 %v3569, %v3573
      %v3578 = vmax.f32 %v3570, %v3574
      %v3581 = vrot.slane %v3577, 5
      %v3582 = vrot.slane %v3581, 4
      %v3583 = vrot.slane %v3578, 5
      %v3584 = vrot.slane %v3583, 4
      %v3587 = vmax.f32 %v3577, %v3582
      %v3588 = vmax.f32 %v3578, %v3584
      %v3591 = vlaneseq
      %v3592 = vshrl.u32 %v3591, 7
      %v3593 = vsub.s32 2, %v3592
      %v3594 = vrot.slane %v3587, %v3593
      %v3595 = vlaneseq
      %v3596 = vshrl.u32 %v3595, 7
      %v3597 = vsub.s32 2, %v3596
      %v3598 = vrot.slane %v3588, %v3597
      %v3601 = vsel %vm560, %v3587, %v3594
      %v3602 = vsel %vm560, %v3588, %v3598
      %v3605 = vrot.slane %v3601, 7
      %v3606 = vrot.slane %v3602, 7
      %v3609 = vrot.slane %v3601, 6
      %v3610 = vrot.slane %v3602, 6
      %v3613 = vsel %vm560, %v3601, %v3605
      %v3614 = vsel %vm560, %v3602, %v3606
      %v3615 = vsel %vm2517, %v3613, %v3605
      %v3616 = vsel %vm2517, %v3614, %v3606
      %v3617 = vsel %vm2040, %v3615, %v3609
      %v3618 = vsel %vm2040, %v3616, %v3610
      %v3621 = vrot.slane %v3617, 7
      %v3622 = vrot.slane %v3618, 7
      %v3625 = vsel %vm560, 0.0, %v3621
      %v3626 = vsel %vm560, 0.0, %v3622
      %v3627 = vsel %vm2543, %v3625, 0.0
      %v3628 = vsel %vm2543, %v3626, 0.0
      %v3631 = vrot.slane %v3627, 1
      %v3632 = vrot.slane %v3628, 1
      %3633 = vrot.lane.b32.xlu0 %v3239, 16
      %v3634 = vpop.permute.xlu0 %3633
      %3635 = vrot.lane.b32.xlu0 %v3631, 16
      %v3636 = vpop.permute.xlu0 %3635
      %3637 = vrot.lane.b32.xlu0 %v3632, 16
      %v3638 = vpop.permute.xlu0 %3637
      %v3642 = vrot.slane %v3627, 2
      %v3643 = vrot.slane %v3628, 2
      %3644 = vrot.lane.b32.xlu0 %v3255, 32
      %v3645 = vpop.permute.xlu0 %3644
      %3646 = vrot.lane.b32.xlu0 %v3642, 32
      %v3647 = vpop.permute.xlu0 %3646
      %3648 = vrot.lane.b32.xlu0 %v3643, 32
      %v3649 = vpop.permute.xlu0 %3648
      %3653 = vrot.lane.b32.xlu0 %v3627, 48
      %v3654 = vpop.permute.xlu0 %3653
      %3655 = vrot.lane.b32.xlu0 %v3628, 48
      %v3656 = vpop.permute.xlu0 %3655
      %3659 = vrot.lane.b32.xlu0 %v3631, 64
      %v3660 = vpop.permute.xlu0 %3659
      %3661 = vrot.lane.b32.xlu0 %v3632, 64
      %v3662 = vpop.permute.xlu0 %3661
      %3665 = vrot.lane.b32.xlu0 %v3642, 80
      %v3666 = vpop.permute.xlu0 %3665
      %3667 = vrot.lane.b32.xlu0 %v3643, 80
      %v3668 = vpop.permute.xlu0 %3667
      %3671 = vrot.lane.b32.xlu0 %v3627, 96
      %v3672 = vpop.permute.xlu0 %3671
      %3673 = vrot.lane.b32.xlu0 %v3628, 96
      %v3674 = vpop.permute.xlu0 %3673
      %3675 = vrot.lane.b32.xlu0 %v3230, 96
      %v3676 = vpop.permute.xlu0 %3675
      %3680 = vrot.lane.b32.xlu0 %v3631, 112
      %v3681 = vpop.permute.xlu0 %3680
      %3682 = vrot.lane.b32.xlu0 %v3632, 112
      %v3683 = vpop.permute.xlu0 %3682
      %3684 = vrot.lane.b32.xlu0 %v3239, 112
      %v3685 = vpop.permute.xlu0 %3684
      %vm3689 = vcmask 130048
      %v3690 = vsel %vm3689, %v3230, %v3634
      %v3691 = vsel %vm3689, %v3627, %v3636
      %v3692 = vsel %vm3689, %v3628, %v3638
      %v3693 = vsel %vm2826, %v3690, %v3645
      %v3694 = vsel %vm2826, %v3691, %v3647
      %v3695 = vsel %vm2826, %v3692, %v3649
      %vm3696 = vcmask 392192
      %v3697 = vsel %vm3696, %v3693, %v3654
      %v3698 = vsel %vm3696, %v3694, %v3654
      %v3699 = vsel %vm3696, %v3694, %v3656
      %v3700 = vsel %vm3696, %v3695, %v3656
      %v3701 = vsel %vm2835, %v3697, %v3660
      %v3702 = vsel %vm2835, %v3698, %v3660
      %v3703 = vsel %vm2835, %v3699, %v3662
      %v3704 = vsel %vm2835, %v3700, %v3662
      %vm3705 = vcmask 654336
      %v3706 = vsel %vm3705, %v3701, %v3666
      %v3707 = vsel %vm3705, %v3702, %v3666
      %v3708 = vsel %vm3705, %v3703, %v3668
      %v3709 = vsel %vm3705, %v3704, %v3668
      %v3710 = vsel %vm2844, %v3706, %v3672
      %v3711 = vsel %vm2844, %v3707, %v3674
      %v3712 = vsel %vm2844, %v3708, %v3674
      %v3713 = vsel %vm2844, %v3709, %v3676
      %vm3714 = vcmask 916480
      %v3715 = vsel %vm3714, %v3710, %v3681
      %v3716 = vsel %vm3714, %v3711, %v3683
      %v3717 = vsel %vm3714, %v3712, %v3683
      %v3718 = vsel %vm3714, %v3713, %v3685
      %v3723 = vcombine.low %v3715, %v3642
      %v3724 = vcombine.low %v3716, %v3643
      %v3725 = vcombine.low %v3717, %v3643
      %v3726 = vcombine.low %v3718, %v3255
      %v3727 = vld [vmem:[%s7] sm:$0xff]
      %v3728 = vld [vmem:[%s7 + $0x8] sm:$0xff]
      %v3729 = vld [vmem:[%s7 + $0x10] sm:$0xff]
      %v3730 = vld [vmem:[%s7 + $0x18] sm:$0xff]
      %v3731 = vld [vmem:[%s7 + $0x20] sm:$0xff]
      %v3732 = vld [vmem:[%s7 + $0x28] sm:$0xff]
      %v3733 = vld [vmem:[%s7 + $0x30] sm:$0xff]
      %v3734 = vld [vmem:[%s7 + $0x38] sm:$0xff]
      %v3735 = vld [vmem:[%s7 + $0x40] sm:$0xff]
      %v3736 = vld [vmem:[%s7 + $0x48] sm:$0xff]
      %v3737 = vld [vmem:[%s7 + $0x50] sm:$0xff]
      %v3738 = vld [vmem:[%s7 + $0x58] sm:$0xff]
      %v3739 = vld [vmem:[%s7 + $0x60] sm:$0xff]
      %v3740 = vld [vmem:[%s7 + $0x68] sm:$0xff]
      %v3741 = vld [vmem:[%s7 + $0x70] sm:$0xff]
      %v3742 = vld [vmem:[%s7 + $0x78] sm:$0xff]
      %v3743 = vld [vmem:[%s7 + $0x80] sm:$0xff]
      %v3744 = vld [vmem:[%s7 + $0x88] sm:$0xff]
      %v3745 = vld [vmem:[%s8] sm:$0x1]
      %v3747 = vlaneseq
      %v3748 = vshrl.u32 %v3747, 7
      %v3749 = vsub.s32 0, %v3748
      %v3750 = vrot.slane %v3745, %v3749
      %v3752 = vcombine.low %v3723, %v3724
      %v3753 = vcombine.high %v3723, %v3724
      %v3754 = vcombine.low %v3725, %v3726
      %v3755 = vcombine.high %v3725, %v3726
      %v3758 = vsel %vm3689, %v3753, 0
      %v3760 = vsel %vm3689, %v3755, 0
      %3762 = vmatprep.subr.mxu0 0.0
      %3763 = vmatpush1.msra.mxu0 %v3727
      %3764 = vmatprep.subr.mxu0 0.0
      %3765 = vmatpush1.msra.mxu0 %v3728
      %3766 = vmatprep.subr.mxu0 0.0
      %3767 = vmatpush1.msra.mxu0 %v3729
      %3768 = vmatprep.subr.mxu0 0.0
      %3769 = vmatpush1.msra.mxu0 %v3730
      %3770 = vmatprep.subr.mxu0 0.0
      %3771 = vmatpush1.msra.mxu0 %v3731
      %3772 = vmatprep.subr.mxu0 0.0
      %3773 = vmatpush1.msra.mxu0 %v3732
      %3774 = vmatprep.subr.mxu0 0.0
      %3775 = vmatpush1.msra.mxu0 %v3733
      %3776 = vmatprep.subr.mxu0 0.0
      %3777 = vmatpush1.msra.mxu0 %v3734
      %3778 = vmatprep.subr.mxu0 0.0
      %3779 = vmatpush1.msra.mxu0 %v3735
      %3780 = vmatprep.subr.mxu0 0.0
      %3781 = vmatpush1.msra.mxu0 %v3736
      %3782 = vmatprep.subr.mxu0 0.0
      %3783 = vmatpush1.msra.mxu0 %v3737
      %3784 = vmatprep.subr.mxu0 0.0
      %3785 = vmatpush1.msra.mxu0 %v3738
      %3786 = vmatprep.subr.mxu0 0.0
      %3787 = vmatpush1.msra.mxu0 %v3739
      %3788 = vmatprep.subr.mxu0 0.0
      %3789 = vmatpush1.msra.mxu0 %v3740
      %3790 = vmatprep.subr.mxu0 0.0
      %3791 = vmatpush1.msra.mxu0 %v3741
      %3792 = vmatprep.subr.mxu0 0.0
      %3793 = vmatpush1.msra.mxu0 %v3742
      %3794 = vmatprep.subr.mxu0 0.0
      %3795 = vmatpush1.msra.mxu0 %v3743
      %3796 = vmatprep.subr.mxu0 0.0
      %3797 = vmatpush1.msra.mxu0 %v3744
      %3798 = vmatprep.subr.mxu0 0.0
      %3799 = vmatpush1.msra.mxu0 0.0
      %3800 = vmatprep.subr.mxu0 0.0
      %3801 = vmatpush1.msra.mxu0 0.0
      %3802 = vmatprep.subr.mxu0 0.0
      %3803 = vmatpush1.msra.mxu0 0.0
      %3804 = vmatprep.subr.mxu0 0.0
      %3805 = vmatpush1.msra.mxu0 0.0
      %3806 = vmatprep.subr.mxu0 0.0
      %3807 = vmatpush1.msra.mxu0 0.0
      %3808 = vmatprep.subr.mxu0 0.0
      %3809 = vmatpush1.msra.mxu0 0.0
      %3810 = vmatprep.subr.mxu0 0.0
      %3811 = vmatpush1.msra.mxu0 0.0
      %3812 = vmatprep.subr.mxu0 0.0
      %3813 = vmatpush1.msra.mxu0 0.0
      %3814 = vmatprep.subr.mxu0 0.0
      %3815 = vmatpush1.msra.mxu0 0.0
      %3816 = vmatprep.subr.mxu0 0.0
      %3817 = vmatpush1.msra.mxu0 0.0
      %3818 = vmatprep.subr.mxu0 0.0
      %3819 = vmatpush1.msra.mxu0 0.0
      %3820 = vmatprep.subr.mxu0 0.0
      %3821 = vmatpush1.msra.mxu0 0.0
      %3822 = vmatprep.subr.mxu0 0.0
      %3823 = vmatpush1.msra.mxu0 0.0
      %3824 = vmatprep.subr.mxu0 0.0
      %3825 = vmatpush1.msra.mxu0 0.0
      %3826 = vmatprep.mubr.f32.mxu0 %v3758
      %3827 = vmatmul.mubr.f32.gmra.mrb[0].mxu0 %v3752
      %v3828 = vpop.f32.mrb[0].mxu0
      %v3829 = vadd.f32 %v3750, %v3828
      %v3830 = vpop.f32.mrb[0].mxu0
      %3831 = vmatprep.mubr.f32.mxu0 %v3760
      %3832 = vmatmul.mubr.f32.gmra.mrb[0].mxu0 %v3754
      %v3833 = vpop.f32.mrb[0].mxu0
      %v3834 = vadd.f32 %v3750, %v3833
      %v3835 = vpop.f32.mrb[0].mxu0
      %3836 = vdwg.mxu0
      %v3837 = vmax.f32 %v3829, 0.0
      %v3838 = vmax.f32 %v3834, 0.0
      %v3841 = vcombine.high %v3837, %v3837
      %v3842 = vcombine.high %v3838, %v3838
      %v3845 = vlaneseq
      %v3846 = vshrl.u32 %v3845, 7
      %v3847 = vsub.s32 0, %v3846
      %v3848 = vrot.slane %v3837, %v3847
      %v3849 = vlaneseq
      %v3850 = vshrl.u32 %v3849, 7
      %v3851 = vsub.s32 0, %v3850
      %v3852 = vrot.slane %v3841, %v3851
      %v3853 = vlaneseq
      %v3854 = vshrl.u32 %v3853, 7
      %v3855 = vsub.s32 0, %v3854
      %v3856 = vrot.slane %v3838, %v3855
      %v3857 = vlaneseq
      %v3858 = vshrl.u32 %v3857, 7
      %v3859 = vsub.s32 0, %v3858
      %v3860 = vrot.slane %v3842, %v3859
      %v3865 = vlaneseq
      %v3866 = vshrl.u32 %v3865, 7
      %v3867 = vsub.s32 1, %v3866
      %v3868 = vrot.slane %v3837, %v3867
      %v3869 = vlaneseq
      %v3870 = vshrl.u32 %v3869, 7
      %v3871 = vsub.s32 1, %v3870
      %v3872 = vrot.slane %v3841, %v3871
      %v3873 = vlaneseq
      %v3874 = vshrl.u32 %v3873, 7
      %v3875 = vsub.s32 1, %v3874
      %v3876 = vrot.slane %v3838, %v3875
      %v3877 = vlaneseq
      %v3878 = vshrl.u32 %v3877, 7
      %v3879 = vsub.s32 1, %v3878
      %v3880 = vrot.slane %v3842, %v3879
      %v3885 = vlaneseq
      %v3886 = vshrl.u32 %v3885, 7
      %v3887 = vsub.s32 2, %v3886
      %v3888 = vrot.slane %v3837, %v3887
      %v3889 = vlaneseq
      %v3890 = vshrl.u32 %v3889, 7
      %v3891 = vsub.s32 2, %v3890
      %v3892 = vrot.slane %v3841, %v3891
      %v3893 = vlaneseq
      %v3894 = vshrl.u32 %v3893, 7
      %v3895 = vsub.s32 2, %v3894
      %v3896 = vrot.slane %v3838, %v3895
      %v3897 = vlaneseq
      %v3898 = vshrl.u32 %v3897, 7
      %v3899 = vsub.s32 2, %v3898
      %v3900 = vrot.slane %v3842, %v3899
      %v3905 = vlaneseq
      %v3906 = vshrl.u32 %v3905, 7
      %v3907 = vsub.s32 3, %v3906
      %v3908 = vrot.slane %v3837, %v3907
      %v3909 = vlaneseq
      %v3910 = vshrl.u32 %v3909, 7
      %v3911 = vsub.s32 3, %v3910
      %v3912 = vrot.slane %v3841, %v3911
      %v3913 = vlaneseq
      %v3914 = vshrl.u32 %v3913, 7
      %v3915 = vsub.s32 3, %v3914
      %v3916 = vrot.slane %v3838, %v3915
      %v3917 = vlaneseq
      %v3918 = vshrl.u32 %v3917, 7
      %v3919 = vsub.s32 3, %v3918
      %v3920 = vrot.slane %v3842, %v3919
      %v3925 = vsel %vm560, %v3837, %v3848
      %v3926 = vsel %vm560, %v3841, %v3852
      %v3927 = vsel %vm560, %v3838, %v3856
      %v3928 = vsel %vm560, %v3842, %v3860
      %v3929 = vsel %vm2517, %v3925, %v3868
      %v3930 = vsel %vm2517, %v3926, %v3872
      %v3931 = vsel %vm2517, %v3927, %v3876
      %v3932 = vsel %vm2517, %v3928, %v3880
      %v3933 = vsel %vm2040, %v3929, %v3868
      %v3934 = vsel %vm2040, %v3930, %v3872
      %v3935 = vsel %vm2040, %v3931, %v3876
      %v3936 = vsel %vm2040, %v3932, %v3880
      %v3937 = vsel %vm2534, %v3933, %v3888
      %v3938 = vsel %vm2534, %v3934, %v3892
      %v3939 = vsel %vm2534, %v3935, %v3896
      %v3940 = vsel %vm2534, %v3936, %v3900
      %v3941 = vsel %vm2543, %v3937, %v3888
      %v3942 = vsel %vm2543, %v3938, %v3892
      %v3943 = vsel %vm2543, %v3939, %v3896
      %v3944 = vsel %vm2543, %v3940, %v3900
      %v3945 = vsel %vm903, %v3941, %v3908
      %v3946 = vsel %vm903, %v3942, %v3912
      %v3947 = vsel %vm903, %v3943, %v3916
      %v3948 = vsel %vm903, %v3944, %v3920
      %v3949 = vsel %vm726, %v3945, %v3908
      %v3950 = vsel %vm726, %v3946, %v3912
      %v3951 = vsel %vm726, %v3947, %v3916
      %v3952 = vsel %vm726, %v3948, %v3920
      %v3957 = vrot.slane %v3949, 7
      %v3958 = vrot.slane %v3950, 7
      %v3959 = vrot.slane %v3951, 7
      %v3960 = vrot.slane %v3952, 7
      %v3965 = vsel %vm560, 0.0, %v3957
      %v3966 = vsel %vm560, 0.0, %v3958
      %v3967 = vsel %vm560, 0.0, %v3959
      %v3968 = vsel %vm560, 0.0, %v3960
      %v3969 = vsel %vm560, %v3957, 0.0
      %v3970 = vsel %vm560, %v3958, 0.0
      %v3971 = vsel %vm560, %v3959, 0.0
      %v3972 = vsel %vm560, %v3960, 0.0
      %v3981 = vrot.slane %v3965, 1
      %v3982 = vrot.slane %v3969, 1
      %v3983 = vsel %vm726, %v3981, %v3982
      %v3984 = vrot.slane %v3966, 1
      %v3985 = vrot.slane %v3970, 1
      %v3986 = vsel %vm726, %v3984, %v3985
      %v3987 = vrot.slane %v3967, 1
      %v3988 = vrot.slane %v3971, 1
      %v3989 = vsel %vm726, %v3987, %v3988
      %v3990 = vrot.slane %v3968, 1
      %v3991 = vrot.slane %v3972, 1
      %v3992 = vsel %vm726, %v3990, %v3991
      %3993 = vrot.lane.b32.xlu0 %v2622, 16
      %v3994 = vpop.permute.xlu0 %3993
      %3995 = vrot.lane.b32.xlu0 %v3983, 16
      %v3996 = vpop.permute.xlu0 %3995
      %3997 = vrot.lane.b32.xlu0 %v3986, 16
      %v3998 = vpop.permute.xlu0 %3997
      %3999 = vrot.lane.b32.xlu0 %v3989, 16
      %v4000 = vpop.permute.xlu0 %3999
      %4001 = vrot.lane.b32.xlu0 %v3992, 16
      %v4002 = vpop.permute.xlu0 %4001
      %v4008 = vrot.slane %v3965, 2
      %v4009 = vrot.slane %v3969, 2
      %v4010 = vsel %vm903, %v4008, %v4009
      %v4011 = vrot.slane %v3966, 2
      %v4012 = vrot.slane %v3970, 2
      %v4013 = vsel %vm903, %v4011, %v4012
      %v4014 = vrot.slane %v3967, 2
      %v4015 = vrot.slane %v3971, 2
      %v4016 = vsel %vm903, %v4014, %v4015
      %v4017 = vrot.slane %v3968, 2
      %v4018 = vrot.slane %v3972, 2
      %v4019 = vsel %vm903, %v4017, %v4018
      %4020 = vrot.lane.b32.xlu0 %v2668, 32
      %v4021 = vpop.permute.xlu0 %4020
      %4022 = vrot.lane.b32.xlu0 %v4010, 32
      %v4023 = vpop.permute.xlu0 %4022
      %4024 = vrot.lane.b32.xlu0 %v4013, 32
      %v4025 = vpop.permute.xlu0 %4024
      %4026 = vrot.lane.b32.xlu0 %v4016, 32
      %v4027 = vpop.permute.xlu0 %4026
      %4028 = vrot.lane.b32.xlu0 %v4019, 32
      %v4029 = vpop.permute.xlu0 %4028
      %4035 = vrot.lane.b32.xlu0 %v3965, 48
      %v4036 = vpop.permute.xlu0 %4035
      %4037 = vrot.lane.b32.xlu0 %v3966, 48
      %v4038 = vpop.permute.xlu0 %4037
      %4039 = vrot.lane.b32.xlu0 %v3967, 48
      %v4040 = vpop.permute.xlu0 %4039
      %4041 = vrot.lane.b32.xlu0 %v3968, 48
      %v4042 = vpop.permute.xlu0 %4041
      %4047 = vrot.lane.b32.xlu0 %v3983, 64
      %v4048 = vpop.permute.xlu0 %4047
      %4049 = vrot.lane.b32.xlu0 %v3986, 64
      %v4050 = vpop.permute.xlu0 %4049
      %4051 = vrot.lane.b32.xlu0 %v3989, 64
      %v4052 = vpop.permute.xlu0 %4051
      %4053 = vrot.lane.b32.xlu0 %v3992, 64
      %v4054 = vpop.permute.xlu0 %4053
      %4059 = vrot.lane.b32.xlu0 %v4010, 80
      %v4060 = vpop.permute.xlu0 %4059
      %4061 = vrot.lane.b32.xlu0 %v4013, 80
      %v4062 = vpop.permute.xlu0 %4061
      %4063 = vrot.lane.b32.xlu0 %v4016, 80
      %v4064 = vpop.permute.xlu0 %4063
      %4065 = vrot.lane.b32.xlu0 %v4019, 80
      %v4066 = vpop.permute.xlu0 %4065
      %4071 = vrot.lane.b32.xlu0 %v3965, 96
      %v4072 = vpop.permute.xlu0 %4071
      %4073 = vrot.lane.b32.xlu0 %v3966, 96
      %v4074 = vpop.permute.xlu0 %4073
      %4075 = vrot.lane.b32.xlu0 %v3967, 96
      %v4076 = vpop.permute.xlu0 %4075
      %4077 = vrot.lane.b32.xlu0 %v3968, 96
      %v4078 = vpop.permute.xlu0 %4077
      %4079 = vrot.lane.b32.xlu0 %v660, 96
      %v4080 = vpop.permute.xlu0 %4079
      %4086 = vrot.lane.b32.xlu0 %v3983, 112
      %v4087 = vpop.permute.xlu0 %4086
      %4088 = vrot.lane.b32.xlu0 %v3986, 112
      %v4089 = vpop.permute.xlu0 %4088
      %4090 = vrot.lane.b32.xlu0 %v3989, 112
      %v4091 = vpop.permute.xlu0 %4090
      %4092 = vrot.lane.b32.xlu0 %v3992, 112
      %v4093 = vpop.permute.xlu0 %4092
      %4094 = vrot.lane.b32.xlu0 %v2622, 112
      %v4095 = vpop.permute.xlu0 %4094
      %v4101 = vsel %vm3689, %v660, %v3994
      %v4102 = vsel %vm3689, %v3965, %v3996
      %v4103 = vsel %vm3689, %v3966, %v3998
      %v4104 = vsel %vm3689, %v3967, %v4000
      %v4105 = vsel %vm3689, %v3968, %v4002
      %v4106 = vsel %vm2826, %v4101, %v4021
      %v4107 = vsel %vm2826, %v4102, %v4023
      %v4108 = vsel %vm2826, %v4103, %v4025
      %v4109 = vsel %vm2826, %v4104, %v4027
      %v4110 = vsel %vm2826, %v4105, %v4029
      %v4111 = vsel %vm3696, %v4106, %v4036
      %v4112 = vsel %vm3696, %v4107, %v4036
      %v4113 = vsel %vm3696, %v4107, %v4038
      %v4114 = vsel %vm3696, %v4108, %v4038
      %v4115 = vsel %vm3696, %v4108, %v4040
      %v4116 = vsel %vm3696, %v4109, %v4040
      %v4117 = vsel %vm3696, %v4109, %v4042
      %v4118 = vsel %vm3696, %v4110, %v4042
      %v4119 = vsel %vm2835, %v4111, %v4048
      %v4120 = vsel %vm2835, %v4112, %v4048
      %v4121 = vsel %vm2835, %v4113, %v4050
      %v4122 = vsel %vm2835, %v4114, %v4050
      %v4123 = vsel %vm2835, %v4115, %v4052
      %v4124 = vsel %vm2835, %v4116, %v4052
      %v4125 = vsel %vm2835, %v4117, %v4054
      %v4126 = vsel %vm2835, %v4118, %v4054
      %v4127 = vsel %vm3705, %v4119, %v4060
      %v4128 = vsel %vm3705, %v4120, %v4060
      %v4129 = vsel %vm3705, %v4121, %v4062
      %v4130 = vsel %vm3705, %v4122, %v4062
      %v4131 = vsel %vm3705, %v4123, %v4064
      %v4132 = vsel %vm3705, %v4124, %v4064
      %v4133 = vsel %vm3705, %v4125, %v4066
      %v4134 = vsel %vm3705, %v4126, %v4066
      %v4135 = vsel %vm2844, %v4127, %v4072
      %v4136 = vsel %vm2844, %v4128, %v4074
      %v4137 = vsel %vm2844, %v4129, %v4074
      %v4138 = vsel %vm2844, %v4130, %v4076
      %v4139 = vsel %vm2844, %v4131, %v4076
      %v4140 = vsel %vm2844, %v4132, %v4078
      %v4141 = vsel %vm2844, %v4133, %v4078
      %v4142 = vsel %vm2844, %v4134, %v4080
      %v4143 = vsel %vm3714, %v4135, %v4087
      %v4144 = vsel %vm3714, %v4136, %v4089
      %v4145 = vsel %vm3714, %v4137, %v4089
      %v4146 = vsel %vm3714, %v4138, %v4091
      %v4147 = vsel %vm3714, %v4139, %v4091
      %v4148 = vsel %vm3714, %v4140, %v4093
      %v4149 = vsel %vm3714, %v4141, %v4093
      %v4150 = vsel %vm3714, %v4142, %v4095
      %v4151 = vld [vmem:[%s9] sm:$0xff]
      %v4152 = vld [vmem:[%s9 + $0x8] sm:$0xff]
      %v4153 = vld [vmem:[%s9 + $0x10] sm:$0xff]
      %v4154 = vld [vmem:[%s9 + $0x18] sm:$0xff]
      %v4155 = vld [vmem:[%s9 + $0x20] sm:$0xff]
      %v4156 = vld [vmem:[%s9 + $0x28] sm:$0xff]
      %v4157 = vld [vmem:[%s9 + $0x30] sm:$0xff]
      %v4158 = vld [vmem:[%s9 + $0x38] sm:$0xff]
      %v4159 = vld [vmem:[%s9 + $0x40] sm:$0xff]
      %v4160 = vld [vmem:[%s9 + $0x48] sm:$0xff]
      %v4161 = vld [vmem:[%s9 + $0x50] sm:$0xff]
      %v4162 = vld [vmem:[%s9 + $0x58] sm:$0xff]
      %v4163 = vld [vmem:[%s9 + $0x60] sm:$0xff]
      %v4164 = vld [vmem:[%s9 + $0x68] sm:$0xff]
      %v4165 = vld [vmem:[%s9 + $0x70] sm:$0xff]
      %v4166 = vld [vmem:[%s9 + $0x78] sm:$0xff]
      %v4167 = vld [vmem:[%s9 + $0x80] sm:$0xff]
      %v4168 = vld [vmem:[%s9 + $0x88] sm:$0xff]
      %v4169 = vld [vmem:[%s10] sm:$0x1]
      %v4171 = vlaneseq
      %v4172 = vshrl.u32 %v4171, 7
      %v4173 = vsub.s32 0, %v4172
      %v4174 = vrot.slane %v4169, %v4173
      %v4176 = vsel %vm3689, %v4010, 0
      %v4178 = vsel %vm3689, %v4013, 0
      %v4180 = vsel %vm3689, %v4016, 0
      %v4182 = vsel %vm3689, %v4019, 0
      %v4184 = vsel %vm3689, %v2668, 0
      %4186 = vmatprep.subr.mxu0 0.0
      %4187 = vmatpush1.msra.mxu0 %v4151
      %4188 = vmatprep.subr.mxu0 0.0
      %4189 = vmatpush1.msra.mxu0 %v4152
      %4190 = vmatprep.subr.mxu0 0.0
      %4191 = vmatpush1.msra.mxu0 %v4153
      %4192 = vmatprep.subr.mxu0 0.0
      %4193 = vmatpush1.msra.mxu0 %v4154
      %4194 = vmatprep.subr.mxu0 0.0
      %4195 = vmatpush1.msra.mxu0 %v4155
      %4196 = vmatprep.subr.mxu0 0.0
      %4197 = vmatpush1.msra.mxu0 %v4156
      %4198 = vmatprep.subr.mxu0 0.0
      %4199 = vmatpush1.msra.mxu0 %v4157
      %4200 = vmatprep.subr.mxu0 0.0
      %4201 = vmatpush1.msra.mxu0 %v4158
      %4202 = vmatprep.subr.mxu0 0.0
      %4203 = vmatpush1.msra.mxu0 %v4159
      %4204 = vmatprep.subr.mxu0 0.0
      %4205 = vmatpush1.msra.mxu0 %v4160
      %4206 = vmatprep.subr.mxu0 0.0
      %4207 = vmatpush1.msra.mxu0 %v4161
      %4208 = vmatprep.subr.mxu0 0.0
      %4209 = vmatpush1.msra.mxu0 %v4162
      %4210 = vmatprep.subr.mxu0 0.0
      %4211 = vmatpush1.msra.mxu0 %v4163
      %4212 = vmatprep.subr.mxu0 0.0
      %4213 = vmatpush1.msra.mxu0 %v4164
      %4214 = vmatprep.subr.mxu0 0.0
      %4215 = vmatpush1.msra.mxu0 %v4165
      %4216 = vmatprep.subr.mxu0 0.0
      %4217 = vmatpush1.msra.mxu0 %v4166
      %4218 = vmatprep.subr.mxu0 0.0
      %4219 = vmatpush1.msra.mxu0 %v4167
      %4220 = vmatprep.subr.mxu0 0.0
      %4221 = vmatpush1.msra.mxu0 %v4168
      %4222 = vmatprep.subr.mxu0 0.0
      %4223 = vmatpush1.msra.mxu0 0.0
      %4224 = vmatprep.subr.mxu0 0.0
      %4225 = vmatpush1.msra.mxu0 0.0
      %4226 = vmatprep.subr.mxu0 0.0
      %4227 = vmatpush1.msra.mxu0 0.0
      %4228 = vmatprep.subr.mxu0 0.0
      %4229 = vmatpush1.msra.mxu0 0.0
      %4230 = vmatprep.subr.mxu0 0.0
      %4231 = vmatpush1.msra.mxu0 0.0
      %4232 = vmatprep.subr.mxu0 0.0
      %4233 = vmatpush1.msra.mxu0 0.0
      %4234 = vmatprep.subr.mxu0 0.0
      %4235 = vmatpush1.msra.mxu0 0.0
      %4236 = vmatprep.subr.mxu0 0.0
      %4237 = vmatpush1.msra.mxu0 0.0
      %4238 = vmatprep.subr.mxu0 0.0
      %4239 = vmatpush1.msra.mxu0 0.0
      %4240 = vmatprep.subr.mxu0 0.0
      %4241 = vmatpush1.msra.mxu0 0.0
      %4242 = vmatprep.subr.mxu0 0.0
      %4243 = vmatpush1.msra.mxu0 0.0
      %4244 = vmatprep.subr.mxu0 0.0
      %4245 = vmatpush1.msra.mxu0 0.0
      %4246 = vmatprep.subr.mxu0 0.0
      %4247 = vmatpush1.msra.mxu0 0.0
      %4248 = vmatprep.subr.mxu0 0.0
      %4249 = vmatpush1.msra.mxu0 0.0
      %4250 = vmatprep.mubr.f32.mxu0 %v4176
      %4251 = vmatmul.mubr.f32.gmra.mrb[0].mxu0 %v4143
      %v4252 = vpop.f32.mrb[0].mxu0
      %v4253 = vadd.f32 %v4174, %v4252
      %v4254 = vpop.f32.mrb[0].mxu0
      %4255 = vmatprep.mubr.f32.mxu0 %v4178
      %4256 = vmatmul.mubr.f32.gmra.mrb[0].mxu0 %v4144
      %v4257 = vpop.f32.mrb[0].mxu0
      %v4258 = vadd.f32 %v4174, %v4257
      %v4259 = vpop.f32.mrb[0].mxu0
      %4260 = vmatprep.mubr.f32.mxu0 %v4178
      %4261 = vmatmul.mubr.f32.gmra.mrb[0].mxu0 %v4145
      %v4262 = vpop.f32.mrb[0].mxu0
      %v4263 = vadd.f32 %v4174, %v4262
      %v4264 = vpop.f32.mrb[0].mxu0
      %4265 = vmatprep.mubr.f32.mxu0 %v4180
      %4266 = vmatmul.mubr.f32.gmra.mrb[0].mxu0 %v4146
      %v4267 = vpop.f32.mrb[0].mxu0
      %v4268 = vadd.f32 %v4174, %v4267
      %v4269 = vpop.f32.mrb[0].mxu0
      %4270 = vmatprep.mubr.f32.mxu0 %v4180
      %4271 = vmatmul.mubr.f32.gmra.mrb[0].mxu0 %v4147
      %v4272 = vpop.f32.mrb[0].mxu0
      %v4273 = vadd.f32 %v4174, %v4272
      %v4274 = vpop.f32.mrb[0].mxu0
      %4275 = vmatprep.mubr.f32.mxu0 %v4182
      %4276 = vmatmul.mubr.f32.gmra.mrb[0].mxu0 %v4148
      %v4277 = vpop.f32.mrb[0].mxu0
      %v4278 = vadd.f32 %v4174, %v4277
      %v4279 = vpop.f32.mrb[0].mxu0
      %4280 = vmatprep.mubr.f32.mxu0 %v4182
      %4281 = vmatmul.mubr.f32.gmra.mrb[0].mxu0 %v4149
      %v4282 = vpop.f32.mrb[0].mxu0
      %v4283 = vadd.f32 %v4174, %v4282
      %v4284 = vpop.f32.mrb[0].mxu0
      %4285 = vmatprep.mubr.f32.mxu0 %v4184
      %4286 = vmatmul.mubr.f32.gmra.mrb[0].mxu0 %v4150
      %v4287 = vpop.f32.mrb[0].mxu0
      %v4288 = vadd.f32 %v4174, %v4287
      %v4289 = vpop.f32.mrb[0].mxu0
      %4290 = vdwg.mxu0
      %v4291 = vmax.f32 %v4253, 0.0
      %v4292 = vmax.f32 %v4258, 0.0
      %v4293 = vmax.f32 %v4263, 0.0
      %v4294 = vmax.f32 %v4268, 0.0
      %v4295 = vmax.f32 %v4273, 0.0
      %v4296 = vmax.f32 %v4278, 0.0
      %v4297 = vmax.f32 %v4283, 0.0
      %v4298 = vmax.f32 %v4288, 0.0
      %v4307 = vrot.slane %v4291, 7
      %v4308 = vrot.slane %v4292, 7
      %v4309 = vrot.slane %v4293, 7
      %v4310 = vrot.slane %v4294, 7
      %v4311 = vrot.slane %v4295, 7
      %v4312 = vrot.slane %v4296, 7
      %v4313 = vrot.slane %v4297, 7
      %v4314 = vrot.slane %v4298, 7
      %v4323 = vrot.slane %v4291, 6
      %v4324 = vrot.slane %v4292, 6
      %v4325 = vrot.slane %v4293, 6
      %v4326 = vrot.slane %v4294, 6
      %v4327 = vrot.slane %v4295, 6
      %v4328 = vrot.slane %v4296, 6
      %v4329 = vrot.slane %v4297, 6
      %v4330 = vrot.slane %v4298, 6
      %v4339 = vrot.slane %v4291, 5
      %v4340 = vrot.slane %v4292, 5
      %v4341 = vrot.slane %v4293, 5
      %v4342 = vrot.slane %v4294, 5
      %v4343 = vrot.slane %v4295, 5
      %v4344 = vrot.slane %v4296, 5
      %v4345 = vrot.slane %v4297, 5
      %v4346 = vrot.slane %v4298, 5
      %v4355 = vrot.slane %v4291, 4
      %v4356 = vrot.slane %v4292, 4
      %v4357 = vrot.slane %v4293, 4
      %v4358 = vrot.slane %v4294, 4
      %v4359 = vrot.slane %v4295, 4
      %v4360 = vrot.slane %v4296, 4
      %v4361 = vrot.slane %v4297, 4
      %v4362 = vrot.slane %v4298, 4
      %v4371 = vrot.slane %v4291, 3
      %v4372 = vrot.slane %v4292, 3
      %v4373 = vrot.slane %v4293, 3
      %v4374 = vrot.slane %v4294, 3
      %v4375 = vrot.slane %v4295, 3
      %v4376 = vrot.slane %v4296, 3
      %v4377 = vrot.slane %v4297, 3
      %v4378 = vrot.slane %v4298, 3
      %v4387 = vrot.slane %v4291, 2
      %v4388 = vrot.slane %v4292, 2
      %v4389 = vrot.slane %v4293, 2
      %v4390 = vrot.slane %v4294, 2
      %v4391 = vrot.slane %v4295, 2
      %v4392 = vrot.slane %v4296, 2
      %v4393 = vrot.slane %v4297, 2
      %v4394 = vrot.slane %v4298, 2
      %v4403 = vrot.slane %v4291, 1
      %v4404 = vrot.slane %v4292, 1
      %v4405 = vrot.slane %v4293, 1
      %v4406 = vrot.slane %v4294, 1
      %v4407 = vrot.slane %v4295, 1
      %v4408 = vrot.slane %v4296, 1
      %v4409 = vrot.slane %v4297, 1
      %v4410 = vrot.slane %v4298, 1
      %v4419 = vsel %vm560, %v4291, %v4307
      %v4420 = vsel %vm560, %v4292, %v4308
      %v4421 = vsel %vm560, %v4293, %v4309
      %v4422 = vsel %vm560, %v4294, %v4310
      %v4423 = vsel %vm560, %v4295, %v4311
      %v4424 = vsel %vm560, %v4296, %v4312
      %v4425 = vsel %vm560, %v4297, %v4313
      %v4426 = vsel %vm560, %v4298, %v4314
      %v4427 = vsel %vm2517, %v4419, %v4307
      %v4428 = vsel %vm2517, %v4420, %v4308
      %v4429 = vsel %vm2517, %v4421, %v4309
      %v4430 = vsel %vm2517, %v4422, %v4310
      %v4431 = vsel %vm2517, %v4423, %v4311
      %v4432 = vsel %vm2517, %v4424, %v4312
      %v4433 = vsel %vm2517, %v4425, %v4313
      %v4434 = vsel %vm2517, %v4426, %v4314
      %v4435 = vsel %vm2040, %v4427, %v4323
      %v4436 = vsel %vm2040, %v4428, %v4324
      %v4437 = vsel %vm2040, %v4429, %v4325
      %v4438 = vsel %vm2040, %v4430, %v4326
      %v4439 = vsel %vm2040, %v4431, %v4327
      %v4440 = vsel %vm2040, %v4432, %v4328
      %v4441 = vsel %vm2040, %v4433, %v4329
      %v4442 = vsel %vm2040, %v4434, %v4330
      %v4443 = vsel %vm2534, %v4435, %v4323
      %v4444 = vsel %vm2534, %v4436, %v4324
      %v4445 = vsel %vm2534, %v4437, %v4325
      %v4446 = vsel %vm2534, %v4438, %v4326
      %v4447 = vsel %vm2534, %v4439, %v4327
      %v4448 = vsel %vm2534, %v4440, %v4328
      %v4449 = vsel %vm2534, %v4441, %v4329
      %v4450 = vsel %vm2534, %v4442, %v4330
      %v4451 = vsel %vm2543, %v4443, %v4339
      %v4452 = vsel %vm2543, %v4444, %v4340
      %v4453 = vsel %vm2543, %v4445, %v4341
      %v4454 = vsel %vm2543, %v4446, %v4342
      %v4455 = vsel %vm2543, %v4447, %v4343
      %v4456 = vsel %vm2543, %v4448, %v4344
      %v4457 = vsel %vm2543, %v4449, %v4345
      %v4458 = vsel %vm2543, %v4450, %v4346
      %v4459 = vsel %vm903, %v4451, %v4339
      %v4460 = vsel %vm903, %v4452, %v4340
      %v4461 = vsel %vm903, %v4453, %v4341
      %v4462 = vsel %vm903, %v4454, %v4342
      %v4463 = vsel %vm903, %v4455, %v4343
      %v4464 = vsel %vm903, %v4456, %v4344
      %v4465 = vsel %vm903, %v4457, %v4345
      %v4466 = vsel %vm903, %v4458, %v4346
      %v4467 = vsel %vm726, %v4459, %v4355
      %v4468 = vsel %vm726, %v4460, %v4356
      %v4469 = vsel %vm726, %v4461, %v4357
      %v4470 = vsel %vm726, %v4462, %v4358
      %v4471 = vsel %vm726, %v4463, %v4359
      %v4472 = vsel %vm726, %v4464, %v4360
      %v4473 = vsel %vm726, %v4465, %v4361
      %v4474 = vsel %vm726, %v4466, %v4362
      %v4475 = vsel %vm560, %v4355, %v4371
      %v4476 = vsel %vm560, %v4356, %v4372
      %v4477 = vsel %vm560, %v4357, %v4373
      %v4478 = vsel %vm560, %v4358, %v4374
      %v4479 = vsel %vm560, %v4359, %v4375
      %v4480 = vsel %vm560, %v4360, %v4376
      %v4481 = vsel %vm560, %v4361, %v4377
      %v4482 = vsel %vm560, %v4362, %v4378
      %v4483 = vsel %vm2517, %v4475, %v4371
      %v4484 = vsel %vm2517, %v4476, %v4372
      %v4485 = vsel %vm2517, %v4477, %v4373
      %v4486 = vsel %vm2517, %v4478, %v4374
      %v4487 = vsel %vm2517, %v4479, %v4375
      %v4488 = vsel %vm2517, %v4480, %v4376
      %v4489 = vsel %vm2517, %v4481, %v4377
      %v4490 = vsel %vm2517, %v4482, %v4378
      %v4491 = vsel %vm2040, %v4483, %v4387
      %v4492 = vsel %vm2040, %v4484, %v4388
      %v4493 = vsel %vm2040, %v4485, %v4389
      %v4494 = vsel %vm2040, %v4486, %v4390
      %v4495 = vsel %vm2040, %v4487, %v4391
      %v4496 = vsel %vm2040, %v4488, %v4392
      %v4497 = vsel %vm2040, %v4489, %v4393
      %v4498 = vsel %vm2040, %v4490, %v4394
      %v4499 = vsel %vm2534, %v4491, %v4387
      %v4500 = vsel %vm2534, %v4492, %v4388
      %v4501 = vsel %vm2534, %v4493, %v4389
      %v4502 = vsel %vm2534, %v4494, %v4390
      %v4503 = vsel %vm2534, %v4495, %v4391
      %v4504 = vsel %vm2534, %v4496, %v4392
      %v4505 = vsel %vm2534, %v4497, %v4393
      %v4506 = vsel %vm2534, %v4498, %v4394
      %v4507 = vsel %vm2543, %v4499, %v4403
      %v4508 = vsel %vm2543, %v4500, %v4404
      %v4509 = vsel %vm2543, %v4501, %v4405
      %v4510 = vsel %vm2543, %v4502, %v4406
      %v4511 = vsel %vm2543, %v4503, %v4407
      %v4512 = vsel %vm2543, %v4504, %v4408
      %v4513 = vsel %vm2543, %v4505, %v4409
      %v4514 = vsel %vm2543, %v4506, %v4410
      %v4515 = vsel %vm903, %v4507, %v4403
      %v4516 = vsel %vm903, %v4508, %v4404
      %v4517 = vsel %vm903, %v4509, %v4405
      %v4518 = vsel %vm903, %v4510, %v4406
      %v4519 = vsel %vm903, %v4511, %v4407
      %v4520 = vsel %vm903, %v4512, %v4408
      %v4521 = vsel %vm903, %v4513, %v4409
      %v4522 = vsel %vm903, %v4514, %v4410
      %v4523 = vsel %vm726, %v4515, %v4291
      %v4524 = vsel %vm726, %v4516, %v4292
      %v4525 = vsel %vm726, %v4517, %v4293
      %v4526 = vsel %vm726, %v4518, %v4294
      %v4527 = vsel %vm726, %v4519, %v4295
      %v4528 = vsel %vm726, %v4520, %v4296
      %v4529 = vsel %vm726, %v4521, %v4297
      %v4530 = vsel %vm726, %v4522, %v4298
      %v4547 = vrot.slane %v4467, 7
      %v4548 = vrot.slane %v4523, 7
      %v4549 = vsel %vm560, %v4547, %v4548
      %v4550 = vrot.slane %v4468, 7
      %v4551 = vrot.slane %v4524, 7
      %v4552 = vsel %vm560, %v4550, %v4551
      %v4553 = vrot.slane %v4469, 7
      %v4554 = vrot.slane %v4525, 7
      %v4555 = vsel %vm560, %v4553, %v4554
      %v4556 = vrot.slane %v4470, 7
      %v4557 = vrot.slane %v4526, 7
      %v4558 = vsel %vm560, %v4556, %v4557
      %v4559 = vrot.slane %v4471, 7
      %v4560 = vrot.slane %v4527, 7
      %v4561 = vsel %vm560, %v4559, %v4560
      %v4562 = vrot.slane %v4472, 7
      %v4563 = vrot.slane %v4528, 7
      %v4564 = vsel %vm560, %v4562, %v4563
      %v4565 = vrot.slane %v4473, 7
      %v4566 = vrot.slane %v4529, 7
      %v4567 = vsel %vm560, %v4565, %v4566
      %v4568 = vrot.slane %v4474, 7
      %v4569 = vrot.slane %v4530, 7
      %v4570 = vsel %vm560, %v4568, %v4569
      %v4595 = vsel %vm560, 0.0, %v4547
      %v4596 = vsel %vm560, 0.0, %v4550
      %v4597 = vsel %vm560, 0.0, %v4553
      %v4598 = vsel %vm560, 0.0, %v4556
      %v4599 = vsel %vm560, 0.0, %v4559
      %v4600 = vsel %vm560, 0.0, %v4562
      %v4601 = vsel %vm560, 0.0, %v4565
      %v4602 = vsel %vm560, 0.0, %v4568
      %v4603 = vsel %vm560, %v4548, 0.0
      %v4604 = vsel %vm560, %v4551, 0.0
      %v4605 = vsel %vm560, %v4554, 0.0
      %v4606 = vsel %vm560, %v4557, 0.0
      %v4607 = vsel %vm560, %v4560, 0.0
      %v4608 = vsel %vm560, %v4563, 0.0
      %v4609 = vsel %vm560, %v4566, 0.0
      %v4610 = vsel %vm560, %v4569, 0.0
      %v4627 = vrot.slane %v4595, 1
      %v4628 = vrot.slane %v4549, 1
      %v4629 = vsel %vm726, %v4627, %v4628
      %v4630 = vrot.slane %v4603, 1
      %v4631 = vsel %vm726, %v4628, %v4630
      %v4632 = vrot.slane %v4596, 1
      %v4633 = vrot.slane %v4552, 1
      %v4634 = vsel %vm726, %v4632, %v4633
      %v4635 = vrot.slane %v4604, 1
      %v4636 = vsel %vm726, %v4633, %v4635
      %v4637 = vrot.slane %v4597, 1
      %v4638 = vrot.slane %v4555, 1
      %v4639 = vsel %vm726, %v4637, %v4638
      %v4640 = vrot.slane %v4605, 1
      %v4641 = vsel %vm726, %v4638, %v4640
      %v4642 = vrot.slane %v4598, 1
      %v4643 = vrot.slane %v4558, 1
      %v4644 = vsel %vm726, %v4642, %v4643
      %v4645 = vrot.slane %v4606, 1
      %v4646 = vsel %vm726, %v4643, %v4645
      %v4647 = vrot.slane %v4599, 1
      %v4648 = vrot.slane %v4561, 1
      %v4649 = vsel %vm726, %v4647, %v4648
      %v4650 = vrot.slane %v4607, 1
      %v4651 = vsel %vm726, %v4648, %v4650
      %v4652 = vrot.slane %v4600, 1
      %v4653 = vrot.slane %v4564, 1
      %v4654 = vsel %vm726, %v4652, %v4653
      %v4655 = vrot.slane %v4608, 1
      %v4656 = vsel %vm726, %v4653, %v4655
      %v4657 = vrot.slane %v4601, 1
      %v4658 = vrot.slane %v4567, 1
      %v4659 = vsel %vm726, %v4657, %v4658
      %v4660 = vrot.slane %v4609, 1
      %v4661 = vsel %vm726, %v4658, %v4660
      %v4662 = vrot.slane %v4602, 1
      %v4663 = vrot.slane %v4570, 1
      %v4664 = vsel %vm726, %v4662, %v4663
      %v4665 = vrot.slane %v4610, 1
      %v4666 = vsel %vm726, %v4663, %v4665
      %4667 = vrot.lane.b32.xlu0 %v729, 32
      %v4668 = vpop.permute.xlu0 %4667
      %4669 = vrot.lane.b32.xlu0 %v731, 32
      %v4670 = vpop.permute.xlu0 %4669
      %4671 = vrot.lane.b32.xlu0 %v4629, 32
      %v4672 = vpop.permute.xlu0 %4671
      %4673 = vrot.lane.b32.xlu0 %v4631, 32
      %v4674 = vpop.permute.xlu0 %4673
      %4675 = vrot.lane.b32.xlu0 %v4634, 32
      %v4676 = vpop.permute.xlu0 %4675
      %4677 = vrot.lane.b32.xlu0 %v4636, 32
      %v4678 = vpop.permute.xlu0 %4677
      %4679 = vrot.lane.b32.xlu0 %v4639, 32
      %v4680 = vpop.permute.xlu0 %4679
      %4681 = vrot.lane.b32.xlu0 %v4641, 32
      %v4682 = vpop.permute.xlu0 %4681
      %4683 = vrot.lane.b32.xlu0 %v4644, 32
      %v4684 = vpop.permute.xlu0 %4683
      %4685 = vrot.lane.b32.xlu0 %v4646, 32
      %v4686 = vpop.permute.xlu0 %4685
      %4687 = vrot.lane.b32.xlu0 %v4649, 32
      %v4688 = vpop.permute.xlu0 %4687
      %4689 = vrot.lane.b32.xlu0 %v4651, 32
      %v4690 = vpop.permute.xlu0 %4689
      %4691 = vrot.lane.b32.xlu0 %v4654, 32
      %v4692 = vpop.permute.xlu0 %4691
      %4693 = vrot.lane.b32.xlu0 %v4656, 32
      %v4694 = vpop.permute.xlu0 %4693
      %4695 = vrot.lane.b32.xlu0 %v4659, 32
      %v4696 = vpop.permute.xlu0 %4695
      %4697 = vrot.lane.b32.xlu0 %v4661, 32
      %v4698 = vpop.permute.xlu0 %4697
      %4699 = vrot.lane.b32.xlu0 %v4664, 32
      %v4700 = vpop.permute.xlu0 %4699
      %4701 = vrot.lane.b32.xlu0 %v4666, 32
      %v4702 = vpop.permute.xlu0 %4701
      %v4721 = vrot.slane %v4595, 2
      %v4722 = vrot.slane %v4549, 2
      %v4723 = vsel %vm903, %v4721, %v4722
      %v4724 = vrot.slane %v4603, 2
      %v4725 = vsel %vm903, %v4722, %v4724
      %v4726 = vrot.slane %v4596, 2
      %v4727 = vrot.slane %v4552, 2
      %v4728 = vsel %vm903, %v4726, %v4727
      %v4729 = vrot.slane %v4604, 2
      %v4730 = vsel %vm903, %v4727, %v4729
      %v4731 = vrot.slane %v4597, 2
      %v4732 = vrot.slane %v4555, 2
      %v4733 = vsel %vm903, %v4731, %v4732
      %v4734 = vrot.slane %v4605, 2
      %v4735 = vsel %vm903, %v4732, %v4734
      %v4736 = vrot.slane %v4598, 2
      %v4737 = vrot.slane %v4558, 2
      %v4738 = vsel %vm903, %v4736, %v4737
      %v4739 = vrot.slane %v4606, 2
      %v4740 = vsel %vm903, %v4737, %v4739
      %v4741 = vrot.slane %v4599, 2
      %v4742 = vrot.slane %v4561, 2
      %v4743 = vsel %vm903, %v4741, %v4742
      %v4744 = vrot.slane %v4607, 2
      %v4745 = vsel %vm903, %v4742, %v4744
      %v4746 = vrot.slane %v4600, 2
      %v4747 = vrot.slane %v4564, 2
      %v4748 = vsel %vm903, %v4746, %v4747
      %v4749 = vrot.slane %v4608, 2
      %v4750 = vsel %vm903, %v4747, %v4749
      %v4751 = vrot.slane %v4601, 2
      %v4752 = vrot.slane %v4567, 2
      %v4753 = vsel %vm903, %v4751, %v4752
      %v4754 = vrot.slane %v4609, 2
      %v4755 = vsel %vm903, %v4752, %v4754
      %v4756 = vrot.slane %v4602, 2
      %v4757 = vrot.slane %v4570, 2
      %v4758 = vsel %vm903, %v4756, %v4757
      %v4759 = vrot.slane %v4610, 2
      %v4760 = vsel %vm903, %v4757, %v4759
      %4761 = vrot.lane.b32.xlu0 %v906, 64
      %v4762 = vpop.permute.xlu0 %4761
      %4763 = vrot.lane.b32.xlu0 %v908, 64
      %v4764 = vpop.permute.xlu0 %4763
      %4765 = vrot.lane.b32.xlu0 %v4723, 64
      %v4766 = vpop.permute.xlu0 %4765
      %4767 = vrot.lane.b32.xlu0 %v4725, 64
      %v4768 = vpop.permute.xlu0 %4767
      %4769 = vrot.lane.b32.xlu0 %v4728, 64
      %v4770 = vpop.permute.xlu0 %4769
      %4771 = vrot.lane.b32.xlu0 %v4730, 64
      %v4772 = vpop.permute.xlu0 %4771
      %4773 = vrot.lane.b32.xlu0 %v4733, 64
      %v4774 = vpop.permute.xlu0 %4773
      %4775 = vrot.lane.b32.xlu0 %v4735, 64
      %v4776 = vpop.permute.xlu0 %4775
      %4777 = vrot.lane.b32.xlu0 %v4738, 64
      %v4778 = vpop.permute.xlu0 %4777
      %4779 = vrot.lane.b32.xlu0 %v4740, 64
      %v4780 = vpop.permute.xlu0 %4779
      %4781 = vrot.lane.b32.xlu0 %v4743, 64
      %v4782 = vpop.permute.xlu0 %4781
      %4783 = vrot.lane.b32.xlu0 %v4745, 64
      %v4784 = vpop.permute.xlu0 %4783
      %4785 = vrot.lane.b32.xlu0 %v4748, 64
      %v4786 = vpop.permute.xlu0 %4785
      %4787 = vrot.lane.b32.xlu0 %v4750, 64
      %v4788 = vpop.permute.xlu0 %4787
      %4789 = vrot.lane.b32.xlu0 %v4753, 64
      %v4790 = vpop.permute.xlu0 %4789
      %4791 = vrot.lane.b32.xlu0 %v4755, 64
      %v4792 = vpop.permute.xlu0 %4791
      %4793 = vrot.lane.b32.xlu0 %v4758, 64
      %v4794 = vpop.permute.xlu0 %4793
      %4795 = vrot.lane.b32.xlu0 %v4760, 64
      %v4796 = vpop.permute.xlu0 %4795
      %4815 = vrot.lane.b32.xlu0 %v4595, 96
      %v4816 = vpop.permute.xlu0 %4815
      %4817 = vrot.lane.b32.xlu0 %v4549, 96
      %v4818 = vpop.permute.xlu0 %4817
      %4819 = vrot.lane.b32.xlu0 %v4596, 96
      %v4820 = vpop.permute.xlu0 %4819
      %4821 = vrot.lane.b32.xlu0 %v4552, 96
      %v4822 = vpop.permute.xlu0 %4821
      %4823 = vrot.lane.b32.xlu0 %v4597, 96
      %v4824 = vpop.permute.xlu0 %4823
      %4825 = vrot.lane.b32.xlu0 %v4555, 96
      %v4826 = vpop.permute.xlu0 %4825
      %4827 = vrot.lane.b32.xlu0 %v4598, 96
      %v4828 = vpop.permute.xlu0 %4827
      %4829 = vrot.lane.b32.xlu0 %v4558, 96
      %v4830 = vpop.permute.xlu0 %4829
      %4831 = vrot.lane.b32.xlu0 %v4599, 96
      %v4832 = vpop.permute.xlu0 %4831
      %4833 = vrot.lane.b32.xlu0 %v4561, 96
      %v4834 = vpop.permute.xlu0 %4833
      %4835 = vrot.lane.b32.xlu0 %v4600, 96
      %v4836 = vpop.permute.xlu0 %4835
      %4837 = vrot.lane.b32.xlu0 %v4564, 96
      %v4838 = vpop.permute.xlu0 %4837
      %4839 = vrot.lane.b32.xlu0 %v4601, 96
      %v4840 = vpop.permute.xlu0 %4839
      %4841 = vrot.lane.b32.xlu0 %v4567, 96
      %v4842 = vpop.permute.xlu0 %4841
      %4843 = vrot.lane.b32.xlu0 %v4602, 96
      %v4844 = vpop.permute.xlu0 %4843
      %4845 = vrot.lane.b32.xlu0 %v4570, 96
      %v4846 = vpop.permute.xlu0 %4845
      %4879 = vrot.lane.b32.xlu0 %v4723, 32
      %v4880 = vpop.permute.xlu0 %4879
      %4881 = vrot.lane.b32.xlu0 %v4725, 32
      %v4882 = vpop.permute.xlu0 %4881
      %4883 = vrot.lane.b32.xlu0 %v4728, 32
      %v4884 = vpop.permute.xlu0 %4883
      %4885 = vrot.lane.b32.xlu0 %v4730, 32
      %v4886 = vpop.permute.xlu0 %4885
      %4887 = vrot.lane.b32.xlu0 %v4733, 32
      %v4888 = vpop.permute.xlu0 %4887
      %4889 = vrot.lane.b32.xlu0 %v4735, 32
      %v4890 = vpop.permute.xlu0 %4889
      %4891 = vrot.lane.b32.xlu0 %v4738, 32
      %v4892 = vpop.permute.xlu0 %4891
      %4893 = vrot.lane.b32.xlu0 %v4740, 32
      %v4894 = vpop.permute.xlu0 %4893
      %4895 = vrot.lane.b32.xlu0 %v4743, 32
      %v4896 = vpop.permute.xlu0 %4895
      %4897 = vrot.lane.b32.xlu0 %v4745, 32
      %v4898 = vpop.permute.xlu0 %4897
      %4899 = vrot.lane.b32.xlu0 %v4748, 32
      %v4900 = vpop.permute.xlu0 %4899
      %4901 = vrot.lane.b32.xlu0 %v4750, 32
      %v4902 = vpop.permute.xlu0 %4901
      %4903 = vrot.lane.b32.xlu0 %v4753, 32
      %v4904 = vpop.permute.xlu0 %4903
      %4905 = vrot.lane.b32.xlu0 %v4755, 32
      %v4906 = vpop.permute.xlu0 %4905
      %4907 = vrot.lane.b32.xlu0 %v4758, 32
      %v4908 = vpop.permute.xlu0 %4907
      %4909 = vrot.lane.b32.xlu0 %v4760, 32
      %v4910 = vpop.permute.xlu0 %4909
      %4927 = vrot.lane.b32.xlu0 %v4595, 64
      %v4928 = vpop.permute.xlu0 %4927
      %4929 = vrot.lane.b32.xlu0 %v4549, 64
      %v4930 = vpop.permute.xlu0 %4929
      %4931 = vrot.lane.b32.xlu0 %v4596, 64
      %v4932 = vpop.permute.xlu0 %4931
      %4933 = vrot.lane.b32.xlu0 %v4552, 64
      %v4934 = vpop.permute.xlu0 %4933
      %4935 = vrot.lane.b32.xlu0 %v4597, 64
      %v4936 = vpop.permute.xlu0 %4935
      %4937 = vrot.lane.b32.xlu0 %v4555, 64
      %v4938 = vpop.permute.xlu0 %4937
      %4939 = vrot.lane.b32.xlu0 %v4598, 64
      %v4940 = vpop.permute.xlu0 %4939
      %4941 = vrot.lane.b32.xlu0 %v4558, 64
      %v4942 = vpop.permute.xlu0 %4941
      %4943 = vrot.lane.b32.xlu0 %v4599, 64
      %v4944 = vpop.permute.xlu0 %4943
      %4945 = vrot.lane.b32.xlu0 %v4561, 64
      %v4946 = vpop.permute.xlu0 %4945
      %4947 = vrot.lane.b32.xlu0 %v4600, 64
      %v4948 = vpop.permute.xlu0 %4947
      %4949 = vrot.lane.b32.xlu0 %v4564, 64
      %v4950 = vpop.permute.xlu0 %4949
      %4951 = vrot.lane.b32.xlu0 %v4601, 64
      %v4952 = vpop.permute.xlu0 %4951
      %4953 = vrot.lane.b32.xlu0 %v4567, 64
      %v4954 = vpop.permute.xlu0 %4953
      %4955 = vrot.lane.b32.xlu0 %v4602, 64
      %v4956 = vpop.permute.xlu0 %4955
      %4957 = vrot.lane.b32.xlu0 %v4570, 64
      %v4958 = vpop.permute.xlu0 %4957
      %4959 = vrot.lane.b32.xlu0 %v562, 64
      %v4960 = vpop.permute.xlu0 %4959
      %4978 = vrot.lane.b32.xlu0 %v4629, 96
      %v4979 = vpop.permute.xlu0 %4978
      %4980 = vrot.lane.b32.xlu0 %v4631, 96
      %v4981 = vpop.permute.xlu0 %4980
      %4982 = vrot.lane.b32.xlu0 %v4634, 96
      %v4983 = vpop.permute.xlu0 %4982
      %4984 = vrot.lane.b32.xlu0 %v4636, 96
      %v4985 = vpop.permute.xlu0 %4984
      %4986 = vrot.lane.b32.xlu0 %v4639, 96
      %v4987 = vpop.permute.xlu0 %4986
      %4988 = vrot.lane.b32.xlu0 %v4641, 96
      %v4989 = vpop.permute.xlu0 %4988
      %4990 = vrot.lane.b32.xlu0 %v4644, 96
      %v4991 = vpop.permute.xlu0 %4990
      %4992 = vrot.lane.b32.xlu0 %v4646, 96
      %v4993 = vpop.permute.xlu0 %4992
      %4994 = vrot.lane.b32.xlu0 %v4649, 96
      %v4995 = vpop.permute.xlu0 %4994
      %4996 = vrot.lane.b32.xlu0 %v4651, 96
      %v4997 = vpop.permute.xlu0 %4996
      %4998 = vrot.lane.b32.xlu0 %v4654, 96
      %v4999 = vpop.permute.xlu0 %4998
      %5000 = vrot.lane.b32.xlu0 %v4656, 96
      %v5001 = vpop.permute.xlu0 %5000
      %5002 = vrot.lane.b32.xlu0 %v4659, 96
      %v5003 = vpop.permute.xlu0 %5002
      %5004 = vrot.lane.b32.xlu0 %v4661, 96
      %v5005 = vpop.permute.xlu0 %5004
      %5006 = vrot.lane.b32.xlu0 %v4664, 96
      %v5007 = vpop.permute.xlu0 %5006
      %5008 = vrot.lane.b32.xlu0 %v4666, 96
      %v5009 = vpop.permute.xlu0 %5008
      %5010 = vrot.lane.b32.xlu0 %v729, 96
      %v5011 = vpop.permute.xlu0 %5010
      %5012 = vrot.lane.b32.xlu0 %v731, 96
      %v5013 = vpop.permute.xlu0 %5012
      %v5032 = vsel %vm2826, %v660, %v4668
      %v5033 = vsel %vm2826, %v562, %v4670
      %v5034 = vsel %vm2826, %v4595, %v4672
      %v5035 = vsel %vm2826, %v4549, %v4674
      %v5036 = vsel %vm2826, %v4596, %v4676
      %v5037 = vsel %vm2826, %v4552, %v4678
      %v5038 = vsel %vm2826, %v4597, %v4680
      %v5039 = vsel %vm2826, %v4555, %v4682
      %v5040 = vsel %vm2826, %v4598, %v4684
      %v5041 = vsel %vm2826, %v4558, %v4686
      %v5042 = vsel %vm2826, %v4599, %v4688
      %v5043 = vsel %vm2826, %v4561, %v4690
      %v5044 = vsel %vm2826, %v4600, %v4692
      %v5045 = vsel %vm2826, %v4564, %v4694
      %v5046 = vsel %vm2826, %v4601, %v4696
      %v5047 = vsel %vm2826, %v4567, %v4698
      %v5048 = vsel %vm2826, %v4602, %v4700
      %v5049 = vsel %vm2826, %v4570, %v4702
      %v5050 = vsel %vm2835, %v5032, %v4762
      %v5051 = vsel %vm2835, %v5033, %v4764
      %v5052 = vsel %vm2835, %v5034, %v4766
      %v5053 = vsel %vm2835, %v5035, %v4768
      %v5054 = vsel %vm2835, %v5036, %v4770
      %v5055 = vsel %vm2835, %v5037, %v4772
      %v5056 = vsel %vm2835, %v5038, %v4774
      %v5057 = vsel %vm2835, %v5039, %v4776
      %v5058 = vsel %vm2835, %v5040, %v4778
      %v5059 = vsel %vm2835, %v5041, %v4780
      %v5060 = vsel %vm2835, %v5042, %v4782
      %v5061 = vsel %vm2835, %v5043, %v4784
      %v5062 = vsel %vm2835, %v5044, %v4786
      %v5063 = vsel %vm2835, %v5045, %v4788
      %v5064 = vsel %vm2835, %v5046, %v4790
      %v5065 = vsel %vm2835, %v5047, %v4792
      %v5066 = vsel %vm2835, %v5048, %v4794
      %v5067 = vsel %vm2835, %v5049, %v4796
      %v5068 = vsel %vm2844, %v5050, %v4816
      %v5069 = vsel %vm2844, %v5051, %v4818
      %v5070 = vsel %vm2844, %v5052, %v4816
      %v5071 = vsel %vm2844, %v5053, %v4818
      %v5072 = vsel %vm2844, %v5052, %v4820
      %v5073 = vsel %vm2844, %v5053, %v4822
      %v5074 = vsel %vm2844, %v5054, %v4820
      %v5075 = vsel %vm2844, %v5055, %v4822
      %v5076 = vsel %vm2844, %v5054, %v4824
      %v5077 = vsel %vm2844, %v5055, %v4826
      %v5078 = vsel %vm2844, %v5056, %v4824
      %v5079 = vsel %vm2844, %v5057, %v4826
      %v5080 = vsel %vm2844, %v5056, %v4828
      %v5081 = vsel %vm2844, %v5057, %v4830
      %v5082 = vsel %vm2844, %v5058, %v4828
      %v5083 = vsel %vm2844, %v5059, %v4830
      %v5084 = vsel %vm2844, %v5058, %v4832
      %v5085 = vsel %vm2844, %v5059, %v4834
      %v5086 = vsel %vm2844, %v5060, %v4832
      %v5087 = vsel %vm2844, %v5061, %v4834
      %v5088 = vsel %vm2844, %v5060, %v4836
      %v5089 = vsel %vm2844, %v5061, %v4838
      %v5090 = vsel %vm2844, %v5062, %v4836
      %v5091 = vsel %vm2844, %v5063, %v4838
      %v5092 = vsel %vm2844, %v5062, %v4840
      %v5093 = vsel %vm2844, %v5063, %v4842
      %v5094 = vsel %vm2844, %v5064, %v4840
      %v5095 = vsel %vm2844, %v5065, %v4842
      %v5096 = vsel %vm2844, %v5064, %v4844
      %v5097 = vsel %vm2844, %v5065, %v4846
      %v5098 = vsel %vm2844, %v5066, %v4844
      %v5099 = vsel %vm2844, %v5067, %v4846
      %v5100 = vsel %vm2826, %v4629, %v4880
      %v5101 = vsel %vm2826, %v4631, %v4882
      %v5102 = vsel %vm2826, %v4634, %v4884
      %v5103 = vsel %vm2826, %v4636, %v4886
      %v5104 = vsel %vm2826, %v4639, %v4888
      %v5105 = vsel %vm2826, %v4641, %v4890
      %v5106 = vsel %vm2826, %v4644, %v4892
      %v5107 = vsel %vm2826, %v4646, %v4894
      %v5108 = vsel %vm2826, %v4649, %v4896
      %v5109 = vsel %vm2826, %v4651, %v4898
      %v5110 = vsel %vm2826, %v4654, %v4900
      %v5111 = vsel %vm2826, %v4656, %v4902
      %v5112 = vsel %vm2826, %v4659, %v4904
      %v5113 = vsel %vm2826, %v4661, %v4906
      %v5114 = vsel %vm2826, %v4664, %v4908
      %v5115 = vsel %vm2826, %v4666, %v4910
      %v5116 = vsel %vm2835, %v5100, %v4928
      %v5117 = vsel %vm2835, %v5101, %v4930
      %v5118 = vsel %vm2835, %v5100, %v4932
      %v5119 = vsel %vm2835, %v5101, %v4934
      %v5120 = vsel %vm2835, %v5102, %v4932
      %v5121 = vsel %vm2835, %v5103, %v4934
      %v5122 = vsel %vm2835, %v5102, %v4936
      %v5123 = vsel %vm2835, %v5103, %v4938
      %v5124 = vsel %vm2835, %v5104, %v4936
      %v5125 = vsel %vm2835, %v5105, %v4938
      %v5126 = vsel %vm2835, %v5104, %v4940
      %v5127 = vsel %vm2835, %v5105, %v4942
      %v5128 = vsel %vm2835, %v5106, %v4940
      %v5129 = vsel %vm2835, %v5107, %v4942
      %v5130 = vsel %vm2835, %v5106, %v4944
      %v5131 = vsel %vm2835, %v5107, %v4946
      %v5132 = vsel %vm2835, %v5108, %v4944
      %v5133 = vsel %vm2835, %v5109, %v4946
      %v5134 = vsel %vm2835, %v5108, %v4948
      %v5135 = vsel %vm2835, %v5109, %v4950
      %v5136 = vsel %vm2835, %v5110, %v4948
      %v5137 = vsel %vm2835, %v5111, %v4950
      %v5138 = vsel %vm2835, %v5110, %v4952
      %v5139 = vsel %vm2835, %v5111, %v4954
      %v5140 = vsel %vm2835, %v5112, %v4952
      %v5141 = vsel %vm2835, %v5113, %v4954
      %v5142 = vsel %vm2835, %v5112, %v4956
      %v5143 = vsel %vm2835, %v5113, %v4958
      %v5144 = vsel %vm2835, %v5114, %v4956
      %v5145 = vsel %vm2835, %v5115, %v4958
      %v5146 = vsel %vm2835, %v5114, %v2793
      %v5147 = vsel %vm2835, %v5115, %v4960
      %v5148 = vsel %vm2844, %v5116, %v4979
      %v5149 = vsel %vm2844, %v5117, %v4981
      %v5150 = vsel %vm2844, %v5118, %v4983
      %v5151 = vsel %vm2844, %v5119, %v4985
      %v5152 = vsel %vm2844, %v5120, %v4983
      %v5153 = vsel %vm2844, %v5121, %v4985
      %v5154 = vsel %vm2844, %v5122, %v4987
      %v5155 = vsel %vm2844, %v5123, %v4989
      %v5156 = vsel %vm2844, %v5124, %v4987
      %v5157 = vsel %vm2844, %v5125, %v4989
      %v5158 = vsel %vm2844, %v5126, %v4991
      %v5159 = vsel %vm2844, %v5127, %v4993
      %v5160 = vsel %vm2844, %v5128, %v4991
      %v5161 = vsel %vm2844, %v5129, %v4993
      %v5162 = vsel %vm2844, %v5130, %v4995
      %v5163 = vsel %vm2844, %v5131, %v4997
      %v5164 = vsel %vm2844, %v5132, %v4995
      %v5165 = vsel %vm2844, %v5133, %v4997
      %v5166 = vsel %vm2844, %v5134, %v4999
      %v5167 = vsel %vm2844, %v5135, %v5001
      %v5168 = vsel %vm2844, %v5136, %v4999
      %v5169 = vsel %vm2844, %v5137, %v5001
      %v5170 = vsel %vm2844, %v5138, %v5003
      %v5171 = vsel %vm2844, %v5139, %v5005
      %v5172 = vsel %vm2844, %v5140, %v5003
      %v5173 = vsel %vm2844, %v5141, %v5005
      %v5174 = vsel %vm2844, %v5142, %v5007
      %v5175 = vsel %vm2844, %v5143, %v5009
      %v5176 = vsel %vm2844, %v5144, %v5007
      %v5177 = vsel %vm2844, %v5145, %v5009
      %v5178 = vsel %vm2844, %v5146, %v5011
      %v5179 = vsel %vm2844, %v5147, %v5013
      %v5180 = vld [vmem:[%s11] sm:$0xff]
      %v5181 = vld [vmem:[%s11 + $0x8] sm:$0xff]
      %v5182 = vld [vmem:[%s11 + $0x10] sm:$0xff]
      %v5183 = vld [vmem:[%s11 + $0x18] sm:$0xff]
      %v5184 = vld [vmem:[%s11 + $0x20] sm:$0xff]
      %v5185 = vld [vmem:[%s11 + $0x28] sm:$0xff]
      %v5186 = vld [vmem:[%s11 + $0x30] sm:$0xff]
      %v5187 = vld [vmem:[%s11 + $0x38] sm:$0xff]
      %v5188 = vld [vmem:[%s11 + $0x40] sm:$0xff]
      %v5189 = vld [vmem:[%s11 + $0x48] sm:$0xff]
      %v5190 = vld [vmem:[%s11 + $0x50] sm:$0xff]
      %v5191 = vld [vmem:[%s11 + $0x58] sm:$0xff]
      %v5192 = vld [vmem:[%s11 + $0x60] sm:$0xff]
      %v5193 = vld [vmem:[%s11 + $0x68] sm:$0xff]
      %v5194 = vld [vmem:[%s11 + $0x70] sm:$0xff]
      %v5195 = vld [vmem:[%s11 + $0x78] sm:$0xff]
      %v5196 = vld [vmem:[%s11 + $0x80] sm:$0xff]
      %v5197 = vld [vmem:[%s11 + $0x88] sm:$0xff]
      %v5198 = vld [vmem:[%s11 + $0x90] sm:$0xff]
      %v5199 = vld [vmem:[%s11 + $0x98] sm:$0xff]
      %v5200 = vld [vmem:[%s11 + $0xa0] sm:$0xff]
      %v5201 = vld [vmem:[%s11 + $0xa8] sm:$0xff]
      %v5202 = vld [vmem:[%s11 + $0xb0] sm:$0xff]
      %v5203 = vld [vmem:[%s11 + $0xb8] sm:$0xff]
      %v5204 = vld [vmem:[%s11 + $0xc0] sm:$0xff]
      %v5205 = vld [vmem:[%s11 + $0xc8] sm:$0xff]
      %v5206 = vld [vmem:[%s11 + $0xd0] sm:$0xff]
      %v5207 = vld [vmem:[%s11 + $0xd8] sm:$0xff]
      %v5208 = vld [vmem:[%s11 + $0xe0] sm:$0xff]
      %v5209 = vld [vmem:[%s11 + $0xe8] sm:$0xff]
      %v5210 = vld [vmem:[%s11 + $0xf0] sm:$0xff]
      %v5211 = vld [vmem:[%s11 + $0xf8] sm:$0xff]
      %v5212 = vld [vmem:[%s11 + $0x100] sm:$0xff]
      %v5213 = vld [vmem:[%s11 + $0x108] sm:$0xff]
      %v5214 = vld [vmem:[%s11 + $0x110] sm:$0xff]
      %v5215 = vld [vmem:[%s11 + $0x118] sm:$0xff]
      %v5216 = vld [vmem:[%s12] sm:$0x1]
      %v5218 = vlaneseq
      %v5219 = vshrl.u32 %v5218, 7
      %v5220 = vsub.s32 0, %v5219
      %v5221 = vrot.slane %v5216, %v5220
      %v5223 = vsel %vm2826, %v4723, 0
      %v5225 = vsel %vm2826, %v4725, 0
      %v5227 = vsel %vm2826, %v4728, 0
      %v5229 = vsel %vm2826, %v4730, 0
      %v5231 = vsel %vm2826, %v4733, 0
      %v5233 = vsel %vm2826, %v4735, 0
      %v5235 = vsel %vm2826, %v4738, 0
      %v5237 = vsel %vm2826, %v4740, 0
      %v5239 = vsel %vm2826, %v4743, 0
      %v5241 = vsel %vm2826, %v4745, 0
      %v5243 = vsel %vm2826, %v4748, 0
      %v5245 = vsel %vm2826, %v4750, 0
      %v5247 = vsel %vm2826, %v4753, 0
      %v5249 = vsel %vm2826, %v4755, 0
      %v5251 = vsel %vm2826, %v4758, 0
      %v5253 = vsel %vm2826, %v4760, 0
      %v5255 = vsel %vm2826, %v906, 0
      %v5257 = vsel %vm2826, %v908, 0
      %5259 = vmatprep.subr.mxu0 0.0
      %5260 = vmatpush1.msra.mxu0 %v5180
      %5261 = vmatprep.subr.mxu0 0.0
      %5262 = vmatpush1.msra.mxu0 %v5181
      %5263 = vmatprep.subr.mxu0 0.0
      %5264 = vmatpush1.msra.mxu0 %v5182
      %5265 = vmatprep.subr.mxu0 0.0
      %5266 = vmatpush1.msra.mxu0 %v5183
      %5267 = vmatprep.subr.mxu0 0.0
      %5268 = vmatpush1.msra.mxu0 %v5184
      %5269 = vmatprep.subr.mxu0 0.0
      %5270 = vmatpush1.msra.mxu0 %v5185
      %5271 = vmatprep.subr.mxu0 0.0
      %5272 = vmatpush1.msra.mxu0 %v5186
      %5273 = vmatprep.subr.mxu0 0.0
      %5274 = vmatpush1.msra.mxu0 %v5187
      %5275 = vmatprep.subr.mxu0 0.0
      %5276 = vmatpush1.msra.mxu0 %v5188
      %5277 = vmatprep.subr.mxu0 0.0
      %5278 = vmatpush1.msra.mxu0 %v5189
      %5279 = vmatprep.subr.mxu0 0.0
      %5280 = vmatpush1.msra.mxu0 %v5190
      %5281 = vmatprep.subr.mxu0 0.0
      %5282 = vmatpush1.msra.mxu0 %v5191
      %5283 = vmatprep.subr.mxu0 0.0
      %5284 = vmatpush1.msra.mxu0 %v5192
      %5285 = vmatprep.subr.mxu0 0.0
      %5286 = vmatpush1.msra.mxu0 %v5193
      %5287 = vmatprep.subr.mxu0 0.0
      %5288 = vmatpush1.msra.mxu0 %v5194
      %5289 = vmatprep.subr.mxu0 0.0
      %5290 = vmatpush1.msra.mxu0 %v5195
      %5291 = vmatprep.subr.mxu0 0.0
      %5292 = vmatpush1.msra.mxu0 %v5196
      %5293 = vmatprep.subr.mxu0 0.0
      %5294 = vmatpush1.msra.mxu0 %v5197
      %5295 = vmatprep.subr.mxu0 0.0
      %5296 = vmatpush1.msra.mxu0 %v5198
      %5297 = vmatprep.subr.mxu0 0.0
      %5298 = vmatpush1.msra.mxu0 %v5199
      %5299 = vmatprep.subr.mxu0 0.0
      %5300 = vmatpush1.msra.mxu0 %v5200
      %5301 = vmatprep.subr.mxu0 0.0
      %5302 = vmatpush1.msra.mxu0 %v5201
      %5303 = vmatprep.subr.mxu0 0.0
      %5304 = vmatpush1.msra.mxu0 %v5202
      %5305 = vmatprep.subr.mxu0 0.0
      %5306 = vmatpush1.msra.mxu0 %v5203
      %5307 = vmatprep.subr.mxu0 0.0
      %5308 = vmatpush1.msra.mxu0 %v5204
      %5309 = vmatprep.subr.mxu0 0.0
      %5310 = vmatpush1.msra.mxu0 %v5205
      %5311 = vmatprep.subr.mxu0 0.0
      %5312 = vmatpush1.msra.mxu0 %v5206
      %5313 = vmatprep.subr.mxu0 0.0
      %5314 = vmatpush1.msra.mxu0 %v5207
      %5315 = vmatprep.subr.mxu0 0.0
      %5316 = vmatpush1.msra.mxu0 %v5208
      %5317 = vmatprep.subr.mxu0 0.0
      %5318 = vmatpush1.msra.mxu0 %v5209
      %5319 = vmatprep.subr.mxu0 0.0
      %5320 = vmatpush1.msra.mxu0 %v5210
      %5321 = vmatprep.subr.mxu0 0.0
      %5322 = vmatpush1.msra.mxu0 %v5211
      %5323 = vmatprep.mubr.f32.mxu0 %v5148
      %5324 = vmatmul.mubr.f32.gmra.mrb[0].mxu0 %v5068
      %v5325 = vpop.f32.mrb[0].mxu0
      %v5326 = vadd.f32 %v5221, %v5325
      %v5327 = vpop.f32.mrb[0].mxu0
      %5328 = vmatprep.mubr.f32.mxu0 %v5149
      %5329 = vmatmul.mubr.f32.gmra.mrb[0].mxu0 %v5069
      %v5330 = vpop.f32.mrb[0].mxu0
      %v5331 = vadd.f32 %v5221, %v5330
      %v5332 = vpop.f32.mrb[0].mxu0
      %5333 = vmatprep.mubr.f32.mxu0 %v5150
      %5334 = vmatmul.mubr.f32.gmra.mrb[0].mxu0 %v5070
      %v5335 = vpop.f32.mrb[0].mxu0
      %v5336 = vadd.f32 %v5221, %v5335
      %v5337 = vpop.f32.mrb[0].mxu0
      %5338 = vmatprep.mubr.f32.mxu0 %v5151
      %5339 = vmatmul.mubr.f32.gmra.mrb[0].mxu0 %v5071
      %v5340 = vpop.f32.mrb[0].mxu0
      %v5341 = vadd.f32 %v5221, %v5340
      %v5342 = vpop.f32.mrb[0].mxu0
      %5343 = vmatprep.mubr.f32.mxu0 %v5152
      %5344 = vmatmul.mubr.f32.gmra.mrb[0].mxu0 %v5072
      %v5345 = vpop.f32.mrb[0].mxu0
      %v5346 = vadd.f32 %v5221, %v5345
      %v5347 = vpop.f32.mrb[0].mxu0
      %5348 = vmatprep.mubr.f32.mxu0 %v5153
      %5349 = vmatmul.mubr.f32.gmra.mrb[0].mxu0 %v5073
      %v5350 = vpop.f32.mrb[0].mxu0
      %v5351 = vadd.f32 %v5221, %v5350
      %v5352 = vpop.f32.mrb[0].mxu0
      %5353 = vmatprep.mubr.f32.mxu0 %v5154
      %5354 = vmatmul.mubr.f32.gmra.mrb[0].mxu0 %v5074
      %v5355 = vpop.f32.mrb[0].mxu0
      %v5356 = vadd.f32 %v5221, %v5355
      %v5357 = vpop.f32.mrb[0].mxu0
      %5358 = vmatprep.mubr.f32.mxu0 %v5155
      %5359 = vmatmul.mubr.f32.gmra.mrb[0].mxu0 %v5075
      %v5360 = vpop.f32.mrb[0].mxu0
      %v5361 = vadd.f32 %v5221, %v5360
      %v5362 = vpop.f32.mrb[0].mxu0
      %5363 = vmatprep.mubr.f32.mxu0 %v5156
      %5364 = vmatmul.mubr.f32.gmra.mrb[0].mxu0 %v5076
      %v5365 = vpop.f32.mrb[0].mxu0
      %v5366 = vadd.f32 %v5221, %v5365
      %v5367 = vpop.f32.mrb[0].mxu0
      %5368 = vmatprep.mubr.f32.mxu0 %v5157
      %5369 = vmatmul.mubr.f32.gmra.mrb[0].mxu0 %v5077
      %v5370 = vpop.f32.mrb[0].mxu0
      %v5371 = vadd.f32 %v5221, %v5370
      %v5372 = vpop.f32.mrb[0].mxu0
      %5373 = vmatprep.mubr.f32.mxu0 %v5158
      %5374 = vmatmul.mubr.f32.gmra.mrb[0].mxu0 %v5078
      %v5375 = vpop.f32.mrb[0].mxu0
      %v5376 = vadd.f32 %v5221, %v5375
      %v5377 = vpop.f32.mrb[0].mxu0
      %5378 = vmatprep.mubr.f32.mxu0 %v5159
      %5379 = vmatmul.mubr.f32.gmra.mrb[0].mxu0 %v5079
      %v5380 = vpop.f32.mrb[0].mxu0
      %v5381 = vadd.f32 %v5221, %v5380
      %v5382 = vpop.f32.mrb[0].mxu0
      %5383 = vmatprep.mubr.f32.mxu0 %v5160
      %5384 = vmatmul.mubr.f32.gmra.mrb[0].mxu0 %v5080
      %v5385 = vpop.f32.mrb[0].mxu0
      %v5386 = vadd.f32 %v5221, %v5385
      %v5387 = vpop.f32.mrb[0].mxu0
      %5388 = vmatprep.mubr.f32.mxu0 %v5161
      %5389 = vmatmul.mubr.f32.gmra.mrb[0].mxu0 %v5081
      %v5390 = vpop.f32.mrb[0].mxu0
      %v5391 = vadd.f32 %v5221, %v5390
      %v5392 = vpop.f32.mrb[0].mxu0
      %5393 = vmatprep.mubr.f32.mxu0 %v5162
      %5394 = vmatmul.mubr.f32.gmra.mrb[0].mxu0 %v5082
      %v5395 = vpop.f32.mrb[0].mxu0
      %v5396 = vadd.f32 %v5221, %v5395
      %v5397 = vpop.f32.mrb[0].mxu0
      %5398 = vmatprep.mubr.f32.mxu0 %v5163
      %5399 = vmatmul.mubr.f32.gmra.mrb[0].mxu0 %v5083
      %v5400 = vpop.f32.mrb[0].mxu0
      %v5401 = vadd.f32 %v5221, %v5400
      %v5402 = vpop.f32.mrb[0].mxu0
      %5403 = vmatprep.mubr.f32.mxu0 %v5164
      %5404 = vmatmul.mubr.f32.gmra.mrb[0].mxu0 %v5084
      %v5405 = vpop.f32.mrb[0].mxu0
      %v5406 = vadd.f32 %v5221, %v5405
      %v5407 = vpop.f32.mrb[0].mxu0
      %5408 = vmatprep.mubr.f32.mxu0 %v5165
      %5409 = vmatmul.mubr.f32.gmra.mrb[0].mxu0 %v5085
      %v5410 = vpop.f32.mrb[0].mxu0
      %v5411 = vadd.f32 %v5221, %v5410
      %v5412 = vpop.f32.mrb[0].mxu0
      %5413 = vmatprep.mubr.f32.mxu0 %v5166
      %5414 = vmatmul.mubr.f32.gmra.mrb[0].mxu0 %v5086
      %v5415 = vpop.f32.mrb[0].mxu0
      %v5416 = vadd.f32 %v5221, %v5415
      %v5417 = vpop.f32.mrb[0].mxu0
      %5418 = vmatprep.mubr.f32.mxu0 %v5167
      %5419 = vmatmul.mubr.f32.gmra.mrb[0].mxu0 %v5087
      %v5420 = vpop.f32.mrb[0].mxu0
      %v5421 = vadd.f32 %v5221, %v5420
      %v5422 = vpop.f32.mrb[0].mxu0
      %5423 = vmatprep.mubr.f32.mxu0 %v5168
      %5424 = vmatmul.mubr.f32.gmra.mrb[0].mxu0 %v5088
      %v5425 = vpop.f32.mrb[0].mxu0
      %v5426 = vadd.f32 %v5221, %v5425
      %v5427 = vpop.f32.mrb[0].mxu0
      %5428 = vmatprep.mubr.f32.mxu0 %v5169
      %5429 = vmatmul.mubr.f32.gmra.mrb[0].mxu0 %v5089
      %v5430 = vpop.f32.mrb[0].mxu0
      %v5431 = vadd.f32 %v5221, %v5430
      %v5432 = vpop.f32.mrb[0].mxu0
      %5433 = vmatprep.mubr.f32.mxu0 %v5170
      %5434 = vmatmul.mubr.f32.gmra.mrb[0].mxu0 %v5090
      %v5435 = vpop.f32.mrb[0].mxu0
      %v5436 = vadd.f32 %v5221, %v5435
      %v5437 = vpop.f32.mrb[0].mxu0
      %5438 = vmatprep.mubr.f32.mxu0 %v5171
      %5439 = vmatmul.mubr.f32.gmra.mrb[0].mxu0 %v5091
      %v5440 = vpop.f32.mrb[0].mxu0
      %v5441 = vadd.f32 %v5221, %v5440
      %v5442 = vpop.f32.mrb[0].mxu0
      %5443 = vmatprep.mubr.f32.mxu0 %v5172
      %5444 = vmatmul.mubr.f32.gmra.mrb[0].mxu0 %v5092
      %v5445 = vpop.f32.mrb[0].mxu0
      %v5446 = vadd.f32 %v5221, %v5445
      %v5447 = vpop.f32.mrb[0].mxu0
      %5448 = vmatprep.mubr.f32.mxu0 %v5173
      %5449 = vmatmul.mubr.f32.gmra.mrb[0].mxu0 %v5093
      %v5450 = vpop.f32.mrb[0].mxu0
      %v5451 = vadd.f32 %v5221, %v5450
      %v5452 = vpop.f32.mrb[0].mxu0
      %5453 = vmatprep.mubr.f32.mxu0 %v5174
      %5454 = vmatmul.mubr.f32.gmra.mrb[0].mxu0 %v5094
      %v5455 = vpop.f32.mrb[0].mxu0
      %v5456 = vadd.f32 %v5221, %v5455
      %v5457 = vpop.f32.mrb[0].mxu0
      %5458 = vmatprep.mubr.f32.mxu0 %v5175
      %5459 = vmatmul.mubr.f32.gmra.mrb[0].mxu0 %v5095
      %v5460 = vpop.f32.mrb[0].mxu0
      %v5461 = vadd.f32 %v5221, %v5460
      %v5462 = vpop.f32.mrb[0].mxu0
      %5463 = vmatprep.mubr.f32.mxu0 %v5176
      %5464 = vmatmul.mubr.f32.gmra.mrb[0].mxu0 %v5096
      %v5465 = vpop.f32.mrb[0].mxu0
      %v5466 = vadd.f32 %v5221, %v5465
      %v5467 = vpop.f32.mrb[0].mxu0
      %5468 = vmatprep.mubr.f32.mxu0 %v5177
      %5469 = vmatmul.mubr.f32.gmra.mrb[0].mxu0 %v5097
      %v5470 = vpop.f32.mrb[0].mxu0
      %v5471 = vadd.f32 %v5221, %v5470
      %v5472 = vpop.f32.mrb[0].mxu0
      %5473 = vmatprep.mubr.f32.mxu0 %v5178
      %5474 = vmatmul.mubr.f32.gmra.mrb[0].mxu0 %v5098
      %v5475 = vpop.f32.mrb[0].mxu0
      %v5476 = vadd.f32 %v5221, %v5475
      %v5477 = vpop.f32.mrb[0].mxu0
      %5478 = vmatprep.mubr.f32.mxu0 %v5179
      %5479 = vmatmul.mubr.f32.gmra.mrb[0].mxu0 %v5099
      %v5480 = vpop.f32.mrb[0].mxu0
      %v5481 = vadd.f32 %v5221, %v5480
      %v5482 = vpop.f32.mrb[0].mxu0
      %5483 = vdwg.mxu0
      %5484 = vmatprep.subr.mxu0 0.0
      %5485 = vmatpush1.msra.mxu0 %v5212
      %5486 = vmatprep.subr.mxu0 0.0
      %5487 = vmatpush1.msra.mxu0 %v5213
      %5488 = vmatprep.subr.mxu0 0.0
      %5489 = vmatpush1.msra.mxu0 %v5214
      %5490 = vmatprep.subr.mxu0 0.0
      %5491 = vmatpush1.msra.mxu0 %v5215
      %5492 = vmatprep.subr.mxu0 0.0
      %5493 = vmatpush1.msra.mxu0 0.0
      %5494 = vmatprep.subr.mxu0 0.0
      %5495 = vmatpush1.msra.mxu0 0.0
      %5496 = vmatprep.subr.mxu0 0.0
      %5497 = vmatpush1.msra.mxu0 0.0
      %5498 = vmatprep.subr.mxu0 0.0
      %5499 = vmatpush1.msra.mxu0 0.0
      %5500 = vmatprep.subr.mxu0 0.0
      %5501 = vmatpush1.msra.mxu0 0.0
      %5502 = vmatprep.subr.mxu0 0.0
      %5503 = vmatpush1.msra.mxu0 0.0
      %5504 = vmatprep.subr.mxu0 0.0
      %5505 = vmatpush1.msra.mxu0 0.0
      %5506 = vmatprep.subr.mxu0 0.0
      %5507 = vmatpush1.msra.mxu0 0.0
      %5508 = vmatprep.subr.mxu0 0.0
      %5509 = vmatpush1.msra.mxu0 0.0
      %5510 = vmatprep.subr.mxu0 0.0
      %5511 = vmatpush1.msra.mxu0 0.0
      %5512 = vmatprep.subr.mxu0 0.0
      %5513 = vmatpush1.msra.mxu0 0.0
      %5514 = vmatprep.subr.mxu0 0.0
      %5515 = vmatpush1.msra.mxu0 0.0
      %5516 = vmatprep.subr.mxu0 0.0
      %5517 = vmatpush1.msra.mxu0 0.0
      %5518 = vmatprep.subr.mxu0 0.0
      %5519 = vmatpush1.msra.mxu0 0.0
      %5520 = vmatprep.subr.mxu0 0.0
      %5521 = vmatpush1.msra.mxu0 0.0
      %5522 = vmatprep.subr.mxu0 0.0
      %5523 = vmatpush1.msra.mxu0 0.0
      %5524 = vmatprep.subr.mxu0 0.0
      %5525 = vmatpush1.msra.mxu0 0.0
      %5526 = vmatprep.subr.mxu0 0.0
      %5527 = vmatpush1.msra.mxu0 0.0
      %5528 = vmatprep.subr.mxu0 0.0
      %5529 = vmatpush1.msra.mxu0 0.0
      %5530 = vmatprep.subr.mxu0 0.0
      %5531 = vmatpush1.msra.mxu0 0.0
      %5532 = vmatprep.subr.mxu0 0.0
      %5533 = vmatpush1.msra.mxu0 0.0
      %5534 = vmatprep.subr.mxu0 0.0
      %5535 = vmatpush1.msra.mxu0 0.0
      %5536 = vmatprep.subr.mxu0 0.0
      %5537 = vmatpush1.msra.mxu0 0.0
      %5538 = vmatprep.subr.mxu0 0.0
      %5539 = vmatpush1.msra.mxu0 0.0
      %5540 = vmatprep.subr.mxu0 0.0
      %5541 = vmatpush1.msra.mxu0 0.0
      %5542 = vmatprep.subr.mxu0 0.0
      %5543 = vmatpush1.msra.mxu0 0.0
      %5544 = vmatprep.subr.mxu0 0.0
      %5545 = vmatpush1.msra.mxu0 0.0
      %5546 = vmatprep.subr.mxu0 0.0
      %5547 = vmatpush1.msra.mxu0 0.0
      %5548 = vmatprep.mubr.f32.mxu0 0.0
      %5549 = vmatmul.mubr.f32.gmra.mrb[0].mxu0 %v5223
      %v5550 = vpop.f32.mrb[0].mxu0
      %v5551 = vadd.f32 %v5326, %v5550
      %v5552 = vpop.f32.mrb[0].mxu0
      %5553 = vmatprep.mubr.f32.mxu0 0.0
      %5554 = vmatmul.mubr.f32.gmra.mrb[0].mxu0 %v5225
      %v5555 = vpop.f32.mrb[0].mxu0
      %v5556 = vadd.f32 %v5331, %v5555
      %v5557 = vpop.f32.mrb[0].mxu0
      %5558 = vmatprep.mubr.f32.mxu0 0.0
      %5559 = vmatmul.mubr.f32.gmra.mrb[0].mxu0 %v5227
      %v5560 = vpop.f32.mrb[0].mxu0
      %v5561 = vadd.f32 %v5336, %v5560
      %v5562 = vpop.f32.mrb[0].mxu0
      %5563 = vmatprep.mubr.f32.mxu0 0.0
      %5564 = vmatmul.mubr.f32.gmra.mrb[0].mxu0 %v5229
      %v5565 = vpop.f32.mrb[0].mxu0
      %v5566 = vadd.f32 %v5341, %v5565
      %v5567 = vpop.f32.mrb[0].mxu0
      %5568 = vmatprep.mubr.f32.mxu0 0.0
      %5569 = vmatmul.mubr.f32.gmra.mrb[0].mxu0 %v5227
      %v5570 = vpop.f32.mrb[0].mxu0
      %v5571 = vadd.f32 %v5346, %v5570
      %v5572 = vpop.f32.mrb[0].mxu0
      %5573 = vmatprep.mubr.f32.mxu0 0.0
      %5574 = vmatmul.mubr.f32.gmra.mrb[0].mxu0 %v5229
      %v5575 = vpop.f32.mrb[0].mxu0
      %v5576 = vadd.f32 %v5351, %v5575
      %v5577 = vpop.f32.mrb[0].mxu0
      %5578 = vmatprep.mubr.f32.mxu0 0.0
      %5579 = vmatmul.mubr.f32.gmra.mrb[0].mxu0 %v5231
      %v5580 = vpop.f32.mrb[0].mxu0
      %v5581 = vadd.f32 %v5356, %v5580
      %v5582 = vpop.f32.mrb[0].mxu0
      %5583 = vmatprep.mubr.f32.mxu0 0.0
      %5584 = vmatmul.mubr.f32.gmra.mrb[0].mxu0 %v5233
      %v5585 = vpop.f32.mrb[0].mxu0
      %v5586 = vadd.f32 %v5361, %v5585
      %v5587 = vpop.f32.mrb[0].mxu0
      %5588 = vmatprep.mubr.f32.mxu0 0.0
      %5589 = vmatmul.mubr.f32.gmra.mrb[0].mxu0 %v5231
      %v5590 = vpop.f32.mrb[0].mxu0
      %v5591 = vadd.f32 %v5366, %v5590
      %v5592 = vpop.f32.mrb[0].mxu0
      %5593 = vmatprep.mubr.f32.mxu0 0.0
      %5594 = vmatmul.mubr.f32.gmra.mrb[0].mxu0 %v5233
      %v5595 = vpop.f32.mrb[0].mxu0
      %v5596 = vadd.f32 %v5371, %v5595
      %v5597 = vpop.f32.mrb[0].mxu0
      %5598 = vmatprep.mubr.f32.mxu0 0.0
      %5599 = vmatmul.mubr.f32.gmra.mrb[0].mxu0 %v5235
      %v5600 = vpop.f32.mrb[0].mxu0
      %v5601 = vadd.f32 %v5376, %v5600
      %v5602 = vpop.f32.mrb[0].mxu0
      %5603 = vmatprep.mubr.f32.mxu0 0.0
      %5604 = vmatmul.mubr.f32.gmra.mrb[0].mxu0 %v5237
      %v5605 = vpop.f32.mrb[0].mxu0
      %v5606 = vadd.f32 %v5381, %v5605
      %v5607 = vpop.f32.mrb[0].mxu0
      %5608 = vmatprep.mubr.f32.mxu0 0.0
      %5609 = vmatmul.mubr.f32.gmra.mrb[0].mxu0 %v5235
      %v5610 = vpop.f32.mrb[0].mxu0
      %v5611 = vadd.f32 %v5386, %v5610
      %v5612 = vpop.f32.mrb[0].mxu0
      %5613 = vmatprep.mubr.f32.mxu0 0.0
      %5614 = vmatmul.mubr.f32.gmra.mrb[0].mxu0 %v5237
      %v5615 = vpop.f32.mrb[0].mxu0
      %v5616 = vadd.f32 %v5391, %v5615
      %v5617 = vpop.f32.mrb[0].mxu0
      %5618 = vmatprep.mubr.f32.mxu0 0.0
      %5619 = vmatmul.mubr.f32.gmra.mrb[0].mxu0 %v5239
      %v5620 = vpop.f32.mrb[0].mxu0
      %v5621 = vadd.f32 %v5396, %v5620
      %v5622 = vpop.f32.mrb[0].mxu0
      %5623 = vmatprep.mubr.f32.mxu0 0.0
      %5624 = vmatmul.mubr.f32.gmra.mrb[0].mxu0 %v5241
      %v5625 = vpop.f32.mrb[0].mxu0
      %v5626 = vadd.f32 %v5401, %v5625
      %v5627 = vpop.f32.mrb[0].mxu0
      %5628 = vmatprep.mubr.f32.mxu0 0.0
      %5629 = vmatmul.mubr.f32.gmra.mrb[0].mxu0 %v5239
      %v5630 = vpop.f32.mrb[0].mxu0
      %v5631 = vadd.f32 %v5406, %v5630
      %v5632 = vpop.f32.mrb[0].mxu0
      %5633 = vmatprep.mubr.f32.mxu0 0.0
      %5634 = vmatmul.mubr.f32.gmra.mrb[0].mxu0 %v5241
      %v5635 = vpop.f32.mrb[0].mxu0
      %v5636 = vadd.f32 %v5411, %v5635
      %v5637 = vpop.f32.mrb[0].mxu0
      %5638 = vmatprep.mubr.f32.mxu0 0.0
      %5639 = vmatmul.mubr.f32.gmra.mrb[0].mxu0 %v5243
      %v5640 = vpop.f32.mrb[0].mxu0
      %v5641 = vadd.f32 %v5416, %v5640
      %v5642 = vpop.f32.mrb[0].mxu0
      %5643 = vmatprep.mubr.f32.mxu0 0.0
      %5644 = vmatmul.mubr.f32.gmra.mrb[0].mxu0 %v5245
      %v5645 = vpop.f32.mrb[0].mxu0
      %v5646 = vadd.f32 %v5421, %v5645
      %v5647 = vpop.f32.mrb[0].mxu0
      %5648 = vmatprep.mubr.f32.mxu0 0.0
      %5649 = vmatmul.mubr.f32.gmra.mrb[0].mxu0 %v5243
      %v5650 = vpop.f32.mrb[0].mxu0
      %v5651 = vadd.f32 %v5426, %v5650
      %v5652 = vpop.f32.mrb[0].mxu0
      %5653 = vmatprep.mubr.f32.mxu0 0.0
      %5654 = vmatmul.mubr.f32.gmra.mrb[0].mxu0 %v5245
      %v5655 = vpop.f32.mrb[0].mxu0
      %v5656 = vadd.f32 %v5431, %v5655
      %v5657 = vpop.f32.mrb[0].mxu0
      %5658 = vmatprep.mubr.f32.mxu0 0.0
      %5659 = vmatmul.mubr.f32.gmra.mrb[0].mxu0 %v5247
      %v5660 = vpop.f32.mrb[0].mxu0
      %v5661 = vadd.f32 %v5436, %v5660
      %v5662 = vpop.f32.mrb[0].mxu0
      %5663 = vmatprep.mubr.f32.mxu0 0.0
      %5664 = vmatmul.mubr.f32.gmra.mrb[0].mxu0 %v5249
      %v5665 = vpop.f32.mrb[0].mxu0
      %v5666 = vadd.f32 %v5441, %v5665
      %v5667 = vpop.f32.mrb[0].mxu0
      %5668 = vmatprep.mubr.f32.mxu0 0.0
      %5669 = vmatmul.mubr.f32.gmra.mrb[0].mxu0 %v5247
      %v5670 = vpop.f32.mrb[0].mxu0
      %v5671 = vadd.f32 %v5446, %v5670
      %v5672 = vpop.f32.mrb[0].mxu0
      %5673 = vmatprep.mubr.f32.mxu0 0.0
      %5674 = vmatmul.mubr.f32.gmra.mrb[0].mxu0 %v5249
      %v5675 = vpop.f32.mrb[0].mxu0
      %v5676 = vadd.f32 %v5451, %v5675
      %v5677 = vpop.f32.mrb[0].mxu0
      %5678 = vmatprep.mubr.f32.mxu0 0.0
      %5679 = vmatmul.mubr.f32.gmra.mrb[0].mxu0 %v5251
      %v5680 = vpop.f32.mrb[0].mxu0
      %v5681 = vadd.f32 %v5456, %v5680
      %v5682 = vpop.f32.mrb[0].mxu0
      %5683 = vmatprep.mubr.f32.mxu0 0.0
      %5684 = vmatmul.mubr.f32.gmra.mrb[0].mxu0 %v5253
      %v5685 = vpop.f32.mrb[0].mxu0
      %v5686 = vadd.f32 %v5461, %v5685
      %v5687 = vpop.f32.mrb[0].mxu0
      %5688 = vmatprep.mubr.f32.mxu0 0.0
      %5689 = vmatmul.mubr.f32.gmra.mrb[0].mxu0 %v5251
      %v5690 = vpop.f32.mrb[0].mxu0
      %v5691 = vadd.f32 %v5466, %v5690
      %v5692 = vpop.f32.mrb[0].mxu0
      %5693 = vmatprep.mubr.f32.mxu0 0.0
      %5694 = vmatmul.mubr.f32.gmra.mrb[0].mxu0 %v5253
      %v5695 = vpop.f32.mrb[0].mxu0
      %v5696 = vadd.f32 %v5471, %v5695
      %v5697 = vpop.f32.mrb[0].mxu0
      %5698 = vmatprep.mubr.f32.mxu0 0.0
      %5699 = vmatmul.mubr.f32.gmra.mrb[0].mxu0 %v5255
      %v5700 = vpop.f32.mrb[0].mxu0
      %v5701 = vadd.f32 %v5476, %v5700
      %v5702 = vpop.f32.mrb[0].mxu0
      %5703 = vmatprep.mubr.f32.mxu0 0.0
      %5704 = vmatmul.mubr.f32.gmra.mrb[0].mxu0 %v5257
      %v5705 = vpop.f32.mrb[0].mxu0
      %v5706 = vadd.f32 %v5481, %v5705
      %v5707 = vpop.f32.mrb[0].mxu0
      %5708 = vdwg.mxu0
      %v5709 = vmax.f32 %v5551, 0.0
      %v5710 = vmax.f32 %v5556, 0.0
      %v5711 = vmax.f32 %v5561, 0.0
      %v5712 = vmax.f32 %v5566, 0.0
      %v5713 = vmax.f32 %v5571, 0.0
      %v5714 = vmax.f32 %v5576, 0.0
      %v5715 = vmax.f32 %v5581, 0.0
      %v5716 = vmax.f32 %v5586, 0.0
      %v5717 = vmax.f32 %v5591, 0.0
      %v5718 = vmax.f32 %v5596, 0.0
      %v5719 = vmax.f32 %v5601, 0.0
      %v5720 = vmax.f32 %v5606, 0.0
      %v5721 = vmax.f32 %v5611, 0.0
      %v5722 = vmax.f32 %v5616, 0.0
      %v5723 = vmax.f32 %v5621, 0.0
      %v5724 = vmax.f32 %v5626, 0.0
      %v5725 = vmax.f32 %v5631, 0.0
      %v5726 = vmax.f32 %v5636, 0.0
      %v5727 = vmax.f32 %v5641, 0.0
      %v5728 = vmax.f32 %v5646, 0.0
      %v5729 = vmax.f32 %v5651, 0.0
      %v5730 = vmax.f32 %v5656, 0.0
      %v5731 = vmax.f32 %v5661, 0.0
      %v5732 = vmax.f32 %v5666, 0.0
      %v5733 = vmax.f32 %v5671, 0.0
      %v5734 = vmax.f32 %v5676, 0.0
      %v5735 = vmax.f32 %v5681, 0.0
      %v5736 = vmax.f32 %v5686, 0.0
      %v5737 = vmax.f32 %v5691, 0.0
      %v5738 = vmax.f32 %v5696, 0.0
      %v5739 = vmax.f32 %v5701, 0.0
      %v5740 = vmax.f32 %v5706, 0.0
      %v5773 = vrot.slane %v5709, 7
      %v5774 = vrot.slane %v5710, 7
      %v5775 = vsel %vm560, %v5773, %v5774
      %v5776 = vrot.slane %v5711, 7
      %v5777 = vrot.slane %v5712, 7
      %v5778 = vsel %vm560, %v5776, %v5777
      %v5779 = vrot.slane %v5713, 7
      %v5780 = vrot.slane %v5714, 7
      %v5781 = vsel %vm560, %v5779, %v5780
      %v5782 = vrot.slane %v5715, 7
      %v5783 = vrot.slane %v5716, 7
      %v5784 = vsel %vm560, %v5782, %v5783
      %v5785 = vrot.slane %v5717, 7
      %v5786 = vrot.slane %v5718, 7
      %v5787 = vsel %vm560, %v5785, %v5786
      %v5788 = vrot.slane %v5719, 7
      %v5789 = vrot.slane %v5720, 7
      %v5790 = vsel %vm560, %v5788, %v5789
      %v5791 = vrot.slane %v5721, 7
      %v5792 = vrot.slane %v5722, 7
      %v5793 = vsel %vm560, %v5791, %v5792
      %v5794 = vrot.slane %v5723, 7
      %v5795 = vrot.slane %v5724, 7
      %v5796 = vsel %vm560, %v5794, %v5795
      %v5797 = vrot.slane %v5725, 7
      %v5798 = vrot.slane %v5726, 7
      %v5799 = vsel %vm560, %v5797, %v5798
      %v5800 = vrot.slane %v5727, 7
      %v5801 = vrot.slane %v5728, 7
      %v5802 = vsel %vm560, %v5800, %v5801
      %v5803 = vrot.slane %v5729, 7
      %v5804 = vrot.slane %v5730, 7
      %v5805 = vsel %vm560, %v5803, %v5804
      %v5806 = vrot.slane %v5731, 7
      %v5807 = vrot.slane %v5732, 7
      %v5808 = vsel %vm560, %v5806, %v5807
      %v5809 = vrot.slane %v5733, 7
      %v5810 = vrot.slane %v5734, 7
      %v5811 = vsel %vm560, %v5809, %v5810
      %v5812 = vrot.slane %v5735, 7
      %v5813 = vrot.slane %v5736, 7
      %v5814 = vsel %vm560, %v5812, %v5813
      %v5815 = vrot.slane %v5737, 7
      %v5816 = vrot.slane %v5738, 7
      %v5817 = vsel %vm560, %v5815, %v5816
      %v5818 = vrot.slane %v5739, 7
      %v5819 = vrot.slane %v5740, 7
      %v5820 = vsel %vm560, %v5818, %v5819
      %v5868 = vsel %vm560, 0.0, %v5773
      %v5869 = vsel %vm560, 0.0, %v5776
      %v5870 = vsel %vm560, 0.0, %v5779
      %v5871 = vsel %vm560, 0.0, %v5782
      %v5872 = vsel %vm560, 0.0, %v5785
      %v5873 = vsel %vm560, 0.0, %v5788
      %v5874 = vsel %vm560, 0.0, %v5791
      %v5875 = vsel %vm560, 0.0, %v5794
      %v5876 = vsel %vm560, 0.0, %v5797
      %v5877 = vsel %vm560, 0.0, %v5800
      %v5878 = vsel %vm560, 0.0, %v5803
      %v5879 = vsel %vm560, 0.0, %v5806
      %v5880 = vsel %vm560, 0.0, %v5809
      %v5881 = vsel %vm560, 0.0, %v5812
      %v5882 = vsel %vm560, 0.0, %v5815
      %v5883 = vsel %vm560, 0.0, %v5818
      %v5884 = vsel %vm560, %v5774, 0.0
      %v5885 = vsel %vm560, %v5777, 0.0
      %v5886 = vsel %vm560, %v5780, 0.0
      %v5887 = vsel %vm560, %v5783, 0.0
      %v5888 = vsel %vm560, %v5786, 0.0
      %v5889 = vsel %vm560, %v5789, 0.0
      %v5890 = vsel %vm560, %v5792, 0.0
      %v5891 = vsel %vm560, %v5795, 0.0
      %v5892 = vsel %vm560, %v5798, 0.0
      %v5893 = vsel %vm560, %v5801, 0.0
      %v5894 = vsel %vm560, %v5804, 0.0
      %v5895 = vsel %vm560, %v5807, 0.0
      %v5896 = vsel %vm560, %v5810, 0.0
      %v5897 = vsel %vm560, %v5813, 0.0
      %v5898 = vsel %vm560, %v5816, 0.0
      %v5899 = vsel %vm560, %v5819, 0.0
      %v5930 = vrot.slane %v5868, 1
      %v5931 = vrot.slane %v5775, 1
      %v5932 = vsel %vm726, %v5930, %v5931
      %v5933 = vrot.slane %v5884, 1
      %v5934 = vsel %vm726, %v5931, %v5933
      %v5935 = vrot.slane %v5869, 1
      %v5936 = vrot.slane %v5778, 1
      %v5937 = vsel %vm726, %v5935, %v5936
      %v5938 = vrot.slane %v5885, 1
      %v5939 = vsel %vm726, %v5936, %v5938
      %v5940 = vrot.slane %v5870, 1
      %v5941 = vrot.slane %v5781, 1
      %v5942 = vsel %vm726, %v5940, %v5941
      %v5943 = vrot.slane %v5886, 1
      %v5944 = vsel %vm726, %v5941, %v5943
      %v5945 = vrot.slane %v5871, 1
      %v5946 = vrot.slane %v5784, 1
      %v5947 = vsel %vm726, %v5945, %v5946
      %v5948 = vrot.slane %v5887, 1
      %v5949 = vsel %vm726, %v5946, %v5948
      %v5950 = vrot.slane %v5872, 1
      %v5951 = vrot.slane %v5787, 1
      %v5952 = vsel %vm726, %v5950, %v5951
      %v5953 = vrot.slane %v5888, 1
      %v5954 = vsel %vm726, %v5951, %v5953
      %v5955 = vrot.slane %v5873, 1
      %v5956 = vrot.slane %v5790, 1
      %v5957 = vsel %vm726, %v5955, %v5956
      %v5958 = vrot.slane %v5889, 1
      %v5959 = vsel %vm726, %v5956, %v5958
      %v5960 = vrot.slane %v5874, 1
      %v5961 = vrot.slane %v5793, 1
      %v5962 = vsel %vm726, %v5960, %v5961
      %v5963 = vrot.slane %v5890, 1
      %v5964 = vsel %vm726, %v5961, %v5963
      %v5965 = vrot.slane %v5875, 1
      %v5966 = vrot.slane %v5796, 1
      %v5967 = vsel %vm726, %v5965, %v5966
      %v5968 = vrot.slane %v5891, 1
      %v5969 = vsel %vm726, %v5966, %v5968
      %v5970 = vrot.slane %v5876, 1
      %v5971 = vrot.slane %v5799, 1
      %v5972 = vsel %vm726, %v5970, %v5971
      %v5973 = vrot.slane %v5892, 1
      %v5974 = vsel %vm726, %v5971, %v5973
      %v5975 = vrot.slane %v5877, 1
      %v5976 = vrot.slane %v5802, 1
      %v5977 = vsel %vm726, %v5975, %v5976
      %v5978 = vrot.slane %v5893, 1
      %v5979 = vsel %vm726, %v5976, %v5978
      %v5980 = vrot.slane %v5878, 1
      %v5981 = vrot.slane %v5805, 1
      %v5982 = vsel %vm726, %v5980, %v5981
      %v5983 = vrot.slane %v5894, 1
      %v5984 = vsel %vm726, %v5981, %v5983
      %v5985 = vrot.slane %v5879, 1
      %v5986 = vrot.slane %v5808, 1
      %v5987 = vsel %vm726, %v5985, %v5986
      %v5988 = vrot.slane %v5895, 1
      %v5989 = vsel %vm726, %v5986, %v5988
      %v5990 = vrot.slane %v5880, 1
      %v5991 = vrot.slane %v5811, 1
      %v5992 = vsel %vm726, %v5990, %v5991
      %v5993 = vrot.slane %v5896, 1
      %v5994 = vsel %vm726, %v5991, %v5993
      %v5995 = vrot.slane %v5881, 1
      %v5996 = vrot.slane %v5814, 1
      %v5997 = vsel %vm726, %v5995, %v5996
      %v5998 = vrot.slane %v5897, 1
      %v5999 = vsel %vm726, %v5996, %v5998
      %v6000 = vrot.slane %v5882, 1
      %v6001 = vrot.slane %v5817, 1
      %v6002 = vsel %vm726, %v6000, %v6001
      %v6003 = vrot.slane %v5898, 1
      %v6004 = vsel %vm726, %v6001, %v6003
      %6005 = vrot.lane.b32.xlu0 %v5932, 32
      %v6006 = vpop.permute.xlu0 %6005
      %6007 = vrot.lane.b32.xlu0 %v5934, 32
      %v6008 = vpop.permute.xlu0 %6007
      %6009 = vrot.lane.b32.xlu0 %v5937, 32
      %v6010 = vpop.permute.xlu0 %6009
      %6011 = vrot.lane.b32.xlu0 %v5939, 32
      %v6012 = vpop.permute.xlu0 %6011
      %6013 = vrot.lane.b32.xlu0 %v5942, 32
      %v6014 = vpop.permute.xlu0 %6013
      %6015 = vrot.lane.b32.xlu0 %v5944, 32
      %v6016 = vpop.permute.xlu0 %6015
      %6017 = vrot.lane.b32.xlu0 %v5947, 32
      %v6018 = vpop.permute.xlu0 %6017
      %6019 = vrot.lane.b32.xlu0 %v5949, 32
      %v6020 = vpop.permute.xlu0 %6019
      %6021 = vrot.lane.b32.xlu0 %v5952, 32
      %v6022 = vpop.permute.xlu0 %6021
      %6023 = vrot.lane.b32.xlu0 %v5954, 32
      %v6024 = vpop.permute.xlu0 %6023
      %6025 = vrot.lane.b32.xlu0 %v5957, 32
      %v6026 = vpop.permute.xlu0 %6025
      %6027 = vrot.lane.b32.xlu0 %v5959, 32
      %v6028 = vpop.permute.xlu0 %6027
      %6029 = vrot.lane.b32.xlu0 %v5962, 32
      %v6030 = vpop.permute.xlu0 %6029
      %6031 = vrot.lane.b32.xlu0 %v5964, 32
      %v6032 = vpop.permute.xlu0 %6031
      %6033 = vrot.lane.b32.xlu0 %v5967, 32
      %v6034 = vpop.permute.xlu0 %6033
      %6035 = vrot.lane.b32.xlu0 %v5969, 32
      %v6036 = vpop.permute.xlu0 %6035
      %6037 = vrot.lane.b32.xlu0 %v5972, 32
      %v6038 = vpop.permute.xlu0 %6037
      %6039 = vrot.lane.b32.xlu0 %v5974, 32
      %v6040 = vpop.permute.xlu0 %6039
      %6041 = vrot.lane.b32.xlu0 %v5977, 32
      %v6042 = vpop.permute.xlu0 %6041
      %6043 = vrot.lane.b32.xlu0 %v5979, 32
      %v6044 = vpop.permute.xlu0 %6043
      %6045 = vrot.lane.b32.xlu0 %v5982, 32
      %v6046 = vpop.permute.xlu0 %6045
      %6047 = vrot.lane.b32.xlu0 %v5984, 32
      %v6048 = vpop.permute.xlu0 %6047
      %6049 = vrot.lane.b32.xlu0 %v5987, 32
      %v6050 = vpop.permute.xlu0 %6049
      %6051 = vrot.lane.b32.xlu0 %v5989, 32
      %v6052 = vpop.permute.xlu0 %6051
      %6053 = vrot.lane.b32.xlu0 %v5992, 32
      %v6054 = vpop.permute.xlu0 %6053
      %6055 = vrot.lane.b32.xlu0 %v5994, 32
      %v6056 = vpop.permute.xlu0 %6055
      %6057 = vrot.lane.b32.xlu0 %v5997, 32
      %v6058 = vpop.permute.xlu0 %6057
      %6059 = vrot.lane.b32.xlu0 %v5999, 32
      %v6060 = vpop.permute.xlu0 %6059
      %6061 = vrot.lane.b32.xlu0 %v6002, 32
      %v6062 = vpop.permute.xlu0 %6061
      %6063 = vrot.lane.b32.xlu0 %v6004, 32
      %v6064 = vpop.permute.xlu0 %6063
      %v6095 = vrot.slane %v5868, 2
      %v6096 = vrot.slane %v5775, 2
      %v6097 = vsel %vm903, %v6095, %v6096
      %v6098 = vrot.slane %v5884, 2
      %v6099 = vsel %vm903, %v6096, %v6098
      %v6100 = vrot.slane %v5869, 2
      %v6101 = vrot.slane %v5778, 2
      %v6102 = vsel %vm903, %v6100, %v6101
      %v6103 = vrot.slane %v5885, 2
      %v6104 = vsel %vm903, %v6101, %v6103
      %v6105 = vrot.slane %v5870, 2
      %v6106 = vrot.slane %v5781, 2
      %v6107 = vsel %vm903, %v6105, %v6106
      %v6108 = vrot.slane %v5886, 2
      %v6109 = vsel %vm903, %v6106, %v6108
      %v6110 = vrot.slane %v5871, 2
      %v6111 = vrot.slane %v5784, 2
      %v6112 = vsel %vm903, %v6110, %v6111
      %v6113 = vrot.slane %v5887, 2
      %v6114 = vsel %vm903, %v6111, %v6113
      %v6115 = vrot.slane %v5872, 2
      %v6116 = vrot.slane %v5787, 2
      %v6117 = vsel %vm903, %v6115, %v6116
      %v6118 = vrot.slane %v5888, 2
      %v6119 = vsel %vm903, %v6116, %v6118
      %v6120 = vrot.slane %v5873, 2
      %v6121 = vrot.slane %v5790, 2
      %v6122 = vsel %vm903, %v6120, %v6121
      %v6123 = vrot.slane %v5889, 2
      %v6124 = vsel %vm903, %v6121, %v6123
      %v6125 = vrot.slane %v5874, 2
      %v6126 = vrot.slane %v5793, 2
      %v6127 = vsel %vm903, %v6125, %v6126
      %v6128 = vrot.slane %v5890, 2
      %v6129 = vsel %vm903, %v6126, %v6128
      %v6130 = vrot.slane %v5875, 2
      %v6131 = vrot.slane %v5796, 2
      %v6132 = vsel %vm903, %v6130, %v6131
      %v6133 = vrot.slane %v5891, 2
      %v6134 = vsel %vm903, %v6131, %v6133
      %v6135 = vrot.slane %v5876, 2
      %v6136 = vrot.slane %v5799, 2
      %v6137 = vsel %vm903, %v6135, %v6136
      %v6138 = vrot.slane %v5892, 2
      %v6139 = vsel %vm903, %v6136, %v6138
      %v6140 = vrot.slane %v5877, 2
      %v6141 = vrot.slane %v5802, 2
      %v6142 = vsel %vm903, %v6140, %v6141
      %v6143 = vrot.slane %v5893, 2
      %v6144 = vsel %vm903, %v6141, %v6143
      %v6145 = vrot.slane %v5878, 2
      %v6146 = vrot.slane %v5805, 2
      %v6147 = vsel %vm903, %v6145, %v6146
      %v6148 = vrot.slane %v5894, 2
      %v6149 = vsel %vm903, %v6146, %v6148
      %v6150 = vrot.slane %v5879, 2
      %v6151 = vrot.slane %v5808, 2
      %v6152 = vsel %vm903, %v6150, %v6151
      %v6153 = vrot.slane %v5895, 2
      %v6154 = vsel %vm903, %v6151, %v6153
      %v6155 = vrot.slane %v5880, 2
      %v6156 = vrot.slane %v5811, 2
      %v6157 = vsel %vm903, %v6155, %v6156
      %v6158 = vrot.slane %v5896, 2
      %v6159 = vsel %vm903, %v6156, %v6158
      %v6160 = vrot.slane %v5881, 2
      %v6161 = vrot.slane %v5814, 2
      %v6162 = vsel %vm903, %v6160, %v6161
      %v6163 = vrot.slane %v5897, 2
      %v6164 = vsel %vm903, %v6161, %v6163
      %v6165 = vrot.slane %v5882, 2
      %v6166 = vrot.slane %v5817, 2
      %v6167 = vsel %vm903, %v6165, %v6166
      %v6168 = vrot.slane %v5898, 2
      %v6169 = vsel %vm903, %v6166, %v6168
      %6170 = vrot.lane.b32.xlu0 %v6097, 64
      %v6171 = vpop.permute.xlu0 %6170
      %6172 = vrot.lane.b32.xlu0 %v6099, 64
      %v6173 = vpop.permute.xlu0 %6172
      %6174 = vrot.lane.b32.xlu0 %v6102, 64
      %v6175 = vpop.permute.xlu0 %6174
      %6176 = vrot.lane.b32.xlu0 %v6104, 64
      %v6177 = vpop.permute.xlu0 %6176
      %6178 = vrot.lane.b32.xlu0 %v6107, 64
      %v6179 = vpop.permute.xlu0 %6178
      %6180 = vrot.lane.b32.xlu0 %v6109, 64
      %v6181 = vpop.permute.xlu0 %6180
      %6182 = vrot.lane.b32.xlu0 %v6112, 64
      %v6183 = vpop.permute.xlu0 %6182
      %6184 = vrot.lane.b32.xlu0 %v6114, 64
      %v6185 = vpop.permute.xlu0 %6184
      %6186 = vrot.lane.b32.xlu0 %v6117, 64
      %v6187 = vpop.permute.xlu0 %6186
      %6188 = vrot.lane.b32.xlu0 %v6119, 64
      %v6189 = vpop.permute.xlu0 %6188
      %6190 = vrot.lane.b32.xlu0 %v6122, 64
      %v6191 = vpop.permute.xlu0 %6190
      %6192 = vrot.lane.b32.xlu0 %v6124, 64
      %v6193 = vpop.permute.xlu0 %6192
      %6194 = vrot.lane.b32.xlu0 %v6127, 64
      %v6195 = vpop.permute.xlu0 %6194
      %6196 = vrot.lane.b32.xlu0 %v6129, 64
      %v6197 = vpop.permute.xlu0 %6196
      %6198 = vrot.lane.b32.xlu0 %v6132, 64
      %v6199 = vpop.permute.xlu0 %6198
      %6200 = vrot.lane.b32.xlu0 %v6134, 64
      %v6201 = vpop.permute.xlu0 %6200
      %6202 = vrot.lane.b32.xlu0 %v6137, 64
      %v6203 = vpop.permute.xlu0 %6202
      %6204 = vrot.lane.b32.xlu0 %v6139, 64
      %v6205 = vpop.permute.xlu0 %6204
      %6206 = vrot.lane.b32.xlu0 %v6142, 64
      %v6207 = vpop.permute.xlu0 %6206
      %6208 = vrot.lane.b32.xlu0 %v6144, 64
      %v6209 = vpop.permute.xlu0 %6208
      %6210 = vrot.lane.b32.xlu0 %v6147, 64
      %v6211 = vpop.permute.xlu0 %6210
      %6212 = vrot.lane.b32.xlu0 %v6149, 64
      %v6213 = vpop.permute.xlu0 %6212
      %6214 = vrot.lane.b32.xlu0 %v6152, 64
      %v6215 = vpop.permute.xlu0 %6214
      %6216 = vrot.lane.b32.xlu0 %v6154, 64
      %v6217 = vpop.permute.xlu0 %6216
      %6218 = vrot.lane.b32.xlu0 %v6157, 64
      %v6219 = vpop.permute.xlu0 %6218
      %6220 = vrot.lane.b32.xlu0 %v6159, 64
      %v6221 = vpop.permute.xlu0 %6220
      %6222 = vrot.lane.b32.xlu0 %v6162, 64
      %v6223 = vpop.permute.xlu0 %6222
      %6224 = vrot.lane.b32.xlu0 %v6164, 64
      %v6225 = vpop.permute.xlu0 %6224
      %6226 = vrot.lane.b32.xlu0 %v6167, 64
      %v6227 = vpop.permute.xlu0 %6226
      %6228 = vrot.lane.b32.xlu0 %v6169, 64
      %v6229 = vpop.permute.xlu0 %6228
      %6261 = vrot.lane.b32.xlu0 %v5868, 96
      %v6262 = vpop.permute.xlu0 %6261
      %6263 = vrot.lane.b32.xlu0 %v5775, 96
      %v6264 = vpop.permute.xlu0 %6263
      %6265 = vrot.lane.b32.xlu0 %v5869, 96
      %v6266 = vpop.permute.xlu0 %6265
      %6267 = vrot.lane.b32.xlu0 %v5778, 96
      %v6268 = vpop.permute.xlu0 %6267
      %6269 = vrot.lane.b32.xlu0 %v5870, 96
      %v6270 = vpop.permute.xlu0 %6269
      %6271 = vrot.lane.b32.xlu0 %v5781, 96
      %v6272 = vpop.permute.xlu0 %6271
      %6273 = vrot.lane.b32.xlu0 %v5871, 96
      %v6274 = vpop.permute.xlu0 %6273
      %6275 = vrot.lane.b32.xlu0 %v5784, 96
      %v6276 = vpop.permute.xlu0 %6275
      %6277 = vrot.lane.b32.xlu0 %v5872, 96
      %v6278 = vpop.permute.xlu0 %6277
      %6279 = vrot.lane.b32.xlu0 %v5787, 96
      %v6280 = vpop.permute.xlu0 %6279
      %6281 = vrot.lane.b32.xlu0 %v5873, 96
      %v6282 = vpop.permute.xlu0 %6281
      %6283 = vrot.lane.b32.xlu0 %v5790, 96
      %v6284 = vpop.permute.xlu0 %6283
      %6285 = vrot.lane.b32.xlu0 %v5874, 96
      %v6286 = vpop.permute.xlu0 %6285
      %6287 = vrot.lane.b32.xlu0 %v5793, 96
      %v6288 = vpop.permute.xlu0 %6287
      %6289 = vrot.lane.b32.xlu0 %v5875, 96
      %v6290 = vpop.permute.xlu0 %6289
      %6291 = vrot.lane.b32.xlu0 %v5796, 96
      %v6292 = vpop.permute.xlu0 %6291
      %6293 = vrot.lane.b32.xlu0 %v5876, 96
      %v6294 = vpop.permute.xlu0 %6293
      %6295 = vrot.lane.b32.xlu0 %v5799, 96
      %v6296 = vpop.permute.xlu0 %6295
      %6297 = vrot.lane.b32.xlu0 %v5877, 96
      %v6298 = vpop.permute.xlu0 %6297
      %6299 = vrot.lane.b32.xlu0 %v5802, 96
      %v6300 = vpop.permute.xlu0 %6299
      %6301 = vrot.lane.b32.xlu0 %v5878, 96
      %v6302 = vpop.permute.xlu0 %6301
      %6303 = vrot.lane.b32.xlu0 %v5805, 96
      %v6304 = vpop.permute.xlu0 %6303
      %6305 = vrot.lane.b32.xlu0 %v5879, 96
      %v6306 = vpop.permute.xlu0 %6305
      %6307 = vrot.lane.b32.xlu0 %v5808, 96
      %v6308 = vpop.permute.xlu0 %6307
      %6309 = vrot.lane.b32.xlu0 %v5880, 96
      %v6310 = vpop.permute.xlu0 %6309
      %6311 = vrot.lane.b32.xlu0 %v5811, 96
      %v6312 = vpop.permute.xlu0 %6311
      %6313 = vrot.lane.b32.xlu0 %v5881, 96
      %v6314 = vpop.permute.xlu0 %6313
      %6315 = vrot.lane.b32.xlu0 %v5814, 96
      %v6316 = vpop.permute.xlu0 %6315
      %6317 = vrot.lane.b32.xlu0 %v5882, 96
      %v6318 = vpop.permute.xlu0 %6317
      %6319 = vrot.lane.b32.xlu0 %v5817, 96
      %v6320 = vpop.permute.xlu0 %6319
      %6321 = vrot.lane.b32.xlu0 %v5883, 96
      %v6322 = vpop.permute.xlu0 %6321
      %6323 = vrot.lane.b32.xlu0 %v5820, 96
      %v6324 = vpop.permute.xlu0 %6323
      %v6358 = vrot.slane %v5883, 1
      %v6359 = vrot.slane %v5820, 1
      %v6360 = vsel %vm726, %v6358, %v6359
      %v6361 = vrot.slane %v5899, 1
      %v6362 = vsel %vm726, %v6359, %v6361
      %v6395 = vrot.slane %v5883, 2
      %v6396 = vrot.slane %v5820, 2
      %v6397 = vsel %vm903, %v6395, %v6396
      %v6398 = vrot.slane %v5899, 2
      %v6399 = vsel %vm903, %v6396, %v6398
      %6400 = vrot.lane.b32.xlu0 %v6097, 32
      %v6401 = vpop.permute.xlu0 %6400
      %6402 = vrot.lane.b32.xlu0 %v6099, 32
      %v6403 = vpop.permute.xlu0 %6402
      %6404 = vrot.lane.b32.xlu0 %v6102, 32
      %v6405 = vpop.permute.xlu0 %6404
      %6406 = vrot.lane.b32.xlu0 %v6104, 32
      %v6407 = vpop.permute.xlu0 %6406
      %6408 = vrot.lane.b32.xlu0 %v6107, 32
      %v6409 = vpop.permute.xlu0 %6408
      %6410 = vrot.lane.b32.xlu0 %v6109, 32
      %v6411 = vpop.permute.xlu0 %6410
      %6412 = vrot.lane.b32.xlu0 %v6112, 32
      %v6413 = vpop.permute.xlu0 %6412
      %6414 = vrot.lane.b32.xlu0 %v6114, 32
      %v6415 = vpop.permute.xlu0 %6414
      %6416 = vrot.lane.b32.xlu0 %v6117, 32
      %v6417 = vpop.permute.xlu0 %6416
      %6418 = vrot.lane.b32.xlu0 %v6119, 32
      %v6419 = vpop.permute.xlu0 %6418
      %6420 = vrot.lane.b32.xlu0 %v6122, 32
      %v6421 = vpop.permute.xlu0 %6420
      %6422 = vrot.lane.b32.xlu0 %v6124, 32
      %v6423 = vpop.permute.xlu0 %6422
      %6424 = vrot.lane.b32.xlu0 %v6127, 32
      %v6425 = vpop.permute.xlu0 %6424
      %6426 = vrot.lane.b32.xlu0 %v6129, 32
      %v6427 = vpop.permute.xlu0 %6426
      %6428 = vrot.lane.b32.xlu0 %v6132, 32
      %v6429 = vpop.permute.xlu0 %6428
      %6430 = vrot.lane.b32.xlu0 %v6134, 32
      %v6431 = vpop.permute.xlu0 %6430
      %6432 = vrot.lane.b32.xlu0 %v6137, 32
      %v6433 = vpop.permute.xlu0 %6432
      %6434 = vrot.lane.b32.xlu0 %v6139, 32
      %v6435 = vpop.permute.xlu0 %6434
      %6436 = vrot.lane.b32.xlu0 %v6142, 32
      %v6437 = vpop.permute.xlu0 %6436
      %6438 = vrot.lane.b32.xlu0 %v6144, 32
      %v6439 = vpop.permute.xlu0 %6438
      %6440 = vrot.lane.b32.xlu0 %v6147, 32
      %v6441 = vpop.permute.xlu0 %6440
      %6442 = vrot.lane.b32.xlu0 %v6149, 32
      %v6443 = vpop.permute.xlu0 %6442
      %6444 = vrot.lane.b32.xlu0 %v6152, 32
      %v6445 = vpop.permute.xlu0 %6444
      %6446 = vrot.lane.b32.xlu0 %v6154, 32
      %v6447 = vpop.permute.xlu0 %6446
      %6448 = vrot.lane.b32.xlu0 %v6157, 32
      %v6449 = vpop.permute.xlu0 %6448
      %6450 = vrot.lane.b32.xlu0 %v6159, 32
      %v6451 = vpop.permute.xlu0 %6450
      %6452 = vrot.lane.b32.xlu0 %v6162, 32
      %v6453 = vpop.permute.xlu0 %6452
      %6454 = vrot.lane.b32.xlu0 %v6164, 32
      %v6455 = vpop.permute.xlu0 %6454
      %6456 = vrot.lane.b32.xlu0 %v6167, 32
      %v6457 = vpop.permute.xlu0 %6456
      %6458 = vrot.lane.b32.xlu0 %v6169, 32
      %v6459 = vpop.permute.xlu0 %6458
      %6460 = vrot.lane.b32.xlu0 %v6397, 32
      %v6461 = vpop.permute.xlu0 %6460
      %6462 = vrot.lane.b32.xlu0 %v6399, 32
      %v6463 = vpop.permute.xlu0 %6462
      %6496 = vrot.lane.b32.xlu0 %v5869, 64
      %v6497 = vpop.permute.xlu0 %6496
      %6498 = vrot.lane.b32.xlu0 %v5778, 64
      %v6499 = vpop.permute.xlu0 %6498
      %6500 = vrot.lane.b32.xlu0 %v5870, 64
      %v6501 = vpop.permute.xlu0 %6500
      %6502 = vrot.lane.b32.xlu0 %v5781, 64
      %v6503 = vpop.permute.xlu0 %6502
      %6504 = vrot.lane.b32.xlu0 %v5871, 64
      %v6505 = vpop.permute.xlu0 %6504
      %6506 = vrot.lane.b32.xlu0 %v5784, 64
      %v6507 = vpop.permute.xlu0 %6506
      %6508 = vrot.lane.b32.xlu0 %v5872, 64
      %v6509 = vpop.permute.xlu0 %6508
      %6510 = vrot.lane.b32.xlu0 %v5787, 64
      %v6511 = vpop.permute.xlu0 %6510
      %6512 = vrot.lane.b32.xlu0 %v5873, 64
      %v6513 = vpop.permute.xlu0 %6512
      %6514 = vrot.lane.b32.xlu0 %v5790, 64
      %v6515 = vpop.permute.xlu0 %6514
      %6516 = vrot.lane.b32.xlu0 %v5874, 64
      %v6517 = vpop.permute.xlu0 %6516
      %6518 = vrot.lane.b32.xlu0 %v5793, 64
      %v6519 = vpop.permute.xlu0 %6518
      %6520 = vrot.lane.b32.xlu0 %v5875, 64
      %v6521 = vpop.permute.xlu0 %6520
      %6522 = vrot.lane.b32.xlu0 %v5796, 64
      %v6523 = vpop.permute.xlu0 %6522
      %6524 = vrot.lane.b32.xlu0 %v5876, 64
      %v6525 = vpop.permute.xlu0 %6524
      %6526 = vrot.lane.b32.xlu0 %v5799, 64
      %v6527 = vpop.permute.xlu0 %6526
      %6528 = vrot.lane.b32.xlu0 %v5877, 64
      %v6529 = vpop.permute.xlu0 %6528
      %6530 = vrot.lane.b32.xlu0 %v5802, 64
      %v6531 = vpop.permute.xlu0 %6530
      %6532 = vrot.lane.b32.xlu0 %v5878, 64
      %v6533 = vpop.permute.xlu0 %6532
      %6534 = vrot.lane.b32.xlu0 %v5805, 64
      %v6535 = vpop.permute.xlu0 %6534
      %6536 = vrot.lane.b32.xlu0 %v5879, 64
      %v6537 = vpop.permute.xlu0 %6536
      %6538 = vrot.lane.b32.xlu0 %v5808, 64
      %v6539 = vpop.permute.xlu0 %6538
      %6540 = vrot.lane.b32.xlu0 %v5880, 64
      %v6541 = vpop.permute.xlu0 %6540
      %6542 = vrot.lane.b32.xlu0 %v5811, 64
      %v6543 = vpop.permute.xlu0 %6542
      %6544 = vrot.lane.b32.xlu0 %v5881, 64
      %v6545 = vpop.permute.xlu0 %6544
      %6546 = vrot.lane.b32.xlu0 %v5814, 64
      %v6547 = vpop.permute.xlu0 %6546
      %6548 = vrot.lane.b32.xlu0 %v5882, 64
      %v6549 = vpop.permute.xlu0 %6548
      %6550 = vrot.lane.b32.xlu0 %v5817, 64
      %v6551 = vpop.permute.xlu0 %6550
      %6552 = vrot.lane.b32.xlu0 %v5883, 64
      %v6553 = vpop.permute.xlu0 %6552
      %6554 = vrot.lane.b32.xlu0 %v5820, 64
      %v6555 = vpop.permute.xlu0 %6554
      %6586 = vrot.lane.b32.xlu0 %v5937, 96
      %v6587 = vpop.permute.xlu0 %6586
      %6588 = vrot.lane.b32.xlu0 %v5939, 96
      %v6589 = vpop.permute.xlu0 %6588
      %6590 = vrot.lane.b32.xlu0 %v5942, 96
      %v6591 = vpop.permute.xlu0 %6590
      %6592 = vrot.lane.b32.xlu0 %v5944, 96
      %v6593 = vpop.permute.xlu0 %6592
      %6594 = vrot.lane.b32.xlu0 %v5947, 96
      %v6595 = vpop.permute.xlu0 %6594
      %6596 = vrot.lane.b32.xlu0 %v5949, 96
      %v6597 = vpop.permute.xlu0 %6596
      %6598 = vrot.lane.b32.xlu0 %v5952, 96
      %v6599 = vpop.permute.xlu0 %6598
      %6600 = vrot.lane.b32.xlu0 %v5954, 96
      %v6601 = vpop.permute.xlu0 %6600
      %6602 = vrot.lane.b32.xlu0 %v5957, 96
      %v6603 = vpop.permute.xlu0 %6602
      %6604 = vrot.lane.b32.xlu0 %v5959, 96
      %v6605 = vpop.permute.xlu0 %6604
      %6606 = vrot.lane.b32.xlu0 %v5962, 96
      %v6607 = vpop.permute.xlu0 %6606
      %6608 = vrot.lane.b32.xlu0 %v5964, 96
      %v6609 = vpop.permute.xlu0 %6608
      %6610 = vrot.lane.b32.xlu0 %v5967, 96
      %v6611 = vpop.permute.xlu0 %6610
      %6612 = vrot.lane.b32.xlu0 %v5969, 96
      %v6613 = vpop.permute.xlu0 %6612
      %6614 = vrot.lane.b32.xlu0 %v5972, 96
      %v6615 = vpop.permute.xlu0 %6614
      %6616 = vrot.lane.b32.xlu0 %v5974, 96
      %v6617 = vpop.permute.xlu0 %6616
      %6618 = vrot.lane.b32.xlu0 %v5977, 96
      %v6619 = vpop.permute.xlu0 %6618
      %6620 = vrot.lane.b32.xlu0 %v5979, 96
      %v6621 = vpop.permute.xlu0 %6620
      %6622 = vrot.lane.b32.xlu0 %v5982, 96
      %v6623 = vpop.permute.xlu0 %6622
      %6624 = vrot.lane.b32.xlu0 %v5984, 96
      %v6625 = vpop.permute.xlu0 %6624
      %6626 = vrot.lane.b32.xlu0 %v5987, 96
      %v6627 = vpop.permute.xlu0 %6626
      %6628 = vrot.lane.b32.xlu0 %v5989, 96
      %v6629 = vpop.permute.xlu0 %6628
      %6630 = vrot.lane.b32.xlu0 %v5992, 96
      %v6631 = vpop.permute.xlu0 %6630
      %6632 = vrot.lane.b32.xlu0 %v5994, 96
      %v6633 = vpop.permute.xlu0 %6632
      %6634 = vrot.lane.b32.xlu0 %v5997, 96
      %v6635 = vpop.permute.xlu0 %6634
      %6636 = vrot.lane.b32.xlu0 %v5999, 96
      %v6637 = vpop.permute.xlu0 %6636
      %6638 = vrot.lane.b32.xlu0 %v6002, 96
      %v6639 = vpop.permute.xlu0 %6638
      %6640 = vrot.lane.b32.xlu0 %v6004, 96
      %v6641 = vpop.permute.xlu0 %6640
      %6642 = vrot.lane.b32.xlu0 %v6360, 96
      %v6643 = vpop.permute.xlu0 %6642
      %6644 = vrot.lane.b32.xlu0 %v6362, 96
      %v6645 = vpop.permute.xlu0 %6644
      %v6676 = vsel %vm2826, %v5868, %v6006
      %v6677 = vsel %vm2826, %v5775, %v6008
      %v6678 = vsel %vm2826, %v5869, %v6010
      %v6679 = vsel %vm2826, %v5778, %v6012
      %v6680 = vsel %vm2826, %v5870, %v6014
      %v6681 = vsel %vm2826, %v5781, %v6016
      %v6682 = vsel %vm2826, %v5871, %v6018
      %v6683 = vsel %vm2826, %v5784, %v6020
      %v6684 = vsel %vm2826, %v5872, %v6022
      %v6685 = vsel %vm2826, %v5787, %v6024
      %v6686 = vsel %vm2826, %v5873, %v6026
      %v6687 = vsel %vm2826, %v5790, %v6028
      %v6688 = vsel %vm2826, %v5874, %v6030
      %v6689 = vsel %vm2826, %v5793, %v6032
      %v6690 = vsel %vm2826, %v5875, %v6034
      %v6691 = vsel %vm2826, %v5796, %v6036
      %v6692 = vsel %vm2826, %v5876, %v6038
      %v6693 = vsel %vm2826, %v5799, %v6040
      %v6694 = vsel %vm2826, %v5877, %v6042
      %v6695 = vsel %vm2826, %v5802, %v6044
      %v6696 = vsel %vm2826, %v5878, %v6046
      %v6697 = vsel %vm2826, %v5805, %v6048
      %v6698 = vsel %vm2826, %v5879, %v6050
      %v6699 = vsel %vm2826, %v5808, %v6052
      %v6700 = vsel %vm2826, %v5880, %v6054
      %v6701 = vsel %vm2826, %v5811, %v6056
      %v6702 = vsel %vm2826, %v5881, %v6058
      %v6703 = vsel %vm2826, %v5814, %v6060
      %v6704 = vsel %vm2826, %v5882, %v6062
      %v6705 = vsel %vm2826, %v5817, %v6064
      %v6706 = vsel %vm2835, %v6676, %v6171
      %v6707 = vsel %vm2835, %v6677, %v6173
      %v6708 = vsel %vm2835, %v6678, %v6175
      %v6709 = vsel %vm2835, %v6679, %v6177
      %v6710 = vsel %vm2835, %v6680, %v6179
      %v6711 = vsel %vm2835, %v6681, %v6181
      %v6712 = vsel %vm2835, %v6682, %v6183
      %v6713 = vsel %vm2835, %v6683, %v6185
      %v6714 = vsel %vm2835, %v6684, %v6187
      %v6715 = vsel %vm2835, %v6685, %v6189
      %v6716 = vsel %vm2835, %v6686, %v6191
      %v6717 = vsel %vm2835, %v6687, %v6193
      %v6718 = vsel %vm2835, %v6688, %v6195
      %v6719 = vsel %vm2835, %v6689, %v6197
      %v6720 = vsel %vm2835, %v6690, %v6199
      %v6721 = vsel %vm2835, %v6691, %v6201
      %v6722 = vsel %vm2835, %v6692, %v6203
      %v6723 = vsel %vm2835, %v6693, %v6205
      %v6724 = vsel %vm2835, %v6694, %v6207
      %v6725 = vsel %vm2835, %v6695, %v6209
      %v6726 = vsel %vm2835, %v6696, %v6211
      %v6727 = vsel %vm2835, %v6697, %v6213
      %v6728 = vsel %vm2835, %v6698, %v6215
      %v6729 = vsel %vm2835, %v6699, %v6217
      %v6730 = vsel %vm2835, %v6700, %v6219
      %v6731 = vsel %vm2835, %v6701, %v6221
      %v6732 = vsel %vm2835, %v6702, %v6223
      %v6733 = vsel %vm2835, %v6703, %v6225
      %v6734 = vsel %vm2835, %v6704, %v6227
      %v6735 = vsel %vm2835, %v6705, %v6229
      %v6736 = vsel %vm2844, %v5050, %v6262
      %v6737 = vsel %vm2844, %v5051, %v6264
      %v6738 = vsel %vm2844, %v6706, %v6266
      %v6739 = vsel %vm2844, %v6707, %v6268
      %v6740 = vsel %vm2844, %v6708, %v6270
      %v6741 = vsel %vm2844, %v6709, %v6272
      %v6742 = vsel %vm2844, %v6710, %v6274
      %v6743 = vsel %vm2844, %v6711, %v6276
      %v6744 = vsel %vm2844, %v6712, %v6278
      %v6745 = vsel %vm2844, %v6713, %v6280
      %v6746 = vsel %vm2844, %v6714, %v6282
      %v6747 = vsel %vm2844, %v6715, %v6284
      %v6748 = vsel %vm2844, %v6716, %v6286
      %v6749 = vsel %vm2844, %v6717, %v6288
      %v6750 = vsel %vm2844, %v6718, %v6290
      %v6751 = vsel %vm2844, %v6719, %v6292
      %v6752 = vsel %vm2844, %v6720, %v6294
      %v6753 = vsel %vm2844, %v6721, %v6296
      %v6754 = vsel %vm2844, %v6722, %v6298
      %v6755 = vsel %vm2844, %v6723, %v6300
      %v6756 = vsel %vm2844, %v6724, %v6302
      %v6757 = vsel %vm2844, %v6725, %v6304
      %v6758 = vsel %vm2844, %v6726, %v6306
      %v6759 = vsel %vm2844, %v6727, %v6308
      %v6760 = vsel %vm2844, %v6728, %v6310
      %v6761 = vsel %vm2844, %v6729, %v6312
      %v6762 = vsel %vm2844, %v6730, %v6314
      %v6763 = vsel %vm2844, %v6731, %v6316
      %v6764 = vsel %vm2844, %v6732, %v6318
      %v6765 = vsel %vm2844, %v6733, %v6320
      %v6766 = vsel %vm2844, %v6734, %v6322
      %v6767 = vsel %vm2844, %v6735, %v6324
      %v6768 = vsel %vm2826, %v5932, %v6401
      %v6769 = vsel %vm2826, %v5934, %v6403
      %v6770 = vsel %vm2826, %v5937, %v6405
      %v6771 = vsel %vm2826, %v5939, %v6407
      %v6772 = vsel %vm2826, %v5942, %v6409
      %v6773 = vsel %vm2826, %v5944, %v6411
      %v6774 = vsel %vm2826, %v5947, %v6413
      %v6775 = vsel %vm2826, %v5949, %v6415
      %v6776 = vsel %vm2826, %v5952, %v6417
      %v6777 = vsel %vm2826, %v5954, %v6419
      %v6778 = vsel %vm2826, %v5957, %v6421
      %v6779 = vsel %vm2826, %v5959, %v6423
      %v6780 = vsel %vm2826, %v5962, %v6425
      %v6781 = vsel %vm2826, %v5964, %v6427
      %v6782 = vsel %vm2826, %v5967, %v6429
      %v6783 = vsel %vm2826, %v5969, %v6431
      %v6784 = vsel %vm2826, %v5972, %v6433
      %v6785 = vsel %vm2826, %v5974, %v6435
      %v6786 = vsel %vm2826, %v5977, %v6437
      %v6787 = vsel %vm2826, %v5979, %v6439
      %v6788 = vsel %vm2826, %v5982, %v6441
      %v6789 = vsel %vm2826, %v5984, %v6443
      %v6790 = vsel %vm2826, %v5987, %v6445
      %v6791 = vsel %vm2826, %v5989, %v6447
      %v6792 = vsel %vm2826, %v5992, %v6449
      %v6793 = vsel %vm2826, %v5994, %v6451
      %v6794 = vsel %vm2826, %v5997, %v6453
      %v6795 = vsel %vm2826, %v5999, %v6455
      %v6796 = vsel %vm2826, %v6002, %v6457
      %v6797 = vsel %vm2826, %v6004, %v6459
      %v6798 = vsel %vm2826, %v6360, %v6461
      %v6799 = vsel %vm2826, %v6362, %v6463
      %v6800 = vsel %vm2835, %v6768, %v6497
      %v6801 = vsel %vm2835, %v6769, %v6499
      %v6802 = vsel %vm2835, %v6770, %v6501
      %v6803 = vsel %vm2835, %v6771, %v6503
      %v6804 = vsel %vm2835, %v6772, %v6505
      %v6805 = vsel %vm2835, %v6773, %v6507
      %v6806 = vsel %vm2835, %v6774, %v6509
      %v6807 = vsel %vm2835, %v6775, %v6511
      %v6808 = vsel %vm2835, %v6776, %v6513
      %v6809 = vsel %vm2835, %v6777, %v6515
      %v6810 = vsel %vm2835, %v6778, %v6517
      %v6811 = vsel %vm2835, %v6779, %v6519
      %v6812 = vsel %vm2835, %v6780, %v6521
      %v6813 = vsel %vm2835, %v6781, %v6523
      %v6814 = vsel %vm2835, %v6782, %v6525
      %v6815 = vsel %vm2835, %v6783, %v6527
      %v6816 = vsel %vm2835, %v6784, %v6529
      %v6817 = vsel %vm2835, %v6785, %v6531
      %v6818 = vsel %vm2835, %v6786, %v6533
      %v6819 = vsel %vm2835, %v6787, %v6535
      %v6820 = vsel %vm2835, %v6788, %v6537
      %v6821 = vsel %vm2835, %v6789, %v6539
      %v6822 = vsel %vm2835, %v6790, %v6541
      %v6823 = vsel %vm2835, %v6791, %v6543
      %v6824 = vsel %vm2835, %v6792, %v6545
      %v6825 = vsel %vm2835, %v6793, %v6547
      %v6826 = vsel %vm2835, %v6794, %v6549
      %v6827 = vsel %vm2835, %v6795, %v6551
      %v6828 = vsel %vm2835, %v6796, %v6553
      %v6829 = vsel %vm2835, %v6797, %v6555
      %v6830 = vsel %vm2835, %v6798, %v2793
      %v6831 = vsel %vm2835, %v6799, %v4960
      %v6832 = vsel %vm2844, %v6800, %v6587
      %v6833 = vsel %vm2844, %v6801, %v6589
      %v6834 = vsel %vm2844, %v6802, %v6591
      %v6835 = vsel %vm2844, %v6803, %v6593
      %v6836 = vsel %vm2844, %v6804, %v6595
      %v6837 = vsel %vm2844, %v6805, %v6597
      %v6838 = vsel %vm2844, %v6806, %v6599
      %v6839 = vsel %vm2844, %v6807, %v6601
      %v6840 = vsel %vm2844, %v6808, %v6603
      %v6841 = vsel %vm2844, %v6809, %v6605
      %v6842 = vsel %vm2844, %v6810, %v6607
      %v6843 = vsel %vm2844, %v6811, %v6609
      %v6844 = vsel %vm2844, %v6812, %v6611
      %v6845 = vsel %vm2844, %v6813, %v6613
      %v6846 = vsel %vm2844, %v6814, %v6615
      %v6847 = vsel %vm2844, %v6815, %v6617
      %v6848 = vsel %vm2844, %v6816, %v6619
      %v6849 = vsel %vm2844, %v6817, %v6621
      %v6850 = vsel %vm2844, %v6818, %v6623
      %v6851 = vsel %vm2844, %v6819, %v6625
      %v6852 = vsel %vm2844, %v6820, %v6627
      %v6853 = vsel %vm2844, %v6821, %v6629
      %v6854 = vsel %vm2844, %v6822, %v6631
      %v6855 = vsel %vm2844, %v6823, %v6633
      %v6856 = vsel %vm2844, %v6824, %v6635
      %v6857 = vsel %vm2844, %v6825, %v6637
      %v6858 = vsel %vm2844, %v6826, %v6639
      %v6859 = vsel %vm2844, %v6827, %v6641
      %v6860 = vsel %vm2844, %v6828, %v6643
      %v6861 = vsel %vm2844, %v6829, %v6645
      %v6862 = vsel %vm2844, %v6830, %v5011
      %v6863 = vsel %vm2844, %v6831, %v5013
      %v6864 = vld [vmem:[%s13] sm:$0xff]
      %v6865 = vld [vmem:[%s13 + $0x8] sm:$0xff]
      %v6866 = vld [vmem:[%s13 + $0x10] sm:$0xff]
      %v6867 = vld [vmem:[%s13 + $0x18] sm:$0xff]
      %v6868 = vld [vmem:[%s13 + $0x20] sm:$0xff]
      %v6869 = vld [vmem:[%s13 + $0x28] sm:$0xff]
      %v6870 = vld [vmem:[%s13 + $0x30] sm:$0xff]
      %v6871 = vld [vmem:[%s13 + $0x38] sm:$0xff]
      %v6872 = vld [vmem:[%s13 + $0x40] sm:$0xff]
      %v6873 = vld [vmem:[%s13 + $0x48] sm:$0xff]
      %v6874 = vld [vmem:[%s13 + $0x50] sm:$0xff]
      %v6875 = vld [vmem:[%s13 + $0x58] sm:$0xff]
      %v6876 = vld [vmem:[%s13 + $0x60] sm:$0xff]
      %v6877 = vld [vmem:[%s13 + $0x68] sm:$0xff]
      %v6878 = vld [vmem:[%s13 + $0x70] sm:$0xff]
      %v6879 = vld [vmem:[%s13 + $0x78] sm:$0xff]
      %v6880 = vld [vmem:[%s13 + $0x80] sm:$0xff]
      %v6881 = vld [vmem:[%s13 + $0x88] sm:$0xff]
      %v6882 = vld [vmem:[%s13 + $0x90] sm:$0xff]
      %v6883 = vld [vmem:[%s13 + $0x98] sm:$0xff]
      %v6884 = vld [vmem:[%s13 + $0xa0] sm:$0xff]
      %v6885 = vld [vmem:[%s13 + $0xa8] sm:$0xff]
      %v6886 = vld [vmem:[%s13 + $0xb0] sm:$0xff]
      %v6887 = vld [vmem:[%s13 + $0xb8] sm:$0xff]
      %v6888 = vld [vmem:[%s13 + $0xc0] sm:$0xff]
      %v6889 = vld [vmem:[%s13 + $0xc8] sm:$0xff]
      %v6890 = vld [vmem:[%s13 + $0xd0] sm:$0xff]
      %v6891 = vld [vmem:[%s13 + $0xd8] sm:$0xff]
      %v6892 = vld [vmem:[%s13 + $0xe0] sm:$0xff]
      %v6893 = vld [vmem:[%s13 + $0xe8] sm:$0xff]
      %v6894 = vld [vmem:[%s13 + $0xf0] sm:$0xff]
      %v6895 = vld [vmem:[%s13 + $0xf8] sm:$0xff]
      %v6896 = vld [vmem:[%s13 + $0x100] sm:$0xff]
      %v6897 = vld [vmem:[%s13 + $0x108] sm:$0xff]
      %v6898 = vld [vmem:[%s13 + $0x110] sm:$0xff]
      %v6899 = vld [vmem:[%s13 + $0x118] sm:$0xff]
      %v6900 = vld [vmem:[%s14] sm:$0x1]
      %v6902 = vlaneseq
      %v6903 = vshrl.u32 %v6902, 7
      %v6904 = vsub.s32 0, %v6903
      %v6905 = vrot.slane %v6900, %v6904
      %v6907 = vsel %vm2826, %v6102, 0
      %v6909 = vsel %vm2826, %v6104, 0
      %v6911 = vsel %vm2826, %v6107, 0
      %v6913 = vsel %vm2826, %v6109, 0
      %v6915 = vsel %vm2826, %v6112, 0
      %v6917 = vsel %vm2826, %v6114, 0
      %v6919 = vsel %vm2826, %v6117, 0
      %v6921 = vsel %vm2826, %v6119, 0
      %v6923 = vsel %vm2826, %v6122, 0
      %v6925 = vsel %vm2826, %v6124, 0
      %v6927 = vsel %vm2826, %v6127, 0
      %v6929 = vsel %vm2826, %v6129, 0
      %v6931 = vsel %vm2826, %v6132, 0
      %v6933 = vsel %vm2826, %v6134, 0
      %v6935 = vsel %vm2826, %v6137, 0
      %v6937 = vsel %vm2826, %v6139, 0
      %v6939 = vsel %vm2826, %v6142, 0
      %v6941 = vsel %vm2826, %v6144, 0
      %v6943 = vsel %vm2826, %v6147, 0
      %v6945 = vsel %vm2826, %v6149, 0
      %v6947 = vsel %vm2826, %v6152, 0
      %v6949 = vsel %vm2826, %v6154, 0
      %v6951 = vsel %vm2826, %v6157, 0
      %v6953 = vsel %vm2826, %v6159, 0
      %v6955 = vsel %vm2826, %v6162, 0
      %v6957 = vsel %vm2826, %v6164, 0
      %v6959 = vsel %vm2826, %v6167, 0
      %v6961 = vsel %vm2826, %v6169, 0
      %v6963 = vsel %vm2826, %v6397, 0
      %v6965 = vsel %vm2826, %v6399, 0
      %6967 = vmatprep.subr.mxu0 0.0
      %6968 = vmatpush1.msra.mxu0 %v6864
      %6969 = vmatprep.subr.mxu0 0.0
      %6970 = vmatpush1.msra.mxu0 %v6865
      %6971 = vmatprep.subr.mxu0 0.0
      %6972 = vmatpush1.msra.mxu0 %v6866
      %6973 = vmatprep.subr.mxu0 0.0
      %6974 = vmatpush1.msra.mxu0 %v6867
      %6975 = vmatprep.subr.mxu0 0.0
      %6976 = vmatpush1.msra.mxu0 %v6868
      %6977 = vmatprep.subr.mxu0 0.0
      %6978 = vmatpush1.msra.mxu0 %v6869
      %6979 = vmatprep.subr.mxu0 0.0
      %6980 = vmatpush1.msra.mxu0 %v6870
      %6981 = vmatprep.subr.mxu0 0.0
      %6982 = vmatpush1.msra.mxu0 %v6871
      %6983 = vmatprep.subr.mxu0 0.0
      %6984 = vmatpush1.msra.mxu0 %v6872
      %6985 = vmatprep.subr.mxu0 0.0
      %6986 = vmatpush1.msra.mxu0 %v6873
      %6987 = vmatprep.subr.mxu0 0.0
      %6988 = vmatpush1.msra.mxu0 %v6874
      %6989 = vmatprep.subr.mxu0 0.0
      %6990 = vmatpush1.msra.mxu0 %v6875
      %6991 = vmatprep.subr.mxu0 0.0
      %6992 = vmatpush1.msra.mxu0 %v6876
      %6993 = vmatprep.subr.mxu0 0.0
      %6994 = vmatpush1.msra.mxu0 %v6877
      %6995 = vmatprep.subr.mxu0 0.0
      %6996 = vmatpush1.msra.mxu0 %v6878
      %6997 = vmatprep.subr.mxu0 0.0
      %6998 = vmatpush1.msra.mxu0 %v6879
      %6999 = vmatprep.subr.mxu0 0.0
      %7000 = vmatpush1.msra.mxu0 %v6880
      %7001 = vmatprep.subr.mxu0 0.0
      %7002 = vmatpush1.msra.mxu0 %v6881
      %7003 = vmatprep.subr.mxu0 0.0
      %7004 = vmatpush1.msra.mxu0 %v6882
      %7005 = vmatprep.subr.mxu0 0.0
      %7006 = vmatpush1.msra.mxu0 %v6883
      %7007 = vmatprep.subr.mxu0 0.0
      %7008 = vmatpush1.msra.mxu0 %v6884
      %7009 = vmatprep.subr.mxu0 0.0
      %7010 = vmatpush1.msra.mxu0 %v6885
      %7011 = vmatprep.subr.mxu0 0.0
      %7012 = vmatpush1.msra.mxu0 %v6886
      %7013 = vmatprep.subr.mxu0 0.0
      %7014 = vmatpush1.msra.mxu0 %v6887
      %7015 = vmatprep.subr.mxu0 0.0
      %7016 = vmatpush1.msra.mxu0 %v6888
      %7017 = vmatprep.subr.mxu0 0.0
      %7018 = vmatpush1.msra.mxu0 %v6889
      %7019 = vmatprep.subr.mxu0 0.0
      %7020 = vmatpush1.msra.mxu0 %v6890
      %7021 = vmatprep.subr.mxu0 0.0
      %7022 = vmatpush1.msra.mxu0 %v6891
      %7023 = vmatprep.subr.mxu0 0.0
      %7024 = vmatpush1.msra.mxu0 %v6892
      %7025 = vmatprep.subr.mxu0 0.0
      %7026 = vmatpush1.msra.mxu0 %v6893
      %7027 = vmatprep.subr.mxu0 0.0
      %7028 = vmatpush1.msra.mxu0 %v6894
      %7029 = vmatprep.subr.mxu0 0.0
      %7030 = vmatpush1.msra.mxu0 %v6895
      %7031 = vmatprep.mubr.f32.mxu0 %v6832
      %7032 = vmatmul.mubr.f32.gmra.mrb[0].mxu0 %v6736
      %v7033 = vpop.f32.mrb[0].mxu0
      %v7034 = vadd.f32 %v6905, %v7033
      %v7035 = vpop.f32.mrb[0].mxu0
      %7036 = vmatprep.mubr.f32.mxu0 %v6833
      %7037 = vmatmul.mubr.f32.gmra.mrb[0].mxu0 %v6737
      %v7038 = vpop.f32.mrb[0].mxu0
      %v7039 = vadd.f32 %v6905, %v7038
      %v7040 = vpop.f32.mrb[0].mxu0
      %7041 = vmatprep.mubr.f32.mxu0 %v6834
      %7042 = vmatmul.mubr.f32.gmra.mrb[0].mxu0 %v6738
      %v7043 = vpop.f32.mrb[0].mxu0
      %v7044 = vadd.f32 %v6905, %v7043
      %v7045 = vpop.f32.mrb[0].mxu0
      %7046 = vmatprep.mubr.f32.mxu0 %v6835
      %7047 = vmatmul.mubr.f32.gmra.mrb[0].mxu0 %v6739
      %v7048 = vpop.f32.mrb[0].mxu0
      %v7049 = vadd.f32 %v6905, %v7048
      %v7050 = vpop.f32.mrb[0].mxu0
      %7051 = vmatprep.mubr.f32.mxu0 %v6836
      %7052 = vmatmul.mubr.f32.gmra.mrb[0].mxu0 %v6740
      %v7053 = vpop.f32.mrb[0].mxu0
      %v7054 = vadd.f32 %v6905, %v7053
      %v7055 = vpop.f32.mrb[0].mxu0
      %7056 = vmatprep.mubr.f32.mxu0 %v6837
      %7057 = vmatmul.mubr.f32.gmra.mrb[0].mxu0 %v6741
      %v7058 = vpop.f32.mrb[0].mxu0
      %v7059 = vadd.f32 %v6905, %v7058
      %v7060 = vpop.f32.mrb[0].mxu0
      %7061 = vmatprep.mubr.f32.mxu0 %v6838
      %7062 = vmatmul.mubr.f32.gmra.mrb[0].mxu0 %v6742
      %v7063 = vpop.f32.mrb[0].mxu0
      %v7064 = vadd.f32 %v6905, %v7063
      %v7065 = vpop.f32.mrb[0].mxu0
      %7066 = vmatprep.mubr.f32.mxu0 %v6839
      %7067 = vmatmul.mubr.f32.gmra.mrb[0].mxu0 %v6743
      %v7068 = vpop.f32.mrb[0].mxu0
      %v7069 = vadd.f32 %v6905, %v7068
      %v7070 = vpop.f32.mrb[0].mxu0
      %7071 = vmatprep.mubr.f32.mxu0 %v6840
      %7072 = vmatmul.mubr.f32.gmra.mrb[0].mxu0 %v6744
      %v7073 = vpop.f32.mrb[0].mxu0
      %v7074 = vadd.f32 %v6905, %v7073
      %v7075 = vpop.f32.mrb[0].mxu0
      %7076 = vmatprep.mubr.f32.mxu0 %v6841
      %7077 = vmatmul.mubr.f32.gmra.mrb[0].mxu0 %v6745
      %v7078 = vpop.f32.mrb[0].mxu0
      %v7079 = vadd.f32 %v6905, %v7078
      %v7080 = vpop.f32.mrb[0].mxu0
      %7081 = vmatprep.mubr.f32.mxu0 %v6842
      %7082 = vmatmul.mubr.f32.gmra.mrb[0].mxu0 %v6746
      %v7083 = vpop.f32.mrb[0].mxu0
      %v7084 = vadd.f32 %v6905, %v7083
      %v7085 = vpop.f32.mrb[0].mxu0
      %7086 = vmatprep.mubr.f32.mxu0 %v6843
      %7087 = vmatmul.mubr.f32.gmra.mrb[0].mxu0 %v6747
      %v7088 = vpop.f32.mrb[0].mxu0
      %v7089 = vadd.f32 %v6905, %v7088
      %v7090 = vpop.f32.mrb[0].mxu0
      %7091 = vmatprep.mubr.f32.mxu0 %v6844
      %7092 = vmatmul.mubr.f32.gmra.mrb[0].mxu0 %v6748
      %v7093 = vpop.f32.mrb[0].mxu0
      %v7094 = vadd.f32 %v6905, %v7093
      %v7095 = vpop.f32.mrb[0].mxu0
      %7096 = vmatprep.mubr.f32.mxu0 %v6845
      %7097 = vmatmul.mubr.f32.gmra.mrb[0].mxu0 %v6749
      %v7098 = vpop.f32.mrb[0].mxu0
      %v7099 = vadd.f32 %v6905, %v7098
      %v7100 = vpop.f32.mrb[0].mxu0
      %7101 = vmatprep.mubr.f32.mxu0 %v6846
      %7102 = vmatmul.mubr.f32.gmra.mrb[0].mxu0 %v6750
      %v7103 = vpop.f32.mrb[0].mxu0
      %v7104 = vadd.f32 %v6905, %v7103
      %v7105 = vpop.f32.mrb[0].mxu0
      %7106 = vmatprep.mubr.f32.mxu0 %v6847
      %7107 = vmatmul.mubr.f32.gmra.mrb[0].mxu0 %v6751
      %v7108 = vpop.f32.mrb[0].mxu0
      %v7109 = vadd.f32 %v6905, %v7108
      %v7110 = vpop.f32.mrb[0].mxu0
      %7111 = vmatprep.mubr.f32.mxu0 %v6848
      %7112 = vmatmul.mubr.f32.gmra.mrb[0].mxu0 %v6752
      %v7113 = vpop.f32.mrb[0].mxu0
      %v7114 = vadd.f32 %v6905, %v7113
      %v7115 = vpop.f32.mrb[0].mxu0
      %7116 = vmatprep.mubr.f32.mxu0 %v6849
      %7117 = vmatmul.mubr.f32.gmra.mrb[0].mxu0 %v6753
      %v7118 = vpop.f32.mrb[0].mxu0
      %v7119 = vadd.f32 %v6905, %v7118
      %v7120 = vpop.f32.mrb[0].mxu0
      %7121 = vmatprep.mubr.f32.mxu0 %v6850
      %7122 = vmatmul.mubr.f32.gmra.mrb[0].mxu0 %v6754
      %v7123 = vpop.f32.mrb[0].mxu0
      %v7124 = vadd.f32 %v6905, %v7123
      %v7125 = vpop.f32.mrb[0].mxu0
      %7126 = vmatprep.mubr.f32.mxu0 %v6851
      %7127 = vmatmul.mubr.f32.gmra.mrb[0].mxu0 %v6755
      %v7128 = vpop.f32.mrb[0].mxu0
      %v7129 = vadd.f32 %v6905, %v7128
      %v7130 = vpop.f32.mrb[0].mxu0
      %7131 = vmatprep.mubr.f32.mxu0 %v6852
      %7132 = vmatmul.mubr.f32.gmra.mrb[0].mxu0 %v6756
      %v7133 = vpop.f32.mrb[0].mxu0
      %v7134 = vadd.f32 %v6905, %v7133
      %v7135 = vpop.f32.mrb[0].mxu0
      %7136 = vmatprep.mubr.f32.mxu0 %v6853
      %7137 = vmatmul.mubr.f32.gmra.mrb[0].mxu0 %v6757
      %v7138 = vpop.f32.mrb[0].mxu0
      %v7139 = vadd.f32 %v6905, %v7138
      %v7140 = vpop.f32.mrb[0].mxu0
      %7141 = vmatprep.mubr.f32.mxu0 %v6854
      %7142 = vmatmul.mubr.f32.gmra.mrb[0].mxu0 %v6758
      %v7143 = vpop.f32.mrb[0].mxu0
      %v7144 = vadd.f32 %v6905, %v7143
      %v7145 = vpop.f32.mrb[0].mxu0
      %7146 = vmatprep.mubr.f32.mxu0 %v6855
      %7147 = vmatmul.mubr.f32.gmra.mrb[0].mxu0 %v6759
      %v7148 = vpop.f32.mrb[0].mxu0
      %v7149 = vadd.f32 %v6905, %v7148
      %v7150 = vpop.f32.mrb[0].mxu0
      %7151 = vmatprep.mubr.f32.mxu0 %v6856
      %7152 = vmatmul.mubr.f32.gmra.mrb[0].mxu0 %v6760
      %v7153 = vpop.f32.mrb[0].mxu0
      %v7154 = vadd.f32 %v6905, %v7153
      %v7155 = vpop.f32.mrb[0].mxu0
      %7156 = vmatprep.mubr.f32.mxu0 %v6857
      %7157 = vmatmul.mubr.f32.gmra.mrb[0].mxu0 %v6761
      %v7158 = vpop.f32.mrb[0].mxu0
      %v7159 = vadd.f32 %v6905, %v7158
      %v7160 = vpop.f32.mrb[0].mxu0
      %7161 = vmatprep.mubr.f32.mxu0 %v6858
      %7162 = vmatmul.mubr.f32.gmra.mrb[0].mxu0 %v6762
      %v7163 = vpop.f32.mrb[0].mxu0
      %v7164 = vadd.f32 %v6905, %v7163
      %v7165 = vpop.f32.mrb[0].mxu0
      %7166 = vmatprep.mubr.f32.mxu0 %v6859
      %7167 = vmatmul.mubr.f32.gmra.mrb[0].mxu0 %v6763
      %v7168 = vpop.f32.mrb[0].mxu0
      %v7169 = vadd.f32 %v6905, %v7168
      %v7170 = vpop.f32.mrb[0].mxu0
      %7171 = vmatprep.mubr.f32.mxu0 %v6860
      %7172 = vmatmul.mubr.f32.gmra.mrb[0].mxu0 %v6764
      %v7173 = vpop.f32.mrb[0].mxu0
      %v7174 = vadd.f32 %v6905, %v7173
      %v7175 = vpop.f32.mrb[0].mxu0
      %7176 = vmatprep.mubr.f32.mxu0 %v6861
      %7177 = vmatmul.mubr.f32.gmra.mrb[0].mxu0 %v6765
      %v7178 = vpop.f32.mrb[0].mxu0
      %v7179 = vadd.f32 %v6905, %v7178
      %v7180 = vpop.f32.mrb[0].mxu0
      %7181 = vmatprep.mubr.f32.mxu0 %v6862
      %7182 = vmatmul.mubr.f32.gmra.mrb[0].mxu0 %v6766
      %v7183 = vpop.f32.mrb[0].mxu0
      %v7184 = vadd.f32 %v6905, %v7183
      %v7185 = vpop.f32.mrb[0].mxu0
      %7186 = vmatprep.mubr.f32.mxu0 %v6863
      %7187 = vmatmul.mubr.f32.gmra.mrb[0].mxu0 %v6767
      %v7188 = vpop.f32.mrb[0].mxu0
      %v7189 = vadd.f32 %v6905, %v7188
      %v7190 = vpop.f32.mrb[0].mxu0
      %7191 = vdwg.mxu0
      %7192 = vmatprep.subr.mxu0 0.0
      %7193 = vmatpush1.msra.mxu0 %v6896
      %7194 = vmatprep.subr.mxu0 0.0
      %7195 = vmatpush1.msra.mxu0 %v6897
      %7196 = vmatprep.subr.mxu0 0.0
      %7197 = vmatpush1.msra.mxu0 %v6898
      %7198 = vmatprep.subr.mxu0 0.0
      %7199 = vmatpush1.msra.mxu0 %v6899
      %7200 = vmatprep.subr.mxu0 0.0
      %7201 = vmatpush1.msra.mxu0 0.0
      %7202 = vmatprep.subr.mxu0 0.0
      %7203 = vmatpush1.msra.mxu0 0.0
      %7204 = vmatprep.subr.mxu0 0.0
      %7205 = vmatpush1.msra.mxu0 0.0
      %7206 = vmatprep.subr.mxu0 0.0
      %7207 = vmatpush1.msra.mxu0 0.0
      %7208 = vmatprep.subr.mxu0 0.0
      %7209 = vmatpush1.msra.mxu0 0.0
      %7210 = vmatprep.subr.mxu0 0.0
      %7211 = vmatpush1.msra.mxu0 0.0
      %7212 = vmatprep.subr.mxu0 0.0
      %7213 = vmatpush1.msra.mxu0 0.0
      %7214 = vmatprep.subr.mxu0 0.0
      %7215 = vmatpush1.msra.mxu0 0.0
      %7216 = vmatprep.subr.mxu0 0.0
      %7217 = vmatpush1.msra.mxu0 0.0
      %7218 = vmatprep.subr.mxu0 0.0
      %7219 = vmatpush1.msra.mxu0 0.0
      %7220 = vmatprep.subr.mxu0 0.0
      %7221 = vmatpush1.msra.mxu0 0.0
      %7222 = vmatprep.subr.mxu0 0.0
      %7223 = vmatpush1.msra.mxu0 0.0
      %7224 = vmatprep.subr.mxu0 0.0
      %7225 = vmatpush1.msra.mxu0 0.0
      %7226 = vmatprep.subr.mxu0 0.0
      %7227 = vmatpush1.msra.mxu0 0.0
      %7228 = vmatprep.subr.mxu0 0.0
      %7229 = vmatpush1.msra.mxu0 0.0
      %7230 = vmatprep.subr.mxu0 0.0
      %7231 = vmatpush1.msra.mxu0 0.0
      %7232 = vmatprep.subr.mxu0 0.0
      %7233 = vmatpush1.msra.mxu0 0.0
      %7234 = vmatprep.subr.mxu0 0.0
      %7235 = vmatpush1.msra.mxu0 0.0
      %7236 = vmatprep.subr.mxu0 0.0
      %7237 = vmatpush1.msra.mxu0 0.0
      %7238 = vmatprep.subr.mxu0 0.0
      %7239 = vmatpush1.msra.mxu0 0.0
      %7240 = vmatprep.subr.mxu0 0.0
      %7241 = vmatpush1.msra.mxu0 0.0
      %7242 = vmatprep.subr.mxu0 0.0
      %7243 = vmatpush1.msra.mxu0 0.0
      %7244 = vmatprep.subr.mxu0 0.0
      %7245 = vmatpush1.msra.mxu0 0.0
      %7246 = vmatprep.subr.mxu0 0.0
      %7247 = vmatpush1.msra.mxu0 0.0
      %7248 = vmatprep.subr.mxu0 0.0
      %7249 = vmatpush1.msra.mxu0 0.0
      %7250 = vmatprep.subr.mxu0 0.0
      %7251 = vmatpush1.msra.mxu0 0.0
      %7252 = vmatprep.subr.mxu0 0.0
      %7253 = vmatpush1.msra.mxu0 0.0
      %7254 = vmatprep.subr.mxu0 0.0
      %7255 = vmatpush1.msra.mxu0 0.0
      %7256 = vmatprep.mubr.f32.mxu0 0.0
      %7257 = vmatmul.mubr.f32.gmra.mrb[0].mxu0 %v6907
      %v7258 = vpop.f32.mrb[0].mxu0
      %v7259 = vadd.f32 %v7034, %v7258
      %v7260 = vpop.f32.mrb[0].mxu0
      %7261 = vmatprep.mubr.f32.mxu0 0.0
      %7262 = vmatmul.mubr.f32.gmra.mrb[0].mxu0 %v6909
      %v7263 = vpop.f32.mrb[0].mxu0
      %v7264 = vadd.f32 %v7039, %v7263
      %v7265 = vpop.f32.mrb[0].mxu0
      %7266 = vmatprep.mubr.f32.mxu0 0.0
      %7267 = vmatmul.mubr.f32.gmra.mrb[0].mxu0 %v6911
      %v7268 = vpop.f32.mrb[0].mxu0
      %v7269 = vadd.f32 %v7044, %v7268
      %v7270 = vpop.f32.mrb[0].mxu0
      %7271 = vmatprep.mubr.f32.mxu0 0.0
      %7272 = vmatmul.mubr.f32.gmra.mrb[0].mxu0 %v6913
      %v7273 = vpop.f32.mrb[0].mxu0
      %v7274 = vadd.f32 %v7049, %v7273
      %v7275 = vpop.f32.mrb[0].mxu0
      %7276 = vmatprep.mubr.f32.mxu0 0.0
      %7277 = vmatmul.mubr.f32.gmra.mrb[0].mxu0 %v6915
      %v7278 = vpop.f32.mrb[0].mxu0
      %v7279 = vadd.f32 %v7054, %v7278
      %v7280 = vpop.f32.mrb[0].mxu0
      %7281 = vmatprep.mubr.f32.mxu0 0.0
      %7282 = vmatmul.mubr.f32.gmra.mrb[0].mxu0 %v6917
      %v7283 = vpop.f32.mrb[0].mxu0
      %v7284 = vadd.f32 %v7059, %v7283
      %v7285 = vpop.f32.mrb[0].mxu0
      %7286 = vmatprep.mubr.f32.mxu0 0.0
      %7287 = vmatmul.mubr.f32.gmra.mrb[0].mxu0 %v6919
      %v7288 = vpop.f32.mrb[0].mxu0
      %v7289 = vadd.f32 %v7064, %v7288
      %v7290 = vpop.f32.mrb[0].mxu0
      %7291 = vmatprep.mubr.f32.mxu0 0.0
      %7292 = vmatmul.mubr.f32.gmra.mrb[0].mxu0 %v6921
      %v7293 = vpop.f32.mrb[0].mxu0
      %v7294 = vadd.f32 %v7069, %v7293
      %v7295 = vpop.f32.mrb[0].mxu0
      %7296 = vmatprep.mubr.f32.mxu0 0.0
      %7297 = vmatmul.mubr.f32.gmra.mrb[0].mxu0 %v6923
      %v7298 = vpop.f32.mrb[0].mxu0
      %v7299 = vadd.f32 %v7074, %v7298
      %v7300 = vpop.f32.mrb[0].mxu0
      %7301 = vmatprep.mubr.f32.mxu0 0.0
      %7302 = vmatmul.mubr.f32.gmra.mrb[0].mxu0 %v6925
      %v7303 = vpop.f32.mrb[0].mxu0
      %v7304 = vadd.f32 %v7079, %v7303
      %v7305 = vpop.f32.mrb[0].mxu0
      %7306 = vmatprep.mubr.f32.mxu0 0.0
      %7307 = vmatmul.mubr.f32.gmra.mrb[0].mxu0 %v6927
      %v7308 = vpop.f32.mrb[0].mxu0
      %v7309 = vadd.f32 %v7084, %v7308
      %v7310 = vpop.f32.mrb[0].mxu0
      %7311 = vmatprep.mubr.f32.mxu0 0.0
      %7312 = vmatmul.mubr.f32.gmra.mrb[0].mxu0 %v6929
      %v7313 = vpop.f32.mrb[0].mxu0
      %v7314 = vadd.f32 %v7089, %v7313
      %v7315 = vpop.f32.mrb[0].mxu0
      %7316 = vmatprep.mubr.f32.mxu0 0.0
      %7317 = vmatmul.mubr.f32.gmra.mrb[0].mxu0 %v6931
      %v7318 = vpop.f32.mrb[0].mxu0
      %v7319 = vadd.f32 %v7094, %v7318
      %v7320 = vpop.f32.mrb[0].mxu0
      %7321 = vmatprep.mubr.f32.mxu0 0.0
      %7322 = vmatmul.mubr.f32.gmra.mrb[0].mxu0 %v6933
      %v7323 = vpop.f32.mrb[0].mxu0
      %v7324 = vadd.f32 %v7099, %v7323
      %v7325 = vpop.f32.mrb[0].mxu0
      %7326 = vmatprep.mubr.f32.mxu0 0.0
      %7327 = vmatmul.mubr.f32.gmra.mrb[0].mxu0 %v6935
      %v7328 = vpop.f32.mrb[0].mxu0
      %v7329 = vadd.f32 %v7104, %v7328
      %v7330 = vpop.f32.mrb[0].mxu0
      %7331 = vmatprep.mubr.f32.mxu0 0.0
      %7332 = vmatmul.mubr.f32.gmra.mrb[0].mxu0 %v6937
      %v7333 = vpop.f32.mrb[0].mxu0
      %v7334 = vadd.f32 %v7109, %v7333
      %v7335 = vpop.f32.mrb[0].mxu0
      %7336 = vmatprep.mubr.f32.mxu0 0.0
      %7337 = vmatmul.mubr.f32.gmra.mrb[0].mxu0 %v6939
      %v7338 = vpop.f32.mrb[0].mxu0
      %v7339 = vadd.f32 %v7114, %v7338
      %v7340 = vpop.f32.mrb[0].mxu0
      %7341 = vmatprep.mubr.f32.mxu0 0.0
      %7342 = vmatmul.mubr.f32.gmra.mrb[0].mxu0 %v6941
      %v7343 = vpop.f32.mrb[0].mxu0
      %v7344 = vadd.f32 %v7119, %v7343
      %v7345 = vpop.f32.mrb[0].mxu0
      %7346 = vmatprep.mubr.f32.mxu0 0.0
      %7347 = vmatmul.mubr.f32.gmra.mrb[0].mxu0 %v6943
      %v7348 = vpop.f32.mrb[0].mxu0
      %v7349 = vadd.f32 %v7124, %v7348
      %v7350 = vpop.f32.mrb[0].mxu0
      %7351 = vmatprep.mubr.f32.mxu0 0.0
      %7352 = vmatmul.mubr.f32.gmra.mrb[0].mxu0 %v6945
      %v7353 = vpop.f32.mrb[0].mxu0
      %v7354 = vadd.f32 %v7129, %v7353
      %v7355 = vpop.f32.mrb[0].mxu0
      %7356 = vmatprep.mubr.f32.mxu0 0.0
      %7357 = vmatmul.mubr.f32.gmra.mrb[0].mxu0 %v6947
      %v7358 = vpop.f32.mrb[0].mxu0
      %v7359 = vadd.f32 %v7134, %v7358
      %v7360 = vpop.f32.mrb[0].mxu0
      %7361 = vmatprep.mubr.f32.mxu0 0.0
      %7362 = vmatmul.mubr.f32.gmra.mrb[0].mxu0 %v6949
      %v7363 = vpop.f32.mrb[0].mxu0
      %v7364 = vadd.f32 %v7139, %v7363
      %v7365 = vpop.f32.mrb[0].mxu0
      %7366 = vmatprep.mubr.f32.mxu0 0.0
      %7367 = vmatmul.mubr.f32.gmra.mrb[0].mxu0 %v6951
      %v7368 = vpop.f32.mrb[0].mxu0
      %v7369 = vadd.f32 %v7144, %v7368
      %v7370 = vpop.f32.mrb[0].mxu0
      %7371 = vmatprep.mubr.f32.mxu0 0.0
      %7372 = vmatmul.mubr.f32.gmra.mrb[0].mxu0 %v6953
      %v7373 = vpop.f32.mrb[0].mxu0
      %v7374 = vadd.f32 %v7149, %v7373
      %v7375 = vpop.f32.mrb[0].mxu0
      %7376 = vmatprep.mubr.f32.mxu0 0.0
      %7377 = vmatmul.mubr.f32.gmra.mrb[0].mxu0 %v6955
      %v7378 = vpop.f32.mrb[0].mxu0
      %v7379 = vadd.f32 %v7154, %v7378
      %v7380 = vpop.f32.mrb[0].mxu0
      %7381 = vmatprep.mubr.f32.mxu0 0.0
      %7382 = vmatmul.mubr.f32.gmra.mrb[0].mxu0 %v6957
      %v7383 = vpop.f32.mrb[0].mxu0
      %v7384 = vadd.f32 %v7159, %v7383
      %v7385 = vpop.f32.mrb[0].mxu0
      %7386 = vmatprep.mubr.f32.mxu0 0.0
      %7387 = vmatmul.mubr.f32.gmra.mrb[0].mxu0 %v6959
      %v7388 = vpop.f32.mrb[0].mxu0
      %v7389 = vadd.f32 %v7164, %v7388
      %v7390 = vpop.f32.mrb[0].mxu0
      %7391 = vmatprep.mubr.f32.mxu0 0.0
      %7392 = vmatmul.mubr.f32.gmra.mrb[0].mxu0 %v6961
      %v7393 = vpop.f32.mrb[0].mxu0
      %v7394 = vadd.f32 %v7169, %v7393
      %v7395 = vpop.f32.mrb[0].mxu0
      %7396 = vmatprep.mubr.f32.mxu0 0.0
      %7397 = vmatmul.mubr.f32.gmra.mrb[0].mxu0 %v6963
      %v7398 = vpop.f32.mrb[0].mxu0
      %v7399 = vadd.f32 %v7174, %v7398
      %v7400 = vpop.f32.mrb[0].mxu0
      %7401 = vmatprep.mubr.f32.mxu0 0.0
      %7402 = vmatmul.mubr.f32.gmra.mrb[0].mxu0 %v6965
      %v7403 = vpop.f32.mrb[0].mxu0
      %v7404 = vadd.f32 %v7179, %v7403
      %v7405 = vpop.f32.mrb[0].mxu0
      %7406 = vmatprep.mubr.f32.mxu0 0.0
      %7407 = vmatmul.mubr.f32.gmra.mrb[0].mxu0 %v5255
      %v7408 = vpop.f32.mrb[0].mxu0
      %v7409 = vadd.f32 %v7184, %v7408
      %v7410 = vpop.f32.mrb[0].mxu0
      %7411 = vmatprep.mubr.f32.mxu0 0.0
      %7412 = vmatmul.mubr.f32.gmra.mrb[0].mxu0 %v5257
      %v7413 = vpop.f32.mrb[0].mxu0
      %v7414 = vadd.f32 %v7189, %v7413
      %v7415 = vpop.f32.mrb[0].mxu0
      %7416 = vdwg.mxu0
      %v7417 = vmax.f32 %v7259, 0.0
      %v7418 = vmax.f32 %v7264, 0.0
      %v7419 = vmax.f32 %v7269, 0.0
      %v7420 = vmax.f32 %v7274, 0.0
      %v7421 = vmax.f32 %v7279, 0.0
      %v7422 = vmax.f32 %v7284, 0.0
      %v7423 = vmax.f32 %v7289, 0.0
      %v7424 = vmax.f32 %v7294, 0.0
      %v7425 = vmax.f32 %v7299, 0.0
      %v7426 = vmax.f32 %v7304, 0.0
      %v7427 = vmax.f32 %v7309, 0.0
      %v7428 = vmax.f32 %v7314, 0.0
      %v7429 = vmax.f32 %v7319, 0.0
      %v7430 = vmax.f32 %v7324, 0.0
      %v7431 = vmax.f32 %v7329, 0.0
      %v7432 = vmax.f32 %v7334, 0.0
      %v7433 = vmax.f32 %v7339, 0.0
      %v7434 = vmax.f32 %v7344, 0.0
      %v7435 = vmax.f32 %v7349, 0.0
      %v7436 = vmax.f32 %v7354, 0.0
      %v7437 = vmax.f32 %v7359, 0.0
      %v7438 = vmax.f32 %v7364, 0.0
      %v7439 = vmax.f32 %v7369, 0.0
      %v7440 = vmax.f32 %v7374, 0.0
      %v7441 = vmax.f32 %v7379, 0.0
      %v7442 = vmax.f32 %v7384, 0.0
      %v7443 = vmax.f32 %v7389, 0.0
      %v7444 = vmax.f32 %v7394, 0.0
      %v7445 = vmax.f32 %v7399, 0.0
      %v7446 = vmax.f32 %v7404, 0.0
      %v7447 = vmax.f32 %v7409, 0.0
      %v7448 = vmax.f32 %v7414, 0.0
      %7449 = vst.msk [vmem:[%s494] sm:$0xff] %vm1668, %v7417
      %7450 = vst.msk [vmem:[%s494 + $0x8] sm:$0xff] %vm1668, %v7418
      %7451 = vst.msk [vmem:[%s494 + $0x10] sm:$0xff] %vm1668, %v7419
      %7452 = vst.msk [vmem:[%s494 + $0x18] sm:$0xff] %vm1668, %v7420
      %7453 = vst.msk [vmem:[%s494 + $0x20] sm:$0xff] %vm1668, %v7421
      %7454 = vst.msk [vmem:[%s494 + $0x28] sm:$0xff] %vm1668, %v7422
      %7455 = vst.msk [vmem:[%s494 + $0x30] sm:$0xff] %vm1668, %v7423
      %7456 = vst.msk [vmem:[%s494 + $0x38] sm:$0xff] %vm1668, %v7424
      %7457 = vst.msk [vmem:[%s494 + $0x40] sm:$0xff] %vm1668, %v7425
      %7458 = vst.msk [vmem:[%s494 + $0x48] sm:$0xff] %vm1668, %v7426
      %7459 = vst.msk [vmem:[%s494 + $0x50] sm:$0xff] %vm1668, %v7427
      %7460 = vst.msk [vmem:[%s494 + $0x58] sm:$0xff] %vm1668, %v7428
      %7461 = vst.msk [vmem:[%s494 + $0x60] sm:$0xff] %vm1668, %v7429
      %7462 = vst.msk [vmem:[%s494 + $0x68] sm:$0xff] %vm1668, %v7430
      %7463 = vst.msk [vmem:[%s494 + $0x70] sm:$0xff] %vm1668, %v7431
      %7464 = vst.msk [vmem:[%s494 + $0x78] sm:$0xff] %vm1668, %v7432
      %7465 = vst.msk [vmem:[%s494 + $0x80] sm:$0xff] %vm1668, %v7433
      %7466 = vst.msk [vmem:[%s494 + $0x88] sm:$0xff] %vm1668, %v7434
      %7467 = vst.msk [vmem:[%s494 + $0x90] sm:$0xff] %vm1668, %v7435
      %7468 = vst.msk [vmem:[%s494 + $0x98] sm:$0xff] %vm1668, %v7436
      %7469 = vst.msk [vmem:[%s494 + $0xa0] sm:$0xff] %vm1668, %v7437
      %7470 = vst.msk [vmem:[%s494 + $0xa8] sm:$0xff] %vm1668, %v7438
      %7471 = vst.msk [vmem:[%s494 + $0xb0] sm:$0xff] %vm1668, %v7439
      %7472 = vst.msk [vmem:[%s494 + $0xb8] sm:$0xff] %vm1668, %v7440
      %7473 = vst.msk [vmem:[%s494 + $0xc0] sm:$0xff] %vm1668, %v7441
      %7474 = vst.msk [vmem:[%s494 + $0xc8] sm:$0xff] %vm1668, %v7442
      %7475 = vst.msk [vmem:[%s494 + $0xd0] sm:$0xff] %vm1668, %v7443
      %7476 = vst.msk [vmem:[%s494 + $0xd8] sm:$0xff] %vm1668, %v7444
      %7477 = vst.msk [vmem:[%s494 + $0xe0] sm:$0xff] %vm1668, %v7445
      %7478 = vst.msk [vmem:[%s494 + $0xe8] sm:$0xff] %vm1668, %v7446
      %7479 = vst.msk [vmem:[%s494 + $0xf0] sm:$0xff] %vm1668, %v7447
      %7480 = vst.msk [vmem:[%s494 + $0xf8] sm:$0xff] %vm1668, %v7448
      %p7481 = scmp.lt.s32.totalorder %s26, 1
      %s7482 = scalar_select %p7481, %s26, 1
      %s7483 = smul.addr %s7482, 32
      %s7484 = smul.addr %s7483, 8
      %s7485 = scalar_lea.vmem %s15, %s7484
      // Predicated region
      $region81: #{autoencoder_forward.1} parent=79 // pred_check
        %p7486 = pneg %p364
      $region82: #{autoencoder_forward.1} parent=79 // pred_check_branch
        %7488 = sbr.rel (%p7486) target = $region84
      $region83: #{autoencoder_forward.1} parent=79 // pred_region
        _
      $region84: #{autoencoder_forward.1} parent=79 // pred_fallthru
        _
    $region80: #{autoencoder_forward.1} parent=5 // pred_fallthru
      _
    %p7489 = scmp.le.s32.totalorder 2, %s21
    // Predicated region
    $region85: #{autoencoder_forward.1} parent=5 // pred_check
      %p7490 = pneg %p7489
    $region86: #{autoencoder_forward.1} parent=5 // pred_check_branch
      %7492 = sbr.rel (%p7490) target = $region88
    $region87: #{autoencoder_forward.1} parent=5 // pred_region
      %s7493 = ssub.s32 %s21, 2
      // Predicated region
      $region89: #{autoencoder_forward.1} parent=87 // pred_check
        %p7494 = pneg %p370
      $region90: #{autoencoder_forward.1} parent=87 // pred_check_branch
        %7496 = sbr.rel (%p7494) target = $region92
      $region91: #{autoencoder_forward.1} parent=87 // pred_region
        %p7497 = scmp.lt.s32.totalorder %s27, 1
        %s7498 = scalar_select %p7497, %s27, 1
        %s7499 = smul.addr %s7498, 32
        %s7500 = smul.addr %s7499, 8
        %s7501 = scalar_lea.vmem %s15, %s7500
      $region92: #{autoencoder_forward.1} parent=87 // pred_fallthru
        _
    $region88: #{autoencoder_forward.1} parent=5 // pred_fallthru
      _
  $region6: #{autoencoder_forward.1} parent=0 // loop_footer
    %s25 = sadd.s32 1, %s21
  $region7: #{autoencoder_forward.1} parent=0 // loop_footer_branch
    %20 = sbr.rel target = $region3
  $region8: #{autoencoder_forward.1} parent=0 // loop_exit
    _

</llo_original>
